<compile_context>
chip_gen: v7x
topology: tpu7x:2x2x1
jax: 0.10.0
libtpu: 0.0.40
codegen_flags: <defaults>
</compile_context>

<pallas_src>
import jax
import jax.numpy as jnp
from jax.experimental import pallas as pl
from jax.experimental.pallas import tpu as pltpu

EPS = 1e-5
COMPUTE_DTYPE = jnp.bfloat16      # MXU operand dtype (all accumulation in f32)
VMEM_LIMIT = 32 * 1024 * 1024     # explicit scoped-VMEM budget (safe on v5e/v6e/v7x)


def _compiler_params():
    return pltpu.CompilerParams(
        dimension_semantics=("parallel",),
        vmem_limit_bytes=VMEM_LIMIT,
    )


def _pick_row_tile(total, target):
    # largest divisor of `total` that is <= target and a multiple of 8 (or == total)
    for t in range(min(total, target), 0, -1):
        if total % t == 0 and (t % 8 == 0 or t == total):
            return t
    return total


def _pick_divisor(total, target):
    # TODO(synk): for awkward H without a friendly divisor this falls back to
    # whole-image tiles; a masked-stats variant would allow arbitrary H tiling.
    for t in range(min(total, target), 0, -1):
        if total % t == 0:
            return t
    return total


# ----------------------------- Pallas kernels ------------------------------

def matmul_bias_kernel(a_ref, w_ref, b_ref, o_ref):
    # o = a @ w + b   (ConvTranspose2d k=2 s=2 as a pixel-wise matmul; bf16 in, f32 out)
    o_ref[...] = (
        jnp.dot(a_ref[...], w_ref[...], preferred_element_type=jnp.float32)
        + b_ref[...]
    )


def conv3x3_stats_kernel(x_ref, w_ref, b_ref, y_ref, st_ref):
    # One (image, row-tile) block: 3x3 conv as 9 shifted matmuls on a halo'd tile
    # (in-VMEM im2col), + bias, plus per-tile partial BatchNorm statistics.
    thp2, wp2, cin = x_ref.shape
    th, wd = thp2 - 2, wp2 - 2
    cout = y_ref.shape[-1]
    x = x_ref[...]                                         # (th+2, wd+2, cin) bf16
    acc = jnp.zeros((th * wd, cout), jnp.float32)
    for kh in range(3):
        for kw in range(3):
            patch = x[kh:kh + th, kw:kw + wd, :].reshape(th * wd, cin)
            acc = acc + jnp.dot(patch, w_ref[kh * 3 + kw],
                                preferred_element_type=jnp.float32)
    y = acc + b_ref[...]                                   # f32 epilogue
    y_ref[...] = y
    st_ref[...] = jnp.concatenate(
        [jnp.sum(y, axis=0, keepdims=True),
         jnp.sum(y * y, axis=0, keepdims=True)], axis=0)


def bn_relu_kernel(y_ref, s_ref, o_ref, out_ref):
    # Lane-dense elementwise pass: out = relu(y * scale + offset)
    out_ref[...] = jnp.maximum(
        y_ref[...] * s_ref[...] + o_ref[...], 0.0).astype(out_ref.dtype)


# ----------------------------- Pallas wrappers ------------------------------

def _pallas_matmul_bias(a, w, b2d, tm):
    M, K = a.shape
    C = w.shape[1]
    return pl.pallas_call(
        matmul_bias_kernel,
        out_shape=jax.ShapeDtypeStruct((M, C), jnp.float32),
        grid=(M // tm,),
        in_specs=[
            pl.BlockSpec((tm, K), lambda i: (i, 0)),
            pl.BlockSpec((K, C), lambda i: (0, 0)),
            pl.BlockSpec((1, C), lambda i: (0, 0)),
        ],
        out_specs=pl.BlockSpec((tm, C), lambda i: (i, 0)),
        compiler_params=_compiler_params(),
        cost_estimate=pl.CostEstimate(
            flops=2 * M * K * C, transcendentals=0,
            bytes_accessed=M * K * 2 + K * C * 2 + C * 4 + M * C * 4),
    )(a, w, b2d)


def _pallas_conv3x3_stats(x_tiles, wf, b2d, th, wd, cout):
    NB = x_tiles.shape[0]
    cin = x_tiles.shape[-1]
    M = NB * th * wd
    return pl.pallas_call(
        conv3x3_stats_kernel,
        out_shape=(jax.ShapeDtypeStruct((M, cout), jnp.float32),
                   jax.ShapeDtypeStruct((NB, 2, cout), jnp.float32)),
        grid=(NB,),
        in_specs=[
            pl.BlockSpec((None, th + 2, wd + 2, cin), lambda i: (i, 0, 0, 0)),
            pl.BlockSpec((9, cin, cout), lambda i: (0, 0, 0)),
            pl.BlockSpec((1, cout), lambda i: (0, 0)),
        ],
        out_specs=(
            pl.BlockSpec((th * wd, cout), lambda i: (i, 0)),
            pl.BlockSpec((None, 2, cout), lambda i: (i, 0, 0)),
        ),
        compiler_params=_compiler_params(),
        cost_estimate=pl.CostEstimate(
            flops=2 * M * 9 * cin * cout, transcendentals=0,
            bytes_accessed=(NB * (th + 2) * (wd + 2) * cin * 2
                            + 9 * cin * cout * 2 + M * cout * 4 + NB * 2 * cout * 4)),
    )(x_tiles, wf, b2d)


def _pallas_bn_relu(y2, scale2, offset2, tr, out_dtype):
    R, L = y2.shape
    return pl.pallas_call(
        bn_relu_kernel,
        out_shape=jax.ShapeDtypeStruct((R, L), out_dtype),
        grid=(R // tr,),
        in_specs=[
            pl.BlockSpec((tr, L), lambda i: (i, 0)),
            pl.BlockSpec((1, L), lambda i: (0, 0)),
            pl.BlockSpec((1, L), lambda i: (0, 0)),
        ],
        out_specs=pl.BlockSpec((tr, L), lambda i: (i, 0)),
        compiler_params=_compiler_params(),
        cost_estimate=pl.CostEstimate(
            flops=3 * R * L, transcendentals=0,
            bytes_accessed=R * L * 4 + 2 * L * 4
            + R * L * jnp.dtype(out_dtype).itemsize),
    )(y2, scale2, offset2)


# ----------------------------- JAX glue -------------------------------------

def conv_transpose_2x2_s2(x, w, b):
    # x: [N,H,W,Cin], w: [Cin,Cout,2,2] (PyTorch ConvTranspose2d layout), b: [Cout]
    N, H, W, Cin = x.shape
    Cout = w.shape[1]
    wf = jnp.transpose(w, (0, 2, 3, 1)).reshape(Cin, 4 * Cout).astype(COMPUTE_DTYPE)
    bf = jnp.tile(b, 4).reshape(1, 4 * Cout)                 # col = (kh*2+kw)*Cout + co
    M = N * H * W
    tm = _pick_row_tile(M, 1024)
    y = _pallas_matmul_bias(x.reshape(M, Cin).astype(COMPUTE_DTYPE), wf, bf, tm)
    # TODO(synk): fuse this pixel-shuffle + the pad/concat in decoder_block_forward
    # into the conv1 input pipeline (currently 2-3 extra XLA passes over `up`).
    y = y.reshape(N, H, W, 2, 2, Cout).transpose(0, 1, 3, 2, 4, 5)
    return y.reshape(N, 2 * H, 2 * W, Cout)


def _halo_row_tiles(x, th):
    # x: (N,H,W,C) -> zero-padded, H-tiled with a 1-row halo: (N*num_t, th+2, W+2, C)
    N, H, W, C = x.shape
    xp = jnp.pad(x, ((0, 0), (1, 1), (1, 1), (0, 0)))
    num_t = H // th
    tiles = jnp.stack([xp[:, t * th:t * th + th + 2] for t in range(num_t)], axis=1)
    return tiles.reshape(N * num_t, th + 2, W + 2, C)


def conv3x3_bn_relu(x, w, b, gamma, beta, out_dtype):
    # Conv2d(k=3, padding=1) + BatchNorm2d(training batch stats) + ReLU, two Pallas passes.
    N, H, W, Cin = x.shape
    Cout = w.shape[0]
    th = _pick_divisor(H, 32)
    xt = _halo_row_tiles(x.astype(COMPUTE_DTYPE), th)
    wf = jnp.transpose(w, (2, 3, 1, 0)).reshape(9, Cin, Cout).astype(COMPUTE_DTYPE)
    y, st = _pallas_conv3x3_stats(
        xt, wf, b.astype(jnp.float32).reshape(1, Cout), th, W, Cout)

    # global batch statistics from per-tile partials (tiny reduction, biased variance)
    M = N * H * W
    mean = jnp.sum(st[:, 0, :], axis=0) / M
    var = jnp.maximum(jnp.sum(st[:, 1, :], axis=0) / M - mean * mean, 0.0)
    scale = gamma * jax.lax.rsqrt(var + EPS)
    offset = beta - mean * scale

    # lane-dense normalize pass: view y as (N*H, W*Cout) (free reshape of the HBM buffer)
    y2 = y.reshape(N * H, W * Cout)
    scale2 = jnp.tile(scale, W).reshape(1, W * Cout)
    offset2 = jnp.tile(offset, W).reshape(1, W * Cout)
    tr = _pick_row_tile(N * H, 1024)
    out2 = _pallas_bn_relu(y2, scale2, offset2, tr, out_dtype)
    return out2.reshape(N, H, W, Cout)


def decoder_block_forward(params, x1, x2):
    # x1, x2 in NHWC (NCHW PyTorch inputs transposed by the caller)
    up = conv_transpose_2x2_s2(x1, params["up_w"], params["up_b"])
    diffY = x2.shape[1] - up.shape[1]
    diffX = x2.shape[2] - up.shape[2]
    up = jnp.pad(
        up,
        ((0, 0), (diffY // 2, diffY - diffY // 2), (diffX // 2, diffX - diffX // 2), (0, 0)),
    )
    x = jnp.concatenate([x2, up], axis=-1)   # torch.cat([x2, x1], dim=1)
    # TODO(synk): conv1's BN+ReLU pass could be folded into conv2's input read,
    # but the spatial zero-padding must happen AFTER BN+ReLU, which needs
    # in-kernel border masking; kept as a separate lane-dense pass for now.
    x = conv3x3_bn_relu(x, params["c1_w"], params["c1_b"],
                        params["bn1_g"], params["bn1_b"], jnp.bfloat16)
    x = conv3x3_bn_relu(x, params["c2_w"], params["c2_b"],
                        params["bn2_g"], params["bn2_b"], jnp.float32)
    return x


# ----------------------------- pure-jnp reference ---------------------------

def _im2col_3x3(x):
    N, H, W, C = x.shape
    xp = jnp.pad(x, ((0, 0), (1, 1), (1, 1), (0, 0)))
    cols = [xp[:, kh:kh + H, kw:kw + W, :] for kh in range(3) for kw in range(3)]
    return jnp.concatenate(cols, axis=-1).reshape(N * H * W, 9 * C)


def _ref_forward(params, x1, x2):
    cd = COMPUTE_DTYPE
    N, H, W, Cin = x1.shape
    Cout = params["up_w"].shape[1]
    wf = jnp.transpose(params["up_w"], (0, 2, 3, 1)).reshape(Cin, 4 * Cout)
    y = jnp.dot(x1.reshape(-1, Cin).astype(cd), wf.astype(cd),
                preferred_element_type=jnp.float32) + jnp.tile(params["up_b"], 4)
    up = y.reshape(N, H, W, 2, 2, Cout).transpose(0, 1, 3, 2, 4, 5)
    up = up.reshape(N, 2 * H, 2 * W, Cout)
    diffY = x2.shape[1] - up.shape[1]
    diffX = x2.shape[2] - up.shape[2]
    up = jnp.pad(up, ((0, 0), (diffY // 2, diffY - diffY // 2),
                      (diffX // 2, diffX - diffX // 2), (0, 0)))
    x = jnp.concatenate([x2, up], axis=-1)

    def cbr(x, w, b, g, bt, out_dtype):
        n, h, wd, _ = x.shape
        a = _im2col_3x3(x.astype(cd))
        wf = jnp.transpose(w, (2, 3, 1, 0)).reshape(-1, w.shape[0]).astype(cd)
        y = jnp.dot(a, wf, preferred_element_type=jnp.float32) + b
        mean = y.mean(0, keepdims=True)
        var = ((y - mean) ** 2).mean(0, keepdims=True)
        y = (y - mean) * jax.lax.rsqrt(var + EPS) * g + bt
        return jnp.maximum(y, 0.0).astype(out_dtype).reshape(n, h, wd, -1)

    x = cbr(x, params["c1_w"], params["c1_b"], params["bn1_g"], params["bn1_b"], jnp.bfloat16)
    x = cbr(x, params["c2_w"], params["c2_b"], params["bn2_g"], params["bn2_b"], jnp.float32)
    return x


# ----------------------------- main ------------------------------------------

if __name__ == "__main__":
    in_c, out_c = 8, 4
    N, H1, W1 = 2, 8, 8           # x1: [N, in_c, 8, 8]   (PyTorch NCHW)
    H2, W2 = 16, 16               # x2: [N, out_c, 16, 16]

    key = jax.random.PRNGKey(0)
    ks = jax.random.split(key, 12)

    params = {
        # ConvTranspose2d(in_c, out_c, k=2, s=2): weight [in_c, out_c, 2, 2]
        "up_w": 0.1 * jax.random.normal(ks[0], (in_c, out_c, 2, 2), jnp.float32),
        "up_b": 0.1 * jax.random.normal(ks[1], (out_c,), jnp.float32),
        # ConvBlock.conv1: Conv2d(in_c, out_c, 3, padding=1)
        "c1_w": 0.1 * jax.random.normal(ks[2], (out_c, in_c, 3, 3), jnp.float32),
        "c1_b": 0.1 * jax.random.normal(ks[3], (out_c,), jnp.float32),
        "bn1_g": 1.0 + 0.1 * jax.random.normal(ks[4], (out_c,), jnp.float32),
        "bn1_b": 0.1 * jax.random.normal(ks[5], (out_c,), jnp.float32),
        # ConvBlock.conv2: Conv2d(out_c, out_c, 3, padding=1)
        "c2_w": 0.1 * jax.random.normal(ks[6], (out_c, out_c, 3, 3), jnp.float32),
        "c2_b": 0.1 * jax.random.normal(ks[7], (out_c,), jnp.float32),
        "bn2_g": 1.0 + 0.1 * jax.random.normal(ks[8], (out_c,), jnp.float32),
        "bn2_b": 0.1 * jax.random.normal(ks[9], (out_c,), jnp.float32),
        # TODO(synk): DecoderBlock also constructs `self.conv = Conv(in_c, out_c)` but
        # never uses it in forward(); its parameters are intentionally not materialized.
    }

    # Inputs built in NCHW (PyTorch convention) then transposed to the kernel's NHWC layout.
    x1_nchw = jax.random.normal(ks[10], (N, in_c, H1, W1), jnp.float32)
    x2_nchw = jax.random.normal(ks[11], (N, out_c, H2, W2), jnp.float32)
    x1 = jnp.transpose(x1_nchw, (0, 2, 3, 1))
    x2 = jnp.transpose(x2_nchw, (0, 2, 3, 1))

    out = jax.jit(decoder_block_forward)(params, x1, x2)
    out = jax.block_until_ready(out)

    ref = _ref_forward(params, x1, x2)
    assert out.shape == (N, H2, W2, out_c), out.shape
    # bf16 MXU operands + different f32 accumulation order -> compare at a bf16-aware tolerance
    max_err = float(jnp.max(jnp.abs(out - ref)))
    assert jnp.allclose(out, ref, atol=2e-2, rtol=2e-2), max_err

    print("KERNEL_OK")
</pallas_src>

<mosaic_0001>
module attributes {stable_mosaic.version = 11 : i64} {
  func.func @matmul_bias_kernel(%arg0: i32, %arg1: memref<128x8xbf16, #tpu.memory_space<vmem>>, %arg2: memref<8x16xbf16, #tpu.memory_space<vmem>>, %arg3: memref<1x16xf32, #tpu.memory_space<vmem>>, %arg4: memref<128x16xf32, #tpu.memory_space<vmem>>) attributes {dimension_semantics = [#tpu.dimension_semantics<parallel>], iteration_bounds = array<i64: 1>, scalar_prefetch = 0 : i64, scratch_operands = 0 : i64, tpu.core_type = #tpu.core_type<tc>, window_params = [{transform_indices = @transform_0, window_bounds = array<i64: 128, 8>}, {pipeline_mode = #tpu.pipeline_mode<synchronous>, transform_indices = @transform_1, window_bounds = array<i64: 8, 16>}, {pipeline_mode = #tpu.pipeline_mode<synchronous>, transform_indices = @transform_2, window_bounds = array<i64: 1, 16>}, {transform_indices = @transform_3, window_bounds = array<i64: 128, 16>}]} {
    %c0 = arith.constant 0 : index
    %c0_0 = arith.constant 0 : index
    %0 = vector.load %arg1[%c0, %c0_0] : memref<128x8xbf16, #tpu.memory_space<vmem>>, vector<128x8xbf16>
    %c0_1 = arith.constant 0 : index
    %c0_2 = arith.constant 0 : index
    %1 = vector.load %arg2[%c0_1, %c0_2] : memref<8x16xbf16, #tpu.memory_space<vmem>>, vector<8x16xbf16>
    %cst = arith.constant dense<0.000000e+00> : vector<128x16xf32>
    %2 = tpu.matmul %0, %1, %cst {dimension_numbers = #tpu.dot_dimension_numbers<[1], [0], [0], [1], [0, 0, 1, 1], [], []>} : vector<128x8xbf16>, vector<8x16xbf16>, vector<128x16xf32> -> vector<128x16xf32>
    %c0_3 = arith.constant 0 : index
    %c0_4 = arith.constant 0 : index
    %3 = vector.load %arg3[%c0_3, %c0_4] : memref<1x16xf32, #tpu.memory_space<vmem>>, vector<1x16xf32>
    %4 = vector.broadcast %3 : vector<1x16xf32> to vector<128x16xf32>
    %5 = arith.addf %2, %4 : vector<128x16xf32>
    %c0_5 = arith.constant 0 : index
    %c0_6 = arith.constant 0 : index
    %6 = vector.load %arg4[%c0_5, %c0_6] : memref<128x16xf32, #tpu.memory_space<vmem>>, vector<128x16xf32>
    tpu.vector_store %arg4[%c0_5, %c0_6], %5 {strides = array<i32>} : memref<128x16xf32, #tpu.memory_space<vmem>>, vector<128x16xf32>,
    return
  }
  func.func @transform_0(%arg0: i32) -> (i32, i32) {
    %c0_i32 = arith.constant 0 : i32
    %c0_i32_0 = arith.constant 0 : i32
    return %arg0, %c0_i32 : i32, i32
  }
  func.func @transform_1(%arg0: i32) -> (i32, i32) {
    %c0_i32 = arith.constant 0 : i32
    %c0_i32_0 = arith.constant 0 : i32
    %c0_i32_1 = arith.constant 0 : i32
    return %c0_i32, %c0_i32_0 : i32, i32
  }
  func.func @transform_2(%arg0: i32) -> (i32, i32) {
    %c0_i32 = arith.constant 0 : i32
    %c0_i32_0 = arith.constant 0 : i32
    %c0_i32_1 = arith.constant 0 : i32
    return %c0_i32, %c0_i32_0 : i32, i32
  }
  func.func @transform_3(%arg0: i32) -> (i32, i32) {
    %c0_i32 = arith.constant 0 : i32
    %c0_i32_0 = arith.constant 0 : i32
    return %arg0, %c0_i32 : i32, i32
  }
}

module attributes {stable_mosaic.version = 11 : i64} {
  func.func @conv3x3_stats_kernel(%arg0: i32, %arg1: memref<1x18x18x8xbf16, #tpu.memory_space<vmem>>, %arg2: memref<9x8x4xbf16, #tpu.memory_space<vmem>>, %arg3: memref<1x4xf32, #tpu.memory_space<vmem>>, %arg4: memref<256x4xf32, #tpu.memory_space<vmem>>, %arg5: memref<1x2x4xf32, #tpu.memory_space<vmem>>) attributes {dimension_semantics = [#tpu.dimension_semantics<parallel>], iteration_bounds = array<i64: 2>, scalar_prefetch = 0 : i64, scratch_operands = 0 : i64, tpu.core_type = #tpu.core_type<tc>, window_params = [{transform_indices = @transform_0, window_bounds = array<i64: 1, 18, 18, 8>}, {pipeline_mode = #tpu.pipeline_mode<synchronous>, transform_indices = @transform_1, window_bounds = array<i64: 9, 8, 4>}, {pipeline_mode = #tpu.pipeline_mode<synchronous>, transform_indices = @transform_2, window_bounds = array<i64: 1, 4>}, {transform_indices = @transform_3, window_bounds = array<i64: 256, 4>}, {transform_indices = @transform_4, window_bounds = array<i64: 1, 2, 4>}]} {
    %c0 = arith.constant 0 : index
    %c0_0 = arith.constant 0 : index
    %c0_1 = arith.constant 0 : index
    %c0_2 = arith.constant 0 : index
    %0 = vector.load %arg1[%c0, %c0_0, %c0_1, %c0_2] : memref<1x18x18x8xbf16, #tpu.memory_space<vmem>>, vector<1x18x18x8xbf16>
    %1 = vector.shape_cast %0 : vector<1x18x18x8xbf16> to vector<18x18x8xbf16>
    %cst = arith.constant 0.000000e+00 : f32
    %2 = vector.broadcast %cst : f32 to vector<256x4xf32>
    %3 = vector.extract_strided_slice %1 {offsets = [0, 0, 0], sizes = [16, 16, 8], strides = [1, 1, 1]} : vector<18x18x8xbf16> to vector<16x16x8xbf16>
    %4 = vector.shape_cast %3 : vector<16x16x8xbf16> to vector<256x8xbf16>
    %c0_3 = arith.constant 0 : index
    %c0_4 = arith.constant 0 : index
    %c0_5 = arith.constant 0 : index
    %5 = vector.load %arg2[%c0_3, %c0_4, %c0_5] : memref<9x8x4xbf16, #tpu.memory_space<vmem>>, vector<1x8x4xbf16>
    %6 = vector.shape_cast %5 : vector<1x8x4xbf16> to vector<8x4xbf16>
    %cst_6 = arith.constant dense<0.000000e+00> : vector<256x4xf32>
    %7 = tpu.matmul %4, %6, %cst_6 {dimension_numbers = #tpu.dot_dimension_numbers<[1], [0], [0], [1], [0, 0, 1, 1], [], []>} : vector<256x8xbf16>, vector<8x4xbf16>, vector<256x4xf32> -> vector<256x4xf32>
    %8 = arith.addf %2, %7 : vector<256x4xf32>
    %9 = vector.extract_strided_slice %1 {offsets = [0, 1, 0], sizes = [16, 16, 8], strides = [1, 1, 1]} : vector<18x18x8xbf16> to vector<16x16x8xbf16>
    %10 = vector.shape_cast %9 : vector<16x16x8xbf16> to vector<256x8xbf16>
    %c1 = arith.constant 1 : index
    %c0_7 = arith.constant 0 : index
    %c0_8 = arith.constant 0 : index
    %11 = vector.load %arg2[%c1, %c0_7, %c0_8] : memref<9x8x4xbf16, #tpu.memory_space<vmem>>, vector<1x8x4xbf16>
    %12 = vector.shape_cast %11 : vector<1x8x4xbf16> to vector<8x4xbf16>
    %cst_9 = arith.constant dense<0.000000e+00> : vector<256x4xf32>
    %13 = tpu.matmul %10, %12, %cst_9 {dimension_numbers = #tpu.dot_dimension_numbers<[1], [0], [0], [1], [0, 0, 1, 1], [], []>} : vector<256x8xbf16>, vector<8x4xbf16>, vector<256x4xf32> -> vector<256x4xf32>
    %14 = arith.addf %8, %13 : vector<256x4xf32>
    %15 = vector.extract_strided_slice %1 {offsets = [0, 2, 0], sizes = [16, 16, 8], strides = [1, 1, 1]} : vector<18x18x8xbf16> to vector<16x16x8xbf16>
    %16 = vector.shape_cast %15 : vector<16x16x8xbf16> to vector<256x8xbf16>
    %c2 = arith.constant 2 : index
    %c0_10 = arith.constant 0 : index
    %c0_11 = arith.constant 0 : index
    %17 = vector.load %arg2[%c2, %c0_10, %c0_11] : memref<9x8x4xbf16, #tpu.memory_space<vmem>>, vector<1x8x4xbf16>
    %18 = vector.shape_cast %17 : vector<1x8x4xbf16> to vector<8x4xbf16>
    %cst_12 = arith.constant dense<0.000000e+00> : vector<256x4xf32>
    %19 = tpu.matmul %16, %18, %cst_12 {dimension_numbers = #tpu.dot_dimension_numbers<[1], [0], [0], [1], [0, 0, 1, 1], [], []>} : vector<256x8xbf16>, vector<8x4xbf16>, vector<256x4xf32> -> vector<256x4xf32>
    %20 = arith.addf %14, %19 : vector<256x4xf32>
    %21 = vector.extract_strided_slice %1 {offsets = [1, 0, 0], sizes = [16, 16, 8], strides = [1, 1, 1]} : vector<18x18x8xbf16> to vector<16x16x8xbf16>
    %22 = vector.shape_cast %21 : vector<16x16x8xbf16> to vector<256x8xbf16>
    %c3 = arith.constant 3 : index
    %c0_13 = arith.constant 0 : index
    %c0_14 = arith.constant 0 : index
    %23 = vector.load %arg2[%c3, %c0_13, %c0_14] : memref<9x8x4xbf16, #tpu.memory_space<vmem>>, vector<1x8x4xbf16>
    %24 = vector.shape_cast %23 : vector<1x8x4xbf16> to vector<8x4xbf16>
    %cst_15 = arith.constant dense<0.000000e+00> : vector<256x4xf32>
    %25 = tpu.matmul %22, %24, %cst_15 {dimension_numbers = #tpu.dot_dimension_numbers<[1], [0], [0], [1], [0, 0, 1, 1], [], []>} : vector<256x8xbf16>, vector<8x4xbf16>, vector<256x4xf32> -> vector<256x4xf32>
    %26 = arith.addf %20, %25 : vector<256x4xf32>
    %27 = vector.extract_strided_slice %1 {offsets = [1, 1, 0], sizes = [16, 16, 8], strides = [1, 1, 1]} : vector<18x18x8xbf16> to vector<16x16x8xbf16>
    %28 = vector.shape_cast %27 : vector<16x16x8xbf16> to vector<256x8xbf16>
    %c4 = arith.constant 4 : index
    %c0_16 = arith.constant 0 : index
    %c0_17 = arith.constant 0 : index
    %29 = vector.load %arg2[%c4, %c0_16, %c0_17] : memref<9x8x4xbf16, #tpu.memory_space<vmem>>, vector<1x8x4xbf16>
    %30 = vector.shape_cast %29 : vector<1x8x4xbf16> to vector<8x4xbf16>
    %cst_18 = arith.constant dense<0.000000e+00> : vector<256x4xf32>
    %31 = tpu.matmul %28, %30, %cst_18 {dimension_numbers = #tpu.dot_dimension_numbers<[1], [0], [0], [1], [0, 0, 1, 1], [], []>} : vector<256x8xbf16>, vector<8x4xbf16>, vector<256x4xf32> -> vector<256x4xf32>
    %32 = arith.addf %26, %31 : vector<256x4xf32>
    %33 = vector.extract_strided_slice %1 {offsets = [1, 2, 0], sizes = [16, 16, 8], strides = [1, 1, 1]} : vector<18x18x8xbf16> to vector<16x16x8xbf16>
    %34 = vector.shape_cast %33 : vector<16x16x8xbf16> to vector<256x8xbf16>
    %c5 = arith.constant 5 : index
    %c0_19 = arith.constant 0 : index
    %c0_20 = arith.constant 0 : index
    %35 = vector.load %arg2[%c5, %c0_19, %c0_20] : memref<9x8x4xbf16, #tpu.memory_space<vmem>>, vector<1x8x4xbf16>
    %36 = vector.shape_cast %35 : vector<1x8x4xbf16> to vector<8x4xbf16>
    %cst_21 = arith.constant dense<0.000000e+00> : vector<256x4xf32>
    %37 = tpu.matmul %34, %36, %cst_21 {dimension_numbers = #tpu.dot_dimension_numbers<[1], [0], [0], [1], [0, 0, 1, 1], [], []>} : vector<256x8xbf16>, vector<8x4xbf16>, vector<256x4xf32> -> vector<256x4xf32>
    %38 = arith.addf %32, %37 : vector<256x4xf32>
    %39 = vector.extract_strided_slice %1 {offsets = [2, 0, 0], sizes = [16, 16, 8], strides = [1, 1, 1]} : vector<18x18x8xbf16> to vector<16x16x8xbf16>
    %40 = vector.shape_cast %39 : vector<16x16x8xbf16> to vector<256x8xbf16>
    %c6 = arith.constant 6 : index
    %c0_22 = arith.constant 0 : index
    %c0_23 = arith.constant 0 : index
    %41 = vector.load %arg2[%c6, %c0_22, %c0_23] : memref<9x8x4xbf16, #tpu.memory_space<vmem>>, vector<1x8x4xbf16>
    %42 = vector.shape_cast %41 : vector<1x8x4xbf16> to vector<8x4xbf16>
    %cst_24 = arith.constant dense<0.000000e+00> : vector<256x4xf32>
    %43 = tpu.matmul %40, %42, %cst_24 {dimension_numbers = #tpu.dot_dimension_numbers<[1], [0], [0], [1], [0, 0, 1, 1], [], []>} : vector<256x8xbf16>, vector<8x4xbf16>, vector<256x4xf32> -> vector<256x4xf32>
    %44 = arith.addf %38, %43 : vector<256x4xf32>
    %45 = vector.extract_strided_slice %1 {offsets = [2, 1, 0], sizes = [16, 16, 8], strides = [1, 1, 1]} : vector<18x18x8xbf16> to vector<16x16x8xbf16>
    %46 = vector.shape_cast %45 : vector<16x16x8xbf16> to vector<256x8xbf16>
    %c7 = arith.constant 7 : index
    %c0_25 = arith.constant 0 : index
    %c0_26 = arith.constant 0 : index
    %47 = vector.load %arg2[%c7, %c0_25, %c0_26] : memref<9x8x4xbf16, #tpu.memory_space<vmem>>, vector<1x8x4xbf16>
    %48 = vector.shape_cast %47 : vector<1x8x4xbf16> to vector<8x4xbf16>
    %cst_27 = arith.constant dense<0.000000e+00> : vector<256x4xf32>
    %49 = tpu.matmul %46, %48, %cst_27 {dimension_numbers = #tpu.dot_dimension_numbers<[1], [0], [0], [1], [0, 0, 1, 1], [], []>} : vector<256x8xbf16>, vector<8x4xbf16>, vector<256x4xf32> -> vector<256x4xf32>
    %50 = arith.addf %44, %49 : vector<256x4xf32>
    %51 = vector.extract_strided_slice %1 {offsets = [2, 2, 0], sizes = [16, 16, 8], strides = [1, 1, 1]} : vector<18x18x8xbf16> to vector<16x16x8xbf16>
    %52 = vector.shape_cast %51 : vector<16x16x8xbf16> to vector<256x8xbf16>
    %c8 = arith.constant 8 : index
    %c0_28 = arith.constant 0 : index
    %c0_29 = arith.constant 0 : index
    %53 = vector.load %arg2[%c8, %c0_28, %c0_29] : memref<9x8x4xbf16, #tpu.memory_space<vmem>>, vector<1x8x4xbf16>
    %54 = vector.shape_cast %53 : vector<1x8x4xbf16> to vector<8x4xbf16>
    %cst_30 = arith.constant dense<0.000000e+00> : vector<256x4xf32>
    %55 = tpu.matmul %52, %54, %cst_30 {dimension_numbers = #tpu.dot_dimension_numbers<[1], [0], [0], [1], [0, 0, 1, 1], [], []>} : vector<256x8xbf16>, vector<8x4xbf16>, vector<256x4xf32> -> vector<256x4xf32>
    %56 = arith.addf %50, %55 : vector<256x4xf32>
    %c0_31 = arith.constant 0 : index
    %c0_32 = arith.constant 0 : index
    %57 = vector.load %arg3[%c0_31, %c0_32] : memref<1x4xf32, #tpu.memory_space<vmem>>, vector<1x4xf32>
    %58 = vector.broadcast %57 : vector<1x4xf32> to vector<256x4xf32>
    %59 = arith.addf %56, %58 : vector<256x4xf32>
    %c0_33 = arith.constant 0 : index
    %c0_34 = arith.constant 0 : index
    %60 = vector.load %arg4[%c0_33, %c0_34] : memref<256x4xf32, #tpu.memory_space<vmem>>, vector<256x4xf32>
    tpu.vector_store %arg4[%c0_33, %c0_34], %59 {strides = array<i32>} : memref<256x4xf32, #tpu.memory_space<vmem>>, vector<256x4xf32>,
    %cst_35 = arith.constant dense<0.000000e+00> : vector<4xf32>
    %61 = vector.multi_reduction <add>, %59, %cst_35 [0] : vector<256x4xf32> to vector<4xf32>
    %62 = vector.shape_cast %61 : vector<4xf32> to vector<1x4xf32>
    %63 = arith.mulf %59, %59 : vector<256x4xf32>
    %cst_36 = arith.constant dense<0.000000e+00> : vector<4xf32>
    %64 = vector.multi_reduction <add>, %63, %cst_36 [0] : vector<256x4xf32> to vector<4xf32>
    %65 = vector.shape_cast %64 : vector<4xf32> to vector<1x4xf32>
    %66 = tpu.concatenate %62, %65 in 0 : vector<1x4xf32>, vector<1x4xf32> -> vector<2x4xf32>
    %c0_37 = arith.constant 0 : index
    %c0_38 = arith.constant 0 : index
    %c0_39 = arith.constant 0 : index
    %67 = vector.load %arg5[%c0_37, %c0_38, %c0_39] : memref<1x2x4xf32, #tpu.memory_space<vmem>>, vector<1x2x4xf32>
    %68 = vector.shape_cast %67 : vector<1x2x4xf32> to vector<2x4xf32>
    %69 = vector.shape_cast %66 : vector<2x4xf32> to vector<1x2x4xf32>
    tpu.vector_store %arg5[%c0_37, %c0_38, %c0_39], %69 {strides = array<i32>} : memref<1x2x4xf32, #tpu.memory_space<vmem>>, vector<1x2x4xf32>,
    return
  }
  func.func @transform_0(%arg0: i32) -> (i32, i32, i32, i32) {
    %c0_i32 = arith.constant 0 : i32
    %c0_i32_0 = arith.constant 0 : i32
    %c0_i32_1 = arith.constant 0 : i32
    %c0_i32_2 = arith.constant 0 : i32
    return %arg0, %c0_i32, %c0_i32_0, %c0_i32_1 : i32, i32, i32, i32
  }
  func.func @transform_1(%arg0: i32) -> (i32, i32, i32) {
    %c0_i32 = arith.constant 0 : i32
    %c0_i32_0 = arith.constant 0 : i32
    %c0_i32_1 = arith.constant 0 : i32
    %c0_i32_2 = arith.constant 0 : i32
    return %c0_i32, %c0_i32_0, %c0_i32_1 : i32, i32, i32
  }
  func.func @transform_2(%arg0: i32) -> (i32, i32) {
    %c0_i32 = arith.constant 0 : i32
    %c0_i32_0 = arith.constant 0 : i32
    %c0_i32_1 = arith.constant 0 : i32
    return %c0_i32, %c0_i32_0 : i32, i32
  }
  func.func @transform_3(%arg0: i32) -> (i32, i32) {
    %c0_i32 = arith.constant 0 : i32
    %c0_i32_0 = arith.constant 0 : i32
    return %arg0, %c0_i32 : i32, i32
  }
  func.func @transform_4(%arg0: i32) -> (i32, i32, i32) {
    %c0_i32 = arith.constant 0 : i32
    %c0_i32_0 = arith.constant 0 : i32
    %c0_i32_1 = arith.constant 0 : i32
    return %arg0, %c0_i32, %c0_i32_0 : i32, i32, i32
  }
}

module attributes {stable_mosaic.version = 11 : i64} {
  func.func @bn_relu_kernel(%arg0: i32, %arg1: memref<32x64xf32, #tpu.memory_space<vmem>>, %arg2: memref<1x64xf32, #tpu.memory_space<vmem>>, %arg3: memref<1x64xf32, #tpu.memory_space<vmem>>, %arg4: memref<32x64xbf16, #tpu.memory_space<vmem>>) attributes {dimension_semantics = [#tpu.dimension_semantics<parallel>], iteration_bounds = array<i64: 1>, scalar_prefetch = 0 : i64, scratch_operands = 0 : i64, tpu.core_type = #tpu.core_type<tc>, window_params = [{transform_indices = @transform_0, window_bounds = array<i64: 32, 64>}, {pipeline_mode = #tpu.pipeline_mode<synchronous>, transform_indices = @transform_1, window_bounds = array<i64: 1, 64>}, {pipeline_mode = #tpu.pipeline_mode<synchronous>, transform_indices = @transform_2, window_bounds = array<i64: 1, 64>}, {transform_indices = @transform_3, window_bounds = array<i64: 32, 64>}]} {
    %c0 = arith.constant 0 : index
    %c0_0 = arith.constant 0 : index
    %0 = vector.load %arg1[%c0, %c0_0] : memref<32x64xf32, #tpu.memory_space<vmem>>, vector<32x64xf32>
    %c0_1 = arith.constant 0 : index
    %c0_2 = arith.constant 0 : index
    %1 = vector.load %arg2[%c0_1, %c0_2] : memref<1x64xf32, #tpu.memory_space<vmem>>, vector<1x64xf32>
    %2 = vector.broadcast %1 : vector<1x64xf32> to vector<32x64xf32>
    %3 = arith.mulf %0, %2 : vector<32x64xf32>
    %c0_3 = arith.constant 0 : index
    %c0_4 = arith.constant 0 : index
    %4 = vector.load %arg3[%c0_3, %c0_4] : memref<1x64xf32, #tpu.memory_space<vmem>>, vector<1x64xf32>
    %5 = vector.broadcast %4 : vector<1x64xf32> to vector<32x64xf32>
    %6 = arith.addf %3, %5 : vector<32x64xf32>
    %cst = arith.constant 0.000000e+00 : f32
    %7 = vector.broadcast %cst : f32 to vector<32x64xf32>
    %8 = arith.maximumf %6, %7 : vector<32x64xf32>
    %9 = arith.truncf %8 : vector<32x64xf32> to vector<32x64xbf16>
    %c0_5 = arith.constant 0 : index
    %c0_6 = arith.constant 0 : index
    %10 = vector.load %arg4[%c0_5, %c0_6] : memref<32x64xbf16, #tpu.memory_space<vmem>>, vector<32x64xbf16>
    tpu.vector_store %arg4[%c0_5, %c0_6], %9 {strides = array<i32>} : memref<32x64xbf16, #tpu.memory_space<vmem>>, vector<32x64xbf16>,
    return
  }
  func.func @transform_0(%arg0: i32) -> (i32, i32) {
    %c0_i32 = arith.constant 0 : i32
    %c0_i32_0 = arith.constant 0 : i32
    return %arg0, %c0_i32 : i32, i32
  }
  func.func @transform_1(%arg0: i32) -> (i32, i32) {
    %c0_i32 = arith.constant 0 : i32
    %c0_i32_0 = arith.constant 0 : i32
    %c0_i32_1 = arith.constant 0 : i32
    return %c0_i32, %c0_i32_0 : i32, i32
  }
  func.func @transform_2(%arg0: i32) -> (i32, i32) {
    %c0_i32 = arith.constant 0 : i32
    %c0_i32_0 = arith.constant 0 : i32
    %c0_i32_1 = arith.constant 0 : i32
    return %c0_i32, %c0_i32_0 : i32, i32
  }
  func.func @transform_3(%arg0: i32) -> (i32, i32) {
    %c0_i32 = arith.constant 0 : i32
    %c0_i32_0 = arith.constant 0 : i32
    return %arg0, %c0_i32 : i32, i32
  }
}

module attributes {stable_mosaic.version = 11 : i64} {
  func.func @conv3x3_stats_kernel(%arg0: i32, %arg1: memref<1x18x18x4xbf16, #tpu.memory_space<vmem>>, %arg2: memref<9x4x4xbf16, #tpu.memory_space<vmem>>, %arg3: memref<1x4xf32, #tpu.memory_space<vmem>>, %arg4: memref<256x4xf32, #tpu.memory_space<vmem>>, %arg5: memref<1x2x4xf32, #tpu.memory_space<vmem>>) attributes {dimension_semantics = [#tpu.dimension_semantics<parallel>], iteration_bounds = array<i64: 2>, scalar_prefetch = 0 : i64, scratch_operands = 0 : i64, tpu.core_type = #tpu.core_type<tc>, window_params = [{transform_indices = @transform_0, window_bounds = array<i64: 1, 18, 18, 4>}, {pipeline_mode = #tpu.pipeline_mode<synchronous>, transform_indices = @transform_1, window_bounds = array<i64: 9, 4, 4>}, {pipeline_mode = #tpu.pipeline_mode<synchronous>, transform_indices = @transform_2, window_bounds = array<i64: 1, 4>}, {transform_indices = @transform_3, window_bounds = array<i64: 256, 4>}, {transform_indices = @transform_4, window_bounds = array<i64: 1, 2, 4>}]} {
    %c0 = arith.constant 0 : index
    %c0_0 = arith.constant 0 : index
    %c0_1 = arith.constant 0 : index
    %c0_2 = arith.constant 0 : index
    %0 = vector.load %arg1[%c0, %c0_0, %c0_1, %c0_2] : memref<1x18x18x4xbf16, #tpu.memory_space<vmem>>, vector<1x18x18x4xbf16>
    %1 = vector.shape_cast %0 : vector<1x18x18x4xbf16> to vector<18x18x4xbf16>
    %cst = arith.constant 0.000000e+00 : f32
    %2 = vector.broadcast %cst : f32 to vector<256x4xf32>
    %3 = vector.extract_strided_slice %1 {offsets = [0, 0, 0], sizes = [16, 16, 4], strides = [1, 1, 1]} : vector<18x18x4xbf16> to vector<16x16x4xbf16>
    %4 = vector.shape_cast %3 : vector<16x16x4xbf16> to vector<256x4xbf16>
    %c0_3 = arith.constant 0 : index
    %c0_4 = arith.constant 0 : index
    %c0_5 = arith.constant 0 : index
    %5 = vector.load %arg2[%c0_3, %c0_4, %c0_5] : memref<9x4x4xbf16, #tpu.memory_space<vmem>>, vector<1x4x4xbf16>
    %6 = vector.shape_cast %5 : vector<1x4x4xbf16> to vector<4x4xbf16>
    %cst_6 = arith.constant dense<0.000000e+00> : vector<256x4xf32>
    %7 = tpu.matmul %4, %6, %cst_6 {dimension_numbers = #tpu.dot_dimension_numbers<[1], [0], [0], [1], [0, 0, 1, 1], [], []>} : vector<256x4xbf16>, vector<4x4xbf16>, vector<256x4xf32> -> vector<256x4xf32>
    %8 = arith.addf %2, %7 : vector<256x4xf32>
    %9 = vector.extract_strided_slice %1 {offsets = [0, 1, 0], sizes = [16, 16, 4], strides = [1, 1, 1]} : vector<18x18x4xbf16> to vector<16x16x4xbf16>
    %10 = vector.shape_cast %9 : vector<16x16x4xbf16> to vector<256x4xbf16>
    %c1 = arith.constant 1 : index
    %c0_7 = arith.constant 0 : index
    %c0_8 = arith.constant 0 : index
    %11 = vector.load %arg2[%c1, %c0_7, %c0_8] : memref<9x4x4xbf16, #tpu.memory_space<vmem>>, vector<1x4x4xbf16>
    %12 = vector.shape_cast %11 : vector<1x4x4xbf16> to vector<4x4xbf16>
    %cst_9 = arith.constant dense<0.000000e+00> : vector<256x4xf32>
    %13 = tpu.matmul %10, %12, %cst_9 {dimension_numbers = #tpu.dot_dimension_numbers<[1], [0], [0], [1], [0, 0, 1, 1], [], []>} : vector<256x4xbf16>, vector<4x4xbf16>, vector<256x4xf32> -> vector<256x4xf32>
    %14 = arith.addf %8, %13 : vector<256x4xf32>
    %15 = vector.extract_strided_slice %1 {offsets = [0, 2, 0], sizes = [16, 16, 4], strides = [1, 1, 1]} : vector<18x18x4xbf16> to vector<16x16x4xbf16>
    %16 = vector.shape_cast %15 : vector<16x16x4xbf16> to vector<256x4xbf16>
    %c2 = arith.constant 2 : index
    %c0_10 = arith.constant 0 : index
    %c0_11 = arith.constant 0 : index
    %17 = vector.load %arg2[%c2, %c0_10, %c0_11] : memref<9x4x4xbf16, #tpu.memory_space<vmem>>, vector<1x4x4xbf16>
    %18 = vector.shape_cast %17 : vector<1x4x4xbf16> to vector<4x4xbf16>
    %cst_12 = arith.constant dense<0.000000e+00> : vector<256x4xf32>
    %19 = tpu.matmul %16, %18, %cst_12 {dimension_numbers = #tpu.dot_dimension_numbers<[1], [0], [0], [1], [0, 0, 1, 1], [], []>} : vector<256x4xbf16>, vector<4x4xbf16>, vector<256x4xf32> -> vector<256x4xf32>
    %20 = arith.addf %14, %19 : vector<256x4xf32>
    %21 = vector.extract_strided_slice %1 {offsets = [1, 0, 0], sizes = [16, 16, 4], strides = [1, 1, 1]} : vector<18x18x4xbf16> to vector<16x16x4xbf16>
    %22 = vector.shape_cast %21 : vector<16x16x4xbf16> to vector<256x4xbf16>
    %c3 = arith.constant 3 : index
    %c0_13 = arith.constant 0 : index
    %c0_14 = arith.constant 0 : index
    %23 = vector.load %arg2[%c3, %c0_13, %c0_14] : memref<9x4x4xbf16, #tpu.memory_space<vmem>>, vector<1x4x4xbf16>
    %24 = vector.shape_cast %23 : vector<1x4x4xbf16> to vector<4x4xbf16>
    %cst_15 = arith.constant dense<0.000000e+00> : vector<256x4xf32>
    %25 = tpu.matmul %22, %24, %cst_15 {dimension_numbers = #tpu.dot_dimension_numbers<[1], [0], [0], [1], [0, 0, 1, 1], [], []>} : vector<256x4xbf16>, vector<4x4xbf16>, vector<256x4xf32> -> vector<256x4xf32>
    %26 = arith.addf %20, %25 : vector<256x4xf32>
    %27 = vector.extract_strided_slice %1 {offsets = [1, 1, 0], sizes = [16, 16, 4], strides = [1, 1, 1]} : vector<18x18x4xbf16> to vector<16x16x4xbf16>
    %28 = vector.shape_cast %27 : vector<16x16x4xbf16> to vector<256x4xbf16>
    %c4 = arith.constant 4 : index
    %c0_16 = arith.constant 0 : index
    %c0_17 = arith.constant 0 : index
    %29 = vector.load %arg2[%c4, %c0_16, %c0_17] : memref<9x4x4xbf16, #tpu.memory_space<vmem>>, vector<1x4x4xbf16>
    %30 = vector.shape_cast %29 : vector<1x4x4xbf16> to vector<4x4xbf16>
    %cst_18 = arith.constant dense<0.000000e+00> : vector<256x4xf32>
    %31 = tpu.matmul %28, %30, %cst_18 {dimension_numbers = #tpu.dot_dimension_numbers<[1], [0], [0], [1], [0, 0, 1, 1], [], []>} : vector<256x4xbf16>, vector<4x4xbf16>, vector<256x4xf32> -> vector<256x4xf32>
    %32 = arith.addf %26, %31 : vector<256x4xf32>
    %33 = vector.extract_strided_slice %1 {offsets = [1, 2, 0], sizes = [16, 16, 4], strides = [1, 1, 1]} : vector<18x18x4xbf16> to vector<16x16x4xbf16>
    %34 = vector.shape_cast %33 : vector<16x16x4xbf16> to vector<256x4xbf16>
    %c5 = arith.constant 5 : index
    %c0_19 = arith.constant 0 : index
    %c0_20 = arith.constant 0 : index
    %35 = vector.load %arg2[%c5, %c0_19, %c0_20] : memref<9x4x4xbf16, #tpu.memory_space<vmem>>, vector<1x4x4xbf16>
    %36 = vector.shape_cast %35 : vector<1x4x4xbf16> to vector<4x4xbf16>
    %cst_21 = arith.constant dense<0.000000e+00> : vector<256x4xf32>
    %37 = tpu.matmul %34, %36, %cst_21 {dimension_numbers = #tpu.dot_dimension_numbers<[1], [0], [0], [1], [0, 0, 1, 1], [], []>} : vector<256x4xbf16>, vector<4x4xbf16>, vector<256x4xf32> -> vector<256x4xf32>
    %38 = arith.addf %32, %37 : vector<256x4xf32>
    %39 = vector.extract_strided_slice %1 {offsets = [2, 0, 0], sizes = [16, 16, 4], strides = [1, 1, 1]} : vector<18x18x4xbf16> to vector<16x16x4xbf16>
    %40 = vector.shape_cast %39 : vector<16x16x4xbf16> to vector<256x4xbf16>
    %c6 = arith.constant 6 : index
    %c0_22 = arith.constant 0 : index
    %c0_23 = arith.constant 0 : index
    %41 = vector.load %arg2[%c6, %c0_22, %c0_23] : memref<9x4x4xbf16, #tpu.memory_space<vmem>>, vector<1x4x4xbf16>
    %42 = vector.shape_cast %41 : vector<1x4x4xbf16> to vector<4x4xbf16>
    %cst_24 = arith.constant dense<0.000000e+00> : vector<256x4xf32>
    %43 = tpu.matmul %40, %42, %cst_24 {dimension_numbers = #tpu.dot_dimension_numbers<[1], [0], [0], [1], [0, 0, 1, 1], [], []>} : vector<256x4xbf16>, vector<4x4xbf16>, vector<256x4xf32> -> vector<256x4xf32>
    %44 = arith.addf %38, %43 : vector<256x4xf32>
    %45 = vector.extract_strided_slice %1 {offsets = [2, 1, 0], sizes = [16, 16, 4], strides = [1, 1, 1]} : vector<18x18x4xbf16> to vector<16x16x4xbf16>
    %46 = vector.shape_cast %45 : vector<16x16x4xbf16> to vector<256x4xbf16>
    %c7 = arith.constant 7 : index
    %c0_25 = arith.constant 0 : index
    %c0_26 = arith.constant 0 : index
    %47 = vector.load %arg2[%c7, %c0_25, %c0_26] : memref<9x4x4xbf16, #tpu.memory_space<vmem>>, vector<1x4x4xbf16>
    %48 = vector.shape_cast %47 : vector<1x4x4xbf16> to vector<4x4xbf16>
    %cst_27 = arith.constant dense<0.000000e+00> : vector<256x4xf32>
    %49 = tpu.matmul %46, %48, %cst_27 {dimension_numbers = #tpu.dot_dimension_numbers<[1], [0], [0], [1], [0, 0, 1, 1], [], []>} : vector<256x4xbf16>, vector<4x4xbf16>, vector<256x4xf32> -> vector<256x4xf32>
    %50 = arith.addf %44, %49 : vector<256x4xf32>
    %51 = vector.extract_strided_slice %1 {offsets = [2, 2, 0], sizes = [16, 16, 4], strides = [1, 1, 1]} : vector<18x18x4xbf16> to vector<16x16x4xbf16>
    %52 = vector.shape_cast %51 : vector<16x16x4xbf16> to vector<256x4xbf16>
    %c8 = arith.constant 8 : index
    %c0_28 = arith.constant 0 : index
    %c0_29 = arith.constant 0 : index
    %53 = vector.load %arg2[%c8, %c0_28, %c0_29] : memref<9x4x4xbf16, #tpu.memory_space<vmem>>, vector<1x4x4xbf16>
    %54 = vector.shape_cast %53 : vector<1x4x4xbf16> to vector<4x4xbf16>
    %cst_30 = arith.constant dense<0.000000e+00> : vector<256x4xf32>
    %55 = tpu.matmul %52, %54, %cst_30 {dimension_numbers = #tpu.dot_dimension_numbers<[1], [0], [0], [1], [0, 0, 1, 1], [], []>} : vector<256x4xbf16>, vector<4x4xbf16>, vector<256x4xf32> -> vector<256x4xf32>
    %56 = arith.addf %50, %55 : vector<256x4xf32>
    %c0_31 = arith.constant 0 : index
    %c0_32 = arith.constant 0 : index
    %57 = vector.load %arg3[%c0_31, %c0_32] : memref<1x4xf32, #tpu.memory_space<vmem>>, vector<1x4xf32>
    %58 = vector.broadcast %57 : vector<1x4xf32> to vector<256x4xf32>
    %59 = arith.addf %56, %58 : vector<256x4xf32>
    %c0_33 = arith.constant 0 : index
    %c0_34 = arith.constant 0 : index
    %60 = vector.load %arg4[%c0_33, %c0_34] : memref<256x4xf32, #tpu.memory_space<vmem>>, vector<256x4xf32>
    tpu.vector_store %arg4[%c0_33, %c0_34], %59 {strides = array<i32>} : memref<256x4xf32, #tpu.memory_space<vmem>>, vector<256x4xf32>,
    %cst_35 = arith.constant dense<0.000000e+00> : vector<4xf32>
    %61 = vector.multi_reduction <add>, %59, %cst_35 [0] : vector<256x4xf32> to vector<4xf32>
    %62 = vector.shape_cast %61 : vector<4xf32> to vector<1x4xf32>
    %63 = arith.mulf %59, %59 : vector<256x4xf32>
    %cst_36 = arith.constant dense<0.000000e+00> : vector<4xf32>
    %64 = vector.multi_reduction <add>, %63, %cst_36 [0] : vector<256x4xf32> to vector<4xf32>
    %65 = vector.shape_cast %64 : vector<4xf32> to vector<1x4xf32>
    %66 = tpu.concatenate %62, %65 in 0 : vector<1x4xf32>, vector<1x4xf32> -> vector<2x4xf32>
    %c0_37 = arith.constant 0 : index
    %c0_38 = arith.constant 0 : index
    %c0_39 = arith.constant 0 : index
    %67 = vector.load %arg5[%c0_37, %c0_38, %c0_39] : memref<1x2x4xf32, #tpu.memory_space<vmem>>, vector<1x2x4xf32>
    %68 = vector.shape_cast %67 : vector<1x2x4xf32> to vector<2x4xf32>
    %69 = vector.shape_cast %66 : vector<2x4xf32> to vector<1x2x4xf32>
    tpu.vector_store %arg5[%c0_37, %c0_38, %c0_39], %69 {strides = array<i32>} : memref<1x2x4xf32, #tpu.memory_space<vmem>>, vector<1x2x4xf32>,
    return
  }
  func.func @transform_0(%arg0: i32) -> (i32, i32, i32, i32) {
    %c0_i32 = arith.constant 0 : i32
    %c0_i32_0 = arith.constant 0 : i32
    %c0_i32_1 = arith.constant 0 : i32
    %c0_i32_2 = arith.constant 0 : i32
    return %arg0, %c0_i32, %c0_i32_0, %c0_i32_1 : i32, i32, i32, i32
  }
  func.func @transform_1(%arg0: i32) -> (i32, i32, i32) {
    %c0_i32 = arith.constant 0 : i32
    %c0_i32_0 = arith.constant 0 : i32
    %c0_i32_1 = arith.constant 0 : i32
    %c0_i32_2 = arith.constant 0 : i32
    return %c0_i32, %c0_i32_0, %c0_i32_1 : i32, i32, i32
  }
  func.func @transform_2(%arg0: i32) -> (i32, i32) {
    %c0_i32 = arith.constant 0 : i32
    %c0_i32_0 = arith.constant 0 : i32
    %c0_i32_1 = arith.constant 0 : i32
    return %c0_i32, %c0_i32_0 : i32, i32
  }
  func.func @transform_3(%arg0: i32) -> (i32, i32) {
    %c0_i32 = arith.constant 0 : i32
    %c0_i32_0 = arith.constant 0 : i32
    return %arg0, %c0_i32 : i32, i32
  }
  func.func @transform_4(%arg0: i32) -> (i32, i32, i32) {
    %c0_i32 = arith.constant 0 : i32
    %c0_i32_0 = arith.constant 0 : i32
    %c0_i32_1 = arith.constant 0 : i32
    return %arg0, %c0_i32, %c0_i32_0 : i32, i32, i32
  }
}

module attributes {stable_mosaic.version = 11 : i64} {
  func.func @bn_relu_kernel(%arg0: i32, %arg1: memref<32x64xf32, #tpu.memory_space<vmem>>, %arg2: memref<1x64xf32, #tpu.memory_space<vmem>>, %arg3: memref<1x64xf32, #tpu.memory_space<vmem>>, %arg4: memref<32x64xf32, #tpu.memory_space<vmem>>) attributes {dimension_semantics = [#tpu.dimension_semantics<parallel>], iteration_bounds = array<i64: 1>, scalar_prefetch = 0 : i64, scratch_operands = 0 : i64, tpu.core_type = #tpu.core_type<tc>, window_params = [{transform_indices = @transform_0, window_bounds = array<i64: 32, 64>}, {pipeline_mode = #tpu.pipeline_mode<synchronous>, transform_indices = @transform_1, window_bounds = array<i64: 1, 64>}, {pipeline_mode = #tpu.pipeline_mode<synchronous>, transform_indices = @transform_2, window_bounds = array<i64: 1, 64>}, {transform_indices = @transform_3, window_bounds = array<i64: 32, 64>}]} {
    %c0 = arith.constant 0 : index
    %c0_0 = arith.constant 0 : index
    %0 = vector.load %arg1[%c0, %c0_0] : memref<32x64xf32, #tpu.memory_space<vmem>>, vector<32x64xf32>
    %c0_1 = arith.constant 0 : index
    %c0_2 = arith.constant 0 : index
    %1 = vector.load %arg2[%c0_1, %c0_2] : memref<1x64xf32, #tpu.memory_space<vmem>>, vector<1x64xf32>
    %2 = vector.broadcast %1 : vector<1x64xf32> to vector<32x64xf32>
    %3 = arith.mulf %0, %2 : vector<32x64xf32>
    %c0_3 = arith.constant 0 : index
    %c0_4 = arith.constant 0 : index
    %4 = vector.load %arg3[%c0_3, %c0_4] : memref<1x64xf32, #tpu.memory_space<vmem>>, vector<1x64xf32>
    %5 = vector.broadcast %4 : vector<1x64xf32> to vector<32x64xf32>
    %6 = arith.addf %3, %5 : vector<32x64xf32>
    %cst = arith.constant 0.000000e+00 : f32
    %7 = vector.broadcast %cst : f32 to vector<32x64xf32>
    %8 = arith.maximumf %6, %7 : vector<32x64xf32>
    %c0_5 = arith.constant 0 : index
    %c0_6 = arith.constant 0 : index
    %9 = vector.load %arg4[%c0_5, %c0_6] : memref<32x64xf32, #tpu.memory_space<vmem>>, vector<32x64xf32>
    tpu.vector_store %arg4[%c0_5, %c0_6], %8 {strides = array<i32>} : memref<32x64xf32, #tpu.memory_space<vmem>>, vector<32x64xf32>,
    return
  }
  func.func @transform_0(%arg0: i32) -> (i32, i32) {
    %c0_i32 = arith.constant 0 : i32
    %c0_i32_0 = arith.constant 0 : i32
    return %arg0, %c0_i32 : i32, i32
  }
  func.func @transform_1(%arg0: i32) -> (i32, i32) {
    %c0_i32 = arith.constant 0 : i32
    %c0_i32_0 = arith.constant 0 : i32
    %c0_i32_1 = arith.constant 0 : i32
    return %c0_i32, %c0_i32_0 : i32, i32
  }
  func.func @transform_2(%arg0: i32) -> (i32, i32) {
    %c0_i32 = arith.constant 0 : i32
    %c0_i32_0 = arith.constant 0 : i32
    %c0_i32_1 = arith.constant 0 : i32
    return %c0_i32, %c0_i32_0 : i32, i32
  }
  func.func @transform_3(%arg0: i32) -> (i32, i32) {
    %c0_i32 = arith.constant 0 : i32
    %c0_i32_0 = arith.constant 0 : i32
    return %arg0, %c0_i32 : i32, i32
  }
}

</mosaic_0001>

<llo_original>
// kernel: tile.28
$region0: #{tile.28}
  #allocation0 [shape = 's32[1]{0}', space=sflag, size = 0x4, scoped, tag = 'scoped memory for tile.28']
  %s0 = inlined_call_operand.vmem [shape: f32[4], index: 0, kind: input, shape index: {}]
  %s1 = inlined_call_operand.vmem [shape: f32[4,4], index: 1, kind: output, shape index: {}]
  // Predicated region
  $region2: #{tile.28} parent=0 // pred_check
    _
  $region3: #{tile.28} parent=0 // pred_check_branch
    %3 = sbr.rel (0) target = $region5
  $region4: #{tile.28} parent=0 // pred_region
    _
  $region5: #{tile.28} parent=0 // pred_fallthru
    _
  %v4 = vld [vmem:[%s0] ss:$0 sm:$0xff]
  %5 = vst [vmem:[%s1] sm:$0xf] %v4

// kernel: tile.29
$region0: #{tile.29}
  %s0 = inlined_call_operand.vmem [shape: f32[4,4], index: 0, kind: input, shape index: {}]
  %s1 = inlined_call_operand.vmem [shape: f32[1,16], index: 1, kind: output, shape index: {}]
  $region1: #{tile.29} parent=0
    #allocation0 [shape = 'u8[4096]{0}', space=vmem, size = 0x1000, scoped, tag = 'scoped mem for output reshape']
    #allocation1 [shape = 'u8[4096]{0}', space=vmem, size = 0x1000, scoped, tag = 'scoped mem for input reshape']
    %s3 = sshllo.u32 0, 4
    %v4 = vld [vmem:[%s0] sm:%s3]
    %5 = vst [vmem:[#allocation1] sm:%s3] %v4
    %v6 = vld [vmem:[#allocation1] sm:$0x1]
    %vm7 = vcmask 31744
    %8 = vst.msk [vmem:[#allocation0] sm:$0x1] %vm7, %v6
    %s9 = scalar_lea.vmem [#allocation1], 3
    %v10 = vld [vmem:[%s9] sm:$0x1]
    %11 = vrot.lane.b32.xlu0 %v10, 12
    %v12 = vpop.permute.xlu0 %11
    %vm13 = vcmask 130144
    %14 = vst.msk [vmem:[#allocation0] sm:$0x1] %vm13, %v12
    %s15 = scalar_lea.vmem [#allocation1], 2
    %v16 = vld [vmem:[%s15] sm:$0x1]
    %17 = vrot.lane.b32.xlu0 %v16, 8
    %v18 = vpop.permute.xlu0 %17
    %vm19 = vcmask 97344
    %20 = vst.msk [vmem:[#allocation0] sm:$0x1] %vm19, %v18
    %s21 = scalar_lea.vmem [#allocation1], 1
    %v22 = vld [vmem:[%s21] sm:$0x1]
    %23 = vrot.lane.b32.xlu0 %v22, 4
    %v24 = vpop.permute.xlu0 %23
    %vm25 = vcmask 64544
    %26 = vst.msk [vmem:[#allocation0] sm:$0x1] %vm25, %v24
    %s28 = sshllo.u32 0, 1
    %v30 = vld [vmem:[#allocation0] sm:%s28]
    %s31 = sshllo.u32 0, 1
    %32 = vst [vmem:[%s1] sm:%s31] %v30

// kernel: decoder_block_forward.5
$region0: #{decoder_block_forward.5}
  #allocation0 [shape = 'u32[]', space=smem, size = 0x4, offset = 0x4, fixed_abs, tag = 'smem constant byte address 0x4 - core index']
  #allocation1 [shape = 'u32[144,128]{1,0:T(1,128)}', space=vmem, size = 0x12000, scoped, tag = 'internal scratch']
  %s0 = inlined_call_operand.vmem [shape: bf16[128,8], index: 0, kind: input, shape index: {}]
  %s1 = inlined_call_operand.vmem [shape: bf16[8,16], index: 1, kind: input, shape index: {}]
  %s2 = inlined_call_operand.vmem [shape: f32[1,16], index: 2, kind: input, shape index: {}]
  %s3 = inlined_call_operand.vmem [shape: f32[128,16], index: 3, kind: output, shape index: {}]
  %s4 = sld [smem:[#allocation0]]
  $region22: #{decoder_block_forward.5} parent=0
    _
  %s6 = ssub.s32 1, %s4
  %s7 = scalar_select 0, %s6, %s4
  // Predicated region
  $region2: #{decoder_block_forward.5} parent=0 // pred_check
    _
  $region3: #{decoder_block_forward.5} parent=0 // pred_check_branch
    %9 = sbr.rel (0) target = $region5
  $region4: #{decoder_block_forward.5} parent=0 // pred_region
    _
  $region5: #{decoder_block_forward.5} parent=0 // pred_fallthru
    _
  // Predicated region
  $region6: #{decoder_block_forward.5} parent=0 // pred_check
    _
  $region7: #{decoder_block_forward.5} parent=0 // pred_check_branch
    %11 = sbr.rel (0) target = $region9
  $region8: #{decoder_block_forward.5} parent=0 // pred_region
    _
  $region9: #{decoder_block_forward.5} parent=0 // pred_fallthru
    _
  // Predicated region
  $region10: #{decoder_block_forward.5} parent=0 // pred_check
    _
  $region11: #{decoder_block_forward.5} parent=0 // pred_check_branch
    %13 = sbr.rel (0) target = $region13
  $region12: #{decoder_block_forward.5} parent=0 // pred_region
    _
  $region13: #{decoder_block_forward.5} parent=0 // pred_fallthru
    _
  %v15 = vld [vmem:[%s0] sm:$0xf]
  %v16 = vld [vmem:[%s0 + $0x4] sm:$0xf]
  %v17 = vld [vmem:[%s0 + $0x8] sm:$0xf]
  %v18 = vld [vmem:[%s0 + $0xc] sm:$0xf]
  %v19 = vld [vmem:[%s0 + $0x10] sm:$0xf]
  %v20 = vld [vmem:[%s0 + $0x14] sm:$0xf]
  %v21 = vld [vmem:[%s0 + $0x18] sm:$0xf]
  %v22 = vld [vmem:[%s0 + $0x1c] sm:$0xf]
  %v23 = vld [vmem:[%s0 + $0x20] sm:$0xf]
  %v24 = vld [vmem:[%s0 + $0x24] sm:$0xf]
  %v25 = vld [vmem:[%s0 + $0x28] sm:$0xf]
  %v26 = vld [vmem:[%s0 + $0x2c] sm:$0xf]
  %v27 = vld [vmem:[%s0 + $0x30] sm:$0xf]
  %v28 = vld [vmem:[%s0 + $0x34] sm:$0xf]
  %v29 = vld [vmem:[%s0 + $0x38] sm:$0xf]
  %v30 = vld [vmem:[%s0 + $0x3c] sm:$0xf]
  %v31 = vld [vmem:[%s1] sm:$0xf]
  %v32 = vld [vmem:[%s2] sm:$0x1]
  %v34 = vlaneseq
  %v35 = vshrl.u32 %v34, 7
  %v36 = vsub.s32 0, %v35
  %v37 = vrot.slane %v32, %v36
  %v55 = vunpack.c.l.b16 %v15
  %v56 = vunpack.c.l.b16 %v16
  %v57 = vunpack.c.l.b16 %v17
  %v58 = vunpack.c.l.b16 %v18
  %v59 = vunpack.c.l.b16 %v19
  %v60 = vunpack.c.l.b16 %v20
  %v61 = vunpack.c.l.b16 %v21
  %v62 = vunpack.c.l.b16 %v22
  %v63 = vunpack.c.l.b16 %v23
  %v64 = vunpack.c.l.b16 %v24
  %v65 = vunpack.c.l.b16 %v25
  %v66 = vunpack.c.l.b16 %v26
  %v67 = vunpack.c.l.b16 %v27
  %v68 = vunpack.c.l.b16 %v28
  %v69 = vunpack.c.l.b16 %v29
  %v70 = vunpack.c.l.b16 %v30
  %v71 = vpack.c.b16 %v56, %v55
  %v72 = vpack.c.b16 %v58, %v57
  %v73 = vpack.c.b16 %v60, %v59
  %v74 = vpack.c.b16 %v62, %v61
  %v75 = vpack.c.b16 %v64, %v63
  %v76 = vpack.c.b16 %v66, %v65
  %v77 = vpack.c.b16 %v68, %v67
  %v78 = vpack.c.b16 %v70, %v69
  %vm79 = vcmask 64512
  %v81 = vsel %vm79, %v71, 0
  %v84 = vsel %vm79, %v72, 0
  %v87 = vsel %vm79, %v73, 0
  %v90 = vsel %vm79, %v74, 0
  %v93 = vsel %vm79, %v75, 0
  %v96 = vsel %vm79, %v76, 0
  %v99 = vsel %vm79, %v77, 0
  %v102 = vsel %vm79, %v78, 0
  %vm104 = vcmask 1043456
  %v106 = vsel %vm104, %v31, 0
  %108 = vmatprep.subr.bf16.mxu0 0
  %109 = vmatpush1.bf16.msra.mxu0 %v106
  %110 = vmatprep.subr.bf16.mxu0 0
  %111 = vmatpush1.bf16.msra.mxu0 0
  %112 = vmatprep.subr.bf16.mxu0 0
  %113 = vmatpush1.bf16.msra.mxu0 0
  %114 = vmatprep.subr.bf16.mxu0 0
  %115 = vmatpush1.bf16.msra.mxu0 0
  %116 = vmatprep.subr.bf16.mxu0 0
  %117 = vmatpush1.bf16.msra.mxu0 0
  %118 = vmatprep.subr.bf16.mxu0 0
  %119 = vmatpush1.bf16.msra.mxu0 0
  %120 = vmatprep.subr.bf16.mxu0 0
  %121 = vmatpush1.bf16.msra.mxu0 0
  %122 = vmatprep.subr.bf16.mxu0 0
  %123 = vmatpush1.bf16.msra.mxu0 0
  %124 = vmatprep.subr.bf16.mxu0 0
  %125 = vmatpush1.bf16.msra.mxu0 0
  %126 = vmatprep.subr.bf16.mxu0 0
  %127 = vmatpush1.bf16.msra.mxu0 0
  %128 = vmatprep.subr.bf16.mxu0 0
  %129 = vmatpush1.bf16.msra.mxu0 0
  %130 = vmatprep.subr.bf16.mxu0 0
  %131 = vmatpush1.bf16.msra.mxu0 0
  %132 = vmatprep.subr.bf16.mxu0 0
  %133 = vmatpush1.bf16.msra.mxu0 0
  %134 = vmatprep.subr.bf16.mxu0 0
  %135 = vmatpush1.bf16.msra.mxu0 0
  %136 = vmatprep.subr.bf16.mxu0 0
  %137 = vmatpush1.bf16.msra.mxu0 0
  %138 = vmatprep.subr.bf16.mxu0 0
  %139 = vmatpush1.bf16.msra.mxu0 0
  %140 = vmatprep.mubr.bf16.mxu0 0
  %141 = vmatmul.mubr.bf16.gmra.mrb[0].mxu0 %v81
  %v142 = vpop.f32.mrb[0].mxu0
  %v143 = vadd.f32 %v37, %v142
  %v144 = vpop.f32.mrb[0].mxu0
  %v145 = vpop.f32.mrb[0].mxu0
  %v146 = vadd.f32 %v37, %v145
  %v147 = vpop.f32.mrb[0].mxu0
  %148 = vmatprep.mubr.bf16.mxu0 0
  %149 = vmatmul.mubr.bf16.gmra.mrb[0].mxu0 %v84
  %v150 = vpop.f32.mrb[0].mxu0
  %v151 = vadd.f32 %v37, %v150
  %v152 = vpop.f32.mrb[0].mxu0
  %v153 = vpop.f32.mrb[0].mxu0
  %v154 = vadd.f32 %v37, %v153
  %v155 = vpop.f32.mrb[0].mxu0
  %156 = vmatprep.mubr.bf16.mxu0 0
  %157 = vmatmul.mubr.bf16.gmra.mrb[0].mxu0 %v87
  %v158 = vpop.f32.mrb[0].mxu0
  %v159 = vadd.f32 %v37, %v158
  %v160 = vpop.f32.mrb[0].mxu0
  %v161 = vpop.f32.mrb[0].mxu0
  %v162 = vadd.f32 %v37, %v161
  %v163 = vpop.f32.mrb[0].mxu0
  %164 = vmatprep.mubr.bf16.mxu0 0
  %165 = vmatmul.mubr.bf16.gmra.mrb[0].mxu0 %v90
  %v166 = vpop.f32.mrb[0].mxu0
  %v167 = vadd.f32 %v37, %v166
  %v168 = vpop.f32.mrb[0].mxu0
  %v169 = vpop.f32.mrb[0].mxu0
  %v170 = vadd.f32 %v37, %v169
  %v171 = vpop.f32.mrb[0].mxu0
  %172 = vmatprep.mubr.bf16.mxu0 0
  %173 = vmatmul.mubr.bf16.gmra.mrb[0].mxu0 %v93
  %v174 = vpop.f32.mrb[0].mxu0
  %v175 = vadd.f32 %v37, %v174
  %v176 = vpop.f32.mrb[0].mxu0
  %v177 = vpop.f32.mrb[0].mxu0
  %v178 = vadd.f32 %v37, %v177
  %v179 = vpop.f32.mrb[0].mxu0
  %180 = vmatprep.mubr.bf16.mxu0 0
  %181 = vmatmul.mubr.bf16.gmra.mrb[0].mxu0 %v96
  %v182 = vpop.f32.mrb[0].mxu0
  %v183 = vadd.f32 %v37, %v182
  %v184 = vpop.f32.mrb[0].mxu0
  %v185 = vpop.f32.mrb[0].mxu0
  %v186 = vadd.f32 %v37, %v185
  %v187 = vpop.f32.mrb[0].mxu0
  %188 = vmatprep.mubr.bf16.mxu0 0
  %189 = vmatmul.mubr.bf16.gmra.mrb[0].mxu0 %v99
  %v190 = vpop.f32.mrb[0].mxu0
  %v191 = vadd.f32 %v37, %v190
  %v192 = vpop.f32.mrb[0].mxu0
  %v193 = vpop.f32.mrb[0].mxu0
  %v194 = vadd.f32 %v37, %v193
  %v195 = vpop.f32.mrb[0].mxu0
  %196 = vmatprep.mubr.bf16.mxu0 0
  %197 = vmatmul.mubr.bf16.gmra.mrb[0].mxu0 %v102
  %v198 = vpop.f32.mrb[0].mxu0
  %v199 = vadd.f32 %v37, %v198
  %v200 = vpop.f32.mrb[0].mxu0
  %v201 = vpop.f32.mrb[0].mxu0
  %v202 = vadd.f32 %v37, %v201
  %v203 = vpop.f32.mrb[0].mxu0
  %204 = vdwg.mxu0
  %vm205 = vcmask 130048
  %206 = vst.msk [vmem:[%s3] sm:$0xff] %vm205, %v143
  %207 = vst.msk [vmem:[%s3 + $0x8] sm:$0xff] %vm205, %v146
  %208 = vst.msk [vmem:[%s3 + $0x10] sm:$0xff] %vm205, %v151
  %209 = vst.msk [vmem:[%s3 + $0x18] sm:$0xff] %vm205, %v154
  %210 = vst.msk [vmem:[%s3 + $0x20] sm:$0xff] %vm205, %v159
  %211 = vst.msk [vmem:[%s3 + $0x28] sm:$0xff] %vm205, %v162
  %212 = vst.msk [vmem:[%s3 + $0x30] sm:$0xff] %vm205, %v167
  %213 = vst.msk [vmem:[%s3 + $0x38] sm:$0xff] %vm205, %v170
  %214 = vst.msk [vmem:[%s3 + $0x40] sm:$0xff] %vm205, %v175
  %215 = vst.msk [vmem:[%s3 + $0x48] sm:$0xff] %vm205, %v178
  %216 = vst.msk [vmem:[%s3 + $0x50] sm:$0xff] %vm205, %v183
  %217 = vst.msk [vmem:[%s3 + $0x58] sm:$0xff] %vm205, %v186
  %218 = vst.msk [vmem:[%s3 + $0x60] sm:$0xff] %vm205, %v191
  %219 = vst.msk [vmem:[%s3 + $0x68] sm:$0xff] %vm205, %v194
  %220 = vst.msk [vmem:[%s3 + $0x70] sm:$0xff] %vm205, %v199
  %221 = vst.msk [vmem:[%s3 + $0x78] sm:$0xff] %vm205, %v202
  // Predicated region
  $region14: #{decoder_block_forward.5} parent=0 // pred_check
    _
  $region15: #{decoder_block_forward.5} parent=0 // pred_check_branch
    %223 = sbr.rel (0) target = $region17
  $region16: #{decoder_block_forward.5} parent=0 // pred_region
    _
  $region17: #{decoder_block_forward.5} parent=0 // pred_fallthru
    _
  // Predicated region
  $region18: #{decoder_block_forward.5} parent=0 // pred_check
    _
  $region19: #{decoder_block_forward.5} parent=0 // pred_check_branch
    %225 = sbr.rel (0) target = $region21
  $region20: #{decoder_block_forward.5} parent=0 // pred_region
    _
  $region21: #{decoder_block_forward.5} parent=0 // pred_fallthru
    _

// kernel: tile.33
$region0: #{tile.33}
  #allocation0 [shape = 's32[1]{0}', space=sflag, size = 0x4, scoped, tag = 'scoped memory for tile.33']
  %s0 = inlined_call_operand.vmem [shape: f32[4], index: 0, kind: input, shape index: {}]
  %s1 = inlined_call_operand.vmem [shape: f32[16,4], index: 1, kind: output, shape index: {}]
  // Predicated region
  $region2: #{tile.33} parent=0 // pred_check
    _
  $region3: #{tile.33} parent=0 // pred_check_branch
    %3 = sbr.rel (0) target = $region5
  $region4: #{tile.33} parent=0 // pred_region
    _
  $region5: #{tile.33} parent=0 // pred_fallthru
    _
  %v4 = vld [vmem:[%s0] ss:$0 sm:$0xff]
  %5 = vst [vmem:[%s1] sm:$0xff] %v4
  %s6 = scalar_lea.vmem %s1, 8
  %7 = vst [vmem:[%s6] sm:$0xff] %v4

// kernel: tile.34
$region0: #{tile.34}
  %s0 = inlined_call_operand.vmem [shape: f32[16,4], index: 0, kind: input, shape index: {}]
  %s1 = inlined_call_operand.vmem [shape: f32[1,64], index: 1, kind: output, shape index: {}]
  $region1: #{tile.34} parent=0
    #allocation0 [shape = 'u8[4096]{0}', space=vmem, size = 0x1000, scoped, tag = 'scoped mem for output reshape']
    %v2 = vld [vmem:[%s0] sm:$0x1]
    %vm3 = vcmask 31744
    %4 = vst.msk [vmem:[#allocation0] sm:$0x1] %vm3, %v2
    %s5 = scalar_lea.vmem %s0, 15
    %v6 = vld [vmem:[%s5] sm:$0x1]
    %7 = vrot.lane.b32.xlu0 %v6, 60
    %v8 = vpop.permute.xlu0 %7
    %vm9 = vcmask 523744
    %10 = vst.msk [vmem:[#allocation0] sm:$0x1] %vm9, %v8
    %s11 = scalar_lea.vmem %s0, 14
    %v12 = vld [vmem:[%s11] sm:$0x1]
    %13 = vrot.lane.b32.xlu0 %v12, 56
    %v14 = vpop.permute.xlu0 %13
    %vm15 = vcmask 490944
    %16 = vst.msk [vmem:[#allocation0] sm:$0x1] %vm15, %v14
    %s17 = scalar_lea.vmem %s0, 13
    %v18 = vld [vmem:[%s17] sm:$0x1]
    %19 = vrot.lane.b32.xlu0 %v18, 52
    %v20 = vpop.permute.xlu0 %19
    %vm21 = vcmask 458144
    %22 = vst.msk [vmem:[#allocation0] sm:$0x1] %vm21, %v20
    %s23 = scalar_lea.vmem %s0, 12
    %v24 = vld [vmem:[%s23] sm:$0x1]
    %25 = vrot.lane.b32.xlu0 %v24, 48
    %v26 = vpop.permute.xlu0 %25
    %vm27 = vcmask 425344
    %28 = vst.msk [vmem:[#allocation0] sm:$0x1] %vm27, %v26
    %s29 = scalar_lea.vmem %s0, 11
    %v30 = vld [vmem:[%s29] sm:$0x1]
    %31 = vrot.lane.b32.xlu0 %v30, 44
    %v32 = vpop.permute.xlu0 %31
    %vm33 = vcmask 392544
    %34 = vst.msk [vmem:[#allocation0] sm:$0x1] %vm33, %v32
    %s35 = scalar_lea.vmem %s0, 10
    %v36 = vld [vmem:[%s35] sm:$0x1]
    %37 = vrot.lane.b32.xlu0 %v36, 40
    %v38 = vpop.permute.xlu0 %37
    %vm39 = vcmask 359744
    %40 = vst.msk [vmem:[#allocation0] sm:$0x1] %vm39, %v38
    %s41 = scalar_lea.vmem %s0, 9
    %v42 = vld [vmem:[%s41] sm:$0x1]
    %43 = vrot.lane.b32.xlu0 %v42, 36
    %v44 = vpop.permute.xlu0 %43
    %vm45 = vcmask 326944
    %46 = vst.msk [vmem:[#allocation0] sm:$0x1] %vm45, %v44
    %s47 = scalar_lea.vmem %s0, 8
    %v48 = vld [vmem:[%s47] sm:$0x1]
    %49 = vrot.lane.b32.xlu0 %v48, 32
    %v50 = vpop.permute.xlu0 %49
    %vm51 = vcmask 294144
    %52 = vst.msk [vmem:[#allocation0] sm:$0x1] %vm51, %v50
    %s53 = scalar_lea.vmem %s0, 7
    %v54 = vld [vmem:[%s53] sm:$0x1]
    %55 = vrot.lane.b32.xlu0 %v54, 28
    %v56 = vpop.permute.xlu0 %55
    %vm57 = vcmask 261344
    %58 = vst.msk [vmem:[#allocation0] sm:$0x1] %vm57, %v56
    %s59 = scalar_lea.vmem %s0, 6
    %v60 = vld [vmem:[%s59] sm:$0x1]
    %61 = vrot.lane.b32.xlu0 %v60, 24
    %v62 = vpop.permute.xlu0 %61
    %vm63 = vcmask 228544
    %64 = vst.msk [vmem:[#allocation0] sm:$0x1] %vm63, %v62
    %s65 = scalar_lea.vmem %s0, 5
    %v66 = vld [vmem:[%s65] sm:$0x1]
    %67 = vrot.lane.b32.xlu0 %v66, 20
    %v68 = vpop.permute.xlu0 %67
    %vm69 = vcmask 195744
    %70 = vst.msk [vmem:[#allocation0] sm:$0x1] %vm69, %v68
    %s71 = scalar_lea.vmem %s0, 4
    %v72 = vld [vmem:[%s71] sm:$0x1]
    %73 = vrot.lane.b32.xlu0 %v72, 16
    %v74 = vpop.permute.xlu0 %73
    %vm75 = vcmask 162944
    %76 = vst.msk [vmem:[#allocation0] sm:$0x1] %vm75, %v74
    %s77 = scalar_lea.vmem %s0, 3
    %v78 = vld [vmem:[%s77] sm:$0x1]
    %79 = vrot.lane.b32.xlu0 %v78, 12
    %v80 = vpop.permute.xlu0 %79
    %vm81 = vcmask 130144
    %82 = vst.msk [vmem:[#allocation0] sm:$0x1] %vm81, %v80
    %s83 = scalar_lea.vmem %s0, 2
    %v84 = vld [vmem:[%s83] sm:$0x1]
    %85 = vrot.lane.b32.xlu0 %v84, 8
    %v86 = vpop.permute.xlu0 %85
    %vm87 = vcmask 97344
    %88 = vst.msk [vmem:[#allocation0] sm:$0x1] %vm87, %v86
    %s89 = scalar_lea.vmem %s0, 1
    %v90 = vld [vmem:[%s89] sm:$0x1]
    %91 = vrot.lane.b32.xlu0 %v90, 4
    %v92 = vpop.permute.xlu0 %91
    %vm93 = vcmask 64544
    %94 = vst.msk [vmem:[#allocation0] sm:$0x1] %vm93, %v92
    %s96 = sshllo.u32 0, 1
    %v98 = vld [vmem:[#allocation0] sm:%s96]
    %s99 = sshllo.u32 0, 1
    %100 = vst [vmem:[%s1] sm:%s99] %v98

// kernel: decoder_block_forward.7
$region0: #{decoder_block_forward.7}
  #allocation0 [shape = 'u32[]', space=smem, size = 0x4, offset = 0x4, fixed_abs, tag = 'smem constant byte address 0x4 - core index']
  #allocation1 [shape = 'u32[144,128]{1,0:T(1,128)}', space=vmem, size = 0x12000, scoped, tag = 'internal scratch']
  %s0 = inlined_call_operand.vmem [shape: f32[32,64], index: 0, kind: input, shape index: {}]
  %s1 = inlined_call_operand.vmem [shape: f32[1,64], index: 1, kind: input, shape index: {}]
  %s2 = inlined_call_operand.vmem [shape: f32[1,64], index: 2, kind: input, shape index: {}]
  %s3 = inlined_call_operand.vmem [shape: bf16[32,64], index: 3, kind: output, shape index: {}]
  %s4 = sld [smem:[#allocation0]]
  $region22: #{decoder_block_forward.7} parent=0
    _
  %s6 = ssub.s32 1, %s4
  %s7 = scalar_select 0, %s6, %s4
  // Predicated region
  $region2: #{decoder_block_forward.7} parent=0 // pred_check
    _
  $region3: #{decoder_block_forward.7} parent=0 // pred_check_branch
    %9 = sbr.rel (0) target = $region5
  $region4: #{decoder_block_forward.7} parent=0 // pred_region
    _
  $region5: #{decoder_block_forward.7} parent=0 // pred_fallthru
    _
  // Predicated region
  $region6: #{decoder_block_forward.7} parent=0 // pred_check
    _
  $region7: #{decoder_block_forward.7} parent=0 // pred_check_branch
    %11 = sbr.rel (0) target = $region9
  $region8: #{decoder_block_forward.7} parent=0 // pred_region
    _
  $region9: #{decoder_block_forward.7} parent=0 // pred_fallthru
    _
  // Predicated region
  $region10: #{decoder_block_forward.7} parent=0 // pred_check
    _
  $region11: #{decoder_block_forward.7} parent=0 // pred_check_branch
    %13 = sbr.rel (0) target = $region13
  $region12: #{decoder_block_forward.7} parent=0 // pred_region
    _
  $region13: #{decoder_block_forward.7} parent=0 // pred_fallthru
    _
  %v14 = vld [vmem:[%s0] sm:$0xff]
  %v15 = vld [vmem:[%s0 + $0x8] sm:$0xff]
  %v16 = vld [vmem:[%s0 + $0x10] sm:$0xff]
  %v17 = vld [vmem:[%s0 + $0x18] sm:$0xff]
  %v18 = vld [vmem:[%s1] sm:$0x1]
  %v20 = vlaneseq
  %v21 = vshrl.u32 %v20, 7
  %v22 = vsub.s32 0, %v21
  %v23 = vrot.slane %v18, %v22
  %v25 = vmul.f32 %v14, %v23
  %v26 = vmul.f32 %v15, %v23
  %v27 = vmul.f32 %v16, %v23
  %v28 = vmul.f32 %v17, %v23
  %v29 = vld [vmem:[%s2] sm:$0x1]
  %v31 = vlaneseq
  %v32 = vshrl.u32 %v31, 7
  %v33 = vsub.s32 0, %v32
  %v34 = vrot.slane %v29, %v33
  %v36 = vadd.f32 %v25, %v34
  %v37 = vadd.f32 %v26, %v34
  %v38 = vadd.f32 %v27, %v34
  %v39 = vadd.f32 %v28, %v34
  %v40 = vmax.f32 %v36, 0.0
  %v41 = vmax.f32 %v37, 0.0
  %v42 = vmax.f32 %v38, 0.0
  %v43 = vmax.f32 %v39, 0.0
  %v44 = vpack.c.bf16 %v41, %v40
  %v45 = vpack.c.bf16 %v43, %v42
  %v48 = vunpack.c.l.b16 %v44
  %v49 = vunpack.c.h.b16 %v44
  %v50 = vunpack.c.l.b16 %v45
  %v51 = vunpack.c.h.b16 %v45
  %v52 = vpack.c.b16 %v48, %v48
  %v53 = vpack.c.b16 %v49, %v49
  %v54 = vpack.c.b16 %v50, %v50
  %v55 = vpack.c.b16 %v51, %v51
  %vm60 = vcmask 519168
  %61 = vst.msk [vmem:[%s3] sm:$0xf] %vm60, %v52
  %62 = vst.msk [vmem:[%s3 + $0x4] sm:$0xf] %vm60, %v53
  %63 = vst.msk [vmem:[%s3 + $0x8] sm:$0xf] %vm60, %v54
  %64 = vst.msk [vmem:[%s3 + $0xc] sm:$0xf] %vm60, %v55
  // Predicated region
  $region14: #{decoder_block_forward.7} parent=0 // pred_check
    _
  $region15: #{decoder_block_forward.7} parent=0 // pred_check_branch
    %66 = sbr.rel (0) target = $region17
  $region16: #{decoder_block_forward.7} parent=0 // pred_region
    _
  $region17: #{decoder_block_forward.7} parent=0 // pred_fallthru
    _
  // Predicated region
  $region18: #{decoder_block_forward.7} parent=0 // pred_check
    _
  $region19: #{decoder_block_forward.7} parent=0 // pred_check_branch
    %68 = sbr.rel (0) target = $region21
  $region20: #{decoder_block_forward.7} parent=0 // pred_region
    _
  $region21: #{decoder_block_forward.7} parent=0 // pred_fallthru
    _

// kernel: decoder_block_forward.6
$region0: #{decoder_block_forward.6}
  #allocation0 [shape = 'u32[]', space=smem, size = 0x4, offset = 0x4, fixed_abs, tag = 'smem constant byte address 0x4 - core index']
  #allocation1 [shape = 'u32[144,128]{1,0:T(1,128)}', space=vmem, size = 0x12000, scoped, tag = 'internal scratch']
  %s0 = inlined_call_operand.vmem [shape: bf16[2,18,18,8], index: 0, kind: input, shape index: {}]
  %s1 = inlined_call_operand.vmem [shape: bf16[9,8,4], index: 1, kind: input, shape index: {}]
  %s2 = inlined_call_operand.vmem [shape: f32[1,4], index: 2, kind: input, shape index: {}]
  %s3 = inlined_call_operand.vmem [shape: f32[512,4], index: 3, kind: output, shape index: {0}]
  %s4 = inlined_call_operand.vmem [shape: f32[2,2,4], index: 4, kind: output, shape index: {1}]
  %5 = xla_tuple %s3, %s4
  %s6 = sld [smem:[#allocation0]]
  $region53: #{decoder_block_forward.6} parent=0
    _
  %s8 = ssub.s32 1, %s6
  %s9 = scalar_select 0, %s8, %s6
  loop: start=0, step=1, limit=4
  $region2: #{decoder_block_forward.6} parent=0 // loop_pre_header
    _
  $region3: #{decoder_block_forward.6} parent=0 // loop_header
    %s11 = sphi 0, %s15
    %p12 = scmp.ge.s32.totalorder %s11, 4
    %s21 = sphi 0, %s23
    %s24 = sphi 0, %s21
    %s25 = sphi 0, %s24
    %s41 = sphi 0, %s25
    %s45 = sphi 0, %s45
    %s47 = sphi 0, %s45
    %s48 = sphi 0, %s47
    %s62 = sphi 0, %s48
    %s66 = sphi 0, %s66
    %s68 = sphi 0, %s66
    %s69 = sphi 0, %s68
    %s83 = sphi 0, %s69
    %s89 = sphi 0, %s91
    %s92 = sphi 0, %s89
    %s93 = sphi 0, %s92
    %s109 = sphi 0, %s93
    %s115 = sphi 0, %s117
    %s118 = sphi 0, %s115
    %s119 = sphi 0, %s118
    %s135 = sphi 0, %s119
  $region4: #{decoder_block_forward.6} parent=0 // loop_header_branch
    %14 = sbr.rel (%p12) target = $region8
  $region5: #{decoder_block_forward.6} parent=0 // loop_body
    %s16 = ssub.s32 %s11, 1
    %s17 = ssub.s32 %s11, 2
    %s18 = sadd.s32 %s11, 1
    %s19 = ssub.s32 %s11, %s18
    %p20 = scmp.eq.s32.totalorder %s19, 0
    %s22 = sadd.s32 %s21, 1
    %s23 = scalar_select %p20, %s21, %s22
    %p26 = pneg %p20
    %p27 = scmp.eq.s32.totalorder %s11, 1
    %p28 = por %p26, %p27
    %p29 = scmp.ne.s32.totalorder %s21, %s24
    %p30 = scmp.eq.s32.totalorder %s11, 0
    %p31 = por %p29, %p30
    %p32 = scmp.ne.s32.totalorder %s21, %s24
    %p33 = scmp.eq.s32.totalorder %s16, 1
    %p34 = por %p32, %p33
    %p35 = scmp.ne.s32.totalorder %s24, %s25
    %p36 = scmp.eq.s32.totalorder %s16, 0
    %p37 = por %p35, %p36
    %p38 = scmp.ne.s32.totalorder %s24, %s25
    %p39 = scmp.eq.s32.totalorder %s17, 1
    %p40 = por %p38, %p39
    %p42 = scmp.ne.s32.totalorder %s25, %s41
    %p43 = scmp.eq.s32.totalorder %s17, 0
    %p44 = por %p42, %p43
    %s46 = sadd.s32 %s45, 1
    %p49 = scmp.eq.s32.totalorder %s11, 1
    %p50 = scmp.ne.s32.totalorder %s45, %s47
    %p51 = scmp.eq.s32.totalorder %s11, 0
    %p52 = por %p50, %p51
    %p53 = scmp.ne.s32.totalorder %s45, %s47
    %p54 = scmp.eq.s32.totalorder %s16, 1
    %p55 = por %p53, %p54
    %p56 = scmp.ne.s32.totalorder %s47, %s48
    %p57 = scmp.eq.s32.totalorder %s16, 0
    %p58 = por %p56, %p57
    %p59 = scmp.ne.s32.totalorder %s47, %s48
    %p60 = scmp.eq.s32.totalorder %s17, 1
    %p61 = por %p59, %p60
    %p63 = scmp.ne.s32.totalorder %s48, %s62
    %p64 = scmp.eq.s32.totalorder %s17, 0
    %p65 = por %p63, %p64
    %s67 = sadd.s32 %s66, 1
    %p70 = scmp.eq.s32.totalorder %s11, 1
    %p71 = scmp.ne.s32.totalorder %s66, %s68
    %p72 = scmp.eq.s32.totalorder %s11, 0
    %p73 = por %p71, %p72
    %p74 = scmp.ne.s32.totalorder %s66, %s68
    %p75 = scmp.eq.s32.totalorder %s16, 1
    %p76 = por %p74, %p75
    %p77 = scmp.ne.s32.totalorder %s68, %s69
    %p78 = scmp.eq.s32.totalorder %s16, 0
    %p79 = por %p77, %p78
    %p80 = scmp.ne.s32.totalorder %s68, %s69
    %p81 = scmp.eq.s32.totalorder %s17, 1
    %p82 = por %p80, %p81
    %p84 = scmp.ne.s32.totalorder %s69, %s83
    %p85 = scmp.eq.s32.totalorder %s17, 0
    %p86 = por %p84, %p85
    %s87 = ssub.s32 %s11, %s18
    %p88 = scmp.eq.s32.totalorder %s87, 0
    %s90 = sadd.s32 %s89, 1
    %s91 = scalar_select %p88, %s89, %s90
    %p94 = pneg %p88
    %p95 = scmp.eq.s32.totalorder %s11, 1
    %p96 = por %p94, %p95
    %p97 = scmp.ne.s32.totalorder %s89, %s92
    %p98 = scmp.eq.s32.totalorder %s11, 0
    %p99 = por %p97, %p98
    %p100 = scmp.ne.s32.totalorder %s89, %s92
    %p101 = scmp.eq.s32.totalorder %s16, 1
    %p102 = por %p100, %p101
    %p103 = scmp.ne.s32.totalorder %s92, %s93
    %p104 = scmp.eq.s32.totalorder %s16, 0
    %p105 = por %p103, %p104
    %p106 = scmp.ne.s32.totalorder %s92, %s93
    %p107 = scmp.eq.s32.totalorder %s17, 1
    %p108 = por %p106, %p107
    %p110 = scmp.ne.s32.totalorder %s93, %s109
    %p111 = scmp.eq.s32.totalorder %s17, 0
    %p112 = por %p110, %p111
    %s113 = ssub.s32 %s11, %s18
    %p114 = scmp.eq.s32.totalorder %s113, 0
    %s116 = sadd.s32 %s115, 1
    %s117 = scalar_select %p114, %s115, %s116
    %p120 = pneg %p114
    %p121 = scmp.eq.s32.totalorder %s11, 1
    %p122 = por %p120, %p121
    %p123 = scmp.ne.s32.totalorder %s115, %s118
    %p124 = scmp.eq.s32.totalorder %s11, 0
    %p125 = por %p123, %p124
    %p126 = scmp.ne.s32.totalorder %s115, %s118
    %p127 = scmp.eq.s32.totalorder %s16, 1
    %p128 = por %p126, %p127
    %p129 = scmp.ne.s32.totalorder %s118, %s119
    %p130 = scmp.eq.s32.totalorder %s16, 0
    %p131 = por %p129, %p130
    %p132 = scmp.ne.s32.totalorder %s118, %s119
    %p133 = scmp.eq.s32.totalorder %s17, 1
    %p134 = por %p132, %p133
    %p136 = scmp.ne.s32.totalorder %s119, %s135
    %p137 = scmp.eq.s32.totalorder %s17, 0
    %p138 = por %p136, %p137
    %p139 = scmp.le.s32.totalorder 1, %s11
    %p140 = scmp.lt.s32.totalorder %s11, 3
    %p141 = pnand %p139, %p140
    %p142 = pneg %p141
    // Predicated region
    $region9: #{decoder_block_forward.6} parent=5 // pred_check
      _
    $region10: #{decoder_block_forward.6} parent=5 // pred_check_branch
      %144 = sbr.rel (%p141) target = $region12
    $region11: #{decoder_block_forward.6} parent=5 // pred_region
      %s145 = ssub.s32 %s11, 1
      // Predicated region
      $region13: #{decoder_block_forward.6} parent=11 // pred_check
        %p146 = pneg %p58
      $region14: #{decoder_block_forward.6} parent=11 // pred_check_branch
        %148 = sbr.rel (%p146) target = $region16
      $region15: #{decoder_block_forward.6} parent=11 // pred_region
        _
      $region16: #{decoder_block_forward.6} parent=11 // pred_fallthru
        _
      // Predicated region
      $region17: #{decoder_block_forward.6} parent=11 // pred_check
        %p149 = pneg %p79
      $region18: #{decoder_block_forward.6} parent=11 // pred_check_branch
        %151 = sbr.rel (%p149) target = $region20
      $region19: #{decoder_block_forward.6} parent=11 // pred_region
        _
      $region20: #{decoder_block_forward.6} parent=11 // pred_fallthru
        _
    $region12: #{decoder_block_forward.6} parent=5 // pred_fallthru
      _
    %p152 = scmp.lt.s32.totalorder %s11, 2
    // Predicated region
    $region21: #{decoder_block_forward.6} parent=5 // pred_check
      %p153 = pneg %p152
    $region22: #{decoder_block_forward.6} parent=5 // pred_check_branch
      %155 = sbr.rel (%p153) target = $region24
    $region23: #{decoder_block_forward.6} parent=5 // pred_region
      // Predicated region
      $region25: #{decoder_block_forward.6} parent=23 // pred_check
        %p156 = pneg %p31
      $region26: #{decoder_block_forward.6} parent=23 // pred_check_branch
        %158 = sbr.rel (%p156) target = $region28
      $region27: #{decoder_block_forward.6} parent=23 // pred_region
        %p159 = scmp.lt.s32.totalorder %s11, 1
        %s160 = scalar_select %p159, %s11, 1
        %s161 = smul.addr %s160, 54
        %s162 = smul.addr %s161, 4
        %s163 = scalar_lea.vmem %s0, %s162
      $region28: #{decoder_block_forward.6} parent=23 // pred_fallthru
        _
    $region24: #{decoder_block_forward.6} parent=5 // pred_fallthru
      _
    %p164 = scmp.le.s32.totalorder 1, %s11
    %p165 = scmp.lt.s32.totalorder %s11, 3
    %p166 = pnand %p164, %p165
    %p167 = pneg %p166
    // Predicated region
    $region29: #{decoder_block_forward.6} parent=5 // pred_check
      _
    $region30: #{decoder_block_forward.6} parent=5 // pred_check_branch
      %169 = sbr.rel (%p166) target = $region32
    $region31: #{decoder_block_forward.6} parent=5 // pred_region
      %s170 = ssub.s32 %s11, 1
      %p171 = scmp.lt.s32.totalorder %s16, 1
      %s172 = scalar_select %p171, %s16, 1
      %s173 = smul.addr %s172, 54
      %s174 = smul.addr %s173, 4
      %s175 = scalar_lea.vmem %s0, %s174
      %p176 = pneg %p37
      %p177 = pneg %p34
      %p178 = pneg %p58
      %p179 = pneg %p55
      %p180 = pneg %p79
      %p181 = pneg %p76
      %p182 = pneg %p105
      %p183 = pneg %p102
      %s184 = smul.u32 32, %s16
      %p185 = scmp.lt.s32.totalorder %s184, 63
      %s186 = scalar_select %p185, %s184, 63
      %s187 = smul.addr %s186, 8
      %s188 = scalar_lea.vmem %s3, %s187
      %p189 = pneg %p131
      %p190 = pneg %p128
      %p191 = scmp.lt.s32.totalorder %s16, 1
      %s192 = scalar_select %p191, %s16, 1
      %s193 = smul.addr %s192, 2
      %s194 = scalar_lea.vmem %s4, %s193
      %p195 = scmp.lt.s32.totalorder %s16, 1
      %s196 = scalar_select %p195, %s16, 1
      %s197 = smul.addr %s196, 54
      %s198 = smul.addr %s197, 4
      %s199 = scalar_lea.vmem %s0, %s198
      %s200 = smul.u32 32, %s16
      %p201 = scmp.lt.s32.totalorder %s200, 63
      %s202 = scalar_select %p201, %s200, 63
      %s203 = smul.addr %s202, 8
      %s204 = scalar_lea.vmem %s3, %s203
      %s205 = smul.u32 32, %s16
      %p206 = scmp.lt.s32.totalorder %s16, 1
      %s207 = scalar_select %p206, %s16, 1
      %s208 = smul.addr %s207, 2
      %s209 = scalar_lea.vmem %s4, %s208
      %v211 = vld [vmem:[%s199] sm:$0xf]
      %v212 = vld [vmem:[%s199 + $0x4] sm:$0xf]
      %v213 = vld [vmem:[%s199 + $0x8] sm:$0x1]
      %v214 = vld [vmem:[%s199 + $0xc] sm:$0xf]
      %v215 = vld [vmem:[%s199 + $0x10] sm:$0xf]
      %v216 = vld [vmem:[%s199 + $0x14] sm:$0x1]
      %v217 = vld [vmem:[%s199 + $0x18] sm:$0xf]
      %v218 = vld [vmem:[%s199 + $0x1c] sm:$0xf]
      %v219 = vld [vmem:[%s199 + $0x20] sm:$0x1]
      %v220 = vld [vmem:[%s199 + $0x24] sm:$0xf]
      %v221 = vld [vmem:[%s199 + $0x28] sm:$0xf]
      %v222 = vld [vmem:[%s199 + $0x2c] sm:$0x1]
      %v223 = vld [vmem:[%s199 + $0x30] sm:$0xf]
      %v224 = vld [vmem:[%s199 + $0x34] sm:$0xf]
      %v225 = vld [vmem:[%s199 + $0x38] sm:$0x1]
      %v226 = vld [vmem:[%s199 + $0x3c] sm:$0xf]
      %v227 = vld [vmem:[%s199 + $0x40] sm:$0xf]
      %v228 = vld [vmem:[%s199 + $0x44] sm:$0x1]
      %v229 = vld [vmem:[%s199 + $0x48] sm:$0xf]
      %v230 = vld [vmem:[%s199 + $0x4c] sm:$0xf]
      %v231 = vld [vmem:[%s199 + $0x50] sm:$0x1]
      %v232 = vld [vmem:[%s199 + $0x54] sm:$0xf]
      %v233 = vld [vmem:[%s199 + $0x58] sm:$0xf]
      %v234 = vld [vmem:[%s199 + $0x5c] sm:$0x1]
      %v235 = vld [vmem:[%s199 + $0x60] sm:$0xf]
      %v236 = vld [vmem:[%s199 + $0x64] sm:$0xf]
      %v237 = vld [vmem:[%s199 + $0x68] sm:$0x1]
      %v238 = vld [vmem:[%s199 + $0x6c] sm:$0xf]
      %v239 = vld [vmem:[%s199 + $0x70] sm:$0xf]
      %v240 = vld [vmem:[%s199 + $0x74] sm:$0x1]
      %v241 = vld [vmem:[%s199 + $0x78] sm:$0xf]
      %v242 = vld [vmem:[%s199 + $0x7c] sm:$0xf]
      %v243 = vld [vmem:[%s199 + $0x80] sm:$0x1]
      %v244 = vld [vmem:[%s199 + $0x84] sm:$0xf]
      %v245 = vld [vmem:[%s199 + $0x88] sm:$0xf]
      %v246 = vld [vmem:[%s199 + $0x8c] sm:$0x1]
      %v247 = vld [vmem:[%s199 + $0x90] sm:$0xf]
      %v248 = vld [vmem:[%s199 + $0x94] sm:$0xf]
      %v249 = vld [vmem:[%s199 + $0x98] sm:$0x1]
      %v250 = vld [vmem:[%s199 + $0x9c] sm:$0xf]
      %v251 = vld [vmem:[%s199 + $0xa0] sm:$0xf]
      %v252 = vld [vmem:[%s199 + $0xa4] sm:$0x1]
      %v253 = vld [vmem:[%s199 + $0xa8] sm:$0xf]
      %v254 = vld [vmem:[%s199 + $0xac] sm:$0xf]
      %v255 = vld [vmem:[%s199 + $0xb0] sm:$0x1]
      %v256 = vld [vmem:[%s199 + $0xb4] sm:$0xf]
      %v257 = vld [vmem:[%s199 + $0xb8] sm:$0xf]
      %v258 = vld [vmem:[%s199 + $0xbc] sm:$0x1]
      %v259 = vld [vmem:[%s199 + $0xc0] sm:$0xf]
      %v260 = vld [vmem:[%s199 + $0xc4] sm:$0xf]
      %v261 = vld [vmem:[%s199 + $0xc8] sm:$0x1]
      %v262 = vld [vmem:[%s199 + $0xcc] sm:$0xf]
      %v263 = vld [vmem:[%s199 + $0xd0] sm:$0xf]
      %v264 = vld [vmem:[%s199 + $0xd4] sm:$0x1]
      %v265 = vld [vmem:[%s1] sm:$0xf]
      %vm266 = vsmask.f32 3328
      %vm267 = vsmask.f32 7440
      %vm268 = vmor %vm266, %vm267
      %v270 = vshrl.u32 %v211, 16
      %v272 = vrot.slane %v270, 4
      %v273 = vshll.u32 %v211, 16
      %v275 = vrot.slane %v273, 5
      %v276 = vor.u32 %v272, %v275
      %v277 = vrot.slane %v276, 4
      %v279 = vshll.u32 %v212, 16
      %v281 = vrot.slane %v279, 5
      %v282 = vsel %vm268, %v277, %v281
      %v283 = vshrl.u32 %v212, 16
      %v285 = vrot.slane %v283, 4
      %v286 = vor.u32 %v285, %v281
      %v287 = vrot.slane %v286, 4
      %v289 = vshll.u32 %v213, 16
      %v291 = vrot.slane %v289, 5
      %v292 = vsel %vm268, %v287, %v291
      %v294 = vshrl.u32 %v214, 16
      %v296 = vrot.slane %v294, 4
      %v297 = vshll.u32 %v214, 16
      %v299 = vrot.slane %v297, 5
      %v300 = vor.u32 %v296, %v299
      %v301 = vrot.slane %v300, 4
      %v303 = vshll.u32 %v215, 16
      %v305 = vrot.slane %v303, 5
      %v306 = vsel %vm268, %v301, %v305
      %v307 = vshrl.u32 %v215, 16
      %v309 = vrot.slane %v307, 4
      %v310 = vor.u32 %v309, %v305
      %v311 = vrot.slane %v310, 4
      %v313 = vshll.u32 %v216, 16
      %v315 = vrot.slane %v313, 5
      %v316 = vsel %vm268, %v311, %v315
      %v318 = vshrl.u32 %v217, 16
      %v320 = vrot.slane %v318, 4
      %v321 = vshll.u32 %v217, 16
      %v323 = vrot.slane %v321, 5
      %v324 = vor.u32 %v320, %v323
      %v325 = vrot.slane %v324, 4
      %v327 = vshll.u32 %v218, 16
      %v329 = vrot.slane %v327, 5
      %v330 = vsel %vm268, %v325, %v329
      %v331 = vshrl.u32 %v218, 16
      %v333 = vrot.slane %v331, 4
      %v334 = vor.u32 %v333, %v329
      %v335 = vrot.slane %v334, 4
      %v337 = vshll.u32 %v219, 16
      %v339 = vrot.slane %v337, 5
      %v340 = vsel %vm268, %v335, %v339
      %v342 = vshrl.u32 %v220, 16
      %v344 = vrot.slane %v342, 4
      %v345 = vshll.u32 %v220, 16
      %v347 = vrot.slane %v345, 5
      %v348 = vor.u32 %v344, %v347
      %v349 = vrot.slane %v348, 4
      %v351 = vshll.u32 %v221, 16
      %v353 = vrot.slane %v351, 5
      %v354 = vsel %vm268, %v349, %v353
      %v355 = vshrl.u32 %v221, 16
      %v357 = vrot.slane %v355, 4
      %v358 = vor.u32 %v357, %v353
      %v359 = vrot.slane %v358, 4
      %v361 = vshll.u32 %v222, 16
      %v363 = vrot.slane %v361, 5
      %v364 = vsel %vm268, %v359, %v363
      %v366 = vshrl.u32 %v223, 16
      %v368 = vrot.slane %v366, 4
      %v369 = vshll.u32 %v223, 16
      %v371 = vrot.slane %v369, 5
      %v372 = vor.u32 %v368, %v371
      %v373 = vrot.slane %v372, 4
      %v375 = vshll.u32 %v224, 16
      %v377 = vrot.slane %v375, 5
      %v378 = vsel %vm268, %v373, %v377
      %v379 = vshrl.u32 %v224, 16
      %v381 = vrot.slane %v379, 4
      %v382 = vor.u32 %v381, %v377
      %v383 = vrot.slane %v382, 4
      %v385 = vshll.u32 %v225, 16
      %v387 = vrot.slane %v385, 5
      %v388 = vsel %vm268, %v383, %v387
      %v390 = vshrl.u32 %v226, 16
      %v392 = vrot.slane %v390, 4
      %v393 = vshll.u32 %v226, 16
      %v395 = vrot.slane %v393, 5
      %v396 = vor.u32 %v392, %v395
      %v397 = vrot.slane %v396, 4
      %v399 = vshll.u32 %v227, 16
      %v401 = vrot.slane %v399, 5
      %v402 = vsel %vm268, %v397, %v401
      %v403 = vshrl.u32 %v227, 16
      %v405 = vrot.slane %v403, 4
      %v406 = vor.u32 %v405, %v401
      %v407 = vrot.slane %v406, 4
      %v409 = vshll.u32 %v228, 16
      %v411 = vrot.slane %v409, 5
      %v412 = vsel %vm268, %v407, %v411
      %v414 = vshrl.u32 %v229, 16
      %v416 = vrot.slane %v414, 4
      %v417 = vshll.u32 %v229, 16
      %v419 = vrot.slane %v417, 5
      %v420 = vor.u32 %v416, %v419
      %v421 = vrot.slane %v420, 4
      %v423 = vshll.u32 %v230, 16
      %v425 = vrot.slane %v423, 5
      %v426 = vsel %vm268, %v421, %v425
      %v427 = vshrl.u32 %v230, 16
      %v429 = vrot.slane %v427, 4
      %v430 = vor.u32 %v429, %v425
      %v431 = vrot.slane %v430, 4
      %v433 = vshll.u32 %v231, 16
      %v435 = vrot.slane %v433, 5
      %v436 = vsel %vm268, %v431, %v435
      %v438 = vshrl.u32 %v232, 16
      %v440 = vrot.slane %v438, 4
      %v441 = vshll.u32 %v232, 16
      %v443 = vrot.slane %v441, 5
      %v444 = vor.u32 %v440, %v443
      %v445 = vrot.slane %v444, 4
      %v447 = vshll.u32 %v233, 16
      %v449 = vrot.slane %v447, 5
      %v450 = vsel %vm268, %v445, %v449
      %v451 = vshrl.u32 %v233, 16
      %v453 = vrot.slane %v451, 4
      %v454 = vor.u32 %v453, %v449
      %v455 = vrot.slane %v454, 4
      %v457 = vshll.u32 %v234, 16
      %v459 = vrot.slane %v457, 5
      %v460 = vsel %vm268, %v455, %v459
      %v462 = vshrl.u32 %v235, 16
      %v464 = vrot.slane %v462, 4
      %v465 = vshll.u32 %v235, 16
      %v467 = vrot.slane %v465, 5
      %v468 = vor.u32 %v464, %v467
      %v469 = vrot.slane %v468, 4
      %v471 = vshll.u32 %v236, 16
      %v473 = vrot.slane %v471, 5
      %v474 = vsel %vm268, %v469, %v473
      %v475 = vshrl.u32 %v236, 16
      %v477 = vrot.slane %v475, 4
      %v478 = vor.u32 %v477, %v473
      %v479 = vrot.slane %v478, 4
      %v481 = vshll.u32 %v237, 16
      %v483 = vrot.slane %v481, 5
      %v484 = vsel %vm268, %v479, %v483
      %v486 = vshrl.u32 %v238, 16
      %v488 = vrot.slane %v486, 4
      %v489 = vshll.u32 %v238, 16
      %v491 = vrot.slane %v489, 5
      %v492 = vor.u32 %v488, %v491
      %v493 = vrot.slane %v492, 4
      %v495 = vshll.u32 %v239, 16
      %v497 = vrot.slane %v495, 5
      %v498 = vsel %vm268, %v493, %v497
      %v499 = vshrl.u32 %v239, 16
      %v501 = vrot.slane %v499, 4
      %v502 = vor.u32 %v501, %v497
      %v503 = vrot.slane %v502, 4
      %v505 = vshll.u32 %v240, 16
      %v507 = vrot.slane %v505, 5
      %v508 = vsel %vm268, %v503, %v507
      %v510 = vshrl.u32 %v241, 16
      %v512 = vrot.slane %v510, 4
      %v513 = vshll.u32 %v241, 16
      %v515 = vrot.slane %v513, 5
      %v516 = vor.u32 %v512, %v515
      %v517 = vrot.slane %v516, 4
      %v519 = vshll.u32 %v242, 16
      %v521 = vrot.slane %v519, 5
      %v522 = vsel %vm268, %v517, %v521
      %v523 = vshrl.u32 %v242, 16
      %v525 = vrot.slane %v523, 4
      %v526 = vor.u32 %v525, %v521
      %v527 = vrot.slane %v526, 4
      %v529 = vshll.u32 %v243, 16
      %v531 = vrot.slane %v529, 5
      %v532 = vsel %vm268, %v527, %v531
      %v534 = vshrl.u32 %v244, 16
      %v536 = vrot.slane %v534, 4
      %v537 = vshll.u32 %v244, 16
      %v539 = vrot.slane %v537, 5
      %v540 = vor.u32 %v536, %v539
      %v541 = vrot.slane %v540, 4
      %v543 = vshll.u32 %v245, 16
      %v545 = vrot.slane %v543, 5
      %v546 = vsel %vm268, %v541, %v545
      %v547 = vshrl.u32 %v245, 16
      %v549 = vrot.slane %v547, 4
      %v550 = vor.u32 %v549, %v545
      %v551 = vrot.slane %v550, 4
      %v553 = vshll.u32 %v246, 16
      %v555 = vrot.slane %v553, 5
      %v556 = vsel %vm268, %v551, %v555
      %v558 = vshrl.u32 %v247, 16
      %v560 = vrot.slane %v558, 4
      %v561 = vshll.u32 %v247, 16
      %v563 = vrot.slane %v561, 5
      %v564 = vor.u32 %v560, %v563
      %v565 = vrot.slane %v564, 4
      %v567 = vshll.u32 %v248, 16
      %v569 = vrot.slane %v567, 5
      %v570 = vsel %vm268, %v565, %v569
      %v571 = vshrl.u32 %v248, 16
      %v573 = vrot.slane %v571, 4
      %v574 = vor.u32 %v573, %v569
      %v575 = vrot.slane %v574, 4
      %v577 = vshll.u32 %v249, 16
      %v579 = vrot.slane %v577, 5
      %v580 = vsel %vm268, %v575, %v579
      %v582 = vshrl.u32 %v250, 16
      %v584 = vrot.slane %v582, 4
      %v585 = vshll.u32 %v250, 16
      %v587 = vrot.slane %v585, 5
      %v588 = vor.u32 %v584, %v587
      %v589 = vrot.slane %v588, 4
      %v591 = vshll.u32 %v251, 16
      %v593 = vrot.slane %v591, 5
      %v594 = vsel %vm268, %v589, %v593
      %v595 = vshrl.u32 %v251, 16
      %v597 = vrot.slane %v595, 4
      %v598 = vor.u32 %v597, %v593
      %v599 = vrot.slane %v598, 4
      %v601 = vshll.u32 %v252, 16
      %v603 = vrot.slane %v601, 5
      %v604 = vsel %vm268, %v599, %v603
      %v606 = vshrl.u32 %v253, 16
      %v608 = vrot.slane %v606, 4
      %v609 = vshll.u32 %v253, 16
      %v611 = vrot.slane %v609, 5
      %v612 = vor.u32 %v608, %v611
      %v613 = vrot.slane %v612, 4
      %v615 = vshll.u32 %v254, 16
      %v617 = vrot.slane %v615, 5
      %v618 = vsel %vm268, %v613, %v617
      %v619 = vshrl.u32 %v254, 16
      %v621 = vrot.slane %v619, 4
      %v622 = vor.u32 %v621, %v617
      %v623 = vrot.slane %v622, 4
      %v625 = vshll.u32 %v255, 16
      %v627 = vrot.slane %v625, 5
      %v628 = vsel %vm268, %v623, %v627
      %v630 = vshrl.u32 %v256, 16
      %v632 = vrot.slane %v630, 4
      %v633 = vshll.u32 %v256, 16
      %v635 = vrot.slane %v633, 5
      %v636 = vor.u32 %v632, %v635
      %v637 = vrot.slane %v636, 4
      %v639 = vshll.u32 %v257, 16
      %v641 = vrot.slane %v639, 5
      %v642 = vsel %vm268, %v637, %v641
      %v643 = vshrl.u32 %v257, 16
      %v645 = vrot.slane %v643, 4
      %v646 = vor.u32 %v645, %v641
      %v647 = vrot.slane %v646, 4
      %v649 = vshll.u32 %v258, 16
      %v651 = vrot.slane %v649, 5
      %v652 = vsel %vm268, %v647, %v651
      %s653 = scalar_lea.vmem %s1, 4
      %v654 = vld [vmem:[%s653] sm:$0xf]
      %v655 = vunpack.c.l.b16 %v282
      %v656 = vunpack.c.l.b16 %v292
      %v657 = vunpack.c.l.b16 %v306
      %v658 = vunpack.c.l.b16 %v316
      %v659 = vunpack.c.l.b16 %v330
      %v660 = vunpack.c.l.b16 %v340
      %v661 = vunpack.c.l.b16 %v354
      %v662 = vunpack.c.l.b16 %v364
      %v663 = vunpack.c.l.b16 %v378
      %v664 = vunpack.c.l.b16 %v388
      %v665 = vunpack.c.l.b16 %v402
      %v666 = vunpack.c.l.b16 %v412
      %v667 = vunpack.c.l.b16 %v426
      %v668 = vunpack.c.l.b16 %v436
      %v669 = vunpack.c.l.b16 %v450
      %v670 = vunpack.c.l.b16 %v460
      %v671 = vunpack.c.l.b16 %v474
      %v672 = vunpack.c.l.b16 %v484
      %v673 = vunpack.c.l.b16 %v498
      %v674 = vunpack.c.l.b16 %v508
      %v675 = vunpack.c.l.b16 %v522
      %v676 = vunpack.c.l.b16 %v532
      %v677 = vunpack.c.l.b16 %v546
      %v678 = vunpack.c.l.b16 %v556
      %v679 = vunpack.c.l.b16 %v570
      %v680 = vunpack.c.l.b16 %v580
      %v681 = vunpack.c.l.b16 %v594
      %v682 = vunpack.c.l.b16 %v604
      %v683 = vunpack.c.l.b16 %v618
      %v684 = vunpack.c.l.b16 %v628
      %v685 = vunpack.c.l.b16 %v642
      %v686 = vunpack.c.l.b16 %v652
      %v687 = vpack.c.b16 %v656, %v655
      %v688 = vpack.c.b16 %v658, %v657
      %v689 = vpack.c.b16 %v660, %v659
      %v690 = vpack.c.b16 %v662, %v661
      %v691 = vpack.c.b16 %v664, %v663
      %v692 = vpack.c.b16 %v666, %v665
      %v693 = vpack.c.b16 %v668, %v667
      %v694 = vpack.c.b16 %v670, %v669
      %v695 = vpack.c.b16 %v672, %v671
      %v696 = vpack.c.b16 %v674, %v673
      %v697 = vpack.c.b16 %v676, %v675
      %v698 = vpack.c.b16 %v678, %v677
      %v699 = vpack.c.b16 %v680, %v679
      %v700 = vpack.c.b16 %v682, %v681
      %v701 = vpack.c.b16 %v684, %v683
      %v702 = vpack.c.b16 %v686, %v685
      %vm703 = vcmask 64512
      %v705 = vsel %vm703, %v687, 0
      %v708 = vsel %vm703, %v688, 0
      %v711 = vsel %vm703, %v689, 0
      %v714 = vsel %vm703, %v690, 0
      %v717 = vsel %vm703, %v691, 0
      %v720 = vsel %vm703, %v692, 0
      %v723 = vsel %vm703, %v693, 0
      %v726 = vsel %vm703, %v694, 0
      %v729 = vsel %vm703, %v695, 0
      %v732 = vsel %vm703, %v696, 0
      %v735 = vsel %vm703, %v697, 0
      %v738 = vsel %vm703, %v698, 0
      %v741 = vsel %vm703, %v699, 0
      %v744 = vsel %vm703, %v700, 0
      %v747 = vsel %vm703, %v701, 0
      %v750 = vsel %vm703, %v702, 0
      %vm752 = vcmask 1043456
      %v754 = vsel %vm752, %v654, 0
      %756 = vmatprep.subr.bf16.mxu0 0
      %757 = vmatpush1.bf16.msra.mxu0 %v754
      %758 = vmatprep.subr.bf16.mxu0 0
      %759 = vmatpush1.bf16.msra.mxu0 0
      %760 = vmatprep.subr.bf16.mxu0 0
      %761 = vmatpush1.bf16.msra.mxu0 0
      %762 = vmatprep.subr.bf16.mxu0 0
      %763 = vmatpush1.bf16.msra.mxu0 0
      %764 = vmatprep.subr.bf16.mxu0 0
      %765 = vmatpush1.bf16.msra.mxu0 0
      %766 = vmatprep.subr.bf16.mxu0 0
      %767 = vmatpush1.bf16.msra.mxu0 0
      %768 = vmatprep.subr.bf16.mxu0 0
      %769 = vmatpush1.bf16.msra.mxu0 0
      %770 = vmatprep.subr.bf16.mxu0 0
      %771 = vmatpush1.bf16.msra.mxu0 0
      %772 = vmatprep.subr.bf16.mxu0 0
      %773 = vmatpush1.bf16.msra.mxu0 0
      %774 = vmatprep.subr.bf16.mxu0 0
      %775 = vmatpush1.bf16.msra.mxu0 0
      %776 = vmatprep.subr.bf16.mxu0 0
      %777 = vmatpush1.bf16.msra.mxu0 0
      %778 = vmatprep.subr.bf16.mxu0 0
      %779 = vmatpush1.bf16.msra.mxu0 0
      %780 = vmatprep.subr.bf16.mxu0 0
      %781 = vmatpush1.bf16.msra.mxu0 0
      %782 = vmatprep.subr.bf16.mxu0 0
      %783 = vmatpush1.bf16.msra.mxu0 0
      %784 = vmatprep.subr.bf16.mxu0 0
      %785 = vmatpush1.bf16.msra.mxu0 0
      %786 = vmatprep.subr.bf16.mxu0 0
      %787 = vmatpush1.bf16.msra.mxu0 0
      %788 = vmatprep.mubr.bf16.mxu0 0
      %789 = vmatmul.mubr.bf16.gmra.mrb[0].mxu0 %v705
      %v790 = vpop.f32.mrb[0].mxu0
      %v791 = vadd.f32 0.0, %v790
      %v792 = vpop.f32.mrb[0].mxu0
      %v793 = vpop.f32.mrb[0].mxu0
      %v794 = vadd.f32 0.0, %v793
      %v795 = vpop.f32.mrb[0].mxu0
      %796 = vmatprep.mubr.bf16.mxu0 0
      %797 = vmatmul.mubr.bf16.gmra.mrb[0].mxu0 %v708
      %v798 = vpop.f32.mrb[0].mxu0
      %v799 = vadd.f32 0.0, %v798
      %v800 = vpop.f32.mrb[0].mxu0
      %v801 = vpop.f32.mrb[0].mxu0
      %v802 = vadd.f32 0.0, %v801
      %v803 = vpop.f32.mrb[0].mxu0
      %804 = vmatprep.mubr.bf16.mxu0 0
      %805 = vmatmul.mubr.bf16.gmra.mrb[0].mxu0 %v711
      %v806 = vpop.f32.mrb[0].mxu0
      %v807 = vadd.f32 0.0, %v806
      %v808 = vpop.f32.mrb[0].mxu0
      %v809 = vpop.f32.mrb[0].mxu0
      %v810 = vadd.f32 0.0, %v809
      %v811 = vpop.f32.mrb[0].mxu0
      %812 = vmatprep.mubr.bf16.mxu0 0
      %813 = vmatmul.mubr.bf16.gmra.mrb[0].mxu0 %v714
      %v814 = vpop.f32.mrb[0].mxu0
      %v815 = vadd.f32 0.0, %v814
      %v816 = vpop.f32.mrb[0].mxu0
      %v817 = vpop.f32.mrb[0].mxu0
      %v818 = vadd.f32 0.0, %v817
      %v819 = vpop.f32.mrb[0].mxu0
      %820 = vmatprep.mubr.bf16.mxu0 0
      %821 = vmatmul.mubr.bf16.gmra.mrb[0].mxu0 %v717
      %v822 = vpop.f32.mrb[0].mxu0
      %v823 = vadd.f32 0.0, %v822
      %v824 = vpop.f32.mrb[0].mxu0
      %v825 = vpop.f32.mrb[0].mxu0
      %v826 = vadd.f32 0.0, %v825
      %v827 = vpop.f32.mrb[0].mxu0
      %828 = vmatprep.mubr.bf16.mxu0 0
      %829 = vmatmul.mubr.bf16.gmra.mrb[0].mxu0 %v720
      %v830 = vpop.f32.mrb[0].mxu0
      %v831 = vadd.f32 0.0, %v830
      %v832 = vpop.f32.mrb[0].mxu0
      %v833 = vpop.f32.mrb[0].mxu0
      %v834 = vadd.f32 0.0, %v833
      %v835 = vpop.f32.mrb[0].mxu0
      %836 = vmatprep.mubr.bf16.mxu0 0
      %837 = vmatmul.mubr.bf16.gmra.mrb[0].mxu0 %v723
      %v838 = vpop.f32.mrb[0].mxu0
      %v839 = vadd.f32 0.0, %v838
      %v840 = vpop.f32.mrb[0].mxu0
      %v841 = vpop.f32.mrb[0].mxu0
      %v842 = vadd.f32 0.0, %v841
      %v843 = vpop.f32.mrb[0].mxu0
      %844 = vmatprep.mubr.bf16.mxu0 0
      %845 = vmatmul.mubr.bf16.gmra.mrb[0].mxu0 %v726
      %v846 = vpop.f32.mrb[0].mxu0
      %v847 = vadd.f32 0.0, %v846
      %v848 = vpop.f32.mrb[0].mxu0
      %v849 = vpop.f32.mrb[0].mxu0
      %v850 = vadd.f32 0.0, %v849
      %v851 = vpop.f32.mrb[0].mxu0
      %852 = vmatprep.mubr.bf16.mxu0 0
      %853 = vmatmul.mubr.bf16.gmra.mrb[0].mxu0 %v729
      %v854 = vpop.f32.mrb[0].mxu0
      %v855 = vadd.f32 0.0, %v854
      %v856 = vpop.f32.mrb[0].mxu0
      %v857 = vpop.f32.mrb[0].mxu0
      %v858 = vadd.f32 0.0, %v857
      %v859 = vpop.f32.mrb[0].mxu0
      %860 = vmatprep.mubr.bf16.mxu0 0
      %861 = vmatmul.mubr.bf16.gmra.mrb[0].mxu0 %v732
      %v862 = vpop.f32.mrb[0].mxu0
      %v863 = vadd.f32 0.0, %v862
      %v864 = vpop.f32.mrb[0].mxu0
      %v865 = vpop.f32.mrb[0].mxu0
      %v866 = vadd.f32 0.0, %v865
      %v867 = vpop.f32.mrb[0].mxu0
      %868 = vmatprep.mubr.bf16.mxu0 0
      %869 = vmatmul.mubr.bf16.gmra.mrb[0].mxu0 %v735
      %v870 = vpop.f32.mrb[0].mxu0
      %v871 = vadd.f32 0.0, %v870
      %v872 = vpop.f32.mrb[0].mxu0
      %v873 = vpop.f32.mrb[0].mxu0
      %v874 = vadd.f32 0.0, %v873
      %v875 = vpop.f32.mrb[0].mxu0
      %876 = vmatprep.mubr.bf16.mxu0 0
      %877 = vmatmul.mubr.bf16.gmra.mrb[0].mxu0 %v738
      %v878 = vpop.f32.mrb[0].mxu0
      %v879 = vadd.f32 0.0, %v878
      %v880 = vpop.f32.mrb[0].mxu0
      %v881 = vpop.f32.mrb[0].mxu0
      %v882 = vadd.f32 0.0, %v881
      %v883 = vpop.f32.mrb[0].mxu0
      %884 = vmatprep.mubr.bf16.mxu0 0
      %885 = vmatmul.mubr.bf16.gmra.mrb[0].mxu0 %v741
      %v886 = vpop.f32.mrb[0].mxu0
      %v887 = vadd.f32 0.0, %v886
      %v888 = vpop.f32.mrb[0].mxu0
      %v889 = vpop.f32.mrb[0].mxu0
      %v890 = vadd.f32 0.0, %v889
      %v891 = vpop.f32.mrb[0].mxu0
      %892 = vmatprep.mubr.bf16.mxu0 0
      %893 = vmatmul.mubr.bf16.gmra.mrb[0].mxu0 %v744
      %v894 = vpop.f32.mrb[0].mxu0
      %v895 = vadd.f32 0.0, %v894
      %v896 = vpop.f32.mrb[0].mxu0
      %v897 = vpop.f32.mrb[0].mxu0
      %v898 = vadd.f32 0.0, %v897
      %v899 = vpop.f32.mrb[0].mxu0
      %900 = vmatprep.mubr.bf16.mxu0 0
      %901 = vmatmul.mubr.bf16.gmra.mrb[0].mxu0 %v747
      %v902 = vpop.f32.mrb[0].mxu0
      %v903 = vadd.f32 0.0, %v902
      %v904 = vpop.f32.mrb[0].mxu0
      %v905 = vpop.f32.mrb[0].mxu0
      %v906 = vadd.f32 0.0, %v905
      %v907 = vpop.f32.mrb[0].mxu0
      %908 = vmatprep.mubr.bf16.mxu0 0
      %909 = vmatmul.mubr.bf16.gmra.mrb[0].mxu0 %v750
      %v910 = vpop.f32.mrb[0].mxu0
      %v911 = vadd.f32 0.0, %v910
      %v912 = vpop.f32.mrb[0].mxu0
      %v913 = vpop.f32.mrb[0].mxu0
      %v914 = vadd.f32 0.0, %v913
      %v915 = vpop.f32.mrb[0].mxu0
      %916 = vdwg.mxu0
      %v949 = vunpack.c.l.b16 %v211
      %v950 = vunpack.c.l.b16 %v212
      %v951 = vunpack.c.l.b16 %v214
      %v952 = vunpack.c.l.b16 %v215
      %v953 = vunpack.c.l.b16 %v217
      %v954 = vunpack.c.l.b16 %v218
      %v955 = vunpack.c.l.b16 %v220
      %v956 = vunpack.c.l.b16 %v221
      %v957 = vunpack.c.l.b16 %v223
      %v958 = vunpack.c.l.b16 %v224
      %v959 = vunpack.c.l.b16 %v226
      %v960 = vunpack.c.l.b16 %v227
      %v961 = vunpack.c.l.b16 %v229
      %v962 = vunpack.c.l.b16 %v230
      %v963 = vunpack.c.l.b16 %v232
      %v964 = vunpack.c.l.b16 %v233
      %v965 = vunpack.c.l.b16 %v235
      %v966 = vunpack.c.l.b16 %v236
      %v967 = vunpack.c.l.b16 %v238
      %v968 = vunpack.c.l.b16 %v239
      %v969 = vunpack.c.l.b16 %v241
      %v970 = vunpack.c.l.b16 %v242
      %v971 = vunpack.c.l.b16 %v244
      %v972 = vunpack.c.l.b16 %v245
      %v973 = vunpack.c.l.b16 %v247
      %v974 = vunpack.c.l.b16 %v248
      %v975 = vunpack.c.l.b16 %v250
      %v976 = vunpack.c.l.b16 %v251
      %v977 = vunpack.c.l.b16 %v253
      %v978 = vunpack.c.l.b16 %v254
      %v979 = vunpack.c.l.b16 %v256
      %v980 = vunpack.c.l.b16 %v257
      %v981 = vpack.c.b16 %v950, %v949
      %v982 = vpack.c.b16 %v952, %v951
      %v983 = vpack.c.b16 %v954, %v953
      %v984 = vpack.c.b16 %v956, %v955
      %v985 = vpack.c.b16 %v958, %v957
      %v986 = vpack.c.b16 %v960, %v959
      %v987 = vpack.c.b16 %v962, %v961
      %v988 = vpack.c.b16 %v964, %v963
      %v989 = vpack.c.b16 %v966, %v965
      %v990 = vpack.c.b16 %v968, %v967
      %v991 = vpack.c.b16 %v970, %v969
      %v992 = vpack.c.b16 %v972, %v971
      %v993 = vpack.c.b16 %v974, %v973
      %v994 = vpack.c.b16 %v976, %v975
      %v995 = vpack.c.b16 %v978, %v977
      %v996 = vpack.c.b16 %v980, %v979
      %v998 = vsel %vm703, %v981, 0
      %v1001 = vsel %vm703, %v982, 0
      %v1004 = vsel %vm703, %v983, 0
      %v1007 = vsel %vm703, %v984, 0
      %v1010 = vsel %vm703, %v985, 0
      %v1013 = vsel %vm703, %v986, 0
      %v1016 = vsel %vm703, %v987, 0
      %v1019 = vsel %vm703, %v988, 0
      %v1022 = vsel %vm703, %v989, 0
      %v1025 = vsel %vm703, %v990, 0
      %v1028 = vsel %vm703, %v991, 0
      %v1031 = vsel %vm703, %v992, 0
      %v1034 = vsel %vm703, %v993, 0
      %v1037 = vsel %vm703, %v994, 0
      %v1040 = vsel %vm703, %v995, 0
      %v1043 = vsel %vm703, %v996, 0
      %v1046 = vsel %vm752, %v265, 0
      %1048 = vmatprep.subr.bf16.mxu0 0
      %1049 = vmatpush1.bf16.msra.mxu0 %v1046
      %1050 = vmatprep.subr.bf16.mxu0 0
      %1051 = vmatpush1.bf16.msra.mxu0 0
      %1052 = vmatprep.subr.bf16.mxu0 0
      %1053 = vmatpush1.bf16.msra.mxu0 0
      %1054 = vmatprep.subr.bf16.mxu0 0
      %1055 = vmatpush1.bf16.msra.mxu0 0
      %1056 = vmatprep.subr.bf16.mxu0 0
      %1057 = vmatpush1.bf16.msra.mxu0 0
      %1058 = vmatprep.subr.bf16.mxu0 0
      %1059 = vmatpush1.bf16.msra.mxu0 0
      %1060 = vmatprep.subr.bf16.mxu0 0
      %1061 = vmatpush1.bf16.msra.mxu0 0
      %1062 = vmatprep.subr.bf16.mxu0 0
      %1063 = vmatpush1.bf16.msra.mxu0 0
      %1064 = vmatprep.subr.bf16.mxu0 0
      %1065 = vmatpush1.bf16.msra.mxu0 0
      %1066 = vmatprep.subr.bf16.mxu0 0
      %1067 = vmatpush1.bf16.msra.mxu0 0
      %1068 = vmatprep.subr.bf16.mxu0 0
      %1069 = vmatpush1.bf16.msra.mxu0 0
      %1070 = vmatprep.subr.bf16.mxu0 0
      %1071 = vmatpush1.bf16.msra.mxu0 0
      %1072 = vmatprep.subr.bf16.mxu0 0
      %1073 = vmatpush1.bf16.msra.mxu0 0
      %1074 = vmatprep.subr.bf16.mxu0 0
      %1075 = vmatpush1.bf16.msra.mxu0 0
      %1076 = vmatprep.subr.bf16.mxu0 0
      %1077 = vmatpush1.bf16.msra.mxu0 0
      %1078 = vmatprep.subr.bf16.mxu0 0
      %1079 = vmatpush1.bf16.msra.mxu0 0
      %1080 = vmatprep.mubr.bf16.mxu0 0
      %1081 = vmatmul.mubr.bf16.gmra.mrb[0].mxu0 %v998
      %v1082 = vpop.f32.mrb[0].mxu0
      %v1083 = vadd.f32 %v791, %v1082
      %v1084 = vpop.f32.mrb[0].mxu0
      %v1085 = vpop.f32.mrb[0].mxu0
      %v1086 = vadd.f32 %v794, %v1085
      %v1087 = vpop.f32.mrb[0].mxu0
      %1088 = vmatprep.mubr.bf16.mxu0 0
      %1089 = vmatmul.mubr.bf16.gmra.mrb[0].mxu0 %v1001
      %v1090 = vpop.f32.mrb[0].mxu0
      %v1091 = vadd.f32 %v799, %v1090
      %v1092 = vpop.f32.mrb[0].mxu0
      %v1093 = vpop.f32.mrb[0].mxu0
      %v1094 = vadd.f32 %v802, %v1093
      %v1095 = vpop.f32.mrb[0].mxu0
      %1096 = vmatprep.mubr.bf16.mxu0 0
      %1097 = vmatmul.mubr.bf16.gmra.mrb[0].mxu0 %v1004
      %v1098 = vpop.f32.mrb[0].mxu0
      %v1099 = vadd.f32 %v807, %v1098
      %v1100 = vpop.f32.mrb[0].mxu0
      %v1101 = vpop.f32.mrb[0].mxu0
      %v1102 = vadd.f32 %v810, %v1101
      %v1103 = vpop.f32.mrb[0].mxu0
      %1104 = vmatprep.mubr.bf16.mxu0 0
      %1105 = vmatmul.mubr.bf16.gmra.mrb[0].mxu0 %v1007
      %v1106 = vpop.f32.mrb[0].mxu0
      %v1107 = vadd.f32 %v815, %v1106
      %v1108 = vpop.f32.mrb[0].mxu0
      %v1109 = vpop.f32.mrb[0].mxu0
      %v1110 = vadd.f32 %v818, %v1109
      %v1111 = vpop.f32.mrb[0].mxu0
      %1112 = vmatprep.mubr.bf16.mxu0 0
      %1113 = vmatmul.mubr.bf16.gmra.mrb[0].mxu0 %v1010
      %v1114 = vpop.f32.mrb[0].mxu0
      %v1115 = vadd.f32 %v823, %v1114
      %v1116 = vpop.f32.mrb[0].mxu0
      %v1117 = vpop.f32.mrb[0].mxu0
      %v1118 = vadd.f32 %v826, %v1117
      %v1119 = vpop.f32.mrb[0].mxu0
      %1120 = vmatprep.mubr.bf16.mxu0 0
      %1121 = vmatmul.mubr.bf16.gmra.mrb[0].mxu0 %v1013
      %v1122 = vpop.f32.mrb[0].mxu0
      %v1123 = vadd.f32 %v831, %v1122
      %v1124 = vpop.f32.mrb[0].mxu0
      %v1125 = vpop.f32.mrb[0].mxu0
      %v1126 = vadd.f32 %v834, %v1125
      %v1127 = vpop.f32.mrb[0].mxu0
      %1128 = vmatprep.mubr.bf16.mxu0 0
      %1129 = vmatmul.mubr.bf16.gmra.mrb[0].mxu0 %v1016
      %v1130 = vpop.f32.mrb[0].mxu0
      %v1131 = vadd.f32 %v839, %v1130
      %v1132 = vpop.f32.mrb[0].mxu0
      %v1133 = vpop.f32.mrb[0].mxu0
      %v1134 = vadd.f32 %v842, %v1133
      %v1135 = vpop.f32.mrb[0].mxu0
      %1136 = vmatprep.mubr.bf16.mxu0 0
      %1137 = vmatmul.mubr.bf16.gmra.mrb[0].mxu0 %v1019
      %v1138 = vpop.f32.mrb[0].mxu0
      %v1139 = vadd.f32 %v847, %v1138
      %v1140 = vpop.f32.mrb[0].mxu0
      %v1141 = vpop.f32.mrb[0].mxu0
      %v1142 = vadd.f32 %v850, %v1141
      %v1143 = vpop.f32.mrb[0].mxu0
      %1144 = vmatprep.mubr.bf16.mxu0 0
      %1145 = vmatmul.mubr.bf16.gmra.mrb[0].mxu0 %v1022
      %v1146 = vpop.f32.mrb[0].mxu0
      %v1147 = vadd.f32 %v855, %v1146
      %v1148 = vpop.f32.mrb[0].mxu0
      %v1149 = vpop.f32.mrb[0].mxu0
      %v1150 = vadd.f32 %v858, %v1149
      %v1151 = vpop.f32.mrb[0].mxu0
      %1152 = vmatprep.mubr.bf16.mxu0 0
      %1153 = vmatmul.mubr.bf16.gmra.mrb[0].mxu0 %v1025
      %v1154 = vpop.f32.mrb[0].mxu0
      %v1155 = vadd.f32 %v863, %v1154
      %v1156 = vpop.f32.mrb[0].mxu0
      %v1157 = vpop.f32.mrb[0].mxu0
      %v1158 = vadd.f32 %v866, %v1157
      %v1159 = vpop.f32.mrb[0].mxu0
      %1160 = vmatprep.mubr.bf16.mxu0 0
      %1161 = vmatmul.mubr.bf16.gmra.mrb[0].mxu0 %v1028
      %v1162 = vpop.f32.mrb[0].mxu0
      %v1163 = vadd.f32 %v871, %v1162
      %v1164 = vpop.f32.mrb[0].mxu0
      %v1165 = vpop.f32.mrb[0].mxu0
      %v1166 = vadd.f32 %v874, %v1165
      %v1167 = vpop.f32.mrb[0].mxu0
      %1168 = vmatprep.mubr.bf16.mxu0 0
      %1169 = vmatmul.mubr.bf16.gmra.mrb[0].mxu0 %v1031
      %v1170 = vpop.f32.mrb[0].mxu0
      %v1171 = vadd.f32 %v879, %v1170
      %v1172 = vpop.f32.mrb[0].mxu0
      %v1173 = vpop.f32.mrb[0].mxu0
      %v1174 = vadd.f32 %v882, %v1173
      %v1175 = vpop.f32.mrb[0].mxu0
      %1176 = vmatprep.mubr.bf16.mxu0 0
      %1177 = vmatmul.mubr.bf16.gmra.mrb[0].mxu0 %v1034
      %v1178 = vpop.f32.mrb[0].mxu0
      %v1179 = vadd.f32 %v887, %v1178
      %v1180 = vpop.f32.mrb[0].mxu0
      %v1181 = vpop.f32.mrb[0].mxu0
      %v1182 = vadd.f32 %v890, %v1181
      %v1183 = vpop.f32.mrb[0].mxu0
      %1184 = vmatprep.mubr.bf16.mxu0 0
      %1185 = vmatmul.mubr.bf16.gmra.mrb[0].mxu0 %v1037
      %v1186 = vpop.f32.mrb[0].mxu0
      %v1187 = vadd.f32 %v895, %v1186
      %v1188 = vpop.f32.mrb[0].mxu0
      %v1189 = vpop.f32.mrb[0].mxu0
      %v1190 = vadd.f32 %v898, %v1189
      %v1191 = vpop.f32.mrb[0].mxu0
      %1192 = vmatprep.mubr.bf16.mxu0 0
      %1193 = vmatmul.mubr.bf16.gmra.mrb[0].mxu0 %v1040
      %v1194 = vpop.f32.mrb[0].mxu0
      %v1195 = vadd.f32 %v903, %v1194
      %v1196 = vpop.f32.mrb[0].mxu0
      %v1197 = vpop.f32.mrb[0].mxu0
      %v1198 = vadd.f32 %v906, %v1197
      %v1199 = vpop.f32.mrb[0].mxu0
      %1200 = vmatprep.mubr.bf16.mxu0 0
      %1201 = vmatmul.mubr.bf16.gmra.mrb[0].mxu0 %v1043
      %v1202 = vpop.f32.mrb[0].mxu0
      %v1203 = vadd.f32 %v911, %v1202
      %v1204 = vpop.f32.mrb[0].mxu0
      %v1205 = vpop.f32.mrb[0].mxu0
      %v1206 = vadd.f32 %v914, %v1205
      %v1207 = vpop.f32.mrb[0].mxu0
      %1208 = vdwg.mxu0
      %vm1225 = vcmask 1042432
      %vm1226 = vcmask 1046532
      %vm1227 = vmor %vm1225, %vm1226
      %v1228 = vrot.slane %v211, 5
      %v1229 = vrot.slane %v1228, 4
      %v1230 = vrot.slane %v212, 5
      %v1231 = vsel %vm1227, %v1229, %v1230
      %v1232 = vrot.slane %v1230, 4
      %v1233 = vrot.slane %v213, 5
      %v1234 = vsel %vm1227, %v1232, %v1233
      %v1235 = vrot.slane %v214, 5
      %v1236 = vrot.slane %v1235, 4
      %v1237 = vrot.slane %v215, 5
      %v1238 = vsel %vm1227, %v1236, %v1237
      %v1239 = vrot.slane %v1237, 4
      %v1240 = vrot.slane %v216, 5
      %v1241 = vsel %vm1227, %v1239, %v1240
      %v1242 = vrot.slane %v217, 5
      %v1243 = vrot.slane %v1242, 4
      %v1244 = vrot.slane %v218, 5
      %v1245 = vsel %vm1227, %v1243, %v1244
      %v1246 = vrot.slane %v1244, 4
      %v1247 = vrot.slane %v219, 5
      %v1248 = vsel %vm1227, %v1246, %v1247
      %v1249 = vrot.slane %v220, 5
      %v1250 = vrot.slane %v1249, 4
      %v1251 = vrot.slane %v221, 5
      %v1252 = vsel %vm1227, %v1250, %v1251
      %v1253 = vrot.slane %v1251, 4
      %v1254 = vrot.slane %v222, 5
      %v1255 = vsel %vm1227, %v1253, %v1254
      %v1256 = vrot.slane %v223, 5
      %v1257 = vrot.slane %v1256, 4
      %v1258 = vrot.slane %v224, 5
      %v1259 = vsel %vm1227, %v1257, %v1258
      %v1260 = vrot.slane %v1258, 4
      %v1261 = vrot.slane %v225, 5
      %v1262 = vsel %vm1227, %v1260, %v1261
      %v1263 = vrot.slane %v226, 5
      %v1264 = vrot.slane %v1263, 4
      %v1265 = vrot.slane %v227, 5
      %v1266 = vsel %vm1227, %v1264, %v1265
      %v1267 = vrot.slane %v1265, 4
      %v1268 = vrot.slane %v228, 5
      %v1269 = vsel %vm1227, %v1267, %v1268
      %v1270 = vrot.slane %v229, 5
      %v1271 = vrot.slane %v1270, 4
      %v1272 = vrot.slane %v230, 5
      %v1273 = vsel %vm1227, %v1271, %v1272
      %v1274 = vrot.slane %v1272, 4
      %v1275 = vrot.slane %v231, 5
      %v1276 = vsel %vm1227, %v1274, %v1275
      %v1277 = vrot.slane %v232, 5
      %v1278 = vrot.slane %v1277, 4
      %v1279 = vrot.slane %v233, 5
      %v1280 = vsel %vm1227, %v1278, %v1279
      %v1281 = vrot.slane %v1279, 4
      %v1282 = vrot.slane %v234, 5
      %v1283 = vsel %vm1227, %v1281, %v1282
      %v1284 = vrot.slane %v235, 5
      %v1285 = vrot.slane %v1284, 4
      %v1286 = vrot.slane %v236, 5
      %v1287 = vsel %vm1227, %v1285, %v1286
      %v1288 = vrot.slane %v1286, 4
      %v1289 = vrot.slane %v237, 5
      %v1290 = vsel %vm1227, %v1288, %v1289
      %v1291 = vrot.slane %v238, 5
      %v1292 = vrot.slane %v1291, 4
      %v1293 = vrot.slane %v239, 5
      %v1294 = vsel %vm1227, %v1292, %v1293
      %v1295 = vrot.slane %v1293, 4
      %v1296 = vrot.slane %v240, 5
      %v1297 = vsel %vm1227, %v1295, %v1296
      %v1298 = vrot.slane %v241, 5
      %v1299 = vrot.slane %v1298, 4
      %v1300 = vrot.slane %v242, 5
      %v1301 = vsel %vm1227, %v1299, %v1300
      %v1302 = vrot.slane %v1300, 4
      %v1303 = vrot.slane %v243, 5
      %v1304 = vsel %vm1227, %v1302, %v1303
      %v1305 = vrot.slane %v244, 5
      %v1306 = vrot.slane %v1305, 4
      %v1307 = vrot.slane %v245, 5
      %v1308 = vsel %vm1227, %v1306, %v1307
      %v1309 = vrot.slane %v1307, 4
      %v1310 = vrot.slane %v246, 5
      %v1311 = vsel %vm1227, %v1309, %v1310
      %v1312 = vrot.slane %v247, 5
      %v1313 = vrot.slane %v1312, 4
      %v1314 = vrot.slane %v248, 5
      %v1315 = vsel %vm1227, %v1313, %v1314
      %v1316 = vrot.slane %v1314, 4
      %v1317 = vrot.slane %v249, 5
      %v1318 = vsel %vm1227, %v1316, %v1317
      %v1319 = vrot.slane %v250, 5
      %v1320 = vrot.slane %v1319, 4
      %v1321 = vrot.slane %v251, 5
      %v1322 = vsel %vm1227, %v1320, %v1321
      %v1323 = vrot.slane %v1321, 4
      %v1324 = vrot.slane %v252, 5
      %v1325 = vsel %vm1227, %v1323, %v1324
      %v1326 = vrot.slane %v253, 5
      %v1327 = vrot.slane %v1326, 4
      %v1328 = vrot.slane %v254, 5
      %v1329 = vsel %vm1227, %v1327, %v1328
      %v1330 = vrot.slane %v1328, 4
      %v1331 = vrot.slane %v255, 5
      %v1332 = vsel %vm1227, %v1330, %v1331
      %v1333 = vrot.slane %v256, 5
      %v1334 = vrot.slane %v1333, 4
      %v1335 = vrot.slane %v257, 5
      %v1336 = vsel %vm1227, %v1334, %v1335
      %v1337 = vrot.slane %v1335, 4
      %v1338 = vrot.slane %v258, 5
      %v1339 = vsel %vm1227, %v1337, %v1338
      %s1340 = scalar_lea.vmem %s1, 8
      %v1341 = vld [vmem:[%s1340] sm:$0xf]
      %v1342 = vunpack.c.l.b16 %v1231
      %v1343 = vunpack.c.l.b16 %v1234
      %v1344 = vunpack.c.l.b16 %v1238
      %v1345 = vunpack.c.l.b16 %v1241
      %v1346 = vunpack.c.l.b16 %v1245
      %v1347 = vunpack.c.l.b16 %v1248
      %v1348 = vunpack.c.l.b16 %v1252
      %v1349 = vunpack.c.l.b16 %v1255
      %v1350 = vunpack.c.l.b16 %v1259
      %v1351 = vunpack.c.l.b16 %v1262
      %v1352 = vunpack.c.l.b16 %v1266
      %v1353 = vunpack.c.l.b16 %v1269
      %v1354 = vunpack.c.l.b16 %v1273
      %v1355 = vunpack.c.l.b16 %v1276
      %v1356 = vunpack.c.l.b16 %v1280
      %v1357 = vunpack.c.l.b16 %v1283
      %v1358 = vunpack.c.l.b16 %v1287
      %v1359 = vunpack.c.l.b16 %v1290
      %v1360 = vunpack.c.l.b16 %v1294
      %v1361 = vunpack.c.l.b16 %v1297
      %v1362 = vunpack.c.l.b16 %v1301
      %v1363 = vunpack.c.l.b16 %v1304
      %v1364 = vunpack.c.l.b16 %v1308
      %v1365 = vunpack.c.l.b16 %v1311
      %v1366 = vunpack.c.l.b16 %v1315
      %v1367 = vunpack.c.l.b16 %v1318
      %v1368 = vunpack.c.l.b16 %v1322
      %v1369 = vunpack.c.l.b16 %v1325
      %v1370 = vunpack.c.l.b16 %v1329
      %v1371 = vunpack.c.l.b16 %v1332
      %v1372 = vunpack.c.l.b16 %v1336
      %v1373 = vunpack.c.l.b16 %v1339
      %v1374 = vpack.c.b16 %v1343, %v1342
      %v1375 = vpack.c.b16 %v1345, %v1344
      %v1376 = vpack.c.b16 %v1347, %v1346
      %v1377 = vpack.c.b16 %v1349, %v1348
      %v1378 = vpack.c.b16 %v1351, %v1350
      %v1379 = vpack.c.b16 %v1353, %v1352
      %v1380 = vpack.c.b16 %v1355, %v1354
      %v1381 = vpack.c.b16 %v1357, %v1356
      %v1382 = vpack.c.b16 %v1359, %v1358
      %v1383 = vpack.c.b16 %v1361, %v1360
      %v1384 = vpack.c.b16 %v1363, %v1362
      %v1385 = vpack.c.b16 %v1365, %v1364
      %v1386 = vpack.c.b16 %v1367, %v1366
      %v1387 = vpack.c.b16 %v1369, %v1368
      %v1388 = vpack.c.b16 %v1371, %v1370
      %v1389 = vpack.c.b16 %v1373, %v1372
      %v1391 = vsel %vm703, %v1374, 0
      %v1394 = vsel %vm703, %v1375, 0
      %v1397 = vsel %vm703, %v1376, 0
      %v1400 = vsel %vm703, %v1377, 0
      %v1403 = vsel %vm703, %v1378, 0
      %v1406 = vsel %vm703, %v1379, 0
      %v1409 = vsel %vm703, %v1380, 0
      %v1412 = vsel %vm703, %v1381, 0
      %v1415 = vsel %vm703, %v1382, 0
      %v1418 = vsel %vm703, %v1383, 0
      %v1421 = vsel %vm703, %v1384, 0
      %v1424 = vsel %vm703, %v1385, 0
      %v1427 = vsel %vm703, %v1386, 0
      %v1430 = vsel %vm703, %v1387, 0
      %v1433 = vsel %vm703, %v1388, 0
      %v1436 = vsel %vm703, %v1389, 0
      %v1439 = vsel %vm752, %v1341, 0
      %1441 = vmatprep.subr.bf16.mxu0 0
      %1442 = vmatpush1.bf16.msra.mxu0 %v1439
      %1443 = vmatprep.subr.bf16.mxu0 0
      %1444 = vmatpush1.bf16.msra.mxu0 0
      %1445 = vmatprep.subr.bf16.mxu0 0
      %1446 = vmatpush1.bf16.msra.mxu0 0
      %1447 = vmatprep.subr.bf16.mxu0 0
      %1448 = vmatpush1.bf16.msra.mxu0 0
      %1449 = vmatprep.subr.bf16.mxu0 0
      %1450 = vmatpush1.bf16.msra.mxu0 0
      %1451 = vmatprep.subr.bf16.mxu0 0
      %1452 = vmatpush1.bf16.msra.mxu0 0
      %1453 = vmatprep.subr.bf16.mxu0 0
      %1454 = vmatpush1.bf16.msra.mxu0 0
      %1455 = vmatprep.subr.bf16.mxu0 0
      %1456 = vmatpush1.bf16.msra.mxu0 0
      %1457 = vmatprep.subr.bf16.mxu0 0
      %1458 = vmatpush1.bf16.msra.mxu0 0
      %1459 = vmatprep.subr.bf16.mxu0 0
      %1460 = vmatpush1.bf16.msra.mxu0 0
      %1461 = vmatprep.subr.bf16.mxu0 0
      %1462 = vmatpush1.bf16.msra.mxu0 0
      %1463 = vmatprep.subr.bf16.mxu0 0
      %1464 = vmatpush1.bf16.msra.mxu0 0
      %1465 = vmatprep.subr.bf16.mxu0 0
      %1466 = vmatpush1.bf16.msra.mxu0 0
      %1467 = vmatprep.subr.bf16.mxu0 0
      %1468 = vmatpush1.bf16.msra.mxu0 0
      %1469 = vmatprep.subr.bf16.mxu0 0
      %1470 = vmatpush1.bf16.msra.mxu0 0
      %1471 = vmatprep.subr.bf16.mxu0 0
      %1472 = vmatpush1.bf16.msra.mxu0 0
      %1473 = vmatprep.mubr.bf16.mxu0 0
      %1474 = vmatmul.mubr.bf16.gmra.mrb[0].mxu0 %v1391
      %v1475 = vpop.f32.mrb[0].mxu0
      %v1476 = vadd.f32 0.0, %v1475
      %v1477 = vpop.f32.mrb[0].mxu0
      %v1478 = vpop.f32.mrb[0].mxu0
      %v1479 = vadd.f32 0.0, %v1478
      %v1480 = vpop.f32.mrb[0].mxu0
      %1481 = vmatprep.mubr.bf16.mxu0 0
      %1482 = vmatmul.mubr.bf16.gmra.mrb[0].mxu0 %v1394
      %v1483 = vpop.f32.mrb[0].mxu0
      %v1484 = vadd.f32 0.0, %v1483
      %v1485 = vpop.f32.mrb[0].mxu0
      %v1486 = vpop.f32.mrb[0].mxu0
      %v1487 = vadd.f32 0.0, %v1486
      %v1488 = vpop.f32.mrb[0].mxu0
      %1489 = vmatprep.mubr.bf16.mxu0 0
      %1490 = vmatmul.mubr.bf16.gmra.mrb[0].mxu0 %v1397
      %v1491 = vpop.f32.mrb[0].mxu0
      %v1492 = vadd.f32 0.0, %v1491
      %v1493 = vpop.f32.mrb[0].mxu0
      %v1494 = vpop.f32.mrb[0].mxu0
      %v1495 = vadd.f32 0.0, %v1494
      %v1496 = vpop.f32.mrb[0].mxu0
      %1497 = vmatprep.mubr.bf16.mxu0 0
      %1498 = vmatmul.mubr.bf16.gmra.mrb[0].mxu0 %v1400
      %v1499 = vpop.f32.mrb[0].mxu0
      %v1500 = vadd.f32 0.0, %v1499
      %v1501 = vpop.f32.mrb[0].mxu0
      %v1502 = vpop.f32.mrb[0].mxu0
      %v1503 = vadd.f32 0.0, %v1502
      %v1504 = vpop.f32.mrb[0].mxu0
      %1505 = vmatprep.mubr.bf16.mxu0 0
      %1506 = vmatmul.mubr.bf16.gmra.mrb[0].mxu0 %v1403
      %v1507 = vpop.f32.mrb[0].mxu0
      %v1508 = vadd.f32 0.0, %v1507
      %v1509 = vpop.f32.mrb[0].mxu0
      %v1510 = vpop.f32.mrb[0].mxu0
      %v1511 = vadd.f32 0.0, %v1510
      %v1512 = vpop.f32.mrb[0].mxu0
      %1513 = vmatprep.mubr.bf16.mxu0 0
      %1514 = vmatmul.mubr.bf16.gmra.mrb[0].mxu0 %v1406
      %v1515 = vpop.f32.mrb[0].mxu0
      %v1516 = vadd.f32 0.0, %v1515
      %v1517 = vpop.f32.mrb[0].mxu0
      %v1518 = vpop.f32.mrb[0].mxu0
      %v1519 = vadd.f32 0.0, %v1518
      %v1520 = vpop.f32.mrb[0].mxu0
      %1521 = vmatprep.mubr.bf16.mxu0 0
      %1522 = vmatmul.mubr.bf16.gmra.mrb[0].mxu0 %v1409
      %v1523 = vpop.f32.mrb[0].mxu0
      %v1524 = vadd.f32 0.0, %v1523
      %v1525 = vpop.f32.mrb[0].mxu0
      %v1526 = vpop.f32.mrb[0].mxu0
      %v1527 = vadd.f32 0.0, %v1526
      %v1528 = vpop.f32.mrb[0].mxu0
      %1529 = vmatprep.mubr.bf16.mxu0 0
      %1530 = vmatmul.mubr.bf16.gmra.mrb[0].mxu0 %v1412
      %v1531 = vpop.f32.mrb[0].mxu0
      %v1532 = vadd.f32 0.0, %v1531
      %v1533 = vpop.f32.mrb[0].mxu0
      %v1534 = vpop.f32.mrb[0].mxu0
      %v1535 = vadd.f32 0.0, %v1534
      %v1536 = vpop.f32.mrb[0].mxu0
      %1537 = vmatprep.mubr.bf16.mxu0 0
      %1538 = vmatmul.mubr.bf16.gmra.mrb[0].mxu0 %v1415
      %v1539 = vpop.f32.mrb[0].mxu0
      %v1540 = vadd.f32 0.0, %v1539
      %v1541 = vpop.f32.mrb[0].mxu0
      %v1542 = vpop.f32.mrb[0].mxu0
      %v1543 = vadd.f32 0.0, %v1542
      %v1544 = vpop.f32.mrb[0].mxu0
      %1545 = vmatprep.mubr.bf16.mxu0 0
      %1546 = vmatmul.mubr.bf16.gmra.mrb[0].mxu0 %v1418
      %v1547 = vpop.f32.mrb[0].mxu0
      %v1548 = vadd.f32 0.0, %v1547
      %v1549 = vpop.f32.mrb[0].mxu0
      %v1550 = vpop.f32.mrb[0].mxu0
      %v1551 = vadd.f32 0.0, %v1550
      %v1552 = vpop.f32.mrb[0].mxu0
      %1553 = vmatprep.mubr.bf16.mxu0 0
      %1554 = vmatmul.mubr.bf16.gmra.mrb[0].mxu0 %v1421
      %v1555 = vpop.f32.mrb[0].mxu0
      %v1556 = vadd.f32 0.0, %v1555
      %v1557 = vpop.f32.mrb[0].mxu0
      %v1558 = vpop.f32.mrb[0].mxu0
      %v1559 = vadd.f32 0.0, %v1558
      %v1560 = vpop.f32.mrb[0].mxu0
      %1561 = vmatprep.mubr.bf16.mxu0 0
      %1562 = vmatmul.mubr.bf16.gmra.mrb[0].mxu0 %v1424
      %v1563 = vpop.f32.mrb[0].mxu0
      %v1564 = vadd.f32 0.0, %v1563
      %v1565 = vpop.f32.mrb[0].mxu0
      %v1566 = vpop.f32.mrb[0].mxu0
      %v1567 = vadd.f32 0.0, %v1566
      %v1568 = vpop.f32.mrb[0].mxu0
      %1569 = vmatprep.mubr.bf16.mxu0 0
      %1570 = vmatmul.mubr.bf16.gmra.mrb[0].mxu0 %v1427
      %v1571 = vpop.f32.mrb[0].mxu0
      %v1572 = vadd.f32 0.0, %v1571
      %v1573 = vpop.f32.mrb[0].mxu0
      %v1574 = vpop.f32.mrb[0].mxu0
      %v1575 = vadd.f32 0.0, %v1574
      %v1576 = vpop.f32.mrb[0].mxu0
      %1577 = vmatprep.mubr.bf16.mxu0 0
      %1578 = vmatmul.mubr.bf16.gmra.mrb[0].mxu0 %v1430
      %v1579 = vpop.f32.mrb[0].mxu0
      %v1580 = vadd.f32 0.0, %v1579
      %v1581 = vpop.f32.mrb[0].mxu0
      %v1582 = vpop.f32.mrb[0].mxu0
      %v1583 = vadd.f32 0.0, %v1582
      %v1584 = vpop.f32.mrb[0].mxu0
      %1585 = vmatprep.mubr.bf16.mxu0 0
      %1586 = vmatmul.mubr.bf16.gmra.mrb[0].mxu0 %v1433
      %v1587 = vpop.f32.mrb[0].mxu0
      %v1588 = vadd.f32 0.0, %v1587
      %v1589 = vpop.f32.mrb[0].mxu0
      %v1590 = vpop.f32.mrb[0].mxu0
      %v1591 = vadd.f32 0.0, %v1590
      %v1592 = vpop.f32.mrb[0].mxu0
      %1593 = vmatprep.mubr.bf16.mxu0 0
      %1594 = vmatmul.mubr.bf16.gmra.mrb[0].mxu0 %v1436
      %v1595 = vpop.f32.mrb[0].mxu0
      %v1596 = vadd.f32 0.0, %v1595
      %v1597 = vpop.f32.mrb[0].mxu0
      %v1598 = vpop.f32.mrb[0].mxu0
      %v1599 = vadd.f32 0.0, %v1598
      %v1600 = vpop.f32.mrb[0].mxu0
      %1601 = vdwg.mxu0
      %v1602 = vadd.f32 %v1083, %v1476
      %v1603 = vadd.f32 %v1086, %v1479
      %v1604 = vadd.f32 %v1091, %v1484
      %v1605 = vadd.f32 %v1094, %v1487
      %v1606 = vadd.f32 %v1099, %v1492
      %v1607 = vadd.f32 %v1102, %v1495
      %v1608 = vadd.f32 %v1107, %v1500
      %v1609 = vadd.f32 %v1110, %v1503
      %v1610 = vadd.f32 %v1115, %v1508
      %v1611 = vadd.f32 %v1118, %v1511
      %v1612 = vadd.f32 %v1123, %v1516
      %v1613 = vadd.f32 %v1126, %v1519
      %v1614 = vadd.f32 %v1131, %v1524
      %v1615 = vadd.f32 %v1134, %v1527
      %v1616 = vadd.f32 %v1139, %v1532
      %v1617 = vadd.f32 %v1142, %v1535
      %v1618 = vadd.f32 %v1147, %v1540
      %v1619 = vadd.f32 %v1150, %v1543
      %v1620 = vadd.f32 %v1155, %v1548
      %v1621 = vadd.f32 %v1158, %v1551
      %v1622 = vadd.f32 %v1163, %v1556
      %v1623 = vadd.f32 %v1166, %v1559
      %v1624 = vadd.f32 %v1171, %v1564
      %v1625 = vadd.f32 %v1174, %v1567
      %v1626 = vadd.f32 %v1179, %v1572
      %v1627 = vadd.f32 %v1182, %v1575
      %v1628 = vadd.f32 %v1187, %v1580
      %v1629 = vadd.f32 %v1190, %v1583
      %v1630 = vadd.f32 %v1195, %v1588
      %v1631 = vadd.f32 %v1198, %v1591
      %v1632 = vadd.f32 %v1203, %v1596
      %v1633 = vadd.f32 %v1206, %v1599
      %s1634 = scalar_lea.vmem %s1, 12
      %v1635 = vld [vmem:[%s1634] sm:$0xf]
      %v1638 = vunpack.c.l.b16 %v259
      %v1639 = vunpack.c.l.b16 %v260
      %v1640 = vpack.c.b16 %v1639, %v1638
      %v1642 = vsel %vm703, %v1640, 0
      %v1645 = vsel %vm752, %v1635, 0
      %1647 = vmatprep.subr.bf16.mxu0 0
      %1648 = vmatpush1.bf16.msra.mxu0 %v1645
      %1649 = vmatprep.subr.bf16.mxu0 0
      %1650 = vmatpush1.bf16.msra.mxu0 0
      %1651 = vmatprep.subr.bf16.mxu0 0
      %1652 = vmatpush1.bf16.msra.mxu0 0
      %1653 = vmatprep.subr.bf16.mxu0 0
      %1654 = vmatpush1.bf16.msra.mxu0 0
      %1655 = vmatprep.subr.bf16.mxu0 0
      %1656 = vmatpush1.bf16.msra.mxu0 0
      %1657 = vmatprep.subr.bf16.mxu0 0
      %1658 = vmatpush1.bf16.msra.mxu0 0
      %1659 = vmatprep.subr.bf16.mxu0 0
      %1660 = vmatpush1.bf16.msra.mxu0 0
      %1661 = vmatprep.subr.bf16.mxu0 0
      %1662 = vmatpush1.bf16.msra.mxu0 0
      %1663 = vmatprep.subr.bf16.mxu0 0
      %1664 = vmatpush1.bf16.msra.mxu0 0
      %1665 = vmatprep.subr.bf16.mxu0 0
      %1666 = vmatpush1.bf16.msra.mxu0 0
      %1667 = vmatprep.subr.bf16.mxu0 0
      %1668 = vmatpush1.bf16.msra.mxu0 0
      %1669 = vmatprep.subr.bf16.mxu0 0
      %1670 = vmatpush1.bf16.msra.mxu0 0
      %1671 = vmatprep.subr.bf16.mxu0 0
      %1672 = vmatpush1.bf16.msra.mxu0 0
      %1673 = vmatprep.subr.bf16.mxu0 0
      %1674 = vmatpush1.bf16.msra.mxu0 0
      %1675 = vmatprep.subr.bf16.mxu0 0
      %1676 = vmatpush1.bf16.msra.mxu0 0
      %1677 = vmatprep.subr.bf16.mxu0 0
      %1678 = vmatpush1.bf16.msra.mxu0 0
      %1679 = vmatprep.mubr.bf16.mxu0 0
      %1680 = vmatmul.mubr.bf16.gmra.mrb[0].mxu0 %v1001
      %v1681 = vpop.f32.mrb[0].mxu0
      %v1682 = vadd.f32 0.0, %v1681
      %v1683 = vpop.f32.mrb[0].mxu0
      %v1684 = vpop.f32.mrb[0].mxu0
      %v1685 = vadd.f32 0.0, %v1684
      %v1686 = vpop.f32.mrb[0].mxu0
      %1687 = vmatprep.mubr.bf16.mxu0 0
      %1688 = vmatmul.mubr.bf16.gmra.mrb[0].mxu0 %v1004
      %v1689 = vpop.f32.mrb[0].mxu0
      %v1690 = vadd.f32 0.0, %v1689
      %v1691 = vpop.f32.mrb[0].mxu0
      %v1692 = vpop.f32.mrb[0].mxu0
      %v1693 = vadd.f32 0.0, %v1692
      %v1694 = vpop.f32.mrb[0].mxu0
      %1695 = vmatprep.mubr.bf16.mxu0 0
      %1696 = vmatmul.mubr.bf16.gmra.mrb[0].mxu0 %v1007
      %v1697 = vpop.f32.mrb[0].mxu0
      %v1698 = vadd.f32 0.0, %v1697
      %v1699 = vpop.f32.mrb[0].mxu0
      %v1700 = vpop.f32.mrb[0].mxu0
      %v1701 = vadd.f32 0.0, %v1700
      %v1702 = vpop.f32.mrb[0].mxu0
      %1703 = vmatprep.mubr.bf16.mxu0 0
      %1704 = vmatmul.mubr.bf16.gmra.mrb[0].mxu0 %v1010
      %v1705 = vpop.f32.mrb[0].mxu0
      %v1706 = vadd.f32 0.0, %v1705
      %v1707 = vpop.f32.mrb[0].mxu0
      %v1708 = vpop.f32.mrb[0].mxu0
      %v1709 = vadd.f32 0.0, %v1708
      %v1710 = vpop.f32.mrb[0].mxu0
      %1711 = vmatprep.mubr.bf16.mxu0 0
      %1712 = vmatmul.mubr.bf16.gmra.mrb[0].mxu0 %v1013
      %v1713 = vpop.f32.mrb[0].mxu0
      %v1714 = vadd.f32 0.0, %v1713
      %v1715 = vpop.f32.mrb[0].mxu0
      %v1716 = vpop.f32.mrb[0].mxu0
      %v1717 = vadd.f32 0.0, %v1716
      %v1718 = vpop.f32.mrb[0].mxu0
      %1719 = vmatprep.mubr.bf16.mxu0 0
      %1720 = vmatmul.mubr.bf16.gmra.mrb[0].mxu0 %v1016
      %v1721 = vpop.f32.mrb[0].mxu0
      %v1722 = vadd.f32 0.0, %v1721
      %v1723 = vpop.f32.mrb[0].mxu0
      %v1724 = vpop.f32.mrb[0].mxu0
      %v1725 = vadd.f32 0.0, %v1724
      %v1726 = vpop.f32.mrb[0].mxu0
      %1727 = vmatprep.mubr.bf16.mxu0 0
      %1728 = vmatmul.mubr.bf16.gmra.mrb[0].mxu0 %v1019
      %v1729 = vpop.f32.mrb[0].mxu0
      %v1730 = vadd.f32 0.0, %v1729
      %v1731 = vpop.f32.mrb[0].mxu0
      %v1732 = vpop.f32.mrb[0].mxu0
      %v1733 = vadd.f32 0.0, %v1732
      %v1734 = vpop.f32.mrb[0].mxu0
      %1735 = vmatprep.mubr.bf16.mxu0 0
      %1736 = vmatmul.mubr.bf16.gmra.mrb[0].mxu0 %v1022
      %v1737 = vpop.f32.mrb[0].mxu0
      %v1738 = vadd.f32 0.0, %v1737
      %v1739 = vpop.f32.mrb[0].mxu0
      %v1740 = vpop.f32.mrb[0].mxu0
      %v1741 = vadd.f32 0.0, %v1740
      %v1742 = vpop.f32.mrb[0].mxu0
      %1743 = vmatprep.mubr.bf16.mxu0 0
      %1744 = vmatmul.mubr.bf16.gmra.mrb[0].mxu0 %v1025
      %v1745 = vpop.f32.mrb[0].mxu0
      %v1746 = vadd.f32 0.0, %v1745
      %v1747 = vpop.f32.mrb[0].mxu0
      %v1748 = vpop.f32.mrb[0].mxu0
      %v1749 = vadd.f32 0.0, %v1748
      %v1750 = vpop.f32.mrb[0].mxu0
      %1751 = vmatprep.mubr.bf16.mxu0 0
      %1752 = vmatmul.mubr.bf16.gmra.mrb[0].mxu0 %v1028
      %v1753 = vpop.f32.mrb[0].mxu0
      %v1754 = vadd.f32 0.0, %v1753
      %v1755 = vpop.f32.mrb[0].mxu0
      %v1756 = vpop.f32.mrb[0].mxu0
      %v1757 = vadd.f32 0.0, %v1756
      %v1758 = vpop.f32.mrb[0].mxu0
      %1759 = vmatprep.mubr.bf16.mxu0 0
      %1760 = vmatmul.mubr.bf16.gmra.mrb[0].mxu0 %v1031
      %v1761 = vpop.f32.mrb[0].mxu0
      %v1762 = vadd.f32 0.0, %v1761
      %v1763 = vpop.f32.mrb[0].mxu0
      %v1764 = vpop.f32.mrb[0].mxu0
      %v1765 = vadd.f32 0.0, %v1764
      %v1766 = vpop.f32.mrb[0].mxu0
      %1767 = vmatprep.mubr.bf16.mxu0 0
      %1768 = vmatmul.mubr.bf16.gmra.mrb[0].mxu0 %v1034
      %v1769 = vpop.f32.mrb[0].mxu0
      %v1770 = vadd.f32 0.0, %v1769
      %v1771 = vpop.f32.mrb[0].mxu0
      %v1772 = vpop.f32.mrb[0].mxu0
      %v1773 = vadd.f32 0.0, %v1772
      %v1774 = vpop.f32.mrb[0].mxu0
      %1775 = vmatprep.mubr.bf16.mxu0 0
      %1776 = vmatmul.mubr.bf16.gmra.mrb[0].mxu0 %v1037
      %v1777 = vpop.f32.mrb[0].mxu0
      %v1778 = vadd.f32 0.0, %v1777
      %v1779 = vpop.f32.mrb[0].mxu0
      %v1780 = vpop.f32.mrb[0].mxu0
      %v1781 = vadd.f32 0.0, %v1780
      %v1782 = vpop.f32.mrb[0].mxu0
      %1783 = vmatprep.mubr.bf16.mxu0 0
      %1784 = vmatmul.mubr.bf16.gmra.mrb[0].mxu0 %v1040
      %v1785 = vpop.f32.mrb[0].mxu0
      %v1786 = vadd.f32 0.0, %v1785
      %v1787 = vpop.f32.mrb[0].mxu0
      %v1788 = vpop.f32.mrb[0].mxu0
      %v1789 = vadd.f32 0.0, %v1788
      %v1790 = vpop.f32.mrb[0].mxu0
      %1791 = vmatprep.mubr.bf16.mxu0 0
      %1792 = vmatmul.mubr.bf16.gmra.mrb[0].mxu0 %v1043
      %v1793 = vpop.f32.mrb[0].mxu0
      %v1794 = vadd.f32 0.0, %v1793
      %v1795 = vpop.f32.mrb[0].mxu0
      %v1796 = vpop.f32.mrb[0].mxu0
      %v1797 = vadd.f32 0.0, %v1796
      %v1798 = vpop.f32.mrb[0].mxu0
      %1799 = vmatprep.mubr.bf16.mxu0 0
      %1800 = vmatmul.mubr.bf16.gmra.mrb[0].mxu0 %v1642
      %v1801 = vpop.f32.mrb[0].mxu0
      %v1802 = vadd.f32 0.0, %v1801
      %v1803 = vpop.f32.mrb[0].mxu0
      %v1804 = vpop.f32.mrb[0].mxu0
      %v1805 = vadd.f32 0.0, %v1804
      %v1806 = vpop.f32.mrb[0].mxu0
      %1807 = vdwg.mxu0
      %v1808 = vadd.f32 %v1602, %v1682
      %v1809 = vadd.f32 %v1603, %v1685
      %v1810 = vadd.f32 %v1604, %v1690
      %v1811 = vadd.f32 %v1605, %v1693
      %v1812 = vadd.f32 %v1606, %v1698
      %v1813 = vadd.f32 %v1607, %v1701
      %v1814 = vadd.f32 %v1608, %v1706
      %v1815 = vadd.f32 %v1609, %v1709
      %v1816 = vadd.f32 %v1610, %v1714
      %v1817 = vadd.f32 %v1611, %v1717
      %v1818 = vadd.f32 %v1612, %v1722
      %v1819 = vadd.f32 %v1613, %v1725
      %v1820 = vadd.f32 %v1614, %v1730
      %v1821 = vadd.f32 %v1615, %v1733
      %v1822 = vadd.f32 %v1616, %v1738
      %v1823 = vadd.f32 %v1617, %v1741
      %v1824 = vadd.f32 %v1618, %v1746
      %v1825 = vadd.f32 %v1619, %v1749
      %v1826 = vadd.f32 %v1620, %v1754
      %v1827 = vadd.f32 %v1621, %v1757
      %v1828 = vadd.f32 %v1622, %v1762
      %v1829 = vadd.f32 %v1623, %v1765
      %v1830 = vadd.f32 %v1624, %v1770
      %v1831 = vadd.f32 %v1625, %v1773
      %v1832 = vadd.f32 %v1626, %v1778
      %v1833 = vadd.f32 %v1627, %v1781
      %v1834 = vadd.f32 %v1628, %v1786
      %v1835 = vadd.f32 %v1629, %v1789
      %v1836 = vadd.f32 %v1630, %v1794
      %v1837 = vadd.f32 %v1631, %v1797
      %v1838 = vadd.f32 %v1632, %v1802
      %v1839 = vadd.f32 %v1633, %v1805
      %v1841 = vshrl.u32 %v259, 16
      %v1843 = vrot.slane %v1841, 4
      %v1844 = vshll.u32 %v259, 16
      %v1846 = vrot.slane %v1844, 5
      %v1847 = vor.u32 %v1843, %v1846
      %v1848 = vrot.slane %v1847, 4
      %v1850 = vshll.u32 %v260, 16
      %v1852 = vrot.slane %v1850, 5
      %v1853 = vsel %vm268, %v1848, %v1852
      %v1854 = vshrl.u32 %v260, 16
      %v1856 = vrot.slane %v1854, 4
      %v1857 = vor.u32 %v1856, %v1852
      %v1858 = vrot.slane %v1857, 4
      %v1860 = vshll.u32 %v261, 16
      %v1862 = vrot.slane %v1860, 5
      %v1863 = vsel %vm268, %v1858, %v1862
      %s1864 = scalar_lea.vmem %s1, 16
      %v1865 = vld [vmem:[%s1864] sm:$0xf]
      %v1866 = vunpack.c.l.b16 %v1853
      %v1867 = vunpack.c.l.b16 %v1863
      %v1868 = vpack.c.b16 %v1867, %v1866
      %v1870 = vsel %vm703, %v1868, 0
      %v1873 = vsel %vm752, %v1865, 0
      %1875 = vmatprep.subr.bf16.mxu0 0
      %1876 = vmatpush1.bf16.msra.mxu0 %v1873
      %1877 = vmatprep.subr.bf16.mxu0 0
      %1878 = vmatpush1.bf16.msra.mxu0 0
      %1879 = vmatprep.subr.bf16.mxu0 0
      %1880 = vmatpush1.bf16.msra.mxu0 0
      %1881 = vmatprep.subr.bf16.mxu0 0
      %1882 = vmatpush1.bf16.msra.mxu0 0
      %1883 = vmatprep.subr.bf16.mxu0 0
      %1884 = vmatpush1.bf16.msra.mxu0 0
      %1885 = vmatprep.subr.bf16.mxu0 0
      %1886 = vmatpush1.bf16.msra.mxu0 0
      %1887 = vmatprep.subr.bf16.mxu0 0
      %1888 = vmatpush1.bf16.msra.mxu0 0
      %1889 = vmatprep.subr.bf16.mxu0 0
      %1890 = vmatpush1.bf16.msra.mxu0 0
      %1891 = vmatprep.subr.bf16.mxu0 0
      %1892 = vmatpush1.bf16.msra.mxu0 0
      %1893 = vmatprep.subr.bf16.mxu0 0
      %1894 = vmatpush1.bf16.msra.mxu0 0
      %1895 = vmatprep.subr.bf16.mxu0 0
      %1896 = vmatpush1.bf16.msra.mxu0 0
      %1897 = vmatprep.subr.bf16.mxu0 0
      %1898 = vmatpush1.bf16.msra.mxu0 0
      %1899 = vmatprep.subr.bf16.mxu0 0
      %1900 = vmatpush1.bf16.msra.mxu0 0
      %1901 = vmatprep.subr.bf16.mxu0 0
      %1902 = vmatpush1.bf16.msra.mxu0 0
      %1903 = vmatprep.subr.bf16.mxu0 0
      %1904 = vmatpush1.bf16.msra.mxu0 0
      %1905 = vmatprep.subr.bf16.mxu0 0
      %1906 = vmatpush1.bf16.msra.mxu0 0
      %1907 = vmatprep.mubr.bf16.mxu0 0
      %1908 = vmatmul.mubr.bf16.gmra.mrb[0].mxu0 %v708
      %v1909 = vpop.f32.mrb[0].mxu0
      %v1910 = vadd.f32 0.0, %v1909
      %v1911 = vpop.f32.mrb[0].mxu0
      %v1912 = vpop.f32.mrb[0].mxu0
      %v1913 = vadd.f32 0.0, %v1912
      %v1914 = vpop.f32.mrb[0].mxu0
      %1915 = vmatprep.mubr.bf16.mxu0 0
      %1916 = vmatmul.mubr.bf16.gmra.mrb[0].mxu0 %v711
      %v1917 = vpop.f32.mrb[0].mxu0
      %v1918 = vadd.f32 0.0, %v1917
      %v1919 = vpop.f32.mrb[0].mxu0
      %v1920 = vpop.f32.mrb[0].mxu0
      %v1921 = vadd.f32 0.0, %v1920
      %v1922 = vpop.f32.mrb[0].mxu0
      %1923 = vmatprep.mubr.bf16.mxu0 0
      %1924 = vmatmul.mubr.bf16.gmra.mrb[0].mxu0 %v714
      %v1925 = vpop.f32.mrb[0].mxu0
      %v1926 = vadd.f32 0.0, %v1925
      %v1927 = vpop.f32.mrb[0].mxu0
      %v1928 = vpop.f32.mrb[0].mxu0
      %v1929 = vadd.f32 0.0, %v1928
      %v1930 = vpop.f32.mrb[0].mxu0
      %1931 = vmatprep.mubr.bf16.mxu0 0
      %1932 = vmatmul.mubr.bf16.gmra.mrb[0].mxu0 %v717
      %v1933 = vpop.f32.mrb[0].mxu0
      %v1934 = vadd.f32 0.0, %v1933
      %v1935 = vpop.f32.mrb[0].mxu0
      %v1936 = vpop.f32.mrb[0].mxu0
      %v1937 = vadd.f32 0.0, %v1936
      %v1938 = vpop.f32.mrb[0].mxu0
      %1939 = vmatprep.mubr.bf16.mxu0 0
      %1940 = vmatmul.mubr.bf16.gmra.mrb[0].mxu0 %v720
      %v1941 = vpop.f32.mrb[0].mxu0
      %v1942 = vadd.f32 0.0, %v1941
      %v1943 = vpop.f32.mrb[0].mxu0
      %v1944 = vpop.f32.mrb[0].mxu0
      %v1945 = vadd.f32 0.0, %v1944
      %v1946 = vpop.f32.mrb[0].mxu0
      %1947 = vmatprep.mubr.bf16.mxu0 0
      %1948 = vmatmul.mubr.bf16.gmra.mrb[0].mxu0 %v723
      %v1949 = vpop.f32.mrb[0].mxu0
      %v1950 = vadd.f32 0.0, %v1949
      %v1951 = vpop.f32.mrb[0].mxu0
      %v1952 = vpop.f32.mrb[0].mxu0
      %v1953 = vadd.f32 0.0, %v1952
      %v1954 = vpop.f32.mrb[0].mxu0
      %1955 = vmatprep.mubr.bf16.mxu0 0
      %1956 = vmatmul.mubr.bf16.gmra.mrb[0].mxu0 %v726
      %v1957 = vpop.f32.mrb[0].mxu0
      %v1958 = vadd.f32 0.0, %v1957
      %v1959 = vpop.f32.mrb[0].mxu0
      %v1960 = vpop.f32.mrb[0].mxu0
      %v1961 = vadd.f32 0.0, %v1960
      %v1962 = vpop.f32.mrb[0].mxu0
      %1963 = vmatprep.mubr.bf16.mxu0 0
      %1964 = vmatmul.mubr.bf16.gmra.mrb[0].mxu0 %v729
      %v1965 = vpop.f32.mrb[0].mxu0
      %v1966 = vadd.f32 0.0, %v1965
      %v1967 = vpop.f32.mrb[0].mxu0
      %v1968 = vpop.f32.mrb[0].mxu0
      %v1969 = vadd.f32 0.0, %v1968
      %v1970 = vpop.f32.mrb[0].mxu0
      %1971 = vmatprep.mubr.bf16.mxu0 0
      %1972 = vmatmul.mubr.bf16.gmra.mrb[0].mxu0 %v732
      %v1973 = vpop.f32.mrb[0].mxu0
      %v1974 = vadd.f32 0.0, %v1973
      %v1975 = vpop.f32.mrb[0].mxu0
      %v1976 = vpop.f32.mrb[0].mxu0
      %v1977 = vadd.f32 0.0, %v1976
      %v1978 = vpop.f32.mrb[0].mxu0
      %1979 = vmatprep.mubr.bf16.mxu0 0
      %1980 = vmatmul.mubr.bf16.gmra.mrb[0].mxu0 %v735
      %v1981 = vpop.f32.mrb[0].mxu0
      %v1982 = vadd.f32 0.0, %v1981
      %v1983 = vpop.f32.mrb[0].mxu0
      %v1984 = vpop.f32.mrb[0].mxu0
      %v1985 = vadd.f32 0.0, %v1984
      %v1986 = vpop.f32.mrb[0].mxu0
      %1987 = vmatprep.mubr.bf16.mxu0 0
      %1988 = vmatmul.mubr.bf16.gmra.mrb[0].mxu0 %v738
      %v1989 = vpop.f32.mrb[0].mxu0
      %v1990 = vadd.f32 0.0, %v1989
      %v1991 = vpop.f32.mrb[0].mxu0
      %v1992 = vpop.f32.mrb[0].mxu0
      %v1993 = vadd.f32 0.0, %v1992
      %v1994 = vpop.f32.mrb[0].mxu0
      %1995 = vmatprep.mubr.bf16.mxu0 0
      %1996 = vmatmul.mubr.bf16.gmra.mrb[0].mxu0 %v741
      %v1997 = vpop.f32.mrb[0].mxu0
      %v1998 = vadd.f32 0.0, %v1997
      %v1999 = vpop.f32.mrb[0].mxu0
      %v2000 = vpop.f32.mrb[0].mxu0
      %v2001 = vadd.f32 0.0, %v2000
      %v2002 = vpop.f32.mrb[0].mxu0
      %2003 = vmatprep.mubr.bf16.mxu0 0
      %2004 = vmatmul.mubr.bf16.gmra.mrb[0].mxu0 %v744
      %v2005 = vpop.f32.mrb[0].mxu0
      %v2006 = vadd.f32 0.0, %v2005
      %v2007 = vpop.f32.mrb[0].mxu0
      %v2008 = vpop.f32.mrb[0].mxu0
      %v2009 = vadd.f32 0.0, %v2008
      %v2010 = vpop.f32.mrb[0].mxu0
      %2011 = vmatprep.mubr.bf16.mxu0 0
      %2012 = vmatmul.mubr.bf16.gmra.mrb[0].mxu0 %v747
      %v2013 = vpop.f32.mrb[0].mxu0
      %v2014 = vadd.f32 0.0, %v2013
      %v2015 = vpop.f32.mrb[0].mxu0
      %v2016 = vpop.f32.mrb[0].mxu0
      %v2017 = vadd.f32 0.0, %v2016
      %v2018 = vpop.f32.mrb[0].mxu0
      %2019 = vmatprep.mubr.bf16.mxu0 0
      %2020 = vmatmul.mubr.bf16.gmra.mrb[0].mxu0 %v750
      %v2021 = vpop.f32.mrb[0].mxu0
      %v2022 = vadd.f32 0.0, %v2021
      %v2023 = vpop.f32.mrb[0].mxu0
      %v2024 = vpop.f32.mrb[0].mxu0
      %v2025 = vadd.f32 0.0, %v2024
      %v2026 = vpop.f32.mrb[0].mxu0
      %2027 = vmatprep.mubr.bf16.mxu0 0
      %2028 = vmatmul.mubr.bf16.gmra.mrb[0].mxu0 %v1870
      %v2029 = vpop.f32.mrb[0].mxu0
      %v2030 = vadd.f32 0.0, %v2029
      %v2031 = vpop.f32.mrb[0].mxu0
      %v2032 = vpop.f32.mrb[0].mxu0
      %v2033 = vadd.f32 0.0, %v2032
      %v2034 = vpop.f32.mrb[0].mxu0
      %2035 = vdwg.mxu0
      %v2036 = vadd.f32 %v1808, %v1910
      %v2037 = vadd.f32 %v1809, %v1913
      %v2038 = vadd.f32 %v1810, %v1918
      %v2039 = vadd.f32 %v1811, %v1921
      %v2040 = vadd.f32 %v1812, %v1926
      %v2041 = vadd.f32 %v1813, %v1929
      %v2042 = vadd.f32 %v1814, %v1934
      %v2043 = vadd.f32 %v1815, %v1937
      %v2044 = vadd.f32 %v1816, %v1942
      %v2045 = vadd.f32 %v1817, %v1945
      %v2046 = vadd.f32 %v1818, %v1950
      %v2047 = vadd.f32 %v1819, %v1953
      %v2048 = vadd.f32 %v1820, %v1958
      %v2049 = vadd.f32 %v1821, %v1961
      %v2050 = vadd.f32 %v1822, %v1966
      %v2051 = vadd.f32 %v1823, %v1969
      %v2052 = vadd.f32 %v1824, %v1974
      %v2053 = vadd.f32 %v1825, %v1977
      %v2054 = vadd.f32 %v1826, %v1982
      %v2055 = vadd.f32 %v1827, %v1985
      %v2056 = vadd.f32 %v1828, %v1990
      %v2057 = vadd.f32 %v1829, %v1993
      %v2058 = vadd.f32 %v1830, %v1998
      %v2059 = vadd.f32 %v1831, %v2001
      %v2060 = vadd.f32 %v1832, %v2006
      %v2061 = vadd.f32 %v1833, %v2009
      %v2062 = vadd.f32 %v1834, %v2014
      %v2063 = vadd.f32 %v1835, %v2017
      %v2064 = vadd.f32 %v1836, %v2022
      %v2065 = vadd.f32 %v1837, %v2025
      %v2066 = vadd.f32 %v1838, %v2030
      %v2067 = vadd.f32 %v1839, %v2033
      %v2069 = vrot.slane %v259, 5
      %v2070 = vrot.slane %v2069, 4
      %v2071 = vrot.slane %v260, 5
      %v2072 = vsel %vm1227, %v2070, %v2071
      %v2073 = vrot.slane %v2071, 4
      %v2074 = vrot.slane %v261, 5
      %v2075 = vsel %vm1227, %v2073, %v2074
      %s2076 = scalar_lea.vmem %s1, 20
      %v2077 = vld [vmem:[%s2076] sm:$0xf]
      %v2078 = vunpack.c.l.b16 %v2072
      %v2079 = vunpack.c.l.b16 %v2075
      %v2080 = vpack.c.b16 %v2079, %v2078
      %v2082 = vsel %vm703, %v2080, 0
      %v2085 = vsel %vm752, %v2077, 0
      %2087 = vmatprep.subr.bf16.mxu0 0
      %2088 = vmatpush1.bf16.msra.mxu0 %v2085
      %2089 = vmatprep.subr.bf16.mxu0 0
      %2090 = vmatpush1.bf16.msra.mxu0 0
      %2091 = vmatprep.subr.bf16.mxu0 0
      %2092 = vmatpush1.bf16.msra.mxu0 0
      %2093 = vmatprep.subr.bf16.mxu0 0
      %2094 = vmatpush1.bf16.msra.mxu0 0
      %2095 = vmatprep.subr.bf16.mxu0 0
      %2096 = vmatpush1.bf16.msra.mxu0 0
      %2097 = vmatprep.subr.bf16.mxu0 0
      %2098 = vmatpush1.bf16.msra.mxu0 0
      %2099 = vmatprep.subr.bf16.mxu0 0
      %2100 = vmatpush1.bf16.msra.mxu0 0
      %2101 = vmatprep.subr.bf16.mxu0 0
      %2102 = vmatpush1.bf16.msra.mxu0 0
      %2103 = vmatprep.subr.bf16.mxu0 0
      %2104 = vmatpush1.bf16.msra.mxu0 0
      %2105 = vmatprep.subr.bf16.mxu0 0
      %2106 = vmatpush1.bf16.msra.mxu0 0
      %2107 = vmatprep.subr.bf16.mxu0 0
      %2108 = vmatpush1.bf16.msra.mxu0 0
      %2109 = vmatprep.subr.bf16.mxu0 0
      %2110 = vmatpush1.bf16.msra.mxu0 0
      %2111 = vmatprep.subr.bf16.mxu0 0
      %2112 = vmatpush1.bf16.msra.mxu0 0
      %2113 = vmatprep.subr.bf16.mxu0 0
      %2114 = vmatpush1.bf16.msra.mxu0 0
      %2115 = vmatprep.subr.bf16.mxu0 0
      %2116 = vmatpush1.bf16.msra.mxu0 0
      %2117 = vmatprep.subr.bf16.mxu0 0
      %2118 = vmatpush1.bf16.msra.mxu0 0
      %2119 = vmatprep.mubr.bf16.mxu0 0
      %2120 = vmatmul.mubr.bf16.gmra.mrb[0].mxu0 %v1394
      %v2121 = vpop.f32.mrb[0].mxu0
      %v2122 = vadd.f32 0.0, %v2121
      %v2123 = vpop.f32.mrb[0].mxu0
      %v2124 = vpop.f32.mrb[0].mxu0
      %v2125 = vadd.f32 0.0, %v2124
      %v2126 = vpop.f32.mrb[0].mxu0
      %2127 = vmatprep.mubr.bf16.mxu0 0
      %2128 = vmatmul.mubr.bf16.gmra.mrb[0].mxu0 %v1397
      %v2129 = vpop.f32.mrb[0].mxu0
      %v2130 = vadd.f32 0.0, %v2129
      %v2131 = vpop.f32.mrb[0].mxu0
      %v2132 = vpop.f32.mrb[0].mxu0
      %v2133 = vadd.f32 0.0, %v2132
      %v2134 = vpop.f32.mrb[0].mxu0
      %2135 = vmatprep.mubr.bf16.mxu0 0
      %2136 = vmatmul.mubr.bf16.gmra.mrb[0].mxu0 %v1400
      %v2137 = vpop.f32.mrb[0].mxu0
      %v2138 = vadd.f32 0.0, %v2137
      %v2139 = vpop.f32.mrb[0].mxu0
      %v2140 = vpop.f32.mrb[0].mxu0
      %v2141 = vadd.f32 0.0, %v2140
      %v2142 = vpop.f32.mrb[0].mxu0
      %2143 = vmatprep.mubr.bf16.mxu0 0
      %2144 = vmatmul.mubr.bf16.gmra.mrb[0].mxu0 %v1403
      %v2145 = vpop.f32.mrb[0].mxu0
      %v2146 = vadd.f32 0.0, %v2145
      %v2147 = vpop.f32.mrb[0].mxu0
      %v2148 = vpop.f32.mrb[0].mxu0
      %v2149 = vadd.f32 0.0, %v2148
      %v2150 = vpop.f32.mrb[0].mxu0
      %2151 = vmatprep.mubr.bf16.mxu0 0
      %2152 = vmatmul.mubr.bf16.gmra.mrb[0].mxu0 %v1406
      %v2153 = vpop.f32.mrb[0].mxu0
      %v2154 = vadd.f32 0.0, %v2153
      %v2155 = vpop.f32.mrb[0].mxu0
      %v2156 = vpop.f32.mrb[0].mxu0
      %v2157 = vadd.f32 0.0, %v2156
      %v2158 = vpop.f32.mrb[0].mxu0
      %2159 = vmatprep.mubr.bf16.mxu0 0
      %2160 = vmatmul.mubr.bf16.gmra.mrb[0].mxu0 %v1409
      %v2161 = vpop.f32.mrb[0].mxu0
      %v2162 = vadd.f32 0.0, %v2161
      %v2163 = vpop.f32.mrb[0].mxu0
      %v2164 = vpop.f32.mrb[0].mxu0
      %v2165 = vadd.f32 0.0, %v2164
      %v2166 = vpop.f32.mrb[0].mxu0
      %2167 = vmatprep.mubr.bf16.mxu0 0
      %2168 = vmatmul.mubr.bf16.gmra.mrb[0].mxu0 %v1412
      %v2169 = vpop.f32.mrb[0].mxu0
      %v2170 = vadd.f32 0.0, %v2169
      %v2171 = vpop.f32.mrb[0].mxu0
      %v2172 = vpop.f32.mrb[0].mxu0
      %v2173 = vadd.f32 0.0, %v2172
      %v2174 = vpop.f32.mrb[0].mxu0
      %2175 = vmatprep.mubr.bf16.mxu0 0
      %2176 = vmatmul.mubr.bf16.gmra.mrb[0].mxu0 %v1415
      %v2177 = vpop.f32.mrb[0].mxu0
      %v2178 = vadd.f32 0.0, %v2177
      %v2179 = vpop.f32.mrb[0].mxu0
      %v2180 = vpop.f32.mrb[0].mxu0
      %v2181 = vadd.f32 0.0, %v2180
      %v2182 = vpop.f32.mrb[0].mxu0
      %2183 = vmatprep.mubr.bf16.mxu0 0
      %2184 = vmatmul.mubr.bf16.gmra.mrb[0].mxu0 %v1418
      %v2185 = vpop.f32.mrb[0].mxu0
      %v2186 = vadd.f32 0.0, %v2185
      %v2187 = vpop.f32.mrb[0].mxu0
      %v2188 = vpop.f32.mrb[0].mxu0
      %v2189 = vadd.f32 0.0, %v2188
      %v2190 = vpop.f32.mrb[0].mxu0
      %2191 = vmatprep.mubr.bf16.mxu0 0
      %2192 = vmatmul.mubr.bf16.gmra.mrb[0].mxu0 %v1421
      %v2193 = vpop.f32.mrb[0].mxu0
      %v2194 = vadd.f32 0.0, %v2193
      %v2195 = vpop.f32.mrb[0].mxu0
      %v2196 = vpop.f32.mrb[0].mxu0
      %v2197 = vadd.f32 0.0, %v2196
      %v2198 = vpop.f32.mrb[0].mxu0
      %2199 = vmatprep.mubr.bf16.mxu0 0
      %2200 = vmatmul.mubr.bf16.gmra.mrb[0].mxu0 %v1424
      %v2201 = vpop.f32.mrb[0].mxu0
      %v2202 = vadd.f32 0.0, %v2201
      %v2203 = vpop.f32.mrb[0].mxu0
      %v2204 = vpop.f32.mrb[0].mxu0
      %v2205 = vadd.f32 0.0, %v2204
      %v2206 = vpop.f32.mrb[0].mxu0
      %2207 = vmatprep.mubr.bf16.mxu0 0
      %2208 = vmatmul.mubr.bf16.gmra.mrb[0].mxu0 %v1427
      %v2209 = vpop.f32.mrb[0].mxu0
      %v2210 = vadd.f32 0.0, %v2209
      %v2211 = vpop.f32.mrb[0].mxu0
      %v2212 = vpop.f32.mrb[0].mxu0
      %v2213 = vadd.f32 0.0, %v2212
      %v2214 = vpop.f32.mrb[0].mxu0
      %2215 = vmatprep.mubr.bf16.mxu0 0
      %2216 = vmatmul.mubr.bf16.gmra.mrb[0].mxu0 %v1430
      %v2217 = vpop.f32.mrb[0].mxu0
      %v2218 = vadd.f32 0.0, %v2217
      %v2219 = vpop.f32.mrb[0].mxu0
      %v2220 = vpop.f32.mrb[0].mxu0
      %v2221 = vadd.f32 0.0, %v2220
      %v2222 = vpop.f32.mrb[0].mxu0
      %2223 = vmatprep.mubr.bf16.mxu0 0
      %2224 = vmatmul.mubr.bf16.gmra.mrb[0].mxu0 %v1433
      %v2225 = vpop.f32.mrb[0].mxu0
      %v2226 = vadd.f32 0.0, %v2225
      %v2227 = vpop.f32.mrb[0].mxu0
      %v2228 = vpop.f32.mrb[0].mxu0
      %v2229 = vadd.f32 0.0, %v2228
      %v2230 = vpop.f32.mrb[0].mxu0
      %2231 = vmatprep.mubr.bf16.mxu0 0
      %2232 = vmatmul.mubr.bf16.gmra.mrb[0].mxu0 %v1436
      %v2233 = vpop.f32.mrb[0].mxu0
      %v2234 = vadd.f32 0.0, %v2233
      %v2235 = vpop.f32.mrb[0].mxu0
      %v2236 = vpop.f32.mrb[0].mxu0
      %v2237 = vadd.f32 0.0, %v2236
      %v2238 = vpop.f32.mrb[0].mxu0
      %2239 = vmatprep.mubr.bf16.mxu0 0
      %2240 = vmatmul.mubr.bf16.gmra.mrb[0].mxu0 %v2082
      %v2241 = vpop.f32.mrb[0].mxu0
      %v2242 = vadd.f32 0.0, %v2241
      %v2243 = vpop.f32.mrb[0].mxu0
      %v2244 = vpop.f32.mrb[0].mxu0
      %v2245 = vadd.f32 0.0, %v2244
      %v2246 = vpop.f32.mrb[0].mxu0
      %2247 = vdwg.mxu0
      %v2248 = vadd.f32 %v2036, %v2122
      %v2249 = vadd.f32 %v2037, %v2125
      %v2250 = vadd.f32 %v2038, %v2130
      %v2251 = vadd.f32 %v2039, %v2133
      %v2252 = vadd.f32 %v2040, %v2138
      %v2253 = vadd.f32 %v2041, %v2141
      %v2254 = vadd.f32 %v2042, %v2146
      %v2255 = vadd.f32 %v2043, %v2149
      %v2256 = vadd.f32 %v2044, %v2154
      %v2257 = vadd.f32 %v2045, %v2157
      %v2258 = vadd.f32 %v2046, %v2162
      %v2259 = vadd.f32 %v2047, %v2165
      %v2260 = vadd.f32 %v2048, %v2170
      %v2261 = vadd.f32 %v2049, %v2173
      %v2262 = vadd.f32 %v2050, %v2178
      %v2263 = vadd.f32 %v2051, %v2181
      %v2264 = vadd.f32 %v2052, %v2186
      %v2265 = vadd.f32 %v2053, %v2189
      %v2266 = vadd.f32 %v2054, %v2194
      %v2267 = vadd.f32 %v2055, %v2197
      %v2268 = vadd.f32 %v2056, %v2202
      %v2269 = vadd.f32 %v2057, %v2205
      %v2270 = vadd.f32 %v2058, %v2210
      %v2271 = vadd.f32 %v2059, %v2213
      %v2272 = vadd.f32 %v2060, %v2218
      %v2273 = vadd.f32 %v2061, %v2221
      %v2274 = vadd.f32 %v2062, %v2226
      %v2275 = vadd.f32 %v2063, %v2229
      %v2276 = vadd.f32 %v2064, %v2234
      %v2277 = vadd.f32 %v2065, %v2237
      %v2278 = vadd.f32 %v2066, %v2242
      %v2279 = vadd.f32 %v2067, %v2245
      %s2280 = scalar_lea.vmem %s1, 24
      %v2281 = vld [vmem:[%s2280] sm:$0xf]
      %v2284 = vunpack.c.l.b16 %v262
      %v2285 = vunpack.c.l.b16 %v263
      %v2286 = vpack.c.b16 %v2285, %v2284
      %v2288 = vsel %vm703, %v2286, 0
      %v2291 = vsel %vm752, %v2281, 0
      %2293 = vmatprep.subr.bf16.mxu0 0
      %2294 = vmatpush1.bf16.msra.mxu0 %v2291
      %2295 = vmatprep.subr.bf16.mxu0 0
      %2296 = vmatpush1.bf16.msra.mxu0 0
      %2297 = vmatprep.subr.bf16.mxu0 0
      %2298 = vmatpush1.bf16.msra.mxu0 0
      %2299 = vmatprep.subr.bf16.mxu0 0
      %2300 = vmatpush1.bf16.msra.mxu0 0
      %2301 = vmatprep.subr.bf16.mxu0 0
      %2302 = vmatpush1.bf16.msra.mxu0 0
      %2303 = vmatprep.subr.bf16.mxu0 0
      %2304 = vmatpush1.bf16.msra.mxu0 0
      %2305 = vmatprep.subr.bf16.mxu0 0
      %2306 = vmatpush1.bf16.msra.mxu0 0
      %2307 = vmatprep.subr.bf16.mxu0 0
      %2308 = vmatpush1.bf16.msra.mxu0 0
      %2309 = vmatprep.subr.bf16.mxu0 0
      %2310 = vmatpush1.bf16.msra.mxu0 0
      %2311 = vmatprep.subr.bf16.mxu0 0
      %2312 = vmatpush1.bf16.msra.mxu0 0
      %2313 = vmatprep.subr.bf16.mxu0 0
      %2314 = vmatpush1.bf16.msra.mxu0 0
      %2315 = vmatprep.subr.bf16.mxu0 0
      %2316 = vmatpush1.bf16.msra.mxu0 0
      %2317 = vmatprep.subr.bf16.mxu0 0
      %2318 = vmatpush1.bf16.msra.mxu0 0
      %2319 = vmatprep.subr.bf16.mxu0 0
      %2320 = vmatpush1.bf16.msra.mxu0 0
      %2321 = vmatprep.subr.bf16.mxu0 0
      %2322 = vmatpush1.bf16.msra.mxu0 0
      %2323 = vmatprep.subr.bf16.mxu0 0
      %2324 = vmatpush1.bf16.msra.mxu0 0
      %2325 = vmatprep.mubr.bf16.mxu0 0
      %2326 = vmatmul.mubr.bf16.gmra.mrb[0].mxu0 %v1004
      %v2327 = vpop.f32.mrb[0].mxu0
      %v2328 = vadd.f32 0.0, %v2327
      %v2329 = vpop.f32.mrb[0].mxu0
      %v2330 = vpop.f32.mrb[0].mxu0
      %v2331 = vadd.f32 0.0, %v2330
      %v2332 = vpop.f32.mrb[0].mxu0
      %2333 = vmatprep.mubr.bf16.mxu0 0
      %2334 = vmatmul.mubr.bf16.gmra.mrb[0].mxu0 %v1007
      %v2335 = vpop.f32.mrb[0].mxu0
      %v2336 = vadd.f32 0.0, %v2335
      %v2337 = vpop.f32.mrb[0].mxu0
      %v2338 = vpop.f32.mrb[0].mxu0
      %v2339 = vadd.f32 0.0, %v2338
      %v2340 = vpop.f32.mrb[0].mxu0
      %2341 = vmatprep.mubr.bf16.mxu0 0
      %2342 = vmatmul.mubr.bf16.gmra.mrb[0].mxu0 %v1010
      %v2343 = vpop.f32.mrb[0].mxu0
      %v2344 = vadd.f32 0.0, %v2343
      %v2345 = vpop.f32.mrb[0].mxu0
      %v2346 = vpop.f32.mrb[0].mxu0
      %v2347 = vadd.f32 0.0, %v2346
      %v2348 = vpop.f32.mrb[0].mxu0
      %2349 = vmatprep.mubr.bf16.mxu0 0
      %2350 = vmatmul.mubr.bf16.gmra.mrb[0].mxu0 %v1013
      %v2351 = vpop.f32.mrb[0].mxu0
      %v2352 = vadd.f32 0.0, %v2351
      %v2353 = vpop.f32.mrb[0].mxu0
      %v2354 = vpop.f32.mrb[0].mxu0
      %v2355 = vadd.f32 0.0, %v2354
      %v2356 = vpop.f32.mrb[0].mxu0
      %2357 = vmatprep.mubr.bf16.mxu0 0
      %2358 = vmatmul.mubr.bf16.gmra.mrb[0].mxu0 %v1016
      %v2359 = vpop.f32.mrb[0].mxu0
      %v2360 = vadd.f32 0.0, %v2359
      %v2361 = vpop.f32.mrb[0].mxu0
      %v2362 = vpop.f32.mrb[0].mxu0
      %v2363 = vadd.f32 0.0, %v2362
      %v2364 = vpop.f32.mrb[0].mxu0
      %2365 = vmatprep.mubr.bf16.mxu0 0
      %2366 = vmatmul.mubr.bf16.gmra.mrb[0].mxu0 %v1019
      %v2367 = vpop.f32.mrb[0].mxu0
      %v2368 = vadd.f32 0.0, %v2367
      %v2369 = vpop.f32.mrb[0].mxu0
      %v2370 = vpop.f32.mrb[0].mxu0
      %v2371 = vadd.f32 0.0, %v2370
      %v2372 = vpop.f32.mrb[0].mxu0
      %2373 = vmatprep.mubr.bf16.mxu0 0
      %2374 = vmatmul.mubr.bf16.gmra.mrb[0].mxu0 %v1022
      %v2375 = vpop.f32.mrb[0].mxu0
      %v2376 = vadd.f32 0.0, %v2375
      %v2377 = vpop.f32.mrb[0].mxu0
      %v2378 = vpop.f32.mrb[0].mxu0
      %v2379 = vadd.f32 0.0, %v2378
      %v2380 = vpop.f32.mrb[0].mxu0
      %2381 = vmatprep.mubr.bf16.mxu0 0
      %2382 = vmatmul.mubr.bf16.gmra.mrb[0].mxu0 %v1025
      %v2383 = vpop.f32.mrb[0].mxu0
      %v2384 = vadd.f32 0.0, %v2383
      %v2385 = vpop.f32.mrb[0].mxu0
      %v2386 = vpop.f32.mrb[0].mxu0
      %v2387 = vadd.f32 0.0, %v2386
      %v2388 = vpop.f32.mrb[0].mxu0
      %2389 = vmatprep.mubr.bf16.mxu0 0
      %2390 = vmatmul.mubr.bf16.gmra.mrb[0].mxu0 %v1028
      %v2391 = vpop.f32.mrb[0].mxu0
      %v2392 = vadd.f32 0.0, %v2391
      %v2393 = vpop.f32.mrb[0].mxu0
      %v2394 = vpop.f32.mrb[0].mxu0
      %v2395 = vadd.f32 0.0, %v2394
      %v2396 = vpop.f32.mrb[0].mxu0
      %2397 = vmatprep.mubr.bf16.mxu0 0
      %2398 = vmatmul.mubr.bf16.gmra.mrb[0].mxu0 %v1031
      %v2399 = vpop.f32.mrb[0].mxu0
      %v2400 = vadd.f32 0.0, %v2399
      %v2401 = vpop.f32.mrb[0].mxu0
      %v2402 = vpop.f32.mrb[0].mxu0
      %v2403 = vadd.f32 0.0, %v2402
      %v2404 = vpop.f32.mrb[0].mxu0
      %2405 = vmatprep.mubr.bf16.mxu0 0
      %2406 = vmatmul.mubr.bf16.gmra.mrb[0].mxu0 %v1034
      %v2407 = vpop.f32.mrb[0].mxu0
      %v2408 = vadd.f32 0.0, %v2407
      %v2409 = vpop.f32.mrb[0].mxu0
      %v2410 = vpop.f32.mrb[0].mxu0
      %v2411 = vadd.f32 0.0, %v2410
      %v2412 = vpop.f32.mrb[0].mxu0
      %2413 = vmatprep.mubr.bf16.mxu0 0
      %2414 = vmatmul.mubr.bf16.gmra.mrb[0].mxu0 %v1037
      %v2415 = vpop.f32.mrb[0].mxu0
      %v2416 = vadd.f32 0.0, %v2415
      %v2417 = vpop.f32.mrb[0].mxu0
      %v2418 = vpop.f32.mrb[0].mxu0
      %v2419 = vadd.f32 0.0, %v2418
      %v2420 = vpop.f32.mrb[0].mxu0
      %2421 = vmatprep.mubr.bf16.mxu0 0
      %2422 = vmatmul.mubr.bf16.gmra.mrb[0].mxu0 %v1040
      %v2423 = vpop.f32.mrb[0].mxu0
      %v2424 = vadd.f32 0.0, %v2423
      %v2425 = vpop.f32.mrb[0].mxu0
      %v2426 = vpop.f32.mrb[0].mxu0
      %v2427 = vadd.f32 0.0, %v2426
      %v2428 = vpop.f32.mrb[0].mxu0
      %2429 = vmatprep.mubr.bf16.mxu0 0
      %2430 = vmatmul.mubr.bf16.gmra.mrb[0].mxu0 %v1043
      %v2431 = vpop.f32.mrb[0].mxu0
      %v2432 = vadd.f32 0.0, %v2431
      %v2433 = vpop.f32.mrb[0].mxu0
      %v2434 = vpop.f32.mrb[0].mxu0
      %v2435 = vadd.f32 0.0, %v2434
      %v2436 = vpop.f32.mrb[0].mxu0
      %2437 = vmatprep.mubr.bf16.mxu0 0
      %2438 = vmatmul.mubr.bf16.gmra.mrb[0].mxu0 %v1642
      %v2439 = vpop.f32.mrb[0].mxu0
      %v2440 = vadd.f32 0.0, %v2439
      %v2441 = vpop.f32.mrb[0].mxu0
      %v2442 = vpop.f32.mrb[0].mxu0
      %v2443 = vadd.f32 0.0, %v2442
      %v2444 = vpop.f32.mrb[0].mxu0
      %2445 = vmatprep.mubr.bf16.mxu0 0
      %2446 = vmatmul.mubr.bf16.gmra.mrb[0].mxu0 %v2288
      %v2447 = vpop.f32.mrb[0].mxu0
      %v2448 = vadd.f32 0.0, %v2447
      %v2449 = vpop.f32.mrb[0].mxu0
      %v2450 = vpop.f32.mrb[0].mxu0
      %v2451 = vadd.f32 0.0, %v2450
      %v2452 = vpop.f32.mrb[0].mxu0
      %2453 = vdwg.mxu0
      %v2454 = vadd.f32 %v2248, %v2328
      %v2455 = vadd.f32 %v2249, %v2331
      %v2456 = vadd.f32 %v2250, %v2336
      %v2457 = vadd.f32 %v2251, %v2339
      %v2458 = vadd.f32 %v2252, %v2344
      %v2459 = vadd.f32 %v2253, %v2347
      %v2460 = vadd.f32 %v2254, %v2352
      %v2461 = vadd.f32 %v2255, %v2355
      %v2462 = vadd.f32 %v2256, %v2360
      %v2463 = vadd.f32 %v2257, %v2363
      %v2464 = vadd.f32 %v2258, %v2368
      %v2465 = vadd.f32 %v2259, %v2371
      %v2466 = vadd.f32 %v2260, %v2376
      %v2467 = vadd.f32 %v2261, %v2379
      %v2468 = vadd.f32 %v2262, %v2384
      %v2469 = vadd.f32 %v2263, %v2387
      %v2470 = vadd.f32 %v2264, %v2392
      %v2471 = vadd.f32 %v2265, %v2395
      %v2472 = vadd.f32 %v2266, %v2400
      %v2473 = vadd.f32 %v2267, %v2403
      %v2474 = vadd.f32 %v2268, %v2408
      %v2475 = vadd.f32 %v2269, %v2411
      %v2476 = vadd.f32 %v2270, %v2416
      %v2477 = vadd.f32 %v2271, %v2419
      %v2478 = vadd.f32 %v2272, %v2424
      %v2479 = vadd.f32 %v2273, %v2427
      %v2480 = vadd.f32 %v2274, %v2432
      %v2481 = vadd.f32 %v2275, %v2435
      %v2482 = vadd.f32 %v2276, %v2440
      %v2483 = vadd.f32 %v2277, %v2443
      %v2484 = vadd.f32 %v2278, %v2448
      %v2485 = vadd.f32 %v2279, %v2451
      %v2487 = vshrl.u32 %v262, 16
      %v2489 = vrot.slane %v2487, 4
      %v2490 = vshll.u32 %v262, 16
      %v2492 = vrot.slane %v2490, 5
      %v2493 = vor.u32 %v2489, %v2492
      %v2494 = vrot.slane %v2493, 4
      %v2496 = vshll.u32 %v263, 16
      %v2498 = vrot.slane %v2496, 5
      %v2499 = vsel %vm268, %v2494, %v2498
      %v2500 = vshrl.u32 %v263, 16
      %v2502 = vrot.slane %v2500, 4
      %v2503 = vor.u32 %v2502, %v2498
      %v2504 = vrot.slane %v2503, 4
      %v2506 = vshll.u32 %v264, 16
      %v2508 = vrot.slane %v2506, 5
      %v2509 = vsel %vm268, %v2504, %v2508
      %s2510 = scalar_lea.vmem %s1, 28
      %v2511 = vld [vmem:[%s2510] sm:$0xf]
      %v2512 = vunpack.c.l.b16 %v2499
      %v2513 = vunpack.c.l.b16 %v2509
      %v2514 = vpack.c.b16 %v2513, %v2512
      %v2516 = vsel %vm703, %v2514, 0
      %v2519 = vsel %vm752, %v2511, 0
      %2521 = vmatprep.subr.bf16.mxu0 0
      %2522 = vmatpush1.bf16.msra.mxu0 %v2519
      %2523 = vmatprep.subr.bf16.mxu0 0
      %2524 = vmatpush1.bf16.msra.mxu0 0
      %2525 = vmatprep.subr.bf16.mxu0 0
      %2526 = vmatpush1.bf16.msra.mxu0 0
      %2527 = vmatprep.subr.bf16.mxu0 0
      %2528 = vmatpush1.bf16.msra.mxu0 0
      %2529 = vmatprep.subr.bf16.mxu0 0
      %2530 = vmatpush1.bf16.msra.mxu0 0
      %2531 = vmatprep.subr.bf16.mxu0 0
      %2532 = vmatpush1.bf16.msra.mxu0 0
      %2533 = vmatprep.subr.bf16.mxu0 0
      %2534 = vmatpush1.bf16.msra.mxu0 0
      %2535 = vmatprep.subr.bf16.mxu0 0
      %2536 = vmatpush1.bf16.msra.mxu0 0
      %2537 = vmatprep.subr.bf16.mxu0 0
      %2538 = vmatpush1.bf16.msra.mxu0 0
      %2539 = vmatprep.subr.bf16.mxu0 0
      %2540 = vmatpush1.bf16.msra.mxu0 0
      %2541 = vmatprep.subr.bf16.mxu0 0
      %2542 = vmatpush1.bf16.msra.mxu0 0
      %2543 = vmatprep.subr.bf16.mxu0 0
      %2544 = vmatpush1.bf16.msra.mxu0 0
      %2545 = vmatprep.subr.bf16.mxu0 0
      %2546 = vmatpush1.bf16.msra.mxu0 0
      %2547 = vmatprep.subr.bf16.mxu0 0
      %2548 = vmatpush1.bf16.msra.mxu0 0
      %2549 = vmatprep.subr.bf16.mxu0 0
      %2550 = vmatpush1.bf16.msra.mxu0 0
      %2551 = vmatprep.subr.bf16.mxu0 0
      %2552 = vmatpush1.bf16.msra.mxu0 0
      %2553 = vmatprep.mubr.bf16.mxu0 0
      %2554 = vmatmul.mubr.bf16.gmra.mrb[0].mxu0 %v711
      %v2555 = vpop.f32.mrb[0].mxu0
      %v2556 = vadd.f32 0.0, %v2555
      %v2557 = vpop.f32.mrb[0].mxu0
      %v2558 = vpop.f32.mrb[0].mxu0
      %v2559 = vadd.f32 0.0, %v2558
      %v2560 = vpop.f32.mrb[0].mxu0
      %2561 = vmatprep.mubr.bf16.mxu0 0
      %2562 = vmatmul.mubr.bf16.gmra.mrb[0].mxu0 %v714
      %v2563 = vpop.f32.mrb[0].mxu0
      %v2564 = vadd.f32 0.0, %v2563
      %v2565 = vpop.f32.mrb[0].mxu0
      %v2566 = vpop.f32.mrb[0].mxu0
      %v2567 = vadd.f32 0.0, %v2566
      %v2568 = vpop.f32.mrb[0].mxu0
      %2569 = vmatprep.mubr.bf16.mxu0 0
      %2570 = vmatmul.mubr.bf16.gmra.mrb[0].mxu0 %v717
      %v2571 = vpop.f32.mrb[0].mxu0
      %v2572 = vadd.f32 0.0, %v2571
      %v2573 = vpop.f32.mrb[0].mxu0
      %v2574 = vpop.f32.mrb[0].mxu0
      %v2575 = vadd.f32 0.0, %v2574
      %v2576 = vpop.f32.mrb[0].mxu0
      %2577 = vmatprep.mubr.bf16.mxu0 0
      %2578 = vmatmul.mubr.bf16.gmra.mrb[0].mxu0 %v720
      %v2579 = vpop.f32.mrb[0].mxu0
      %v2580 = vadd.f32 0.0, %v2579
      %v2581 = vpop.f32.mrb[0].mxu0
      %v2582 = vpop.f32.mrb[0].mxu0
      %v2583 = vadd.f32 0.0, %v2582
      %v2584 = vpop.f32.mrb[0].mxu0
      %2585 = vmatprep.mubr.bf16.mxu0 0
      %2586 = vmatmul.mubr.bf16.gmra.mrb[0].mxu0 %v723
      %v2587 = vpop.f32.mrb[0].mxu0
      %v2588 = vadd.f32 0.0, %v2587
      %v2589 = vpop.f32.mrb[0].mxu0
      %v2590 = vpop.f32.mrb[0].mxu0
      %v2591 = vadd.f32 0.0, %v2590
      %v2592 = vpop.f32.mrb[0].mxu0
      %2593 = vmatprep.mubr.bf16.mxu0 0
      %2594 = vmatmul.mubr.bf16.gmra.mrb[0].mxu0 %v726
      %v2595 = vpop.f32.mrb[0].mxu0
      %v2596 = vadd.f32 0.0, %v2595
      %v2597 = vpop.f32.mrb[0].mxu0
      %v2598 = vpop.f32.mrb[0].mxu0
      %v2599 = vadd.f32 0.0, %v2598
      %v2600 = vpop.f32.mrb[0].mxu0
      %2601 = vmatprep.mubr.bf16.mxu0 0
      %2602 = vmatmul.mubr.bf16.gmra.mrb[0].mxu0 %v729
      %v2603 = vpop.f32.mrb[0].mxu0
      %v2604 = vadd.f32 0.0, %v2603
      %v2605 = vpop.f32.mrb[0].mxu0
      %v2606 = vpop.f32.mrb[0].mxu0
      %v2607 = vadd.f32 0.0, %v2606
      %v2608 = vpop.f32.mrb[0].mxu0
      %2609 = vmatprep.mubr.bf16.mxu0 0
      %2610 = vmatmul.mubr.bf16.gmra.mrb[0].mxu0 %v732
      %v2611 = vpop.f32.mrb[0].mxu0
      %v2612 = vadd.f32 0.0, %v2611
      %v2613 = vpop.f32.mrb[0].mxu0
      %v2614 = vpop.f32.mrb[0].mxu0
      %v2615 = vadd.f32 0.0, %v2614
      %v2616 = vpop.f32.mrb[0].mxu0
      %2617 = vmatprep.mubr.bf16.mxu0 0
      %2618 = vmatmul.mubr.bf16.gmra.mrb[0].mxu0 %v735
      %v2619 = vpop.f32.mrb[0].mxu0
      %v2620 = vadd.f32 0.0, %v2619
      %v2621 = vpop.f32.mrb[0].mxu0
      %v2622 = vpop.f32.mrb[0].mxu0
      %v2623 = vadd.f32 0.0, %v2622
      %v2624 = vpop.f32.mrb[0].mxu0
      %2625 = vmatprep.mubr.bf16.mxu0 0
      %2626 = vmatmul.mubr.bf16.gmra.mrb[0].mxu0 %v738
      %v2627 = vpop.f32.mrb[0].mxu0
      %v2628 = vadd.f32 0.0, %v2627
      %v2629 = vpop.f32.mrb[0].mxu0
      %v2630 = vpop.f32.mrb[0].mxu0
      %v2631 = vadd.f32 0.0, %v2630
      %v2632 = vpop.f32.mrb[0].mxu0
      %2633 = vmatprep.mubr.bf16.mxu0 0
      %2634 = vmatmul.mubr.bf16.gmra.mrb[0].mxu0 %v741
      %v2635 = vpop.f32.mrb[0].mxu0
      %v2636 = vadd.f32 0.0, %v2635
      %v2637 = vpop.f32.mrb[0].mxu0
      %v2638 = vpop.f32.mrb[0].mxu0
      %v2639 = vadd.f32 0.0, %v2638
      %v2640 = vpop.f32.mrb[0].mxu0
      %2641 = vmatprep.mubr.bf16.mxu0 0
      %2642 = vmatmul.mubr.bf16.gmra.mrb[0].mxu0 %v744
      %v2643 = vpop.f32.mrb[0].mxu0
      %v2644 = vadd.f32 0.0, %v2643
      %v2645 = vpop.f32.mrb[0].mxu0
      %v2646 = vpop.f32.mrb[0].mxu0
      %v2647 = vadd.f32 0.0, %v2646
      %v2648 = vpop.f32.mrb[0].mxu0
      %2649 = vmatprep.mubr.bf16.mxu0 0
      %2650 = vmatmul.mubr.bf16.gmra.mrb[0].mxu0 %v747
      %v2651 = vpop.f32.mrb[0].mxu0
      %v2652 = vadd.f32 0.0, %v2651
      %v2653 = vpop.f32.mrb[0].mxu0
      %v2654 = vpop.f32.mrb[0].mxu0
      %v2655 = vadd.f32 0.0, %v2654
      %v2656 = vpop.f32.mrb[0].mxu0
      %2657 = vmatprep.mubr.bf16.mxu0 0
      %2658 = vmatmul.mubr.bf16.gmra.mrb[0].mxu0 %v750
      %v2659 = vpop.f32.mrb[0].mxu0
      %v2660 = vadd.f32 0.0, %v2659
      %v2661 = vpop.f32.mrb[0].mxu0
      %v2662 = vpop.f32.mrb[0].mxu0
      %v2663 = vadd.f32 0.0, %v2662
      %v2664 = vpop.f32.mrb[0].mxu0
      %2665 = vmatprep.mubr.bf16.mxu0 0
      %2666 = vmatmul.mubr.bf16.gmra.mrb[0].mxu0 %v1870
      %v2667 = vpop.f32.mrb[0].mxu0
      %v2668 = vadd.f32 0.0, %v2667
      %v2669 = vpop.f32.mrb[0].mxu0
      %v2670 = vpop.f32.mrb[0].mxu0
      %v2671 = vadd.f32 0.0, %v2670
      %v2672 = vpop.f32.mrb[0].mxu0
      %2673 = vmatprep.mubr.bf16.mxu0 0
      %2674 = vmatmul.mubr.bf16.gmra.mrb[0].mxu0 %v2516
      %v2675 = vpop.f32.mrb[0].mxu0
      %v2676 = vadd.f32 0.0, %v2675
      %v2677 = vpop.f32.mrb[0].mxu0
      %v2678 = vpop.f32.mrb[0].mxu0
      %v2679 = vadd.f32 0.0, %v2678
      %v2680 = vpop.f32.mrb[0].mxu0
      %2681 = vdwg.mxu0
      %v2682 = vadd.f32 %v2454, %v2556
      %v2683 = vadd.f32 %v2455, %v2559
      %v2684 = vadd.f32 %v2456, %v2564
      %v2685 = vadd.f32 %v2457, %v2567
      %v2686 = vadd.f32 %v2458, %v2572
      %v2687 = vadd.f32 %v2459, %v2575
      %v2688 = vadd.f32 %v2460, %v2580
      %v2689 = vadd.f32 %v2461, %v2583
      %v2690 = vadd.f32 %v2462, %v2588
      %v2691 = vadd.f32 %v2463, %v2591
      %v2692 = vadd.f32 %v2464, %v2596
      %v2693 = vadd.f32 %v2465, %v2599
      %v2694 = vadd.f32 %v2466, %v2604
      %v2695 = vadd.f32 %v2467, %v2607
      %v2696 = vadd.f32 %v2468, %v2612
      %v2697 = vadd.f32 %v2469, %v2615
      %v2698 = vadd.f32 %v2470, %v2620
      %v2699 = vadd.f32 %v2471, %v2623
      %v2700 = vadd.f32 %v2472, %v2628
      %v2701 = vadd.f32 %v2473, %v2631
      %v2702 = vadd.f32 %v2474, %v2636
      %v2703 = vadd.f32 %v2475, %v2639
      %v2704 = vadd.f32 %v2476, %v2644
      %v2705 = vadd.f32 %v2477, %v2647
      %v2706 = vadd.f32 %v2478, %v2652
      %v2707 = vadd.f32 %v2479, %v2655
      %v2708 = vadd.f32 %v2480, %v2660
      %v2709 = vadd.f32 %v2481, %v2663
      %v2710 = vadd.f32 %v2482, %v2668
      %v2711 = vadd.f32 %v2483, %v2671
      %v2712 = vadd.f32 %v2484, %v2676
      %v2713 = vadd.f32 %v2485, %v2679
      %v2715 = vrot.slane %v262, 5
      %v2716 = vrot.slane %v2715, 4
      %v2717 = vrot.slane %v263, 5
      %v2718 = vsel %vm1227, %v2716, %v2717
      %v2719 = vrot.slane %v2717, 4
      %v2720 = vrot.slane %v264, 5
      %v2721 = vsel %vm1227, %v2719, %v2720
      %s2722 = scalar_lea.vmem %s1, 32
      %v2723 = vld [vmem:[%s2722] sm:$0xf]
      %v2724 = vunpack.c.l.b16 %v2718
      %v2725 = vunpack.c.l.b16 %v2721
      %v2726 = vpack.c.b16 %v2725, %v2724
      %v2728 = vsel %vm703, %v2726, 0
      %v2731 = vsel %vm752, %v2723, 0
      %2733 = vmatprep.subr.bf16.mxu0 0
      %2734 = vmatpush1.bf16.msra.mxu0 %v2731
      %2735 = vmatprep.subr.bf16.mxu0 0
      %2736 = vmatpush1.bf16.msra.mxu0 0
      %2737 = vmatprep.subr.bf16.mxu0 0
      %2738 = vmatpush1.bf16.msra.mxu0 0
      %2739 = vmatprep.subr.bf16.mxu0 0
      %2740 = vmatpush1.bf16.msra.mxu0 0
      %2741 = vmatprep.subr.bf16.mxu0 0
      %2742 = vmatpush1.bf16.msra.mxu0 0
      %2743 = vmatprep.subr.bf16.mxu0 0
      %2744 = vmatpush1.bf16.msra.mxu0 0
      %2745 = vmatprep.subr.bf16.mxu0 0
      %2746 = vmatpush1.bf16.msra.mxu0 0
      %2747 = vmatprep.subr.bf16.mxu0 0
      %2748 = vmatpush1.bf16.msra.mxu0 0
      %2749 = vmatprep.subr.bf16.mxu0 0
      %2750 = vmatpush1.bf16.msra.mxu0 0
      %2751 = vmatprep.subr.bf16.mxu0 0
      %2752 = vmatpush1.bf16.msra.mxu0 0
      %2753 = vmatprep.subr.bf16.mxu0 0
      %2754 = vmatpush1.bf16.msra.mxu0 0
      %2755 = vmatprep.subr.bf16.mxu0 0
      %2756 = vmatpush1.bf16.msra.mxu0 0
      %2757 = vmatprep.subr.bf16.mxu0 0
      %2758 = vmatpush1.bf16.msra.mxu0 0
      %2759 = vmatprep.subr.bf16.mxu0 0
      %2760 = vmatpush1.bf16.msra.mxu0 0
      %2761 = vmatprep.subr.bf16.mxu0 0
      %2762 = vmatpush1.bf16.msra.mxu0 0
      %2763 = vmatprep.subr.bf16.mxu0 0
      %2764 = vmatpush1.bf16.msra.mxu0 0
      %2765 = vmatprep.mubr.bf16.mxu0 0
      %2766 = vmatmul.mubr.bf16.gmra.mrb[0].mxu0 %v1397
      %v2767 = vpop.f32.mrb[0].mxu0
      %v2768 = vadd.f32 0.0, %v2767
      %v2769 = vpop.f32.mrb[0].mxu0
      %v2770 = vpop.f32.mrb[0].mxu0
      %v2771 = vadd.f32 0.0, %v2770
      %v2772 = vpop.f32.mrb[0].mxu0
      %2773 = vmatprep.mubr.bf16.mxu0 0
      %2774 = vmatmul.mubr.bf16.gmra.mrb[0].mxu0 %v1400
      %v2775 = vpop.f32.mrb[0].mxu0
      %v2776 = vadd.f32 0.0, %v2775
      %v2777 = vpop.f32.mrb[0].mxu0
      %v2778 = vpop.f32.mrb[0].mxu0
      %v2779 = vadd.f32 0.0, %v2778
      %v2780 = vpop.f32.mrb[0].mxu0
      %2781 = vmatprep.mubr.bf16.mxu0 0
      %2782 = vmatmul.mubr.bf16.gmra.mrb[0].mxu0 %v1403
      %v2783 = vpop.f32.mrb[0].mxu0
      %v2784 = vadd.f32 0.0, %v2783
      %v2785 = vpop.f32.mrb[0].mxu0
      %v2786 = vpop.f32.mrb[0].mxu0
      %v2787 = vadd.f32 0.0, %v2786
      %v2788 = vpop.f32.mrb[0].mxu0
      %2789 = vmatprep.mubr.bf16.mxu0 0
      %2790 = vmatmul.mubr.bf16.gmra.mrb[0].mxu0 %v1406
      %v2791 = vpop.f32.mrb[0].mxu0
      %v2792 = vadd.f32 0.0, %v2791
      %v2793 = vpop.f32.mrb[0].mxu0
      %v2794 = vpop.f32.mrb[0].mxu0
      %v2795 = vadd.f32 0.0, %v2794
      %v2796 = vpop.f32.mrb[0].mxu0
      %2797 = vmatprep.mubr.bf16.mxu0 0
      %2798 = vmatmul.mubr.bf16.gmra.mrb[0].mxu0 %v1409
      %v2799 = vpop.f32.mrb[0].mxu0
      %v2800 = vadd.f32 0.0, %v2799
      %v2801 = vpop.f32.mrb[0].mxu0
      %v2802 = vpop.f32.mrb[0].mxu0
      %v2803 = vadd.f32 0.0, %v2802
      %v2804 = vpop.f32.mrb[0].mxu0
      %2805 = vmatprep.mubr.bf16.mxu0 0
      %2806 = vmatmul.mubr.bf16.gmra.mrb[0].mxu0 %v1412
      %v2807 = vpop.f32.mrb[0].mxu0
      %v2808 = vadd.f32 0.0, %v2807
      %v2809 = vpop.f32.mrb[0].mxu0
      %v2810 = vpop.f32.mrb[0].mxu0
      %v2811 = vadd.f32 0.0, %v2810
      %v2812 = vpop.f32.mrb[0].mxu0
      %2813 = vmatprep.mubr.bf16.mxu0 0
      %2814 = vmatmul.mubr.bf16.gmra.mrb[0].mxu0 %v1415
      %v2815 = vpop.f32.mrb[0].mxu0
      %v2816 = vadd.f32 0.0, %v2815
      %v2817 = vpop.f32.mrb[0].mxu0
      %v2818 = vpop.f32.mrb[0].mxu0
      %v2819 = vadd.f32 0.0, %v2818
      %v2820 = vpop.f32.mrb[0].mxu0
      %2821 = vmatprep.mubr.bf16.mxu0 0
      %2822 = vmatmul.mubr.bf16.gmra.mrb[0].mxu0 %v1418
      %v2823 = vpop.f32.mrb[0].mxu0
      %v2824 = vadd.f32 0.0, %v2823
      %v2825 = vpop.f32.mrb[0].mxu0
      %v2826 = vpop.f32.mrb[0].mxu0
      %v2827 = vadd.f32 0.0, %v2826
      %v2828 = vpop.f32.mrb[0].mxu0
      %2829 = vmatprep.mubr.bf16.mxu0 0
      %2830 = vmatmul.mubr.bf16.gmra.mrb[0].mxu0 %v1421
      %v2831 = vpop.f32.mrb[0].mxu0
      %v2832 = vadd.f32 0.0, %v2831
      %v2833 = vpop.f32.mrb[0].mxu0
      %v2834 = vpop.f32.mrb[0].mxu0
      %v2835 = vadd.f32 0.0, %v2834
      %v2836 = vpop.f32.mrb[0].mxu0
      %2837 = vmatprep.mubr.bf16.mxu0 0
      %2838 = vmatmul.mubr.bf16.gmra.mrb[0].mxu0 %v1424
      %v2839 = vpop.f32.mrb[0].mxu0
      %v2840 = vadd.f32 0.0, %v2839
      %v2841 = vpop.f32.mrb[0].mxu0
      %v2842 = vpop.f32.mrb[0].mxu0
      %v2843 = vadd.f32 0.0, %v2842
      %v2844 = vpop.f32.mrb[0].mxu0
      %2845 = vmatprep.mubr.bf16.mxu0 0
      %2846 = vmatmul.mubr.bf16.gmra.mrb[0].mxu0 %v1427
      %v2847 = vpop.f32.mrb[0].mxu0
      %v2848 = vadd.f32 0.0, %v2847
      %v2849 = vpop.f32.mrb[0].mxu0
      %v2850 = vpop.f32.mrb[0].mxu0
      %v2851 = vadd.f32 0.0, %v2850
      %v2852 = vpop.f32.mrb[0].mxu0
      %2853 = vmatprep.mubr.bf16.mxu0 0
      %2854 = vmatmul.mubr.bf16.gmra.mrb[0].mxu0 %v1430
      %v2855 = vpop.f32.mrb[0].mxu0
      %v2856 = vadd.f32 0.0, %v2855
      %v2857 = vpop.f32.mrb[0].mxu0
      %v2858 = vpop.f32.mrb[0].mxu0
      %v2859 = vadd.f32 0.0, %v2858
      %v2860 = vpop.f32.mrb[0].mxu0
      %2861 = vmatprep.mubr.bf16.mxu0 0
      %2862 = vmatmul.mubr.bf16.gmra.mrb[0].mxu0 %v1433
      %v2863 = vpop.f32.mrb[0].mxu0
      %v2864 = vadd.f32 0.0, %v2863
      %v2865 = vpop.f32.mrb[0].mxu0
      %v2866 = vpop.f32.mrb[0].mxu0
      %v2867 = vadd.f32 0.0, %v2866
      %v2868 = vpop.f32.mrb[0].mxu0
      %2869 = vmatprep.mubr.bf16.mxu0 0
      %2870 = vmatmul.mubr.bf16.gmra.mrb[0].mxu0 %v1436
      %v2871 = vpop.f32.mrb[0].mxu0
      %v2872 = vadd.f32 0.0, %v2871
      %v2873 = vpop.f32.mrb[0].mxu0
      %v2874 = vpop.f32.mrb[0].mxu0
      %v2875 = vadd.f32 0.0, %v2874
      %v2876 = vpop.f32.mrb[0].mxu0
      %2877 = vmatprep.mubr.bf16.mxu0 0
      %2878 = vmatmul.mubr.bf16.gmra.mrb[0].mxu0 %v2082
      %v2879 = vpop.f32.mrb[0].mxu0
      %v2880 = vadd.f32 0.0, %v2879
      %v2881 = vpop.f32.mrb[0].mxu0
      %v2882 = vpop.f32.mrb[0].mxu0
      %v2883 = vadd.f32 0.0, %v2882
      %v2884 = vpop.f32.mrb[0].mxu0
      %2885 = vmatprep.mubr.bf16.mxu0 0
      %2886 = vmatmul.mubr.bf16.gmra.mrb[0].mxu0 %v2728
      %v2887 = vpop.f32.mrb[0].mxu0
      %v2888 = vadd.f32 0.0, %v2887
      %v2889 = vpop.f32.mrb[0].mxu0
      %v2890 = vpop.f32.mrb[0].mxu0
      %v2891 = vadd.f32 0.0, %v2890
      %v2892 = vpop.f32.mrb[0].mxu0
      %2893 = vdwg.mxu0
      %v2894 = vadd.f32 %v2682, %v2768
      %v2895 = vadd.f32 %v2683, %v2771
      %v2896 = vadd.f32 %v2684, %v2776
      %v2897 = vadd.f32 %v2685, %v2779
      %v2898 = vadd.f32 %v2686, %v2784
      %v2899 = vadd.f32 %v2687, %v2787
      %v2900 = vadd.f32 %v2688, %v2792
      %v2901 = vadd.f32 %v2689, %v2795
      %v2902 = vadd.f32 %v2690, %v2800
      %v2903 = vadd.f32 %v2691, %v2803
      %v2904 = vadd.f32 %v2692, %v2808
      %v2905 = vadd.f32 %v2693, %v2811
      %v2906 = vadd.f32 %v2694, %v2816
      %v2907 = vadd.f32 %v2695, %v2819
      %v2908 = vadd.f32 %v2696, %v2824
      %v2909 = vadd.f32 %v2697, %v2827
      %v2910 = vadd.f32 %v2698, %v2832
      %v2911 = vadd.f32 %v2699, %v2835
      %v2912 = vadd.f32 %v2700, %v2840
      %v2913 = vadd.f32 %v2701, %v2843
      %v2914 = vadd.f32 %v2702, %v2848
      %v2915 = vadd.f32 %v2703, %v2851
      %v2916 = vadd.f32 %v2704, %v2856
      %v2917 = vadd.f32 %v2705, %v2859
      %v2918 = vadd.f32 %v2706, %v2864
      %v2919 = vadd.f32 %v2707, %v2867
      %v2920 = vadd.f32 %v2708, %v2872
      %v2921 = vadd.f32 %v2709, %v2875
      %v2922 = vadd.f32 %v2710, %v2880
      %v2923 = vadd.f32 %v2711, %v2883
      %v2924 = vadd.f32 %v2712, %v2888
      %v2925 = vadd.f32 %v2713, %v2891
      %v2926 = vld [vmem:[%s2] sm:$0x1]
      %v2928 = vlaneseq
      %v2929 = vshrl.u32 %v2928, 7
      %v2930 = vsub.s32 0, %v2929
      %v2931 = vrot.slane %v2926, %v2930
      %v2933 = vadd.f32 %v2894, %v2931
      %v2934 = vadd.f32 %v2895, %v2931
      %v2935 = vadd.f32 %v2896, %v2931
      %v2936 = vadd.f32 %v2897, %v2931
      %v2937 = vadd.f32 %v2898, %v2931
      %v2938 = vadd.f32 %v2899, %v2931
      %v2939 = vadd.f32 %v2900, %v2931
      %v2940 = vadd.f32 %v2901, %v2931
      %v2941 = vadd.f32 %v2902, %v2931
      %v2942 = vadd.f32 %v2903, %v2931
      %v2943 = vadd.f32 %v2904, %v2931
      %v2944 = vadd.f32 %v2905, %v2931
      %v2945 = vadd.f32 %v2906, %v2931
      %v2946 = vadd.f32 %v2907, %v2931
      %v2947 = vadd.f32 %v2908, %v2931
      %v2948 = vadd.f32 %v2909, %v2931
      %v2949 = vadd.f32 %v2910, %v2931
      %v2950 = vadd.f32 %v2911, %v2931
      %v2951 = vadd.f32 %v2912, %v2931
      %v2952 = vadd.f32 %v2913, %v2931
      %v2953 = vadd.f32 %v2914, %v2931
      %v2954 = vadd.f32 %v2915, %v2931
      %v2955 = vadd.f32 %v2916, %v2931
      %v2956 = vadd.f32 %v2917, %v2931
      %v2957 = vadd.f32 %v2918, %v2931
      %v2958 = vadd.f32 %v2919, %v2931
      %v2959 = vadd.f32 %v2920, %v2931
      %v2960 = vadd.f32 %v2921, %v2931
      %v2961 = vadd.f32 %v2922, %v2931
      %v2962 = vadd.f32 %v2923, %v2931
      %v2963 = vadd.f32 %v2924, %v2931
      %v2964 = vadd.f32 %v2925, %v2931
      %vm2965 = vcmask 31744
      %2966 = vst.msk [vmem:[%s204] sm:$0xff] %vm2965, %v2933
      %2967 = vst.msk [vmem:[%s204 + $0x8] sm:$0xff] %vm2965, %v2934
      %2968 = vst.msk [vmem:[%s204 + $0x10] sm:$0xff] %vm2965, %v2935
      %2969 = vst.msk [vmem:[%s204 + $0x18] sm:$0xff] %vm2965, %v2936
      %2970 = vst.msk [vmem:[%s204 + $0x20] sm:$0xff] %vm2965, %v2937
      %2971 = vst.msk [vmem:[%s204 + $0x28] sm:$0xff] %vm2965, %v2938
      %2972 = vst.msk [vmem:[%s204 + $0x30] sm:$0xff] %vm2965, %v2939
      %2973 = vst.msk [vmem:[%s204 + $0x38] sm:$0xff] %vm2965, %v2940
      %2974 = vst.msk [vmem:[%s204 + $0x40] sm:$0xff] %vm2965, %v2941
      %2975 = vst.msk [vmem:[%s204 + $0x48] sm:$0xff] %vm2965, %v2942
      %2976 = vst.msk [vmem:[%s204 + $0x50] sm:$0xff] %vm2965, %v2943
      %2977 = vst.msk [vmem:[%s204 + $0x58] sm:$0xff] %vm2965, %v2944
      %2978 = vst.msk [vmem:[%s204 + $0x60] sm:$0xff] %vm2965, %v2945
      %2979 = vst.msk [vmem:[%s204 + $0x68] sm:$0xff] %vm2965, %v2946
      %2980 = vst.msk [vmem:[%s204 + $0x70] sm:$0xff] %vm2965, %v2947
      %2981 = vst.msk [vmem:[%s204 + $0x78] sm:$0xff] %vm2965, %v2948
      %2982 = vst.msk [vmem:[%s204 + $0x80] sm:$0xff] %vm2965, %v2949
      %2983 = vst.msk [vmem:[%s204 + $0x88] sm:$0xff] %vm2965, %v2950
      %2984 = vst.msk [vmem:[%s204 + $0x90] sm:$0xff] %vm2965, %v2951
      %2985 = vst.msk [vmem:[%s204 + $0x98] sm:$0xff] %vm2965, %v2952
      %2986 = vst.msk [vmem:[%s204 + $0xa0] sm:$0xff] %vm2965, %v2953
      %2987 = vst.msk [vmem:[%s204 + $0xa8] sm:$0xff] %vm2965, %v2954
      %2988 = vst.msk [vmem:[%s204 + $0xb0] sm:$0xff] %vm2965, %v2955
      %2989 = vst.msk [vmem:[%s204 + $0xb8] sm:$0xff] %vm2965, %v2956
      %2990 = vst.msk [vmem:[%s204 + $0xc0] sm:$0xff] %vm2965, %v2957
      %2991 = vst.msk [vmem:[%s204 + $0xc8] sm:$0xff] %vm2965, %v2958
      %2992 = vst.msk [vmem:[%s204 + $0xd0] sm:$0xff] %vm2965, %v2959
      %2993 = vst.msk [vmem:[%s204 + $0xd8] sm:$0xff] %vm2965, %v2960
      %2994 = vst.msk [vmem:[%s204 + $0xe0] sm:$0xff] %vm2965, %v2961
      %2995 = vst.msk [vmem:[%s204 + $0xe8] sm:$0xff] %vm2965, %v2962
      %2996 = vst.msk [vmem:[%s204 + $0xf0] sm:$0xff] %vm2965, %v2963
      %2997 = vst.msk [vmem:[%s204 + $0xf8] sm:$0xff] %vm2965, %v2964
      %v2998 = vsel %vm2965, %v2933, 0.0
      %v2999 = vsel %vm2965, %v2934, 0.0
      %v3000 = vadd.f32 %v2998, %v2999
      %v3001 = vsel %vm2965, %v2935, 0.0
      %v3002 = vadd.f32 %v3000, %v3001
      %v3003 = vsel %vm2965, %v2936, 0.0
      %v3004 = vadd.f32 %v3002, %v3003
      %v3005 = vsel %vm2965, %v2937, 0.0
      %v3006 = vadd.f32 %v3004, %v3005
      %v3007 = vsel %vm2965, %v2938, 0.0
      %v3008 = vadd.f32 %v3006, %v3007
      %v3009 = vsel %vm2965, %v2939, 0.0
      %v3010 = vadd.f32 %v3008, %v3009
      %v3011 = vsel %vm2965, %v2940, 0.0
      %v3012 = vadd.f32 %v3010, %v3011
      %v3013 = vsel %vm2965, %v2941, 0.0
      %v3014 = vadd.f32 %v3012, %v3013
      %v3015 = vsel %vm2965, %v2942, 0.0
      %v3016 = vadd.f32 %v3014, %v3015
      %v3017 = vsel %vm2965, %v2943, 0.0
      %v3018 = vadd.f32 %v3016, %v3017
      %v3019 = vsel %vm2965, %v2944, 0.0
      %v3020 = vadd.f32 %v3018, %v3019
      %v3021 = vsel %vm2965, %v2945, 0.0
      %v3022 = vadd.f32 %v3020, %v3021
      %v3023 = vsel %vm2965, %v2946, 0.0
      %v3024 = vadd.f32 %v3022, %v3023
      %v3025 = vsel %vm2965, %v2947, 0.0
      %v3026 = vadd.f32 %v3024, %v3025
      %v3027 = vsel %vm2965, %v2948, 0.0
      %v3028 = vadd.f32 %v3026, %v3027
      %v3029 = vsel %vm2965, %v2949, 0.0
      %v3030 = vadd.f32 %v3028, %v3029
      %v3031 = vsel %vm2965, %v2950, 0.0
      %v3032 = vadd.f32 %v3030, %v3031
      %v3033 = vsel %vm2965, %v2951, 0.0
      %v3034 = vadd.f32 %v3032, %v3033
      %v3035 = vsel %vm2965, %v2952, 0.0
      %v3036 = vadd.f32 %v3034, %v3035
      %v3037 = vsel %vm2965, %v2953, 0.0
      %v3038 = vadd.f32 %v3036, %v3037
      %v3039 = vsel %vm2965, %v2954, 0.0
      %v3040 = vadd.f32 %v3038, %v3039
      %v3041 = vsel %vm2965, %v2955, 0.0
      %v3042 = vadd.f32 %v3040, %v3041
      %v3043 = vsel %vm2965, %v2956, 0.0
      %v3044 = vadd.f32 %v3042, %v3043
      %v3045 = vsel %vm2965, %v2957, 0.0
      %v3046 = vadd.f32 %v3044, %v3045
      %v3047 = vsel %vm2965, %v2958, 0.0
      %v3048 = vadd.f32 %v3046, %v3047
      %v3049 = vsel %vm2965, %v2959, 0.0
      %v3050 = vadd.f32 %v3048, %v3049
      %v3051 = vsel %vm2965, %v2960, 0.0
      %v3052 = vadd.f32 %v3050, %v3051
      %v3053 = vsel %vm2965, %v2961, 0.0
      %v3054 = vadd.f32 %v3052, %v3053
      %v3055 = vsel %vm2965, %v2962, 0.0
      %v3056 = vadd.f32 %v3054, %v3055
      %v3057 = vsel %vm2965, %v2963, 0.0
      %v3058 = vadd.f32 %v3056, %v3057
      %v3059 = vsel %vm2965, %v2964, 0.0
      %v3060 = vadd.f32 %v3058, %v3059
      %v3061 = vrot.slane %v3060, 4
      %v3062 = vadd.f32 %v3060, %v3061
      %v3063 = vrot.slane %v3062, 2
      %v3064 = vadd.f32 %v3062, %v3063
      %v3065 = vrot.slane %v3064, 1
      %v3066 = vadd.f32 %v3064, %v3065
      %v3067 = vmul.f32 %v2933, %v2933
      %v3068 = vmul.f32 %v2934, %v2934
      %v3069 = vmul.f32 %v2935, %v2935
      %v3070 = vmul.f32 %v2936, %v2936
      %v3071 = vmul.f32 %v2937, %v2937
      %v3072 = vmul.f32 %v2938, %v2938
      %v3073 = vmul.f32 %v2939, %v2939
      %v3074 = vmul.f32 %v2940, %v2940
      %v3075 = vmul.f32 %v2941, %v2941
      %v3076 = vmul.f32 %v2942, %v2942
      %v3077 = vmul.f32 %v2943, %v2943
      %v3078 = vmul.f32 %v2944, %v2944
      %v3079 = vmul.f32 %v2945, %v2945
      %v3080 = vmul.f32 %v2946, %v2946
      %v3081 = vmul.f32 %v2947, %v2947
      %v3082 = vmul.f32 %v2948, %v2948
      %v3083 = vmul.f32 %v2949, %v2949
      %v3084 = vmul.f32 %v2950, %v2950
      %v3085 = vmul.f32 %v2951, %v2951
      %v3086 = vmul.f32 %v2952, %v2952
      %v3087 = vmul.f32 %v2953, %v2953
      %v3088 = vmul.f32 %v2954, %v2954
      %v3089 = vmul.f32 %v2955, %v2955
      %v3090 = vmul.f32 %v2956, %v2956
      %v3091 = vmul.f32 %v2957, %v2957
      %v3092 = vmul.f32 %v2958, %v2958
      %v3093 = vmul.f32 %v2959, %v2959
      %v3094 = vmul.f32 %v2960, %v2960
      %v3095 = vmul.f32 %v2961, %v2961
      %v3096 = vmul.f32 %v2962, %v2962
      %v3097 = vmul.f32 %v2963, %v2963
      %v3098 = vmul.f32 %v2964, %v2964
      %v3099 = vsel %vm2965, %v3067, 0.0
      %v3100 = vsel %vm2965, %v3068, 0.0
      %v3101 = vadd.f32 %v3099, %v3100
      %v3102 = vsel %vm2965, %v3069, 0.0
      %v3103 = vadd.f32 %v3101, %v3102
      %v3104 = vsel %vm2965, %v3070, 0.0
      %v3105 = vadd.f32 %v3103, %v3104
      %v3106 = vsel %vm2965, %v3071, 0.0
      %v3107 = vadd.f32 %v3105, %v3106
      %v3108 = vsel %vm2965, %v3072, 0.0
      %v3109 = vadd.f32 %v3107, %v3108
      %v3110 = vsel %vm2965, %v3073, 0.0
      %v3111 = vadd.f32 %v3109, %v3110
      %v3112 = vsel %vm2965, %v3074, 0.0
      %v3113 = vadd.f32 %v3111, %v3112
      %v3114 = vsel %vm2965, %v3075, 0.0
      %v3115 = vadd.f32 %v3113, %v3114
      %v3116 = vsel %vm2965, %v3076, 0.0
      %v3117 = vadd.f32 %v3115, %v3116
      %v3118 = vsel %vm2965, %v3077, 0.0
      %v3119 = vadd.f32 %v3117, %v3118
      %v3120 = vsel %vm2965, %v3078, 0.0
      %v3121 = vadd.f32 %v3119, %v3120
      %v3122 = vsel %vm2965, %v3079, 0.0
      %v3123 = vadd.f32 %v3121, %v3122
      %v3124 = vsel %vm2965, %v3080, 0.0
      %v3125 = vadd.f32 %v3123, %v3124
      %v3126 = vsel %vm2965, %v3081, 0.0
      %v3127 = vadd.f32 %v3125, %v3126
      %v3128 = vsel %vm2965, %v3082, 0.0
      %v3129 = vadd.f32 %v3127, %v3128
      %v3130 = vsel %vm2965, %v3083, 0.0
      %v3131 = vadd.f32 %v3129, %v3130
      %v3132 = vsel %vm2965, %v3084, 0.0
      %v3133 = vadd.f32 %v3131, %v3132
      %v3134 = vsel %vm2965, %v3085, 0.0
      %v3135 = vadd.f32 %v3133, %v3134
      %v3136 = vsel %vm2965, %v3086, 0.0
      %v3137 = vadd.f32 %v3135, %v3136
      %v3138 = vsel %vm2965, %v3087, 0.0
      %v3139 = vadd.f32 %v3137, %v3138
      %v3140 = vsel %vm2965, %v3088, 0.0
      %v3141 = vadd.f32 %v3139, %v3140
      %v3142 = vsel %vm2965, %v3089, 0.0
      %v3143 = vadd.f32 %v3141, %v3142
      %v3144 = vsel %vm2965, %v3090, 0.0
      %v3145 = vadd.f32 %v3143, %v3144
      %v3146 = vsel %vm2965, %v3091, 0.0
      %v3147 = vadd.f32 %v3145, %v3146
      %v3148 = vsel %vm2965, %v3092, 0.0
      %v3149 = vadd.f32 %v3147, %v3148
      %v3150 = vsel %vm2965, %v3093, 0.0
      %v3151 = vadd.f32 %v3149, %v3150
      %v3152 = vsel %vm2965, %v3094, 0.0
      %v3153 = vadd.f32 %v3151, %v3152
      %v3154 = vsel %vm2965, %v3095, 0.0
      %v3155 = vadd.f32 %v3153, %v3154
      %v3156 = vsel %vm2965, %v3096, 0.0
      %v3157 = vadd.f32 %v3155, %v3156
      %v3158 = vsel %vm2965, %v3097, 0.0
      %v3159 = vadd.f32 %v3157, %v3158
      %v3160 = vsel %vm2965, %v3098, 0.0
      %v3161 = vadd.f32 %v3159, %v3160
      %v3162 = vrot.slane %v3161, 4
      %v3163 = vadd.f32 %v3161, %v3162
      %v3164 = vrot.slane %v3163, 2
      %v3165 = vadd.f32 %v3163, %v3164
      %v3166 = vrot.slane %v3165, 1
      %v3167 = vadd.f32 %v3165, %v3166
      %vm3168 = vcmask 1040384
      %v3169 = vsel %vm3168, %v3066, %v3167
      %vm3170 = vcmask 25600
      %3171 = vst.msk [vmem:[%s209] sm:$0x3] %vm3170, %v3169
      %s3172 = smul.u32 32, %s16
      %p3173 = scmp.lt.s32.totalorder %s3172, 63
      %s3174 = scalar_select %p3173, %s3172, 63
      %s3175 = smul.addr %s3174, 8
      %s3176 = scalar_lea.vmem %s3, %s3175
      %p3177 = scmp.lt.s32.totalorder %s16, 1
      %s3178 = scalar_select %p3177, %s16, 1
      %s3179 = smul.addr %s3178, 2
      %s3180 = scalar_lea.vmem %s4, %s3179
      // Predicated region
      $region33: #{decoder_block_forward.6} parent=31 // pred_check
        %p3181 = pneg %p102
      $region34: #{decoder_block_forward.6} parent=31 // pred_check_branch
        %3183 = sbr.rel (%p3181) target = $region36
      $region35: #{decoder_block_forward.6} parent=31 // pred_region
        %s3184 = smul.u32 32, %s16
      $region36: #{decoder_block_forward.6} parent=31 // pred_fallthru
        _
      // Predicated region
      $region37: #{decoder_block_forward.6} parent=31 // pred_check
        %p3185 = pneg %p128
      $region38: #{decoder_block_forward.6} parent=31 // pred_check_branch
        %3187 = sbr.rel (%p3185) target = $region40
      $region39: #{decoder_block_forward.6} parent=31 // pred_region
        _
      $region40: #{decoder_block_forward.6} parent=31 // pred_fallthru
        _
    $region32: #{decoder_block_forward.6} parent=5 // pred_fallthru
      _
    %p3188 = scmp.le.s32.totalorder 2, %s11
    // Predicated region
    $region41: #{decoder_block_forward.6} parent=5 // pred_check
      %p3189 = pneg %p3188
    $region42: #{decoder_block_forward.6} parent=5 // pred_check_branch
      %3191 = sbr.rel (%p3189) target = $region44
    $region43: #{decoder_block_forward.6} parent=5 // pred_region
      %s3192 = ssub.s32 %s11, 2
      // Predicated region
      $region45: #{decoder_block_forward.6} parent=43 // pred_check
        %p3193 = pneg %p108
      $region46: #{decoder_block_forward.6} parent=43 // pred_check_branch
        %3195 = sbr.rel (%p3193) target = $region48
      $region47: #{decoder_block_forward.6} parent=43 // pred_region
        %s3196 = smul.u32 32, %s17
        %p3197 = scmp.lt.s32.totalorder %s3196, 63
        %s3198 = scalar_select %p3197, %s3196, 63
        %s3199 = smul.addr %s3198, 8
        %s3200 = scalar_lea.vmem %s3, %s3199
      $region48: #{decoder_block_forward.6} parent=43 // pred_fallthru
        _
      // Predicated region
      $region49: #{decoder_block_forward.6} parent=43 // pred_check
        %p3201 = pneg %p134
      $region50: #{decoder_block_forward.6} parent=43 // pred_check_branch
        %3203 = sbr.rel (%p3201) target = $region52
      $region51: #{decoder_block_forward.6} parent=43 // pred_region
        %p3204 = scmp.lt.s32.totalorder %s17, 1
        %s3205 = scalar_select %p3204, %s17, 1
        %s3206 = smul.addr %s3205, 2
        %s3207 = scalar_lea.vmem %s4, %s3206
      $region52: #{decoder_block_forward.6} parent=43 // pred_fallthru
        _
    $region44: #{decoder_block_forward.6} parent=5 // pred_fallthru
      _
  $region6: #{decoder_block_forward.6} parent=0 // loop_footer
    %s15 = sadd.s32 1, %s11
  $region7: #{decoder_block_forward.6} parent=0 // loop_footer_branch
    %10 = sbr.rel target = $region3
  $region8: #{decoder_block_forward.6} parent=0 // loop_exit
    _

// kernel: decoder_block_forward.9
$region0: #{decoder_block_forward.9}
  #allocation0 [shape = 'u32[]', space=smem, size = 0x4, offset = 0x4, fixed_abs, tag = 'smem constant byte address 0x4 - core index']
  #allocation1 [shape = 'u32[144,128]{1,0:T(1,128)}', space=vmem, size = 0x12000, scoped, tag = 'internal scratch']
  %s0 = inlined_call_operand.vmem [shape: f32[32,64], index: 0, kind: input, shape index: {}]
  %s1 = inlined_call_operand.vmem [shape: f32[1,64], index: 1, kind: input, shape index: {}]
  %s2 = inlined_call_operand.vmem [shape: f32[1,64], index: 2, kind: input, shape index: {}]
  %s3 = inlined_call_operand.vmem [shape: f32[32,64], index: 3, kind: output, shape index: {}]
  %s4 = sld [smem:[#allocation0]]
  $region22: #{decoder_block_forward.9} parent=0
    _
  %s6 = ssub.s32 1, %s4
  %s7 = scalar_select 0, %s6, %s4
  // Predicated region
  $region2: #{decoder_block_forward.9} parent=0 // pred_check
    _
  $region3: #{decoder_block_forward.9} parent=0 // pred_check_branch
    %9 = sbr.rel (0) target = $region5
  $region4: #{decoder_block_forward.9} parent=0 // pred_region
    _
  $region5: #{decoder_block_forward.9} parent=0 // pred_fallthru
    _
  // Predicated region
  $region6: #{decoder_block_forward.9} parent=0 // pred_check
    _
  $region7: #{decoder_block_forward.9} parent=0 // pred_check_branch
    %11 = sbr.rel (0) target = $region9
  $region8: #{decoder_block_forward.9} parent=0 // pred_region
    _
  $region9: #{decoder_block_forward.9} parent=0 // pred_fallthru
    _
  // Predicated region
  $region10: #{decoder_block_forward.9} parent=0 // pred_check
    _
  $region11: #{decoder_block_forward.9} parent=0 // pred_check_branch
    %13 = sbr.rel (0) target = $region13
  $region12: #{decoder_block_forward.9} parent=0 // pred_region
    _
  $region13: #{decoder_block_forward.9} parent=0 // pred_fallthru
    _
  %v14 = vld [vmem:[%s0] sm:$0xff]
  %v15 = vld [vmem:[%s0 + $0x8] sm:$0xff]
  %v16 = vld [vmem:[%s0 + $0x10] sm:$0xff]
  %v17 = vld [vmem:[%s0 + $0x18] sm:$0xff]
  %v18 = vld [vmem:[%s1] sm:$0x1]
  %v20 = vlaneseq
  %v21 = vshrl.u32 %v20, 7
  %v22 = vsub.s32 0, %v21
  %v23 = vrot.slane %v18, %v22
  %v25 = vmul.f32 %v14, %v23
  %v26 = vmul.f32 %v15, %v23
  %v27 = vmul.f32 %v16, %v23
  %v28 = vmul.f32 %v17, %v23
  %v29 = vld [vmem:[%s2] sm:$0x1]
  %v31 = vlaneseq
  %v32 = vshrl.u32 %v31, 7
  %v33 = vsub.s32 0, %v32
  %v34 = vrot.slane %v29, %v33
  %v36 = vadd.f32 %v25, %v34
  %v37 = vadd.f32 %v26, %v34
  %v38 = vadd.f32 %v27, %v34
  %v39 = vadd.f32 %v28, %v34
  %v40 = vmax.f32 %v36, 0.0
  %v41 = vmax.f32 %v37, 0.0
  %v42 = vmax.f32 %v38, 0.0
  %v43 = vmax.f32 %v39, 0.0
  %vm44 = vcmask 523264
  %45 = vst.msk [vmem:[%s3] sm:$0xff] %vm44, %v40
  %46 = vst.msk [vmem:[%s3 + $0x8] sm:$0xff] %vm44, %v41
  %47 = vst.msk [vmem:[%s3 + $0x10] sm:$0xff] %vm44, %v42
  %48 = vst.msk [vmem:[%s3 + $0x18] sm:$0xff] %vm44, %v43
  // Predicated region
  $region14: #{decoder_block_forward.9} parent=0 // pred_check
    _
  $region15: #{decoder_block_forward.9} parent=0 // pred_check_branch
    %50 = sbr.rel (0) target = $region17
  $region16: #{decoder_block_forward.9} parent=0 // pred_region
    _
  $region17: #{decoder_block_forward.9} parent=0 // pred_fallthru
    _
  // Predicated region
  $region18: #{decoder_block_forward.9} parent=0 // pred_check
    _
  $region19: #{decoder_block_forward.9} parent=0 // pred_check_branch
    %52 = sbr.rel (0) target = $region21
  $region20: #{decoder_block_forward.9} parent=0 // pred_region
    _
  $region21: #{decoder_block_forward.9} parent=0 // pred_fallthru
    _

// kernel: decoder_block_forward.8
$region0: #{decoder_block_forward.8}
  #allocation0 [shape = 'u32[]', space=smem, size = 0x4, offset = 0x4, fixed_abs, tag = 'smem constant byte address 0x4 - core index']
  #allocation1 [shape = 'u32[144,128]{1,0:T(1,128)}', space=vmem, size = 0x12000, scoped, tag = 'internal scratch']
  %s0 = inlined_call_operand.vmem [shape: bf16[2,18,18,4], index: 0, kind: input, shape index: {}]
  %s1 = inlined_call_operand.vmem [shape: bf16[9,4,4], index: 1, kind: input, shape index: {}]
  %s2 = inlined_call_operand.vmem [shape: f32[1,4], index: 2, kind: input, shape index: {}]
  %s3 = inlined_call_operand.vmem [shape: f32[512,4], index: 3, kind: output, shape index: {0}]
  %s4 = inlined_call_operand.vmem [shape: f32[2,2,4], index: 4, kind: output, shape index: {1}]
  %5 = xla_tuple %s3, %s4
  %s6 = sld [smem:[#allocation0]]
  $region53: #{decoder_block_forward.8} parent=0
    _
  %s8 = ssub.s32 1, %s6
  %s9 = scalar_select 0, %s8, %s6
  loop: start=0, step=1, limit=4
  $region2: #{decoder_block_forward.8} parent=0 // loop_pre_header
    _
  $region3: #{decoder_block_forward.8} parent=0 // loop_header
    %s11 = sphi 0, %s15
    %p12 = scmp.ge.s32.totalorder %s11, 4
    %s21 = sphi 0, %s23
    %s24 = sphi 0, %s21
    %s25 = sphi 0, %s24
    %s41 = sphi 0, %s25
    %s45 = sphi 0, %s45
    %s47 = sphi 0, %s45
    %s48 = sphi 0, %s47
    %s62 = sphi 0, %s48
    %s66 = sphi 0, %s66
    %s68 = sphi 0, %s66
    %s69 = sphi 0, %s68
    %s83 = sphi 0, %s69
    %s89 = sphi 0, %s91
    %s92 = sphi 0, %s89
    %s93 = sphi 0, %s92
    %s109 = sphi 0, %s93
    %s115 = sphi 0, %s117
    %s118 = sphi 0, %s115
    %s119 = sphi 0, %s118
    %s135 = sphi 0, %s119
  $region4: #{decoder_block_forward.8} parent=0 // loop_header_branch
    %14 = sbr.rel (%p12) target = $region8
  $region5: #{decoder_block_forward.8} parent=0 // loop_body
    %s16 = ssub.s32 %s11, 1
    %s17 = ssub.s32 %s11, 2
    %s18 = sadd.s32 %s11, 1
    %s19 = ssub.s32 %s11, %s18
    %p20 = scmp.eq.s32.totalorder %s19, 0
    %s22 = sadd.s32 %s21, 1
    %s23 = scalar_select %p20, %s21, %s22
    %p26 = pneg %p20
    %p27 = scmp.eq.s32.totalorder %s11, 1
    %p28 = por %p26, %p27
    %p29 = scmp.ne.s32.totalorder %s21, %s24
    %p30 = scmp.eq.s32.totalorder %s11, 0
    %p31 = por %p29, %p30
    %p32 = scmp.ne.s32.totalorder %s21, %s24
    %p33 = scmp.eq.s32.totalorder %s16, 1
    %p34 = por %p32, %p33
    %p35 = scmp.ne.s32.totalorder %s24, %s25
    %p36 = scmp.eq.s32.totalorder %s16, 0
    %p37 = por %p35, %p36
    %p38 = scmp.ne.s32.totalorder %s24, %s25
    %p39 = scmp.eq.s32.totalorder %s17, 1
    %p40 = por %p38, %p39
    %p42 = scmp.ne.s32.totalorder %s25, %s41
    %p43 = scmp.eq.s32.totalorder %s17, 0
    %p44 = por %p42, %p43
    %s46 = sadd.s32 %s45, 1
    %p49 = scmp.eq.s32.totalorder %s11, 1
    %p50 = scmp.ne.s32.totalorder %s45, %s47
    %p51 = scmp.eq.s32.totalorder %s11, 0
    %p52 = por %p50, %p51
    %p53 = scmp.ne.s32.totalorder %s45, %s47
    %p54 = scmp.eq.s32.totalorder %s16, 1
    %p55 = por %p53, %p54
    %p56 = scmp.ne.s32.totalorder %s47, %s48
    %p57 = scmp.eq.s32.totalorder %s16, 0
    %p58 = por %p56, %p57
    %p59 = scmp.ne.s32.totalorder %s47, %s48
    %p60 = scmp.eq.s32.totalorder %s17, 1
    %p61 = por %p59, %p60
    %p63 = scmp.ne.s32.totalorder %s48, %s62
    %p64 = scmp.eq.s32.totalorder %s17, 0
    %p65 = por %p63, %p64
    %s67 = sadd.s32 %s66, 1
    %p70 = scmp.eq.s32.totalorder %s11, 1
    %p71 = scmp.ne.s32.totalorder %s66, %s68
    %p72 = scmp.eq.s32.totalorder %s11, 0
    %p73 = por %p71, %p72
    %p74 = scmp.ne.s32.totalorder %s66, %s68
    %p75 = scmp.eq.s32.totalorder %s16, 1
    %p76 = por %p74, %p75
    %p77 = scmp.ne.s32.totalorder %s68, %s69
    %p78 = scmp.eq.s32.totalorder %s16, 0
    %p79 = por %p77, %p78
    %p80 = scmp.ne.s32.totalorder %s68, %s69
    %p81 = scmp.eq.s32.totalorder %s17, 1
    %p82 = por %p80, %p81
    %p84 = scmp.ne.s32.totalorder %s69, %s83
    %p85 = scmp.eq.s32.totalorder %s17, 0
    %p86 = por %p84, %p85
    %s87 = ssub.s32 %s11, %s18
    %p88 = scmp.eq.s32.totalorder %s87, 0
    %s90 = sadd.s32 %s89, 1
    %s91 = scalar_select %p88, %s89, %s90
    %p94 = pneg %p88
    %p95 = scmp.eq.s32.totalorder %s11, 1
    %p96 = por %p94, %p95
    %p97 = scmp.ne.s32.totalorder %s89, %s92
    %p98 = scmp.eq.s32.totalorder %s11, 0
    %p99 = por %p97, %p98
    %p100 = scmp.ne.s32.totalorder %s89, %s92
    %p101 = scmp.eq.s32.totalorder %s16, 1
    %p102 = por %p100, %p101
    %p103 = scmp.ne.s32.totalorder %s92, %s93
    %p104 = scmp.eq.s32.totalorder %s16, 0
    %p105 = por %p103, %p104
    %p106 = scmp.ne.s32.totalorder %s92, %s93
    %p107 = scmp.eq.s32.totalorder %s17, 1
    %p108 = por %p106, %p107
    %p110 = scmp.ne.s32.totalorder %s93, %s109
    %p111 = scmp.eq.s32.totalorder %s17, 0
    %p112 = por %p110, %p111
    %s113 = ssub.s32 %s11, %s18
    %p114 = scmp.eq.s32.totalorder %s113, 0
    %s116 = sadd.s32 %s115, 1
    %s117 = scalar_select %p114, %s115, %s116
    %p120 = pneg %p114
    %p121 = scmp.eq.s32.totalorder %s11, 1
    %p122 = por %p120, %p121
    %p123 = scmp.ne.s32.totalorder %s115, %s118
    %p124 = scmp.eq.s32.totalorder %s11, 0
    %p125 = por %p123, %p124
    %p126 = scmp.ne.s32.totalorder %s115, %s118
    %p127 = scmp.eq.s32.totalorder %s16, 1
    %p128 = por %p126, %p127
    %p129 = scmp.ne.s32.totalorder %s118, %s119
    %p130 = scmp.eq.s32.totalorder %s16, 0
    %p131 = por %p129, %p130
    %p132 = scmp.ne.s32.totalorder %s118, %s119
    %p133 = scmp.eq.s32.totalorder %s17, 1
    %p134 = por %p132, %p133
    %p136 = scmp.ne.s32.totalorder %s119, %s135
    %p137 = scmp.eq.s32.totalorder %s17, 0
    %p138 = por %p136, %p137
    %p139 = scmp.le.s32.totalorder 1, %s11
    %p140 = scmp.lt.s32.totalorder %s11, 3
    %p141 = pnand %p139, %p140
    %p142 = pneg %p141
    // Predicated region
    $region9: #{decoder_block_forward.8} parent=5 // pred_check
      _
    $region10: #{decoder_block_forward.8} parent=5 // pred_check_branch
      %144 = sbr.rel (%p141) target = $region12
    $region11: #{decoder_block_forward.8} parent=5 // pred_region
      %s145 = ssub.s32 %s11, 1
      // Predicated region
      $region13: #{decoder_block_forward.8} parent=11 // pred_check
        %p146 = pneg %p58
      $region14: #{decoder_block_forward.8} parent=11 // pred_check_branch
        %148 = sbr.rel (%p146) target = $region16
      $region15: #{decoder_block_forward.8} parent=11 // pred_region
        _
      $region16: #{decoder_block_forward.8} parent=11 // pred_fallthru
        _
      // Predicated region
      $region17: #{decoder_block_forward.8} parent=11 // pred_check
        %p149 = pneg %p79
      $region18: #{decoder_block_forward.8} parent=11 // pred_check_branch
        %151 = sbr.rel (%p149) target = $region20
      $region19: #{decoder_block_forward.8} parent=11 // pred_region
        _
      $region20: #{decoder_block_forward.8} parent=11 // pred_fallthru
        _
    $region12: #{decoder_block_forward.8} parent=5 // pred_fallthru
      _
    %p152 = scmp.lt.s32.totalorder %s11, 2
    // Predicated region
    $region21: #{decoder_block_forward.8} parent=5 // pred_check
      %p153 = pneg %p152
    $region22: #{decoder_block_forward.8} parent=5 // pred_check_branch
      %155 = sbr.rel (%p153) target = $region24
    $region23: #{decoder_block_forward.8} parent=5 // pred_region
      // Predicated region
      $region25: #{decoder_block_forward.8} parent=23 // pred_check
        %p156 = pneg %p31
      $region26: #{decoder_block_forward.8} parent=23 // pred_check_branch
        %158 = sbr.rel (%p156) target = $region28
      $region27: #{decoder_block_forward.8} parent=23 // pred_region
        %p159 = scmp.lt.s32.totalorder %s11, 1
        %s160 = scalar_select %p159, %s11, 1
        %s161 = smul.addr %s160, 54
        %s162 = smul.addr %s161, 4
        %s163 = scalar_lea.vmem %s0, %s162
      $region28: #{decoder_block_forward.8} parent=23 // pred_fallthru
        _
    $region24: #{decoder_block_forward.8} parent=5 // pred_fallthru
      _
    %p164 = scmp.le.s32.totalorder 1, %s11
    %p165 = scmp.lt.s32.totalorder %s11, 3
    %p166 = pnand %p164, %p165
    %p167 = pneg %p166
    // Predicated region
    $region29: #{decoder_block_forward.8} parent=5 // pred_check
      _
    $region30: #{decoder_block_forward.8} parent=5 // pred_check_branch
      %169 = sbr.rel (%p166) target = $region32
    $region31: #{decoder_block_forward.8} parent=5 // pred_region
      %s170 = ssub.s32 %s11, 1
      %p171 = scmp.lt.s32.totalorder %s16, 1
      %s172 = scalar_select %p171, %s16, 1
      %s173 = smul.addr %s172, 54
      %s174 = smul.addr %s173, 4
      %s175 = scalar_lea.vmem %s0, %s174
      %p176 = pneg %p37
      %p177 = pneg %p34
      %p178 = pneg %p58
      %p179 = pneg %p55
      %p180 = pneg %p79
      %p181 = pneg %p76
      %p182 = pneg %p105
      %p183 = pneg %p102
      %s184 = smul.u32 32, %s16
      %p185 = scmp.lt.s32.totalorder %s184, 63
      %s186 = scalar_select %p185, %s184, 63
      %s187 = smul.addr %s186, 8
      %s188 = scalar_lea.vmem %s3, %s187
      %p189 = pneg %p131
      %p190 = pneg %p128
      %p191 = scmp.lt.s32.totalorder %s16, 1
      %s192 = scalar_select %p191, %s16, 1
      %s193 = smul.addr %s192, 2
      %s194 = scalar_lea.vmem %s4, %s193
      %p195 = scmp.lt.s32.totalorder %s16, 1
      %s196 = scalar_select %p195, %s16, 1
      %s197 = smul.addr %s196, 54
      %s198 = smul.addr %s197, 4
      %s199 = scalar_lea.vmem %s0, %s198
      %s200 = smul.u32 32, %s16
      %p201 = scmp.lt.s32.totalorder %s200, 63
      %s202 = scalar_select %p201, %s200, 63
      %s203 = smul.addr %s202, 8
      %s204 = scalar_lea.vmem %s3, %s203
      %s205 = smul.u32 32, %s16
      %p206 = scmp.lt.s32.totalorder %s16, 1
      %s207 = scalar_select %p206, %s16, 1
      %s208 = smul.addr %s207, 2
      %s209 = scalar_lea.vmem %s4, %s208
      %v211 = vld [vmem:[%s199] sm:$0xf]
      %v212 = vld [vmem:[%s199 + $0x4] sm:$0xf]
      %v213 = vld [vmem:[%s199 + $0x8] sm:$0x1]
      %v214 = vld [vmem:[%s199 + $0xc] sm:$0xf]
      %v215 = vld [vmem:[%s199 + $0x10] sm:$0xf]
      %v216 = vld [vmem:[%s199 + $0x14] sm:$0x1]
      %v217 = vld [vmem:[%s199 + $0x18] sm:$0xf]
      %v218 = vld [vmem:[%s199 + $0x1c] sm:$0xf]
      %v219 = vld [vmem:[%s199 + $0x20] sm:$0x1]
      %v220 = vld [vmem:[%s199 + $0x24] sm:$0xf]
      %v221 = vld [vmem:[%s199 + $0x28] sm:$0xf]
      %v222 = vld [vmem:[%s199 + $0x2c] sm:$0x1]
      %v223 = vld [vmem:[%s199 + $0x30] sm:$0xf]
      %v224 = vld [vmem:[%s199 + $0x34] sm:$0xf]
      %v225 = vld [vmem:[%s199 + $0x38] sm:$0x1]
      %v226 = vld [vmem:[%s199 + $0x3c] sm:$0xf]
      %v227 = vld [vmem:[%s199 + $0x40] sm:$0xf]
      %v228 = vld [vmem:[%s199 + $0x44] sm:$0x1]
      %v229 = vld [vmem:[%s199 + $0x48] sm:$0xf]
      %v230 = vld [vmem:[%s199 + $0x4c] sm:$0xf]
      %v231 = vld [vmem:[%s199 + $0x50] sm:$0x1]
      %v232 = vld [vmem:[%s199 + $0x54] sm:$0xf]
      %v233 = vld [vmem:[%s199 + $0x58] sm:$0xf]
      %v234 = vld [vmem:[%s199 + $0x5c] sm:$0x1]
      %v235 = vld [vmem:[%s199 + $0x60] sm:$0xf]
      %v236 = vld [vmem:[%s199 + $0x64] sm:$0xf]
      %v237 = vld [vmem:[%s199 + $0x68] sm:$0x1]
      %v238 = vld [vmem:[%s199 + $0x6c] sm:$0xf]
      %v239 = vld [vmem:[%s199 + $0x70] sm:$0xf]
      %v240 = vld [vmem:[%s199 + $0x74] sm:$0x1]
      %v241 = vld [vmem:[%s199 + $0x78] sm:$0xf]
      %v242 = vld [vmem:[%s199 + $0x7c] sm:$0xf]
      %v243 = vld [vmem:[%s199 + $0x80] sm:$0x1]
      %v244 = vld [vmem:[%s199 + $0x84] sm:$0xf]
      %v245 = vld [vmem:[%s199 + $0x88] sm:$0xf]
      %v246 = vld [vmem:[%s199 + $0x8c] sm:$0x1]
      %v247 = vld [vmem:[%s199 + $0x90] sm:$0xf]
      %v248 = vld [vmem:[%s199 + $0x94] sm:$0xf]
      %v249 = vld [vmem:[%s199 + $0x98] sm:$0x1]
      %v250 = vld [vmem:[%s199 + $0x9c] sm:$0xf]
      %v251 = vld [vmem:[%s199 + $0xa0] sm:$0xf]
      %v252 = vld [vmem:[%s199 + $0xa4] sm:$0x1]
      %v253 = vld [vmem:[%s199 + $0xa8] sm:$0xf]
      %v254 = vld [vmem:[%s199 + $0xac] sm:$0xf]
      %v255 = vld [vmem:[%s199 + $0xb0] sm:$0x1]
      %v256 = vld [vmem:[%s199 + $0xb4] sm:$0xf]
      %v257 = vld [vmem:[%s199 + $0xb8] sm:$0xf]
      %v258 = vld [vmem:[%s199 + $0xbc] sm:$0x1]
      %v259 = vld [vmem:[%s199 + $0xc0] sm:$0xf]
      %v260 = vld [vmem:[%s199 + $0xc4] sm:$0xf]
      %v261 = vld [vmem:[%s199 + $0xc8] sm:$0x1]
      %v262 = vld [vmem:[%s199 + $0xcc] sm:$0xf]
      %v263 = vld [vmem:[%s199 + $0xd0] sm:$0xf]
      %v264 = vld [vmem:[%s199 + $0xd4] sm:$0x1]
      %v265 = vld [vmem:[%s1] sm:$0x3]
      %vm266 = vsmask.f32 3328
      %vm267 = vsmask.f32 7440
      %vm268 = vmor %vm266, %vm267
      %v270 = vshrl.u32 %v211, 16
      %v272 = vrot.slane %v270, 4
      %v273 = vshll.u32 %v211, 16
      %v275 = vrot.slane %v273, 5
      %v276 = vor.u32 %v272, %v275
      %v277 = vrot.slane %v276, 4
      %v279 = vshll.u32 %v212, 16
      %v281 = vrot.slane %v279, 5
      %v282 = vsel %vm268, %v277, %v281
      %v283 = vshrl.u32 %v212, 16
      %v285 = vrot.slane %v283, 4
      %v286 = vor.u32 %v285, %v281
      %v287 = vrot.slane %v286, 4
      %v289 = vshll.u32 %v213, 16
      %v291 = vrot.slane %v289, 5
      %v292 = vsel %vm268, %v287, %v291
      %v294 = vshrl.u32 %v214, 16
      %v296 = vrot.slane %v294, 4
      %v297 = vshll.u32 %v214, 16
      %v299 = vrot.slane %v297, 5
      %v300 = vor.u32 %v296, %v299
      %v301 = vrot.slane %v300, 4
      %v303 = vshll.u32 %v215, 16
      %v305 = vrot.slane %v303, 5
      %v306 = vsel %vm268, %v301, %v305
      %v307 = vshrl.u32 %v215, 16
      %v309 = vrot.slane %v307, 4
      %v310 = vor.u32 %v309, %v305
      %v311 = vrot.slane %v310, 4
      %v313 = vshll.u32 %v216, 16
      %v315 = vrot.slane %v313, 5
      %v316 = vsel %vm268, %v311, %v315
      %v318 = vshrl.u32 %v217, 16
      %v320 = vrot.slane %v318, 4
      %v321 = vshll.u32 %v217, 16
      %v323 = vrot.slane %v321, 5
      %v324 = vor.u32 %v320, %v323
      %v325 = vrot.slane %v324, 4
      %v327 = vshll.u32 %v218, 16
      %v329 = vrot.slane %v327, 5
      %v330 = vsel %vm268, %v325, %v329
      %v331 = vshrl.u32 %v218, 16
      %v333 = vrot.slane %v331, 4
      %v334 = vor.u32 %v333, %v329
      %v335 = vrot.slane %v334, 4
      %v337 = vshll.u32 %v219, 16
      %v339 = vrot.slane %v337, 5
      %v340 = vsel %vm268, %v335, %v339
      %v342 = vshrl.u32 %v220, 16
      %v344 = vrot.slane %v342, 4
      %v345 = vshll.u32 %v220, 16
      %v347 = vrot.slane %v345, 5
      %v348 = vor.u32 %v344, %v347
      %v349 = vrot.slane %v348, 4
      %v351 = vshll.u32 %v221, 16
      %v353 = vrot.slane %v351, 5
      %v354 = vsel %vm268, %v349, %v353
      %v355 = vshrl.u32 %v221, 16
      %v357 = vrot.slane %v355, 4
      %v358 = vor.u32 %v357, %v353
      %v359 = vrot.slane %v358, 4
      %v361 = vshll.u32 %v222, 16
      %v363 = vrot.slane %v361, 5
      %v364 = vsel %vm268, %v359, %v363
      %v366 = vshrl.u32 %v223, 16
      %v368 = vrot.slane %v366, 4
      %v369 = vshll.u32 %v223, 16
      %v371 = vrot.slane %v369, 5
      %v372 = vor.u32 %v368, %v371
      %v373 = vrot.slane %v372, 4
      %v375 = vshll.u32 %v224, 16
      %v377 = vrot.slane %v375, 5
      %v378 = vsel %vm268, %v373, %v377
      %v379 = vshrl.u32 %v224, 16
      %v381 = vrot.slane %v379, 4
      %v382 = vor.u32 %v381, %v377
      %v383 = vrot.slane %v382, 4
      %v385 = vshll.u32 %v225, 16
      %v387 = vrot.slane %v385, 5
      %v388 = vsel %vm268, %v383, %v387
      %v390 = vshrl.u32 %v226, 16
      %v392 = vrot.slane %v390, 4
      %v393 = vshll.u32 %v226, 16
      %v395 = vrot.slane %v393, 5
      %v396 = vor.u32 %v392, %v395
      %v397 = vrot.slane %v396, 4
      %v399 = vshll.u32 %v227, 16
      %v401 = vrot.slane %v399, 5
      %v402 = vsel %vm268, %v397, %v401
      %v403 = vshrl.u32 %v227, 16
      %v405 = vrot.slane %v403, 4
      %v406 = vor.u32 %v405, %v401
      %v407 = vrot.slane %v406, 4
      %v409 = vshll.u32 %v228, 16
      %v411 = vrot.slane %v409, 5
      %v412 = vsel %vm268, %v407, %v411
      %v414 = vshrl.u32 %v229, 16
      %v416 = vrot.slane %v414, 4
      %v417 = vshll.u32 %v229, 16
      %v419 = vrot.slane %v417, 5
      %v420 = vor.u32 %v416, %v419
      %v421 = vrot.slane %v420, 4
      %v423 = vshll.u32 %v230, 16
      %v425 = vrot.slane %v423, 5
      %v426 = vsel %vm268, %v421, %v425
      %v427 = vshrl.u32 %v230, 16
      %v429 = vrot.slane %v427, 4
      %v430 = vor.u32 %v429, %v425
      %v431 = vrot.slane %v430, 4
      %v433 = vshll.u32 %v231, 16
      %v435 = vrot.slane %v433, 5
      %v436 = vsel %vm268, %v431, %v435
      %v438 = vshrl.u32 %v232, 16
      %v440 = vrot.slane %v438, 4
      %v441 = vshll.u32 %v232, 16
      %v443 = vrot.slane %v441, 5
      %v444 = vor.u32 %v440, %v443
      %v445 = vrot.slane %v444, 4
      %v447 = vshll.u32 %v233, 16
      %v449 = vrot.slane %v447, 5
      %v450 = vsel %vm268, %v445, %v449
      %v451 = vshrl.u32 %v233, 16
      %v453 = vrot.slane %v451, 4
      %v454 = vor.u32 %v453, %v449
      %v455 = vrot.slane %v454, 4
      %v457 = vshll.u32 %v234, 16
      %v459 = vrot.slane %v457, 5
      %v460 = vsel %vm268, %v455, %v459
      %v462 = vshrl.u32 %v235, 16
      %v464 = vrot.slane %v462, 4
      %v465 = vshll.u32 %v235, 16
      %v467 = vrot.slane %v465, 5
      %v468 = vor.u32 %v464, %v467
      %v469 = vrot.slane %v468, 4
      %v471 = vshll.u32 %v236, 16
      %v473 = vrot.slane %v471, 5
      %v474 = vsel %vm268, %v469, %v473
      %v475 = vshrl.u32 %v236, 16
      %v477 = vrot.slane %v475, 4
      %v478 = vor.u32 %v477, %v473
      %v479 = vrot.slane %v478, 4
      %v481 = vshll.u32 %v237, 16
      %v483 = vrot.slane %v481, 5
      %v484 = vsel %vm268, %v479, %v483
      %v486 = vshrl.u32 %v238, 16
      %v488 = vrot.slane %v486, 4
      %v489 = vshll.u32 %v238, 16
      %v491 = vrot.slane %v489, 5
      %v492 = vor.u32 %v488, %v491
      %v493 = vrot.slane %v492, 4
      %v495 = vshll.u32 %v239, 16
      %v497 = vrot.slane %v495, 5
      %v498 = vsel %vm268, %v493, %v497
      %v499 = vshrl.u32 %v239, 16
      %v501 = vrot.slane %v499, 4
      %v502 = vor.u32 %v501, %v497
      %v503 = vrot.slane %v502, 4
      %v505 = vshll.u32 %v240, 16
      %v507 = vrot.slane %v505, 5
      %v508 = vsel %vm268, %v503, %v507
      %v510 = vshrl.u32 %v241, 16
      %v512 = vrot.slane %v510, 4
      %v513 = vshll.u32 %v241, 16
      %v515 = vrot.slane %v513, 5
      %v516 = vor.u32 %v512, %v515
      %v517 = vrot.slane %v516, 4
      %v519 = vshll.u32 %v242, 16
      %v521 = vrot.slane %v519, 5
      %v522 = vsel %vm268, %v517, %v521
      %v523 = vshrl.u32 %v242, 16
      %v525 = vrot.slane %v523, 4
      %v526 = vor.u32 %v525, %v521
      %v527 = vrot.slane %v526, 4
      %v529 = vshll.u32 %v243, 16
      %v531 = vrot.slane %v529, 5
      %v532 = vsel %vm268, %v527, %v531
      %v534 = vshrl.u32 %v244, 16
      %v536 = vrot.slane %v534, 4
      %v537 = vshll.u32 %v244, 16
      %v539 = vrot.slane %v537, 5
      %v540 = vor.u32 %v536, %v539
      %v541 = vrot.slane %v540, 4
      %v543 = vshll.u32 %v245, 16
      %v545 = vrot.slane %v543, 5
      %v546 = vsel %vm268, %v541, %v545
      %v547 = vshrl.u32 %v245, 16
      %v549 = vrot.slane %v547, 4
      %v550 = vor.u32 %v549, %v545
      %v551 = vrot.slane %v550, 4
      %v553 = vshll.u32 %v246, 16
      %v555 = vrot.slane %v553, 5
      %v556 = vsel %vm268, %v551, %v555
      %v558 = vshrl.u32 %v247, 16
      %v560 = vrot.slane %v558, 4
      %v561 = vshll.u32 %v247, 16
      %v563 = vrot.slane %v561, 5
      %v564 = vor.u32 %v560, %v563
      %v565 = vrot.slane %v564, 4
      %v567 = vshll.u32 %v248, 16
      %v569 = vrot.slane %v567, 5
      %v570 = vsel %vm268, %v565, %v569
      %v571 = vshrl.u32 %v248, 16
      %v573 = vrot.slane %v571, 4
      %v574 = vor.u32 %v573, %v569
      %v575 = vrot.slane %v574, 4
      %v577 = vshll.u32 %v249, 16
      %v579 = vrot.slane %v577, 5
      %v580 = vsel %vm268, %v575, %v579
      %v582 = vshrl.u32 %v250, 16
      %v584 = vrot.slane %v582, 4
      %v585 = vshll.u32 %v250, 16
      %v587 = vrot.slane %v585, 5
      %v588 = vor.u32 %v584, %v587
      %v589 = vrot.slane %v588, 4
      %v591 = vshll.u32 %v251, 16
      %v593 = vrot.slane %v591, 5
      %v594 = vsel %vm268, %v589, %v593
      %v595 = vshrl.u32 %v251, 16
      %v597 = vrot.slane %v595, 4
      %v598 = vor.u32 %v597, %v593
      %v599 = vrot.slane %v598, 4
      %v601 = vshll.u32 %v252, 16
      %v603 = vrot.slane %v601, 5
      %v604 = vsel %vm268, %v599, %v603
      %v606 = vshrl.u32 %v253, 16
      %v608 = vrot.slane %v606, 4
      %v609 = vshll.u32 %v253, 16
      %v611 = vrot.slane %v609, 5
      %v612 = vor.u32 %v608, %v611
      %v613 = vrot.slane %v612, 4
      %v615 = vshll.u32 %v254, 16
      %v617 = vrot.slane %v615, 5
      %v618 = vsel %vm268, %v613, %v617
      %v619 = vshrl.u32 %v254, 16
      %v621 = vrot.slane %v619, 4
      %v622 = vor.u32 %v621, %v617
      %v623 = vrot.slane %v622, 4
      %v625 = vshll.u32 %v255, 16
      %v627 = vrot.slane %v625, 5
      %v628 = vsel %vm268, %v623, %v627
      %v630 = vshrl.u32 %v256, 16
      %v632 = vrot.slane %v630, 4
      %v633 = vshll.u32 %v256, 16
      %v635 = vrot.slane %v633, 5
      %v636 = vor.u32 %v632, %v635
      %v637 = vrot.slane %v636, 4
      %v639 = vshll.u32 %v257, 16
      %v641 = vrot.slane %v639, 5
      %v642 = vsel %vm268, %v637, %v641
      %v643 = vshrl.u32 %v257, 16
      %v645 = vrot.slane %v643, 4
      %v646 = vor.u32 %v645, %v641
      %v647 = vrot.slane %v646, 4
      %v649 = vshll.u32 %v258, 16
      %v651 = vrot.slane %v649, 5
      %v652 = vsel %vm268, %v647, %v651
      %s653 = scalar_lea.vmem %s1, 2
      %v654 = vld [vmem:[%s653] sm:$0x3]
      %v655 = vunpack.c.l.b16 %v282
      %v656 = vunpack.c.l.b16 %v292
      %v657 = vunpack.c.l.b16 %v306
      %v658 = vunpack.c.l.b16 %v316
      %v659 = vunpack.c.l.b16 %v330
      %v660 = vunpack.c.l.b16 %v340
      %v661 = vunpack.c.l.b16 %v354
      %v662 = vunpack.c.l.b16 %v364
      %v663 = vunpack.c.l.b16 %v378
      %v664 = vunpack.c.l.b16 %v388
      %v665 = vunpack.c.l.b16 %v402
      %v666 = vunpack.c.l.b16 %v412
      %v667 = vunpack.c.l.b16 %v426
      %v668 = vunpack.c.l.b16 %v436
      %v669 = vunpack.c.l.b16 %v450
      %v670 = vunpack.c.l.b16 %v460
      %v671 = vunpack.c.l.b16 %v474
      %v672 = vunpack.c.l.b16 %v484
      %v673 = vunpack.c.l.b16 %v498
      %v674 = vunpack.c.l.b16 %v508
      %v675 = vunpack.c.l.b16 %v522
      %v676 = vunpack.c.l.b16 %v532
      %v677 = vunpack.c.l.b16 %v546
      %v678 = vunpack.c.l.b16 %v556
      %v679 = vunpack.c.l.b16 %v570
      %v680 = vunpack.c.l.b16 %v580
      %v681 = vunpack.c.l.b16 %v594
      %v682 = vunpack.c.l.b16 %v604
      %v683 = vunpack.c.l.b16 %v618
      %v684 = vunpack.c.l.b16 %v628
      %v685 = vunpack.c.l.b16 %v642
      %v686 = vunpack.c.l.b16 %v652
      %v687 = vpack.c.b16 %v656, %v655
      %v688 = vpack.c.b16 %v658, %v657
      %v689 = vpack.c.b16 %v660, %v659
      %v690 = vpack.c.b16 %v662, %v661
      %v691 = vpack.c.b16 %v664, %v663
      %v692 = vpack.c.b16 %v666, %v665
      %v693 = vpack.c.b16 %v668, %v667
      %v694 = vpack.c.b16 %v670, %v669
      %v695 = vpack.c.b16 %v672, %v671
      %v696 = vpack.c.b16 %v674, %v673
      %v697 = vpack.c.b16 %v676, %v675
      %v698 = vpack.c.b16 %v678, %v677
      %v699 = vpack.c.b16 %v680, %v679
      %v700 = vpack.c.b16 %v682, %v681
      %v701 = vpack.c.b16 %v684, %v683
      %v702 = vpack.c.b16 %v686, %v685
      %vm703 = vcmask 31744
      %v705 = vsel %vm703, %v687, 0
      %v708 = vsel %vm703, %v688, 0
      %v711 = vsel %vm703, %v689, 0
      %v714 = vsel %vm703, %v690, 0
      %v717 = vsel %vm703, %v691, 0
      %v720 = vsel %vm703, %v692, 0
      %v723 = vsel %vm703, %v693, 0
      %v726 = vsel %vm703, %v694, 0
      %v729 = vsel %vm703, %v695, 0
      %v732 = vsel %vm703, %v696, 0
      %v735 = vsel %vm703, %v697, 0
      %v738 = vsel %vm703, %v698, 0
      %v741 = vsel %vm703, %v699, 0
      %v744 = vsel %vm703, %v700, 0
      %v747 = vsel %vm703, %v701, 0
      %v750 = vsel %vm703, %v702, 0
      %vm752 = vcmask 1041408
      %v754 = vsel %vm752, %v654, 0
      %756 = vmatprep.subr.bf16.mxu0 0
      %757 = vmatpush1.bf16.msra.mxu0 %v754
      %758 = vmatprep.subr.bf16.mxu0 0
      %759 = vmatpush1.bf16.msra.mxu0 0
      %760 = vmatprep.subr.bf16.mxu0 0
      %761 = vmatpush1.bf16.msra.mxu0 0
      %762 = vmatprep.subr.bf16.mxu0 0
      %763 = vmatpush1.bf16.msra.mxu0 0
      %764 = vmatprep.subr.bf16.mxu0 0
      %765 = vmatpush1.bf16.msra.mxu0 0
      %766 = vmatprep.subr.bf16.mxu0 0
      %767 = vmatpush1.bf16.msra.mxu0 0
      %768 = vmatprep.subr.bf16.mxu0 0
      %769 = vmatpush1.bf16.msra.mxu0 0
      %770 = vmatprep.subr.bf16.mxu0 0
      %771 = vmatpush1.bf16.msra.mxu0 0
      %772 = vmatprep.subr.bf16.mxu0 0
      %773 = vmatpush1.bf16.msra.mxu0 0
      %774 = vmatprep.subr.bf16.mxu0 0
      %775 = vmatpush1.bf16.msra.mxu0 0
      %776 = vmatprep.subr.bf16.mxu0 0
      %777 = vmatpush1.bf16.msra.mxu0 0
      %778 = vmatprep.subr.bf16.mxu0 0
      %779 = vmatpush1.bf16.msra.mxu0 0
      %780 = vmatprep.subr.bf16.mxu0 0
      %781 = vmatpush1.bf16.msra.mxu0 0
      %782 = vmatprep.subr.bf16.mxu0 0
      %783 = vmatpush1.bf16.msra.mxu0 0
      %784 = vmatprep.subr.bf16.mxu0 0
      %785 = vmatpush1.bf16.msra.mxu0 0
      %786 = vmatprep.subr.bf16.mxu0 0
      %787 = vmatpush1.bf16.msra.mxu0 0
      %788 = vmatprep.mubr.bf16.mxu0 0
      %789 = vmatmul.mubr.bf16.gmra.mrb[0].mxu0 %v705
      %v790 = vpop.f32.mrb[0].mxu0
      %v791 = vadd.f32 0.0, %v790
      %v792 = vpop.f32.mrb[0].mxu0
      %v793 = vpop.f32.mrb[0].mxu0
      %v794 = vadd.f32 0.0, %v793
      %v795 = vpop.f32.mrb[0].mxu0
      %796 = vmatprep.mubr.bf16.mxu0 0
      %797 = vmatmul.mubr.bf16.gmra.mrb[0].mxu0 %v708
      %v798 = vpop.f32.mrb[0].mxu0
      %v799 = vadd.f32 0.0, %v798
      %v800 = vpop.f32.mrb[0].mxu0
      %v801 = vpop.f32.mrb[0].mxu0
      %v802 = vadd.f32 0.0, %v801
      %v803 = vpop.f32.mrb[0].mxu0
      %804 = vmatprep.mubr.bf16.mxu0 0
      %805 = vmatmul.mubr.bf16.gmra.mrb[0].mxu0 %v711
      %v806 = vpop.f32.mrb[0].mxu0
      %v807 = vadd.f32 0.0, %v806
      %v808 = vpop.f32.mrb[0].mxu0
      %v809 = vpop.f32.mrb[0].mxu0
      %v810 = vadd.f32 0.0, %v809
      %v811 = vpop.f32.mrb[0].mxu0
      %812 = vmatprep.mubr.bf16.mxu0 0
      %813 = vmatmul.mubr.bf16.gmra.mrb[0].mxu0 %v714
      %v814 = vpop.f32.mrb[0].mxu0
      %v815 = vadd.f32 0.0, %v814
      %v816 = vpop.f32.mrb[0].mxu0
      %v817 = vpop.f32.mrb[0].mxu0
      %v818 = vadd.f32 0.0, %v817
      %v819 = vpop.f32.mrb[0].mxu0
      %820 = vmatprep.mubr.bf16.mxu0 0
      %821 = vmatmul.mubr.bf16.gmra.mrb[0].mxu0 %v717
      %v822 = vpop.f32.mrb[0].mxu0
      %v823 = vadd.f32 0.0, %v822
      %v824 = vpop.f32.mrb[0].mxu0
      %v825 = vpop.f32.mrb[0].mxu0
      %v826 = vadd.f32 0.0, %v825
      %v827 = vpop.f32.mrb[0].mxu0
      %828 = vmatprep.mubr.bf16.mxu0 0
      %829 = vmatmul.mubr.bf16.gmra.mrb[0].mxu0 %v720
      %v830 = vpop.f32.mrb[0].mxu0
      %v831 = vadd.f32 0.0, %v830
      %v832 = vpop.f32.mrb[0].mxu0
      %v833 = vpop.f32.mrb[0].mxu0
      %v834 = vadd.f32 0.0, %v833
      %v835 = vpop.f32.mrb[0].mxu0
      %836 = vmatprep.mubr.bf16.mxu0 0
      %837 = vmatmul.mubr.bf16.gmra.mrb[0].mxu0 %v723
      %v838 = vpop.f32.mrb[0].mxu0
      %v839 = vadd.f32 0.0, %v838
      %v840 = vpop.f32.mrb[0].mxu0
      %v841 = vpop.f32.mrb[0].mxu0
      %v842 = vadd.f32 0.0, %v841
      %v843 = vpop.f32.mrb[0].mxu0
      %844 = vmatprep.mubr.bf16.mxu0 0
      %845 = vmatmul.mubr.bf16.gmra.mrb[0].mxu0 %v726
      %v846 = vpop.f32.mrb[0].mxu0
      %v847 = vadd.f32 0.0, %v846
      %v848 = vpop.f32.mrb[0].mxu0
      %v849 = vpop.f32.mrb[0].mxu0
      %v850 = vadd.f32 0.0, %v849
      %v851 = vpop.f32.mrb[0].mxu0
      %852 = vmatprep.mubr.bf16.mxu0 0
      %853 = vmatmul.mubr.bf16.gmra.mrb[0].mxu0 %v729
      %v854 = vpop.f32.mrb[0].mxu0
      %v855 = vadd.f32 0.0, %v854
      %v856 = vpop.f32.mrb[0].mxu0
      %v857 = vpop.f32.mrb[0].mxu0
      %v858 = vadd.f32 0.0, %v857
      %v859 = vpop.f32.mrb[0].mxu0
      %860 = vmatprep.mubr.bf16.mxu0 0
      %861 = vmatmul.mubr.bf16.gmra.mrb[0].mxu0 %v732
      %v862 = vpop.f32.mrb[0].mxu0
      %v863 = vadd.f32 0.0, %v862
      %v864 = vpop.f32.mrb[0].mxu0
      %v865 = vpop.f32.mrb[0].mxu0
      %v866 = vadd.f32 0.0, %v865
      %v867 = vpop.f32.mrb[0].mxu0
      %868 = vmatprep.mubr.bf16.mxu0 0
      %869 = vmatmul.mubr.bf16.gmra.mrb[0].mxu0 %v735
      %v870 = vpop.f32.mrb[0].mxu0
      %v871 = vadd.f32 0.0, %v870
      %v872 = vpop.f32.mrb[0].mxu0
      %v873 = vpop.f32.mrb[0].mxu0
      %v874 = vadd.f32 0.0, %v873
      %v875 = vpop.f32.mrb[0].mxu0
      %876 = vmatprep.mubr.bf16.mxu0 0
      %877 = vmatmul.mubr.bf16.gmra.mrb[0].mxu0 %v738
      %v878 = vpop.f32.mrb[0].mxu0
      %v879 = vadd.f32 0.0, %v878
      %v880 = vpop.f32.mrb[0].mxu0
      %v881 = vpop.f32.mrb[0].mxu0
      %v882 = vadd.f32 0.0, %v881
      %v883 = vpop.f32.mrb[0].mxu0
      %884 = vmatprep.mubr.bf16.mxu0 0
      %885 = vmatmul.mubr.bf16.gmra.mrb[0].mxu0 %v741
      %v886 = vpop.f32.mrb[0].mxu0
      %v887 = vadd.f32 0.0, %v886
      %v888 = vpop.f32.mrb[0].mxu0
      %v889 = vpop.f32.mrb[0].mxu0
      %v890 = vadd.f32 0.0, %v889
      %v891 = vpop.f32.mrb[0].mxu0
      %892 = vmatprep.mubr.bf16.mxu0 0
      %893 = vmatmul.mubr.bf16.gmra.mrb[0].mxu0 %v744
      %v894 = vpop.f32.mrb[0].mxu0
      %v895 = vadd.f32 0.0, %v894
      %v896 = vpop.f32.mrb[0].mxu0
      %v897 = vpop.f32.mrb[0].mxu0
      %v898 = vadd.f32 0.0, %v897
      %v899 = vpop.f32.mrb[0].mxu0
      %900 = vmatprep.mubr.bf16.mxu0 0
      %901 = vmatmul.mubr.bf16.gmra.mrb[0].mxu0 %v747
      %v902 = vpop.f32.mrb[0].mxu0
      %v903 = vadd.f32 0.0, %v902
      %v904 = vpop.f32.mrb[0].mxu0
      %v905 = vpop.f32.mrb[0].mxu0
      %v906 = vadd.f32 0.0, %v905
      %v907 = vpop.f32.mrb[0].mxu0
      %908 = vmatprep.mubr.bf16.mxu0 0
      %909 = vmatmul.mubr.bf16.gmra.mrb[0].mxu0 %v750
      %v910 = vpop.f32.mrb[0].mxu0
      %v911 = vadd.f32 0.0, %v910
      %v912 = vpop.f32.mrb[0].mxu0
      %v913 = vpop.f32.mrb[0].mxu0
      %v914 = vadd.f32 0.0, %v913
      %v915 = vpop.f32.mrb[0].mxu0
      %916 = vdwg.mxu0
      %v949 = vunpack.c.l.b16 %v211
      %v950 = vunpack.c.l.b16 %v212
      %v951 = vunpack.c.l.b16 %v214
      %v952 = vunpack.c.l.b16 %v215
      %v953 = vunpack.c.l.b16 %v217
      %v954 = vunpack.c.l.b16 %v218
      %v955 = vunpack.c.l.b16 %v220
      %v956 = vunpack.c.l.b16 %v221
      %v957 = vunpack.c.l.b16 %v223
      %v958 = vunpack.c.l.b16 %v224
      %v959 = vunpack.c.l.b16 %v226
      %v960 = vunpack.c.l.b16 %v227
      %v961 = vunpack.c.l.b16 %v229
      %v962 = vunpack.c.l.b16 %v230
      %v963 = vunpack.c.l.b16 %v232
      %v964 = vunpack.c.l.b16 %v233
      %v965 = vunpack.c.l.b16 %v235
      %v966 = vunpack.c.l.b16 %v236
      %v967 = vunpack.c.l.b16 %v238
      %v968 = vunpack.c.l.b16 %v239
      %v969 = vunpack.c.l.b16 %v241
      %v970 = vunpack.c.l.b16 %v242
      %v971 = vunpack.c.l.b16 %v244
      %v972 = vunpack.c.l.b16 %v245
      %v973 = vunpack.c.l.b16 %v247
      %v974 = vunpack.c.l.b16 %v248
      %v975 = vunpack.c.l.b16 %v250
      %v976 = vunpack.c.l.b16 %v251
      %v977 = vunpack.c.l.b16 %v253
      %v978 = vunpack.c.l.b16 %v254
      %v979 = vunpack.c.l.b16 %v256
      %v980 = vunpack.c.l.b16 %v257
      %v981 = vpack.c.b16 %v950, %v949
      %v982 = vpack.c.b16 %v952, %v951
      %v983 = vpack.c.b16 %v954, %v953
      %v984 = vpack.c.b16 %v956, %v955
      %v985 = vpack.c.b16 %v958, %v957
      %v986 = vpack.c.b16 %v960, %v959
      %v987 = vpack.c.b16 %v962, %v961
      %v988 = vpack.c.b16 %v964, %v963
      %v989 = vpack.c.b16 %v966, %v965
      %v990 = vpack.c.b16 %v968, %v967
      %v991 = vpack.c.b16 %v970, %v969
      %v992 = vpack.c.b16 %v972, %v971
      %v993 = vpack.c.b16 %v974, %v973
      %v994 = vpack.c.b16 %v976, %v975
      %v995 = vpack.c.b16 %v978, %v977
      %v996 = vpack.c.b16 %v980, %v979
      %v998 = vsel %vm703, %v981, 0
      %v1001 = vsel %vm703, %v982, 0
      %v1004 = vsel %vm703, %v983, 0
      %v1007 = vsel %vm703, %v984, 0
      %v1010 = vsel %vm703, %v985, 0
      %v1013 = vsel %vm703, %v986, 0
      %v1016 = vsel %vm703, %v987, 0
      %v1019 = vsel %vm703, %v988, 0
      %v1022 = vsel %vm703, %v989, 0
      %v1025 = vsel %vm703, %v990, 0
      %v1028 = vsel %vm703, %v991, 0
      %v1031 = vsel %vm703, %v992, 0
      %v1034 = vsel %vm703, %v993, 0
      %v1037 = vsel %vm703, %v994, 0
      %v1040 = vsel %vm703, %v995, 0
      %v1043 = vsel %vm703, %v996, 0
      %v1046 = vsel %vm752, %v265, 0
      %1048 = vmatprep.subr.bf16.mxu0 0
      %1049 = vmatpush1.bf16.msra.mxu0 %v1046
      %1050 = vmatprep.subr.bf16.mxu0 0
      %1051 = vmatpush1.bf16.msra.mxu0 0
      %1052 = vmatprep.subr.bf16.mxu0 0
      %1053 = vmatpush1.bf16.msra.mxu0 0
      %1054 = vmatprep.subr.bf16.mxu0 0
      %1055 = vmatpush1.bf16.msra.mxu0 0
      %1056 = vmatprep.subr.bf16.mxu0 0
      %1057 = vmatpush1.bf16.msra.mxu0 0
      %1058 = vmatprep.subr.bf16.mxu0 0
      %1059 = vmatpush1.bf16.msra.mxu0 0
      %1060 = vmatprep.subr.bf16.mxu0 0
      %1061 = vmatpush1.bf16.msra.mxu0 0
      %1062 = vmatprep.subr.bf16.mxu0 0
      %1063 = vmatpush1.bf16.msra.mxu0 0
      %1064 = vmatprep.subr.bf16.mxu0 0
      %1065 = vmatpush1.bf16.msra.mxu0 0
      %1066 = vmatprep.subr.bf16.mxu0 0
      %1067 = vmatpush1.bf16.msra.mxu0 0
      %1068 = vmatprep.subr.bf16.mxu0 0
      %1069 = vmatpush1.bf16.msra.mxu0 0
      %1070 = vmatprep.subr.bf16.mxu0 0
      %1071 = vmatpush1.bf16.msra.mxu0 0
      %1072 = vmatprep.subr.bf16.mxu0 0
      %1073 = vmatpush1.bf16.msra.mxu0 0
      %1074 = vmatprep.subr.bf16.mxu0 0
      %1075 = vmatpush1.bf16.msra.mxu0 0
      %1076 = vmatprep.subr.bf16.mxu0 0
      %1077 = vmatpush1.bf16.msra.mxu0 0
      %1078 = vmatprep.subr.bf16.mxu0 0
      %1079 = vmatpush1.bf16.msra.mxu0 0
      %1080 = vmatprep.mubr.bf16.mxu0 0
      %1081 = vmatmul.mubr.bf16.gmra.mrb[0].mxu0 %v998
      %v1082 = vpop.f32.mrb[0].mxu0
      %v1083 = vadd.f32 %v791, %v1082
      %v1084 = vpop.f32.mrb[0].mxu0
      %v1085 = vpop.f32.mrb[0].mxu0
      %v1086 = vadd.f32 %v794, %v1085
      %v1087 = vpop.f32.mrb[0].mxu0
      %1088 = vmatprep.mubr.bf16.mxu0 0
      %1089 = vmatmul.mubr.bf16.gmra.mrb[0].mxu0 %v1001
      %v1090 = vpop.f32.mrb[0].mxu0
      %v1091 = vadd.f32 %v799, %v1090
      %v1092 = vpop.f32.mrb[0].mxu0
      %v1093 = vpop.f32.mrb[0].mxu0
      %v1094 = vadd.f32 %v802, %v1093
      %v1095 = vpop.f32.mrb[0].mxu0
      %1096 = vmatprep.mubr.bf16.mxu0 0
      %1097 = vmatmul.mubr.bf16.gmra.mrb[0].mxu0 %v1004
      %v1098 = vpop.f32.mrb[0].mxu0
      %v1099 = vadd.f32 %v807, %v1098
      %v1100 = vpop.f32.mrb[0].mxu0
      %v1101 = vpop.f32.mrb[0].mxu0
      %v1102 = vadd.f32 %v810, %v1101
      %v1103 = vpop.f32.mrb[0].mxu0
      %1104 = vmatprep.mubr.bf16.mxu0 0
      %1105 = vmatmul.mubr.bf16.gmra.mrb[0].mxu0 %v1007
      %v1106 = vpop.f32.mrb[0].mxu0
      %v1107 = vadd.f32 %v815, %v1106
      %v1108 = vpop.f32.mrb[0].mxu0
      %v1109 = vpop.f32.mrb[0].mxu0
      %v1110 = vadd.f32 %v818, %v1109
      %v1111 = vpop.f32.mrb[0].mxu0
      %1112 = vmatprep.mubr.bf16.mxu0 0
      %1113 = vmatmul.mubr.bf16.gmra.mrb[0].mxu0 %v1010
      %v1114 = vpop.f32.mrb[0].mxu0
      %v1115 = vadd.f32 %v823, %v1114
      %v1116 = vpop.f32.mrb[0].mxu0
      %v1117 = vpop.f32.mrb[0].mxu0
      %v1118 = vadd.f32 %v826, %v1117
      %v1119 = vpop.f32.mrb[0].mxu0
      %1120 = vmatprep.mubr.bf16.mxu0 0
      %1121 = vmatmul.mubr.bf16.gmra.mrb[0].mxu0 %v1013
      %v1122 = vpop.f32.mrb[0].mxu0
      %v1123 = vadd.f32 %v831, %v1122
      %v1124 = vpop.f32.mrb[0].mxu0
      %v1125 = vpop.f32.mrb[0].mxu0
      %v1126 = vadd.f32 %v834, %v1125
      %v1127 = vpop.f32.mrb[0].mxu0
      %1128 = vmatprep.mubr.bf16.mxu0 0
      %1129 = vmatmul.mubr.bf16.gmra.mrb[0].mxu0 %v1016
      %v1130 = vpop.f32.mrb[0].mxu0
      %v1131 = vadd.f32 %v839, %v1130
      %v1132 = vpop.f32.mrb[0].mxu0
      %v1133 = vpop.f32.mrb[0].mxu0
      %v1134 = vadd.f32 %v842, %v1133
      %v1135 = vpop.f32.mrb[0].mxu0
      %1136 = vmatprep.mubr.bf16.mxu0 0
      %1137 = vmatmul.mubr.bf16.gmra.mrb[0].mxu0 %v1019
      %v1138 = vpop.f32.mrb[0].mxu0
      %v1139 = vadd.f32 %v847, %v1138
      %v1140 = vpop.f32.mrb[0].mxu0
      %v1141 = vpop.f32.mrb[0].mxu0
      %v1142 = vadd.f32 %v850, %v1141
      %v1143 = vpop.f32.mrb[0].mxu0
      %1144 = vmatprep.mubr.bf16.mxu0 0
      %1145 = vmatmul.mubr.bf16.gmra.mrb[0].mxu0 %v1022
      %v1146 = vpop.f32.mrb[0].mxu0
      %v1147 = vadd.f32 %v855, %v1146
      %v1148 = vpop.f32.mrb[0].mxu0
      %v1149 = vpop.f32.mrb[0].mxu0
      %v1150 = vadd.f32 %v858, %v1149
      %v1151 = vpop.f32.mrb[0].mxu0
      %1152 = vmatprep.mubr.bf16.mxu0 0
      %1153 = vmatmul.mubr.bf16.gmra.mrb[0].mxu0 %v1025
      %v1154 = vpop.f32.mrb[0].mxu0
      %v1155 = vadd.f32 %v863, %v1154
      %v1156 = vpop.f32.mrb[0].mxu0
      %v1157 = vpop.f32.mrb[0].mxu0
      %v1158 = vadd.f32 %v866, %v1157
      %v1159 = vpop.f32.mrb[0].mxu0
      %1160 = vmatprep.mubr.bf16.mxu0 0
      %1161 = vmatmul.mubr.bf16.gmra.mrb[0].mxu0 %v1028
      %v1162 = vpop.f32.mrb[0].mxu0
      %v1163 = vadd.f32 %v871, %v1162
      %v1164 = vpop.f32.mrb[0].mxu0
      %v1165 = vpop.f32.mrb[0].mxu0
      %v1166 = vadd.f32 %v874, %v1165
      %v1167 = vpop.f32.mrb[0].mxu0
      %1168 = vmatprep.mubr.bf16.mxu0 0
      %1169 = vmatmul.mubr.bf16.gmra.mrb[0].mxu0 %v1031
      %v1170 = vpop.f32.mrb[0].mxu0
      %v1171 = vadd.f32 %v879, %v1170
      %v1172 = vpop.f32.mrb[0].mxu0
      %v1173 = vpop.f32.mrb[0].mxu0
      %v1174 = vadd.f32 %v882, %v1173
      %v1175 = vpop.f32.mrb[0].mxu0
      %1176 = vmatprep.mubr.bf16.mxu0 0
      %1177 = vmatmul.mubr.bf16.gmra.mrb[0].mxu0 %v1034
      %v1178 = vpop.f32.mrb[0].mxu0
      %v1179 = vadd.f32 %v887, %v1178
      %v1180 = vpop.f32.mrb[0].mxu0
      %v1181 = vpop.f32.mrb[0].mxu0
      %v1182 = vadd.f32 %v890, %v1181
      %v1183 = vpop.f32.mrb[0].mxu0
      %1184 = vmatprep.mubr.bf16.mxu0 0
      %1185 = vmatmul.mubr.bf16.gmra.mrb[0].mxu0 %v1037
      %v1186 = vpop.f32.mrb[0].mxu0
      %v1187 = vadd.f32 %v895, %v1186
      %v1188 = vpop.f32.mrb[0].mxu0
      %v1189 = vpop.f32.mrb[0].mxu0
      %v1190 = vadd.f32 %v898, %v1189
      %v1191 = vpop.f32.mrb[0].mxu0
      %1192 = vmatprep.mubr.bf16.mxu0 0
      %1193 = vmatmul.mubr.bf16.gmra.mrb[0].mxu0 %v1040
      %v1194 = vpop.f32.mrb[0].mxu0
      %v1195 = vadd.f32 %v903, %v1194
      %v1196 = vpop.f32.mrb[0].mxu0
      %v1197 = vpop.f32.mrb[0].mxu0
      %v1198 = vadd.f32 %v906, %v1197
      %v1199 = vpop.f32.mrb[0].mxu0
      %1200 = vmatprep.mubr.bf16.mxu0 0
      %1201 = vmatmul.mubr.bf16.gmra.mrb[0].mxu0 %v1043
      %v1202 = vpop.f32.mrb[0].mxu0
      %v1203 = vadd.f32 %v911, %v1202
      %v1204 = vpop.f32.mrb[0].mxu0
      %v1205 = vpop.f32.mrb[0].mxu0
      %v1206 = vadd.f32 %v914, %v1205
      %v1207 = vpop.f32.mrb[0].mxu0
      %1208 = vdwg.mxu0
      %vm1225 = vcmask 1042432
      %vm1226 = vcmask 1046532
      %vm1227 = vmor %vm1225, %vm1226
      %v1228 = vrot.slane %v211, 5
      %v1229 = vrot.slane %v1228, 4
      %v1230 = vrot.slane %v212, 5
      %v1231 = vsel %vm1227, %v1229, %v1230
      %v1232 = vrot.slane %v1230, 4
      %v1233 = vrot.slane %v213, 5
      %v1234 = vsel %vm1227, %v1232, %v1233
      %v1235 = vrot.slane %v214, 5
      %v1236 = vrot.slane %v1235, 4
      %v1237 = vrot.slane %v215, 5
      %v1238 = vsel %vm1227, %v1236, %v1237
      %v1239 = vrot.slane %v1237, 4
      %v1240 = vrot.slane %v216, 5
      %v1241 = vsel %vm1227, %v1239, %v1240
      %v1242 = vrot.slane %v217, 5
      %v1243 = vrot.slane %v1242, 4
      %v1244 = vrot.slane %v218, 5
      %v1245 = vsel %vm1227, %v1243, %v1244
      %v1246 = vrot.slane %v1244, 4
      %v1247 = vrot.slane %v219, 5
      %v1248 = vsel %vm1227, %v1246, %v1247
      %v1249 = vrot.slane %v220, 5
      %v1250 = vrot.slane %v1249, 4
      %v1251 = vrot.slane %v221, 5
      %v1252 = vsel %vm1227, %v1250, %v1251
      %v1253 = vrot.slane %v1251, 4
      %v1254 = vrot.slane %v222, 5
      %v1255 = vsel %vm1227, %v1253, %v1254
      %v1256 = vrot.slane %v223, 5
      %v1257 = vrot.slane %v1256, 4
      %v1258 = vrot.slane %v224, 5
      %v1259 = vsel %vm1227, %v1257, %v1258
      %v1260 = vrot.slane %v1258, 4
      %v1261 = vrot.slane %v225, 5
      %v1262 = vsel %vm1227, %v1260, %v1261
      %v1263 = vrot.slane %v226, 5
      %v1264 = vrot.slane %v1263, 4
      %v1265 = vrot.slane %v227, 5
      %v1266 = vsel %vm1227, %v1264, %v1265
      %v1267 = vrot.slane %v1265, 4
      %v1268 = vrot.slane %v228, 5
      %v1269 = vsel %vm1227, %v1267, %v1268
      %v1270 = vrot.slane %v229, 5
      %v1271 = vrot.slane %v1270, 4
      %v1272 = vrot.slane %v230, 5
      %v1273 = vsel %vm1227, %v1271, %v1272
      %v1274 = vrot.slane %v1272, 4
      %v1275 = vrot.slane %v231, 5
      %v1276 = vsel %vm1227, %v1274, %v1275
      %v1277 = vrot.slane %v232, 5
      %v1278 = vrot.slane %v1277, 4
      %v1279 = vrot.slane %v233, 5
      %v1280 = vsel %vm1227, %v1278, %v1279
      %v1281 = vrot.slane %v1279, 4
      %v1282 = vrot.slane %v234, 5
      %v1283 = vsel %vm1227, %v1281, %v1282
      %v1284 = vrot.slane %v235, 5
      %v1285 = vrot.slane %v1284, 4
      %v1286 = vrot.slane %v236, 5
      %v1287 = vsel %vm1227, %v1285, %v1286
      %v1288 = vrot.slane %v1286, 4
      %v1289 = vrot.slane %v237, 5
      %v1290 = vsel %vm1227, %v1288, %v1289
      %v1291 = vrot.slane %v238, 5
      %v1292 = vrot.slane %v1291, 4
      %v1293 = vrot.slane %v239, 5
      %v1294 = vsel %vm1227, %v1292, %v1293
      %v1295 = vrot.slane %v1293, 4
      %v1296 = vrot.slane %v240, 5
      %v1297 = vsel %vm1227, %v1295, %v1296
      %v1298 = vrot.slane %v241, 5
      %v1299 = vrot.slane %v1298, 4
      %v1300 = vrot.slane %v242, 5
      %v1301 = vsel %vm1227, %v1299, %v1300
      %v1302 = vrot.slane %v1300, 4
      %v1303 = vrot.slane %v243, 5
      %v1304 = vsel %vm1227, %v1302, %v1303
      %v1305 = vrot.slane %v244, 5
      %v1306 = vrot.slane %v1305, 4
      %v1307 = vrot.slane %v245, 5
      %v1308 = vsel %vm1227, %v1306, %v1307
      %v1309 = vrot.slane %v1307, 4
      %v1310 = vrot.slane %v246, 5
      %v1311 = vsel %vm1227, %v1309, %v1310
      %v1312 = vrot.slane %v247, 5
      %v1313 = vrot.slane %v1312, 4
      %v1314 = vrot.slane %v248, 5
      %v1315 = vsel %vm1227, %v1313, %v1314
      %v1316 = vrot.slane %v1314, 4
      %v1317 = vrot.slane %v249, 5
      %v1318 = vsel %vm1227, %v1316, %v1317
      %v1319 = vrot.slane %v250, 5
      %v1320 = vrot.slane %v1319, 4
      %v1321 = vrot.slane %v251, 5
      %v1322 = vsel %vm1227, %v1320, %v1321
      %v1323 = vrot.slane %v1321, 4
      %v1324 = vrot.slane %v252, 5
      %v1325 = vsel %vm1227, %v1323, %v1324
      %v1326 = vrot.slane %v253, 5
      %v1327 = vrot.slane %v1326, 4
      %v1328 = vrot.slane %v254, 5
      %v1329 = vsel %vm1227, %v1327, %v1328
      %v1330 = vrot.slane %v1328, 4
      %v1331 = vrot.slane %v255, 5
      %v1332 = vsel %vm1227, %v1330, %v1331
      %v1333 = vrot.slane %v256, 5
      %v1334 = vrot.slane %v1333, 4
      %v1335 = vrot.slane %v257, 5
      %v1336 = vsel %vm1227, %v1334, %v1335
      %v1337 = vrot.slane %v1335, 4
      %v1338 = vrot.slane %v258, 5
      %v1339 = vsel %vm1227, %v1337, %v1338
      %s1340 = scalar_lea.vmem %s1, 4
      %v1341 = vld [vmem:[%s1340] sm:$0x3]
      %v1342 = vunpack.c.l.b16 %v1231
      %v1343 = vunpack.c.l.b16 %v1234
      %v1344 = vunpack.c.l.b16 %v1238
      %v1345 = vunpack.c.l.b16 %v1241
      %v1346 = vunpack.c.l.b16 %v1245
      %v1347 = vunpack.c.l.b16 %v1248
      %v1348 = vunpack.c.l.b16 %v1252
      %v1349 = vunpack.c.l.b16 %v1255
      %v1350 = vunpack.c.l.b16 %v1259
      %v1351 = vunpack.c.l.b16 %v1262
      %v1352 = vunpack.c.l.b16 %v1266
      %v1353 = vunpack.c.l.b16 %v1269
      %v1354 = vunpack.c.l.b16 %v1273
      %v1355 = vunpack.c.l.b16 %v1276
      %v1356 = vunpack.c.l.b16 %v1280
      %v1357 = vunpack.c.l.b16 %v1283
      %v1358 = vunpack.c.l.b16 %v1287
      %v1359 = vunpack.c.l.b16 %v1290
      %v1360 = vunpack.c.l.b16 %v1294
      %v1361 = vunpack.c.l.b16 %v1297
      %v1362 = vunpack.c.l.b16 %v1301
      %v1363 = vunpack.c.l.b16 %v1304
      %v1364 = vunpack.c.l.b16 %v1308
      %v1365 = vunpack.c.l.b16 %v1311
      %v1366 = vunpack.c.l.b16 %v1315
      %v1367 = vunpack.c.l.b16 %v1318
      %v1368 = vunpack.c.l.b16 %v1322
      %v1369 = vunpack.c.l.b16 %v1325
      %v1370 = vunpack.c.l.b16 %v1329
      %v1371 = vunpack.c.l.b16 %v1332
      %v1372 = vunpack.c.l.b16 %v1336
      %v1373 = vunpack.c.l.b16 %v1339
      %v1374 = vpack.c.b16 %v1343, %v1342
      %v1375 = vpack.c.b16 %v1345, %v1344
      %v1376 = vpack.c.b16 %v1347, %v1346
      %v1377 = vpack.c.b16 %v1349, %v1348
      %v1378 = vpack.c.b16 %v1351, %v1350
      %v1379 = vpack.c.b16 %v1353, %v1352
      %v1380 = vpack.c.b16 %v1355, %v1354
      %v1381 = vpack.c.b16 %v1357, %v1356
      %v1382 = vpack.c.b16 %v1359, %v1358
      %v1383 = vpack.c.b16 %v1361, %v1360
      %v1384 = vpack.c.b16 %v1363, %v1362
      %v1385 = vpack.c.b16 %v1365, %v1364
      %v1386 = vpack.c.b16 %v1367, %v1366
      %v1387 = vpack.c.b16 %v1369, %v1368
      %v1388 = vpack.c.b16 %v1371, %v1370
      %v1389 = vpack.c.b16 %v1373, %v1372
      %v1391 = vsel %vm703, %v1374, 0
      %v1394 = vsel %vm703, %v1375, 0
      %v1397 = vsel %vm703, %v1376, 0
      %v1400 = vsel %vm703, %v1377, 0
      %v1403 = vsel %vm703, %v1378, 0
      %v1406 = vsel %vm703, %v1379, 0
      %v1409 = vsel %vm703, %v1380, 0
      %v1412 = vsel %vm703, %v1381, 0
      %v1415 = vsel %vm703, %v1382, 0
      %v1418 = vsel %vm703, %v1383, 0
      %v1421 = vsel %vm703, %v1384, 0
      %v1424 = vsel %vm703, %v1385, 0
      %v1427 = vsel %vm703, %v1386, 0
      %v1430 = vsel %vm703, %v1387, 0
      %v1433 = vsel %vm703, %v1388, 0
      %v1436 = vsel %vm703, %v1389, 0
      %v1439 = vsel %vm752, %v1341, 0
      %1441 = vmatprep.subr.bf16.mxu0 0
      %1442 = vmatpush1.bf16.msra.mxu0 %v1439
      %1443 = vmatprep.subr.bf16.mxu0 0
      %1444 = vmatpush1.bf16.msra.mxu0 0
      %1445 = vmatprep.subr.bf16.mxu0 0
      %1446 = vmatpush1.bf16.msra.mxu0 0
      %1447 = vmatprep.subr.bf16.mxu0 0
      %1448 = vmatpush1.bf16.msra.mxu0 0
      %1449 = vmatprep.subr.bf16.mxu0 0
      %1450 = vmatpush1.bf16.msra.mxu0 0
      %1451 = vmatprep.subr.bf16.mxu0 0
      %1452 = vmatpush1.bf16.msra.mxu0 0
      %1453 = vmatprep.subr.bf16.mxu0 0
      %1454 = vmatpush1.bf16.msra.mxu0 0
      %1455 = vmatprep.subr.bf16.mxu0 0
      %1456 = vmatpush1.bf16.msra.mxu0 0
      %1457 = vmatprep.subr.bf16.mxu0 0
      %1458 = vmatpush1.bf16.msra.mxu0 0
      %1459 = vmatprep.subr.bf16.mxu0 0
      %1460 = vmatpush1.bf16.msra.mxu0 0
      %1461 = vmatprep.subr.bf16.mxu0 0
      %1462 = vmatpush1.bf16.msra.mxu0 0
      %1463 = vmatprep.subr.bf16.mxu0 0
      %1464 = vmatpush1.bf16.msra.mxu0 0
      %1465 = vmatprep.subr.bf16.mxu0 0
      %1466 = vmatpush1.bf16.msra.mxu0 0
      %1467 = vmatprep.subr.bf16.mxu0 0
      %1468 = vmatpush1.bf16.msra.mxu0 0
      %1469 = vmatprep.subr.bf16.mxu0 0
      %1470 = vmatpush1.bf16.msra.mxu0 0
      %1471 = vmatprep.subr.bf16.mxu0 0
      %1472 = vmatpush1.bf16.msra.mxu0 0
      %1473 = vmatprep.mubr.bf16.mxu0 0
      %1474 = vmatmul.mubr.bf16.gmra.mrb[0].mxu0 %v1391
      %v1475 = vpop.f32.mrb[0].mxu0
      %v1476 = vadd.f32 0.0, %v1475
      %v1477 = vpop.f32.mrb[0].mxu0
      %v1478 = vpop.f32.mrb[0].mxu0
      %v1479 = vadd.f32 0.0, %v1478
      %v1480 = vpop.f32.mrb[0].mxu0
      %1481 = vmatprep.mubr.bf16.mxu0 0
      %1482 = vmatmul.mubr.bf16.gmra.mrb[0].mxu0 %v1394
      %v1483 = vpop.f32.mrb[0].mxu0
      %v1484 = vadd.f32 0.0, %v1483
      %v1485 = vpop.f32.mrb[0].mxu0
      %v1486 = vpop.f32.mrb[0].mxu0
      %v1487 = vadd.f32 0.0, %v1486
      %v1488 = vpop.f32.mrb[0].mxu0
      %1489 = vmatprep.mubr.bf16.mxu0 0
      %1490 = vmatmul.mubr.bf16.gmra.mrb[0].mxu0 %v1397
      %v1491 = vpop.f32.mrb[0].mxu0
      %v1492 = vadd.f32 0.0, %v1491
      %v1493 = vpop.f32.mrb[0].mxu0
      %v1494 = vpop.f32.mrb[0].mxu0
      %v1495 = vadd.f32 0.0, %v1494
      %v1496 = vpop.f32.mrb[0].mxu0
      %1497 = vmatprep.mubr.bf16.mxu0 0
      %1498 = vmatmul.mubr.bf16.gmra.mrb[0].mxu0 %v1400
      %v1499 = vpop.f32.mrb[0].mxu0
      %v1500 = vadd.f32 0.0, %v1499
      %v1501 = vpop.f32.mrb[0].mxu0
      %v1502 = vpop.f32.mrb[0].mxu0
      %v1503 = vadd.f32 0.0, %v1502
      %v1504 = vpop.f32.mrb[0].mxu0
      %1505 = vmatprep.mubr.bf16.mxu0 0
      %1506 = vmatmul.mubr.bf16.gmra.mrb[0].mxu0 %v1403
      %v1507 = vpop.f32.mrb[0].mxu0
      %v1508 = vadd.f32 0.0, %v1507
      %v1509 = vpop.f32.mrb[0].mxu0
      %v1510 = vpop.f32.mrb[0].mxu0
      %v1511 = vadd.f32 0.0, %v1510
      %v1512 = vpop.f32.mrb[0].mxu0
      %1513 = vmatprep.mubr.bf16.mxu0 0
      %1514 = vmatmul.mubr.bf16.gmra.mrb[0].mxu0 %v1406
      %v1515 = vpop.f32.mrb[0].mxu0
      %v1516 = vadd.f32 0.0, %v1515
      %v1517 = vpop.f32.mrb[0].mxu0
      %v1518 = vpop.f32.mrb[0].mxu0
      %v1519 = vadd.f32 0.0, %v1518
      %v1520 = vpop.f32.mrb[0].mxu0
      %1521 = vmatprep.mubr.bf16.mxu0 0
      %1522 = vmatmul.mubr.bf16.gmra.mrb[0].mxu0 %v1409
      %v1523 = vpop.f32.mrb[0].mxu0
      %v1524 = vadd.f32 0.0, %v1523
      %v1525 = vpop.f32.mrb[0].mxu0
      %v1526 = vpop.f32.mrb[0].mxu0
      %v1527 = vadd.f32 0.0, %v1526
      %v1528 = vpop.f32.mrb[0].mxu0
      %1529 = vmatprep.mubr.bf16.mxu0 0
      %1530 = vmatmul.mubr.bf16.gmra.mrb[0].mxu0 %v1412
      %v1531 = vpop.f32.mrb[0].mxu0
      %v1532 = vadd.f32 0.0, %v1531
      %v1533 = vpop.f32.mrb[0].mxu0
      %v1534 = vpop.f32.mrb[0].mxu0
      %v1535 = vadd.f32 0.0, %v1534
      %v1536 = vpop.f32.mrb[0].mxu0
      %1537 = vmatprep.mubr.bf16.mxu0 0
      %1538 = vmatmul.mubr.bf16.gmra.mrb[0].mxu0 %v1415
      %v1539 = vpop.f32.mrb[0].mxu0
      %v1540 = vadd.f32 0.0, %v1539
      %v1541 = vpop.f32.mrb[0].mxu0
      %v1542 = vpop.f32.mrb[0].mxu0
      %v1543 = vadd.f32 0.0, %v1542
      %v1544 = vpop.f32.mrb[0].mxu0
      %1545 = vmatprep.mubr.bf16.mxu0 0
      %1546 = vmatmul.mubr.bf16.gmra.mrb[0].mxu0 %v1418
      %v1547 = vpop.f32.mrb[0].mxu0
      %v1548 = vadd.f32 0.0, %v1547
      %v1549 = vpop.f32.mrb[0].mxu0
      %v1550 = vpop.f32.mrb[0].mxu0
      %v1551 = vadd.f32 0.0, %v1550
      %v1552 = vpop.f32.mrb[0].mxu0
      %1553 = vmatprep.mubr.bf16.mxu0 0
      %1554 = vmatmul.mubr.bf16.gmra.mrb[0].mxu0 %v1421
      %v1555 = vpop.f32.mrb[0].mxu0
      %v1556 = vadd.f32 0.0, %v1555
      %v1557 = vpop.f32.mrb[0].mxu0
      %v1558 = vpop.f32.mrb[0].mxu0
      %v1559 = vadd.f32 0.0, %v1558
      %v1560 = vpop.f32.mrb[0].mxu0
      %1561 = vmatprep.mubr.bf16.mxu0 0
      %1562 = vmatmul.mubr.bf16.gmra.mrb[0].mxu0 %v1424
      %v1563 = vpop.f32.mrb[0].mxu0
      %v1564 = vadd.f32 0.0, %v1563
      %v1565 = vpop.f32.mrb[0].mxu0
      %v1566 = vpop.f32.mrb[0].mxu0
      %v1567 = vadd.f32 0.0, %v1566
      %v1568 = vpop.f32.mrb[0].mxu0
      %1569 = vmatprep.mubr.bf16.mxu0 0
      %1570 = vmatmul.mubr.bf16.gmra.mrb[0].mxu0 %v1427
      %v1571 = vpop.f32.mrb[0].mxu0
      %v1572 = vadd.f32 0.0, %v1571
      %v1573 = vpop.f32.mrb[0].mxu0
      %v1574 = vpop.f32.mrb[0].mxu0
      %v1575 = vadd.f32 0.0, %v1574
      %v1576 = vpop.f32.mrb[0].mxu0
      %1577 = vmatprep.mubr.bf16.mxu0 0
      %1578 = vmatmul.mubr.bf16.gmra.mrb[0].mxu0 %v1430
      %v1579 = vpop.f32.mrb[0].mxu0
      %v1580 = vadd.f32 0.0, %v1579
      %v1581 = vpop.f32.mrb[0].mxu0
      %v1582 = vpop.f32.mrb[0].mxu0
      %v1583 = vadd.f32 0.0, %v1582
      %v1584 = vpop.f32.mrb[0].mxu0
      %1585 = vmatprep.mubr.bf16.mxu0 0
      %1586 = vmatmul.mubr.bf16.gmra.mrb[0].mxu0 %v1433
      %v1587 = vpop.f32.mrb[0].mxu0
      %v1588 = vadd.f32 0.0, %v1587
      %v1589 = vpop.f32.mrb[0].mxu0
      %v1590 = vpop.f32.mrb[0].mxu0
      %v1591 = vadd.f32 0.0, %v1590
      %v1592 = vpop.f32.mrb[0].mxu0
      %1593 = vmatprep.mubr.bf16.mxu0 0
      %1594 = vmatmul.mubr.bf16.gmra.mrb[0].mxu0 %v1436
      %v1595 = vpop.f32.mrb[0].mxu0
      %v1596 = vadd.f32 0.0, %v1595
      %v1597 = vpop.f32.mrb[0].mxu0
      %v1598 = vpop.f32.mrb[0].mxu0
      %v1599 = vadd.f32 0.0, %v1598
      %v1600 = vpop.f32.mrb[0].mxu0
      %1601 = vdwg.mxu0
      %v1602 = vadd.f32 %v1083, %v1476
      %v1603 = vadd.f32 %v1086, %v1479
      %v1604 = vadd.f32 %v1091, %v1484
      %v1605 = vadd.f32 %v1094, %v1487
      %v1606 = vadd.f32 %v1099, %v1492
      %v1607 = vadd.f32 %v1102, %v1495
      %v1608 = vadd.f32 %v1107, %v1500
      %v1609 = vadd.f32 %v1110, %v1503
      %v1610 = vadd.f32 %v1115, %v1508
      %v1611 = vadd.f32 %v1118, %v1511
      %v1612 = vadd.f32 %v1123, %v1516
      %v1613 = vadd.f32 %v1126, %v1519
      %v1614 = vadd.f32 %v1131, %v1524
      %v1615 = vadd.f32 %v1134, %v1527
      %v1616 = vadd.f32 %v1139, %v1532
      %v1617 = vadd.f32 %v1142, %v1535
      %v1618 = vadd.f32 %v1147, %v1540
      %v1619 = vadd.f32 %v1150, %v1543
      %v1620 = vadd.f32 %v1155, %v1548
      %v1621 = vadd.f32 %v1158, %v1551
      %v1622 = vadd.f32 %v1163, %v1556
      %v1623 = vadd.f32 %v1166, %v1559
      %v1624 = vadd.f32 %v1171, %v1564
      %v1625 = vadd.f32 %v1174, %v1567
      %v1626 = vadd.f32 %v1179, %v1572
      %v1627 = vadd.f32 %v1182, %v1575
      %v1628 = vadd.f32 %v1187, %v1580
      %v1629 = vadd.f32 %v1190, %v1583
      %v1630 = vadd.f32 %v1195, %v1588
      %v1631 = vadd.f32 %v1198, %v1591
      %v1632 = vadd.f32 %v1203, %v1596
      %v1633 = vadd.f32 %v1206, %v1599
      %s1634 = scalar_lea.vmem %s1, 6
      %v1635 = vld [vmem:[%s1634] sm:$0x3]
      %v1638 = vunpack.c.l.b16 %v259
      %v1639 = vunpack.c.l.b16 %v260
      %v1640 = vpack.c.b16 %v1639, %v1638
      %v1642 = vsel %vm703, %v1640, 0
      %v1645 = vsel %vm752, %v1635, 0
      %1647 = vmatprep.subr.bf16.mxu0 0
      %1648 = vmatpush1.bf16.msra.mxu0 %v1645
      %1649 = vmatprep.subr.bf16.mxu0 0
      %1650 = vmatpush1.bf16.msra.mxu0 0
      %1651 = vmatprep.subr.bf16.mxu0 0
      %1652 = vmatpush1.bf16.msra.mxu0 0
      %1653 = vmatprep.subr.bf16.mxu0 0
      %1654 = vmatpush1.bf16.msra.mxu0 0
      %1655 = vmatprep.subr.bf16.mxu0 0
      %1656 = vmatpush1.bf16.msra.mxu0 0
      %1657 = vmatprep.subr.bf16.mxu0 0
      %1658 = vmatpush1.bf16.msra.mxu0 0
      %1659 = vmatprep.subr.bf16.mxu0 0
      %1660 = vmatpush1.bf16.msra.mxu0 0
      %1661 = vmatprep.subr.bf16.mxu0 0
      %1662 = vmatpush1.bf16.msra.mxu0 0
      %1663 = vmatprep.subr.bf16.mxu0 0
      %1664 = vmatpush1.bf16.msra.mxu0 0
      %1665 = vmatprep.subr.bf16.mxu0 0
      %1666 = vmatpush1.bf16.msra.mxu0 0
      %1667 = vmatprep.subr.bf16.mxu0 0
      %1668 = vmatpush1.bf16.msra.mxu0 0
      %1669 = vmatprep.subr.bf16.mxu0 0
      %1670 = vmatpush1.bf16.msra.mxu0 0
      %1671 = vmatprep.subr.bf16.mxu0 0
      %1672 = vmatpush1.bf16.msra.mxu0 0
      %1673 = vmatprep.subr.bf16.mxu0 0
      %1674 = vmatpush1.bf16.msra.mxu0 0
      %1675 = vmatprep.subr.bf16.mxu0 0
      %1676 = vmatpush1.bf16.msra.mxu0 0
      %1677 = vmatprep.subr.bf16.mxu0 0
      %1678 = vmatpush1.bf16.msra.mxu0 0
      %1679 = vmatprep.mubr.bf16.mxu0 0
      %1680 = vmatmul.mubr.bf16.gmra.mrb[0].mxu0 %v1001
      %v1681 = vpop.f32.mrb[0].mxu0
      %v1682 = vadd.f32 0.0, %v1681
      %v1683 = vpop.f32.mrb[0].mxu0
      %v1684 = vpop.f32.mrb[0].mxu0
      %v1685 = vadd.f32 0.0, %v1684
      %v1686 = vpop.f32.mrb[0].mxu0
      %1687 = vmatprep.mubr.bf16.mxu0 0
      %1688 = vmatmul.mubr.bf16.gmra.mrb[0].mxu0 %v1004
      %v1689 = vpop.f32.mrb[0].mxu0
      %v1690 = vadd.f32 0.0, %v1689
      %v1691 = vpop.f32.mrb[0].mxu0
      %v1692 = vpop.f32.mrb[0].mxu0
      %v1693 = vadd.f32 0.0, %v1692
      %v1694 = vpop.f32.mrb[0].mxu0
      %1695 = vmatprep.mubr.bf16.mxu0 0
      %1696 = vmatmul.mubr.bf16.gmra.mrb[0].mxu0 %v1007
      %v1697 = vpop.f32.mrb[0].mxu0
      %v1698 = vadd.f32 0.0, %v1697
      %v1699 = vpop.f32.mrb[0].mxu0
      %v1700 = vpop.f32.mrb[0].mxu0
      %v1701 = vadd.f32 0.0, %v1700
      %v1702 = vpop.f32.mrb[0].mxu0
      %1703 = vmatprep.mubr.bf16.mxu0 0
      %1704 = vmatmul.mubr.bf16.gmra.mrb[0].mxu0 %v1010
      %v1705 = vpop.f32.mrb[0].mxu0
      %v1706 = vadd.f32 0.0, %v1705
      %v1707 = vpop.f32.mrb[0].mxu0
      %v1708 = vpop.f32.mrb[0].mxu0
      %v1709 = vadd.f32 0.0, %v1708
      %v1710 = vpop.f32.mrb[0].mxu0
      %1711 = vmatprep.mubr.bf16.mxu0 0
      %1712 = vmatmul.mubr.bf16.gmra.mrb[0].mxu0 %v1013
      %v1713 = vpop.f32.mrb[0].mxu0
      %v1714 = vadd.f32 0.0, %v1713
      %v1715 = vpop.f32.mrb[0].mxu0
      %v1716 = vpop.f32.mrb[0].mxu0
      %v1717 = vadd.f32 0.0, %v1716
      %v1718 = vpop.f32.mrb[0].mxu0
      %1719 = vmatprep.mubr.bf16.mxu0 0
      %1720 = vmatmul.mubr.bf16.gmra.mrb[0].mxu0 %v1016
      %v1721 = vpop.f32.mrb[0].mxu0
      %v1722 = vadd.f32 0.0, %v1721
      %v1723 = vpop.f32.mrb[0].mxu0
      %v1724 = vpop.f32.mrb[0].mxu0
      %v1725 = vadd.f32 0.0, %v1724
      %v1726 = vpop.f32.mrb[0].mxu0
      %1727 = vmatprep.mubr.bf16.mxu0 0
      %1728 = vmatmul.mubr.bf16.gmra.mrb[0].mxu0 %v1019
      %v1729 = vpop.f32.mrb[0].mxu0
      %v1730 = vadd.f32 0.0, %v1729
      %v1731 = vpop.f32.mrb[0].mxu0
      %v1732 = vpop.f32.mrb[0].mxu0
      %v1733 = vadd.f32 0.0, %v1732
      %v1734 = vpop.f32.mrb[0].mxu0
      %1735 = vmatprep.mubr.bf16.mxu0 0
      %1736 = vmatmul.mubr.bf16.gmra.mrb[0].mxu0 %v1022
      %v1737 = vpop.f32.mrb[0].mxu0
      %v1738 = vadd.f32 0.0, %v1737
      %v1739 = vpop.f32.mrb[0].mxu0
      %v1740 = vpop.f32.mrb[0].mxu0
      %v1741 = vadd.f32 0.0, %v1740
      %v1742 = vpop.f32.mrb[0].mxu0
      %1743 = vmatprep.mubr.bf16.mxu0 0
      %1744 = vmatmul.mubr.bf16.gmra.mrb[0].mxu0 %v1025
      %v1745 = vpop.f32.mrb[0].mxu0
      %v1746 = vadd.f32 0.0, %v1745
      %v1747 = vpop.f32.mrb[0].mxu0
      %v1748 = vpop.f32.mrb[0].mxu0
      %v1749 = vadd.f32 0.0, %v1748
      %v1750 = vpop.f32.mrb[0].mxu0
      %1751 = vmatprep.mubr.bf16.mxu0 0
      %1752 = vmatmul.mubr.bf16.gmra.mrb[0].mxu0 %v1028
      %v1753 = vpop.f32.mrb[0].mxu0
      %v1754 = vadd.f32 0.0, %v1753
      %v1755 = vpop.f32.mrb[0].mxu0
      %v1756 = vpop.f32.mrb[0].mxu0
      %v1757 = vadd.f32 0.0, %v1756
      %v1758 = vpop.f32.mrb[0].mxu0
      %1759 = vmatprep.mubr.bf16.mxu0 0
      %1760 = vmatmul.mubr.bf16.gmra.mrb[0].mxu0 %v1031
      %v1761 = vpop.f32.mrb[0].mxu0
      %v1762 = vadd.f32 0.0, %v1761
      %v1763 = vpop.f32.mrb[0].mxu0
      %v1764 = vpop.f32.mrb[0].mxu0
      %v1765 = vadd.f32 0.0, %v1764
      %v1766 = vpop.f32.mrb[0].mxu0
      %1767 = vmatprep.mubr.bf16.mxu0 0
      %1768 = vmatmul.mubr.bf16.gmra.mrb[0].mxu0 %v1034
      %v1769 = vpop.f32.mrb[0].mxu0
      %v1770 = vadd.f32 0.0, %v1769
      %v1771 = vpop.f32.mrb[0].mxu0
      %v1772 = vpop.f32.mrb[0].mxu0
      %v1773 = vadd.f32 0.0, %v1772
      %v1774 = vpop.f32.mrb[0].mxu0
      %1775 = vmatprep.mubr.bf16.mxu0 0
      %1776 = vmatmul.mubr.bf16.gmra.mrb[0].mxu0 %v1037
      %v1777 = vpop.f32.mrb[0].mxu0
      %v1778 = vadd.f32 0.0, %v1777
      %v1779 = vpop.f32.mrb[0].mxu0
      %v1780 = vpop.f32.mrb[0].mxu0
      %v1781 = vadd.f32 0.0, %v1780
      %v1782 = vpop.f32.mrb[0].mxu0
      %1783 = vmatprep.mubr.bf16.mxu0 0
      %1784 = vmatmul.mubr.bf16.gmra.mrb[0].mxu0 %v1040
      %v1785 = vpop.f32.mrb[0].mxu0
      %v1786 = vadd.f32 0.0, %v1785
      %v1787 = vpop.f32.mrb[0].mxu0
      %v1788 = vpop.f32.mrb[0].mxu0
      %v1789 = vadd.f32 0.0, %v1788
      %v1790 = vpop.f32.mrb[0].mxu0
      %1791 = vmatprep.mubr.bf16.mxu0 0
      %1792 = vmatmul.mubr.bf16.gmra.mrb[0].mxu0 %v1043
      %v1793 = vpop.f32.mrb[0].mxu0
      %v1794 = vadd.f32 0.0, %v1793
      %v1795 = vpop.f32.mrb[0].mxu0
      %v1796 = vpop.f32.mrb[0].mxu0
      %v1797 = vadd.f32 0.0, %v1796
      %v1798 = vpop.f32.mrb[0].mxu0
      %1799 = vmatprep.mubr.bf16.mxu0 0
      %1800 = vmatmul.mubr.bf16.gmra.mrb[0].mxu0 %v1642
      %v1801 = vpop.f32.mrb[0].mxu0
      %v1802 = vadd.f32 0.0, %v1801
      %v1803 = vpop.f32.mrb[0].mxu0
      %v1804 = vpop.f32.mrb[0].mxu0
      %v1805 = vadd.f32 0.0, %v1804
      %v1806 = vpop.f32.mrb[0].mxu0
      %1807 = vdwg.mxu0
      %v1808 = vadd.f32 %v1602, %v1682
      %v1809 = vadd.f32 %v1603, %v1685
      %v1810 = vadd.f32 %v1604, %v1690
      %v1811 = vadd.f32 %v1605, %v1693
      %v1812 = vadd.f32 %v1606, %v1698
      %v1813 = vadd.f32 %v1607, %v1701
      %v1814 = vadd.f32 %v1608, %v1706
      %v1815 = vadd.f32 %v1609, %v1709
      %v1816 = vadd.f32 %v1610, %v1714
      %v1817 = vadd.f32 %v1611, %v1717
      %v1818 = vadd.f32 %v1612, %v1722
      %v1819 = vadd.f32 %v1613, %v1725
      %v1820 = vadd.f32 %v1614, %v1730
      %v1821 = vadd.f32 %v1615, %v1733
      %v1822 = vadd.f32 %v1616, %v1738
      %v1823 = vadd.f32 %v1617, %v1741
      %v1824 = vadd.f32 %v1618, %v1746
      %v1825 = vadd.f32 %v1619, %v1749
      %v1826 = vadd.f32 %v1620, %v1754
      %v1827 = vadd.f32 %v1621, %v1757
      %v1828 = vadd.f32 %v1622, %v1762
      %v1829 = vadd.f32 %v1623, %v1765
      %v1830 = vadd.f32 %v1624, %v1770
      %v1831 = vadd.f32 %v1625, %v1773
      %v1832 = vadd.f32 %v1626, %v1778
      %v1833 = vadd.f32 %v1627, %v1781
      %v1834 = vadd.f32 %v1628, %v1786
      %v1835 = vadd.f32 %v1629, %v1789
      %v1836 = vadd.f32 %v1630, %v1794
      %v1837 = vadd.f32 %v1631, %v1797
      %v1838 = vadd.f32 %v1632, %v1802
      %v1839 = vadd.f32 %v1633, %v1805
      %v1841 = vshrl.u32 %v259, 16
      %v1843 = vrot.slane %v1841, 4
      %v1844 = vshll.u32 %v259, 16
      %v1846 = vrot.slane %v1844, 5
      %v1847 = vor.u32 %v1843, %v1846
      %v1848 = vrot.slane %v1847, 4
      %v1850 = vshll.u32 %v260, 16
      %v1852 = vrot.slane %v1850, 5
      %v1853 = vsel %vm268, %v1848, %v1852
      %v1854 = vshrl.u32 %v260, 16
      %v1856 = vrot.slane %v1854, 4
      %v1857 = vor.u32 %v1856, %v1852
      %v1858 = vrot.slane %v1857, 4
      %v1860 = vshll.u32 %v261, 16
      %v1862 = vrot.slane %v1860, 5
      %v1863 = vsel %vm268, %v1858, %v1862
      %s1864 = scalar_lea.vmem %s1, 8
      %v1865 = vld [vmem:[%s1864] sm:$0x3]
      %v1866 = vunpack.c.l.b16 %v1853
      %v1867 = vunpack.c.l.b16 %v1863
      %v1868 = vpack.c.b16 %v1867, %v1866
      %v1870 = vsel %vm703, %v1868, 0
      %v1873 = vsel %vm752, %v1865, 0
      %1875 = vmatprep.subr.bf16.mxu0 0
      %1876 = vmatpush1.bf16.msra.mxu0 %v1873
      %1877 = vmatprep.subr.bf16.mxu0 0
      %1878 = vmatpush1.bf16.msra.mxu0 0
      %1879 = vmatprep.subr.bf16.mxu0 0
      %1880 = vmatpush1.bf16.msra.mxu0 0
      %1881 = vmatprep.subr.bf16.mxu0 0
      %1882 = vmatpush1.bf16.msra.mxu0 0
      %1883 = vmatprep.subr.bf16.mxu0 0
      %1884 = vmatpush1.bf16.msra.mxu0 0
      %1885 = vmatprep.subr.bf16.mxu0 0
      %1886 = vmatpush1.bf16.msra.mxu0 0
      %1887 = vmatprep.subr.bf16.mxu0 0
      %1888 = vmatpush1.bf16.msra.mxu0 0
      %1889 = vmatprep.subr.bf16.mxu0 0
      %1890 = vmatpush1.bf16.msra.mxu0 0
      %1891 = vmatprep.subr.bf16.mxu0 0
      %1892 = vmatpush1.bf16.msra.mxu0 0
      %1893 = vmatprep.subr.bf16.mxu0 0
      %1894 = vmatpush1.bf16.msra.mxu0 0
      %1895 = vmatprep.subr.bf16.mxu0 0
      %1896 = vmatpush1.bf16.msra.mxu0 0
      %1897 = vmatprep.subr.bf16.mxu0 0
      %1898 = vmatpush1.bf16.msra.mxu0 0
      %1899 = vmatprep.subr.bf16.mxu0 0
      %1900 = vmatpush1.bf16.msra.mxu0 0
      %1901 = vmatprep.subr.bf16.mxu0 0
      %1902 = vmatpush1.bf16.msra.mxu0 0
      %1903 = vmatprep.subr.bf16.mxu0 0
      %1904 = vmatpush1.bf16.msra.mxu0 0
      %1905 = vmatprep.subr.bf16.mxu0 0
      %1906 = vmatpush1.bf16.msra.mxu0 0
      %1907 = vmatprep.mubr.bf16.mxu0 0
      %1908 = vmatmul.mubr.bf16.gmra.mrb[0].mxu0 %v708
      %v1909 = vpop.f32.mrb[0].mxu0
      %v1910 = vadd.f32 0.0, %v1909
      %v1911 = vpop.f32.mrb[0].mxu0
      %v1912 = vpop.f32.mrb[0].mxu0
      %v1913 = vadd.f32 0.0, %v1912
      %v1914 = vpop.f32.mrb[0].mxu0
      %1915 = vmatprep.mubr.bf16.mxu0 0
      %1916 = vmatmul.mubr.bf16.gmra.mrb[0].mxu0 %v711
      %v1917 = vpop.f32.mrb[0].mxu0
      %v1918 = vadd.f32 0.0, %v1917
      %v1919 = vpop.f32.mrb[0].mxu0
      %v1920 = vpop.f32.mrb[0].mxu0
      %v1921 = vadd.f32 0.0, %v1920
      %v1922 = vpop.f32.mrb[0].mxu0
      %1923 = vmatprep.mubr.bf16.mxu0 0
      %1924 = vmatmul.mubr.bf16.gmra.mrb[0].mxu0 %v714
      %v1925 = vpop.f32.mrb[0].mxu0
      %v1926 = vadd.f32 0.0, %v1925
      %v1927 = vpop.f32.mrb[0].mxu0
      %v1928 = vpop.f32.mrb[0].mxu0
      %v1929 = vadd.f32 0.0, %v1928
      %v1930 = vpop.f32.mrb[0].mxu0
      %1931 = vmatprep.mubr.bf16.mxu0 0
      %1932 = vmatmul.mubr.bf16.gmra.mrb[0].mxu0 %v717
      %v1933 = vpop.f32.mrb[0].mxu0
      %v1934 = vadd.f32 0.0, %v1933
      %v1935 = vpop.f32.mrb[0].mxu0
      %v1936 = vpop.f32.mrb[0].mxu0
      %v1937 = vadd.f32 0.0, %v1936
      %v1938 = vpop.f32.mrb[0].mxu0
      %1939 = vmatprep.mubr.bf16.mxu0 0
      %1940 = vmatmul.mubr.bf16.gmra.mrb[0].mxu0 %v720
      %v1941 = vpop.f32.mrb[0].mxu0
      %v1942 = vadd.f32 0.0, %v1941
      %v1943 = vpop.f32.mrb[0].mxu0
      %v1944 = vpop.f32.mrb[0].mxu0
      %v1945 = vadd.f32 0.0, %v1944
      %v1946 = vpop.f32.mrb[0].mxu0
      %1947 = vmatprep.mubr.bf16.mxu0 0
      %1948 = vmatmul.mubr.bf16.gmra.mrb[0].mxu0 %v723
      %v1949 = vpop.f32.mrb[0].mxu0
      %v1950 = vadd.f32 0.0, %v1949
      %v1951 = vpop.f32.mrb[0].mxu0
      %v1952 = vpop.f32.mrb[0].mxu0
      %v1953 = vadd.f32 0.0, %v1952
      %v1954 = vpop.f32.mrb[0].mxu0
      %1955 = vmatprep.mubr.bf16.mxu0 0
      %1956 = vmatmul.mubr.bf16.gmra.mrb[0].mxu0 %v726
      %v1957 = vpop.f32.mrb[0].mxu0
      %v1958 = vadd.f32 0.0, %v1957
      %v1959 = vpop.f32.mrb[0].mxu0
      %v1960 = vpop.f32.mrb[0].mxu0
      %v1961 = vadd.f32 0.0, %v1960
      %v1962 = vpop.f32.mrb[0].mxu0
      %1963 = vmatprep.mubr.bf16.mxu0 0
      %1964 = vmatmul.mubr.bf16.gmra.mrb[0].mxu0 %v729
      %v1965 = vpop.f32.mrb[0].mxu0
      %v1966 = vadd.f32 0.0, %v1965
      %v1967 = vpop.f32.mrb[0].mxu0
      %v1968 = vpop.f32.mrb[0].mxu0
      %v1969 = vadd.f32 0.0, %v1968
      %v1970 = vpop.f32.mrb[0].mxu0
      %1971 = vmatprep.mubr.bf16.mxu0 0
      %1972 = vmatmul.mubr.bf16.gmra.mrb[0].mxu0 %v732
      %v1973 = vpop.f32.mrb[0].mxu0
      %v1974 = vadd.f32 0.0, %v1973
      %v1975 = vpop.f32.mrb[0].mxu0
      %v1976 = vpop.f32.mrb[0].mxu0
      %v1977 = vadd.f32 0.0, %v1976
      %v1978 = vpop.f32.mrb[0].mxu0
      %1979 = vmatprep.mubr.bf16.mxu0 0
      %1980 = vmatmul.mubr.bf16.gmra.mrb[0].mxu0 %v735
      %v1981 = vpop.f32.mrb[0].mxu0
      %v1982 = vadd.f32 0.0, %v1981
      %v1983 = vpop.f32.mrb[0].mxu0
      %v1984 = vpop.f32.mrb[0].mxu0
      %v1985 = vadd.f32 0.0, %v1984
      %v1986 = vpop.f32.mrb[0].mxu0
      %1987 = vmatprep.mubr.bf16.mxu0 0
      %1988 = vmatmul.mubr.bf16.gmra.mrb[0].mxu0 %v738
      %v1989 = vpop.f32.mrb[0].mxu0
      %v1990 = vadd.f32 0.0, %v1989
      %v1991 = vpop.f32.mrb[0].mxu0
      %v1992 = vpop.f32.mrb[0].mxu0
      %v1993 = vadd.f32 0.0, %v1992
      %v1994 = vpop.f32.mrb[0].mxu0
      %1995 = vmatprep.mubr.bf16.mxu0 0
      %1996 = vmatmul.mubr.bf16.gmra.mrb[0].mxu0 %v741
      %v1997 = vpop.f32.mrb[0].mxu0
      %v1998 = vadd.f32 0.0, %v1997
      %v1999 = vpop.f32.mrb[0].mxu0
      %v2000 = vpop.f32.mrb[0].mxu0
      %v2001 = vadd.f32 0.0, %v2000
      %v2002 = vpop.f32.mrb[0].mxu0
      %2003 = vmatprep.mubr.bf16.mxu0 0
      %2004 = vmatmul.mubr.bf16.gmra.mrb[0].mxu0 %v744
      %v2005 = vpop.f32.mrb[0].mxu0
      %v2006 = vadd.f32 0.0, %v2005
      %v2007 = vpop.f32.mrb[0].mxu0
      %v2008 = vpop.f32.mrb[0].mxu0
      %v2009 = vadd.f32 0.0, %v2008
      %v2010 = vpop.f32.mrb[0].mxu0
      %2011 = vmatprep.mubr.bf16.mxu0 0
      %2012 = vmatmul.mubr.bf16.gmra.mrb[0].mxu0 %v747
      %v2013 = vpop.f32.mrb[0].mxu0
      %v2014 = vadd.f32 0.0, %v2013
      %v2015 = vpop.f32.mrb[0].mxu0
      %v2016 = vpop.f32.mrb[0].mxu0
      %v2017 = vadd.f32 0.0, %v2016
      %v2018 = vpop.f32.mrb[0].mxu0
      %2019 = vmatprep.mubr.bf16.mxu0 0
      %2020 = vmatmul.mubr.bf16.gmra.mrb[0].mxu0 %v750
      %v2021 = vpop.f32.mrb[0].mxu0
      %v2022 = vadd.f32 0.0, %v2021
      %v2023 = vpop.f32.mrb[0].mxu0
      %v2024 = vpop.f32.mrb[0].mxu0
      %v2025 = vadd.f32 0.0, %v2024
      %v2026 = vpop.f32.mrb[0].mxu0
      %2027 = vmatprep.mubr.bf16.mxu0 0
      %2028 = vmatmul.mubr.bf16.gmra.mrb[0].mxu0 %v1870
      %v2029 = vpop.f32.mrb[0].mxu0
      %v2030 = vadd.f32 0.0, %v2029
      %v2031 = vpop.f32.mrb[0].mxu0
      %v2032 = vpop.f32.mrb[0].mxu0
      %v2033 = vadd.f32 0.0, %v2032
      %v2034 = vpop.f32.mrb[0].mxu0
      %2035 = vdwg.mxu0
      %v2036 = vadd.f32 %v1808, %v1910
      %v2037 = vadd.f32 %v1809, %v1913
      %v2038 = vadd.f32 %v1810, %v1918
      %v2039 = vadd.f32 %v1811, %v1921
      %v2040 = vadd.f32 %v1812, %v1926
      %v2041 = vadd.f32 %v1813, %v1929
      %v2042 = vadd.f32 %v1814, %v1934
      %v2043 = vadd.f32 %v1815, %v1937
      %v2044 = vadd.f32 %v1816, %v1942
      %v2045 = vadd.f32 %v1817, %v1945
      %v2046 = vadd.f32 %v1818, %v1950
      %v2047 = vadd.f32 %v1819, %v1953
      %v2048 = vadd.f32 %v1820, %v1958
      %v2049 = vadd.f32 %v1821, %v1961
      %v2050 = vadd.f32 %v1822, %v1966
      %v2051 = vadd.f32 %v1823, %v1969
      %v2052 = vadd.f32 %v1824, %v1974
      %v2053 = vadd.f32 %v1825, %v1977
      %v2054 = vadd.f32 %v1826, %v1982
      %v2055 = vadd.f32 %v1827, %v1985
      %v2056 = vadd.f32 %v1828, %v1990
      %v2057 = vadd.f32 %v1829, %v1993
      %v2058 = vadd.f32 %v1830, %v1998
      %v2059 = vadd.f32 %v1831, %v2001
      %v2060 = vadd.f32 %v1832, %v2006
      %v2061 = vadd.f32 %v1833, %v2009
      %v2062 = vadd.f32 %v1834, %v2014
      %v2063 = vadd.f32 %v1835, %v2017
      %v2064 = vadd.f32 %v1836, %v2022
      %v2065 = vadd.f32 %v1837, %v2025
      %v2066 = vadd.f32 %v1838, %v2030
      %v2067 = vadd.f32 %v1839, %v2033
      %v2069 = vrot.slane %v259, 5
      %v2070 = vrot.slane %v2069, 4
      %v2071 = vrot.slane %v260, 5
      %v2072 = vsel %vm1227, %v2070, %v2071
      %v2073 = vrot.slane %v2071, 4
      %v2074 = vrot.slane %v261, 5
      %v2075 = vsel %vm1227, %v2073, %v2074
      %s2076 = scalar_lea.vmem %s1, 10
      %v2077 = vld [vmem:[%s2076] sm:$0x3]
      %v2078 = vunpack.c.l.b16 %v2072
      %v2079 = vunpack.c.l.b16 %v2075
      %v2080 = vpack.c.b16 %v2079, %v2078
      %v2082 = vsel %vm703, %v2080, 0
      %v2085 = vsel %vm752, %v2077, 0
      %2087 = vmatprep.subr.bf16.mxu0 0
      %2088 = vmatpush1.bf16.msra.mxu0 %v2085
      %2089 = vmatprep.subr.bf16.mxu0 0
      %2090 = vmatpush1.bf16.msra.mxu0 0
      %2091 = vmatprep.subr.bf16.mxu0 0
      %2092 = vmatpush1.bf16.msra.mxu0 0
      %2093 = vmatprep.subr.bf16.mxu0 0
      %2094 = vmatpush1.bf16.msra.mxu0 0
      %2095 = vmatprep.subr.bf16.mxu0 0
      %2096 = vmatpush1.bf16.msra.mxu0 0
      %2097 = vmatprep.subr.bf16.mxu0 0
      %2098 = vmatpush1.bf16.msra.mxu0 0
      %2099 = vmatprep.subr.bf16.mxu0 0
      %2100 = vmatpush1.bf16.msra.mxu0 0
      %2101 = vmatprep.subr.bf16.mxu0 0
      %2102 = vmatpush1.bf16.msra.mxu0 0
      %2103 = vmatprep.subr.bf16.mxu0 0
      %2104 = vmatpush1.bf16.msra.mxu0 0
      %2105 = vmatprep.subr.bf16.mxu0 0
      %2106 = vmatpush1.bf16.msra.mxu0 0
      %2107 = vmatprep.subr.bf16.mxu0 0
      %2108 = vmatpush1.bf16.msra.mxu0 0
      %2109 = vmatprep.subr.bf16.mxu0 0
      %2110 = vmatpush1.bf16.msra.mxu0 0
      %2111 = vmatprep.subr.bf16.mxu0 0
      %2112 = vmatpush1.bf16.msra.mxu0 0
      %2113 = vmatprep.subr.bf16.mxu0 0
      %2114 = vmatpush1.bf16.msra.mxu0 0
      %2115 = vmatprep.subr.bf16.mxu0 0
      %2116 = vmatpush1.bf16.msra.mxu0 0
      %2117 = vmatprep.subr.bf16.mxu0 0
      %2118 = vmatpush1.bf16.msra.mxu0 0
      %2119 = vmatprep.mubr.bf16.mxu0 0
      %2120 = vmatmul.mubr.bf16.gmra.mrb[0].mxu0 %v1394
      %v2121 = vpop.f32.mrb[0].mxu0
      %v2122 = vadd.f32 0.0, %v2121
      %v2123 = vpop.f32.mrb[0].mxu0
      %v2124 = vpop.f32.mrb[0].mxu0
      %v2125 = vadd.f32 0.0, %v2124
      %v2126 = vpop.f32.mrb[0].mxu0
      %2127 = vmatprep.mubr.bf16.mxu0 0
      %2128 = vmatmul.mubr.bf16.gmra.mrb[0].mxu0 %v1397
      %v2129 = vpop.f32.mrb[0].mxu0
      %v2130 = vadd.f32 0.0, %v2129
      %v2131 = vpop.f32.mrb[0].mxu0
      %v2132 = vpop.f32.mrb[0].mxu0
      %v2133 = vadd.f32 0.0, %v2132
      %v2134 = vpop.f32.mrb[0].mxu0
      %2135 = vmatprep.mubr.bf16.mxu0 0
      %2136 = vmatmul.mubr.bf16.gmra.mrb[0].mxu0 %v1400
      %v2137 = vpop.f32.mrb[0].mxu0
      %v2138 = vadd.f32 0.0, %v2137
      %v2139 = vpop.f32.mrb[0].mxu0
      %v2140 = vpop.f32.mrb[0].mxu0
      %v2141 = vadd.f32 0.0, %v2140
      %v2142 = vpop.f32.mrb[0].mxu0
      %2143 = vmatprep.mubr.bf16.mxu0 0
      %2144 = vmatmul.mubr.bf16.gmra.mrb[0].mxu0 %v1403
      %v2145 = vpop.f32.mrb[0].mxu0
      %v2146 = vadd.f32 0.0, %v2145
      %v2147 = vpop.f32.mrb[0].mxu0
      %v2148 = vpop.f32.mrb[0].mxu0
      %v2149 = vadd.f32 0.0, %v2148
      %v2150 = vpop.f32.mrb[0].mxu0
      %2151 = vmatprep.mubr.bf16.mxu0 0
      %2152 = vmatmul.mubr.bf16.gmra.mrb[0].mxu0 %v1406
      %v2153 = vpop.f32.mrb[0].mxu0
      %v2154 = vadd.f32 0.0, %v2153
      %v2155 = vpop.f32.mrb[0].mxu0
      %v2156 = vpop.f32.mrb[0].mxu0
      %v2157 = vadd.f32 0.0, %v2156
      %v2158 = vpop.f32.mrb[0].mxu0
      %2159 = vmatprep.mubr.bf16.mxu0 0
      %2160 = vmatmul.mubr.bf16.gmra.mrb[0].mxu0 %v1409
      %v2161 = vpop.f32.mrb[0].mxu0
      %v2162 = vadd.f32 0.0, %v2161
      %v2163 = vpop.f32.mrb[0].mxu0
      %v2164 = vpop.f32.mrb[0].mxu0
      %v2165 = vadd.f32 0.0, %v2164
      %v2166 = vpop.f32.mrb[0].mxu0
      %2167 = vmatprep.mubr.bf16.mxu0 0
      %2168 = vmatmul.mubr.bf16.gmra.mrb[0].mxu0 %v1412
      %v2169 = vpop.f32.mrb[0].mxu0
      %v2170 = vadd.f32 0.0, %v2169
      %v2171 = vpop.f32.mrb[0].mxu0
      %v2172 = vpop.f32.mrb[0].mxu0
      %v2173 = vadd.f32 0.0, %v2172
      %v2174 = vpop.f32.mrb[0].mxu0
      %2175 = vmatprep.mubr.bf16.mxu0 0
      %2176 = vmatmul.mubr.bf16.gmra.mrb[0].mxu0 %v1415
      %v2177 = vpop.f32.mrb[0].mxu0
      %v2178 = vadd.f32 0.0, %v2177
      %v2179 = vpop.f32.mrb[0].mxu0
      %v2180 = vpop.f32.mrb[0].mxu0
      %v2181 = vadd.f32 0.0, %v2180
      %v2182 = vpop.f32.mrb[0].mxu0
      %2183 = vmatprep.mubr.bf16.mxu0 0
      %2184 = vmatmul.mubr.bf16.gmra.mrb[0].mxu0 %v1418
      %v2185 = vpop.f32.mrb[0].mxu0
      %v2186 = vadd.f32 0.0, %v2185
      %v2187 = vpop.f32.mrb[0].mxu0
      %v2188 = vpop.f32.mrb[0].mxu0
      %v2189 = vadd.f32 0.0, %v2188
      %v2190 = vpop.f32.mrb[0].mxu0
      %2191 = vmatprep.mubr.bf16.mxu0 0
      %2192 = vmatmul.mubr.bf16.gmra.mrb[0].mxu0 %v1421
      %v2193 = vpop.f32.mrb[0].mxu0
      %v2194 = vadd.f32 0.0, %v2193
      %v2195 = vpop.f32.mrb[0].mxu0
      %v2196 = vpop.f32.mrb[0].mxu0
      %v2197 = vadd.f32 0.0, %v2196
      %v2198 = vpop.f32.mrb[0].mxu0
      %2199 = vmatprep.mubr.bf16.mxu0 0
      %2200 = vmatmul.mubr.bf16.gmra.mrb[0].mxu0 %v1424
      %v2201 = vpop.f32.mrb[0].mxu0
      %v2202 = vadd.f32 0.0, %v2201
      %v2203 = vpop.f32.mrb[0].mxu0
      %v2204 = vpop.f32.mrb[0].mxu0
      %v2205 = vadd.f32 0.0, %v2204
      %v2206 = vpop.f32.mrb[0].mxu0
      %2207 = vmatprep.mubr.bf16.mxu0 0
      %2208 = vmatmul.mubr.bf16.gmra.mrb[0].mxu0 %v1427
      %v2209 = vpop.f32.mrb[0].mxu0
      %v2210 = vadd.f32 0.0, %v2209
      %v2211 = vpop.f32.mrb[0].mxu0
      %v2212 = vpop.f32.mrb[0].mxu0
      %v2213 = vadd.f32 0.0, %v2212
      %v2214 = vpop.f32.mrb[0].mxu0
      %2215 = vmatprep.mubr.bf16.mxu0 0
      %2216 = vmatmul.mubr.bf16.gmra.mrb[0].mxu0 %v1430
      %v2217 = vpop.f32.mrb[0].mxu0
      %v2218 = vadd.f32 0.0, %v2217
      %v2219 = vpop.f32.mrb[0].mxu0
      %v2220 = vpop.f32.mrb[0].mxu0
      %v2221 = vadd.f32 0.0, %v2220
      %v2222 = vpop.f32.mrb[0].mxu0
      %2223 = vmatprep.mubr.bf16.mxu0 0
      %2224 = vmatmul.mubr.bf16.gmra.mrb[0].mxu0 %v1433
      %v2225 = vpop.f32.mrb[0].mxu0
      %v2226 = vadd.f32 0.0, %v2225
      %v2227 = vpop.f32.mrb[0].mxu0
      %v2228 = vpop.f32.mrb[0].mxu0
      %v2229 = vadd.f32 0.0, %v2228
      %v2230 = vpop.f32.mrb[0].mxu0
      %2231 = vmatprep.mubr.bf16.mxu0 0
      %2232 = vmatmul.mubr.bf16.gmra.mrb[0].mxu0 %v1436
      %v2233 = vpop.f32.mrb[0].mxu0
      %v2234 = vadd.f32 0.0, %v2233
      %v2235 = vpop.f32.mrb[0].mxu0
      %v2236 = vpop.f32.mrb[0].mxu0
      %v2237 = vadd.f32 0.0, %v2236
      %v2238 = vpop.f32.mrb[0].mxu0
      %2239 = vmatprep.mubr.bf16.mxu0 0
      %2240 = vmatmul.mubr.bf16.gmra.mrb[0].mxu0 %v2082
      %v2241 = vpop.f32.mrb[0].mxu0
      %v2242 = vadd.f32 0.0, %v2241
      %v2243 = vpop.f32.mrb[0].mxu0
      %v2244 = vpop.f32.mrb[0].mxu0
      %v2245 = vadd.f32 0.0, %v2244
      %v2246 = vpop.f32.mrb[0].mxu0
      %2247 = vdwg.mxu0
      %v2248 = vadd.f32 %v2036, %v2122
      %v2249 = vadd.f32 %v2037, %v2125
      %v2250 = vadd.f32 %v2038, %v2130
      %v2251 = vadd.f32 %v2039, %v2133
      %v2252 = vadd.f32 %v2040, %v2138
      %v2253 = vadd.f32 %v2041, %v2141
      %v2254 = vadd.f32 %v2042, %v2146
      %v2255 = vadd.f32 %v2043, %v2149
      %v2256 = vadd.f32 %v2044, %v2154
      %v2257 = vadd.f32 %v2045, %v2157
      %v2258 = vadd.f32 %v2046, %v2162
      %v2259 = vadd.f32 %v2047, %v2165
      %v2260 = vadd.f32 %v2048, %v2170
      %v2261 = vadd.f32 %v2049, %v2173
      %v2262 = vadd.f32 %v2050, %v2178
      %v2263 = vadd.f32 %v2051, %v2181
      %v2264 = vadd.f32 %v2052, %v2186
      %v2265 = vadd.f32 %v2053, %v2189
      %v2266 = vadd.f32 %v2054, %v2194
      %v2267 = vadd.f32 %v2055, %v2197
      %v2268 = vadd.f32 %v2056, %v2202
      %v2269 = vadd.f32 %v2057, %v2205
      %v2270 = vadd.f32 %v2058, %v2210
      %v2271 = vadd.f32 %v2059, %v2213
      %v2272 = vadd.f32 %v2060, %v2218
      %v2273 = vadd.f32 %v2061, %v2221
      %v2274 = vadd.f32 %v2062, %v2226
      %v2275 = vadd.f32 %v2063, %v2229
      %v2276 = vadd.f32 %v2064, %v2234
      %v2277 = vadd.f32 %v2065, %v2237
      %v2278 = vadd.f32 %v2066, %v2242
      %v2279 = vadd.f32 %v2067, %v2245
      %s2280 = scalar_lea.vmem %s1, 12
      %v2281 = vld [vmem:[%s2280] sm:$0x3]
      %v2284 = vunpack.c.l.b16 %v262
      %v2285 = vunpack.c.l.b16 %v263
      %v2286 = vpack.c.b16 %v2285, %v2284
      %v2288 = vsel %vm703, %v2286, 0
      %v2291 = vsel %vm752, %v2281, 0
      %2293 = vmatprep.subr.bf16.mxu0 0
      %2294 = vmatpush1.bf16.msra.mxu0 %v2291
      %2295 = vmatprep.subr.bf16.mxu0 0
      %2296 = vmatpush1.bf16.msra.mxu0 0
      %2297 = vmatprep.subr.bf16.mxu0 0
      %2298 = vmatpush1.bf16.msra.mxu0 0
      %2299 = vmatprep.subr.bf16.mxu0 0
      %2300 = vmatpush1.bf16.msra.mxu0 0
      %2301 = vmatprep.subr.bf16.mxu0 0
      %2302 = vmatpush1.bf16.msra.mxu0 0
      %2303 = vmatprep.subr.bf16.mxu0 0
      %2304 = vmatpush1.bf16.msra.mxu0 0
      %2305 = vmatprep.subr.bf16.mxu0 0
      %2306 = vmatpush1.bf16.msra.mxu0 0
      %2307 = vmatprep.subr.bf16.mxu0 0
      %2308 = vmatpush1.bf16.msra.mxu0 0
      %2309 = vmatprep.subr.bf16.mxu0 0
      %2310 = vmatpush1.bf16.msra.mxu0 0
      %2311 = vmatprep.subr.bf16.mxu0 0
      %2312 = vmatpush1.bf16.msra.mxu0 0
      %2313 = vmatprep.subr.bf16.mxu0 0
      %2314 = vmatpush1.bf16.msra.mxu0 0
      %2315 = vmatprep.subr.bf16.mxu0 0
      %2316 = vmatpush1.bf16.msra.mxu0 0
      %2317 = vmatprep.subr.bf16.mxu0 0
      %2318 = vmatpush1.bf16.msra.mxu0 0
      %2319 = vmatprep.subr.bf16.mxu0 0
      %2320 = vmatpush1.bf16.msra.mxu0 0
      %2321 = vmatprep.subr.bf16.mxu0 0
      %2322 = vmatpush1.bf16.msra.mxu0 0
      %2323 = vmatprep.subr.bf16.mxu0 0
      %2324 = vmatpush1.bf16.msra.mxu0 0
      %2325 = vmatprep.mubr.bf16.mxu0 0
      %2326 = vmatmul.mubr.bf16.gmra.mrb[0].mxu0 %v1004
      %v2327 = vpop.f32.mrb[0].mxu0
      %v2328 = vadd.f32 0.0, %v2327
      %v2329 = vpop.f32.mrb[0].mxu0
      %v2330 = vpop.f32.mrb[0].mxu0
      %v2331 = vadd.f32 0.0, %v2330
      %v2332 = vpop.f32.mrb[0].mxu0
      %2333 = vmatprep.mubr.bf16.mxu0 0
      %2334 = vmatmul.mubr.bf16.gmra.mrb[0].mxu0 %v1007
      %v2335 = vpop.f32.mrb[0].mxu0
      %v2336 = vadd.f32 0.0, %v2335
      %v2337 = vpop.f32.mrb[0].mxu0
      %v2338 = vpop.f32.mrb[0].mxu0
      %v2339 = vadd.f32 0.0, %v2338
      %v2340 = vpop.f32.mrb[0].mxu0
      %2341 = vmatprep.mubr.bf16.mxu0 0
      %2342 = vmatmul.mubr.bf16.gmra.mrb[0].mxu0 %v1010
      %v2343 = vpop.f32.mrb[0].mxu0
      %v2344 = vadd.f32 0.0, %v2343
      %v2345 = vpop.f32.mrb[0].mxu0
      %v2346 = vpop.f32.mrb[0].mxu0
      %v2347 = vadd.f32 0.0, %v2346
      %v2348 = vpop.f32.mrb[0].mxu0
      %2349 = vmatprep.mubr.bf16.mxu0 0
      %2350 = vmatmul.mubr.bf16.gmra.mrb[0].mxu0 %v1013
      %v2351 = vpop.f32.mrb[0].mxu0
      %v2352 = vadd.f32 0.0, %v2351
      %v2353 = vpop.f32.mrb[0].mxu0
      %v2354 = vpop.f32.mrb[0].mxu0
      %v2355 = vadd.f32 0.0, %v2354
      %v2356 = vpop.f32.mrb[0].mxu0
      %2357 = vmatprep.mubr.bf16.mxu0 0
      %2358 = vmatmul.mubr.bf16.gmra.mrb[0].mxu0 %v1016
      %v2359 = vpop.f32.mrb[0].mxu0
      %v2360 = vadd.f32 0.0, %v2359
      %v2361 = vpop.f32.mrb[0].mxu0
      %v2362 = vpop.f32.mrb[0].mxu0
      %v2363 = vadd.f32 0.0, %v2362
      %v2364 = vpop.f32.mrb[0].mxu0
      %2365 = vmatprep.mubr.bf16.mxu0 0
      %2366 = vmatmul.mubr.bf16.gmra.mrb[0].mxu0 %v1019
      %v2367 = vpop.f32.mrb[0].mxu0
      %v2368 = vadd.f32 0.0, %v2367
      %v2369 = vpop.f32.mrb[0].mxu0
      %v2370 = vpop.f32.mrb[0].mxu0
      %v2371 = vadd.f32 0.0, %v2370
      %v2372 = vpop.f32.mrb[0].mxu0
      %2373 = vmatprep.mubr.bf16.mxu0 0
      %2374 = vmatmul.mubr.bf16.gmra.mrb[0].mxu0 %v1022
      %v2375 = vpop.f32.mrb[0].mxu0
      %v2376 = vadd.f32 0.0, %v2375
      %v2377 = vpop.f32.mrb[0].mxu0
      %v2378 = vpop.f32.mrb[0].mxu0
      %v2379 = vadd.f32 0.0, %v2378
      %v2380 = vpop.f32.mrb[0].mxu0
      %2381 = vmatprep.mubr.bf16.mxu0 0
      %2382 = vmatmul.mubr.bf16.gmra.mrb[0].mxu0 %v1025
      %v2383 = vpop.f32.mrb[0].mxu0
      %v2384 = vadd.f32 0.0, %v2383
      %v2385 = vpop.f32.mrb[0].mxu0
      %v2386 = vpop.f32.mrb[0].mxu0
      %v2387 = vadd.f32 0.0, %v2386
      %v2388 = vpop.f32.mrb[0].mxu0
      %2389 = vmatprep.mubr.bf16.mxu0 0
      %2390 = vmatmul.mubr.bf16.gmra.mrb[0].mxu0 %v1028
      %v2391 = vpop.f32.mrb[0].mxu0
      %v2392 = vadd.f32 0.0, %v2391
      %v2393 = vpop.f32.mrb[0].mxu0
      %v2394 = vpop.f32.mrb[0].mxu0
      %v2395 = vadd.f32 0.0, %v2394
      %v2396 = vpop.f32.mrb[0].mxu0
      %2397 = vmatprep.mubr.bf16.mxu0 0
      %2398 = vmatmul.mubr.bf16.gmra.mrb[0].mxu0 %v1031
      %v2399 = vpop.f32.mrb[0].mxu0
      %v2400 = vadd.f32 0.0, %v2399
      %v2401 = vpop.f32.mrb[0].mxu0
      %v2402 = vpop.f32.mrb[0].mxu0
      %v2403 = vadd.f32 0.0, %v2402
      %v2404 = vpop.f32.mrb[0].mxu0
      %2405 = vmatprep.mubr.bf16.mxu0 0
      %2406 = vmatmul.mubr.bf16.gmra.mrb[0].mxu0 %v1034
      %v2407 = vpop.f32.mrb[0].mxu0
      %v2408 = vadd.f32 0.0, %v2407
      %v2409 = vpop.f32.mrb[0].mxu0
      %v2410 = vpop.f32.mrb[0].mxu0
      %v2411 = vadd.f32 0.0, %v2410
      %v2412 = vpop.f32.mrb[0].mxu0
      %2413 = vmatprep.mubr.bf16.mxu0 0
      %2414 = vmatmul.mubr.bf16.gmra.mrb[0].mxu0 %v1037
      %v2415 = vpop.f32.mrb[0].mxu0
      %v2416 = vadd.f32 0.0, %v2415
      %v2417 = vpop.f32.mrb[0].mxu0
      %v2418 = vpop.f32.mrb[0].mxu0
      %v2419 = vadd.f32 0.0, %v2418
      %v2420 = vpop.f32.mrb[0].mxu0
      %2421 = vmatprep.mubr.bf16.mxu0 0
      %2422 = vmatmul.mubr.bf16.gmra.mrb[0].mxu0 %v1040
      %v2423 = vpop.f32.mrb[0].mxu0
      %v2424 = vadd.f32 0.0, %v2423
      %v2425 = vpop.f32.mrb[0].mxu0
      %v2426 = vpop.f32.mrb[0].mxu0
      %v2427 = vadd.f32 0.0, %v2426
      %v2428 = vpop.f32.mrb[0].mxu0
      %2429 = vmatprep.mubr.bf16.mxu0 0
      %2430 = vmatmul.mubr.bf16.gmra.mrb[0].mxu0 %v1043
      %v2431 = vpop.f32.mrb[0].mxu0
      %v2432 = vadd.f32 0.0, %v2431
      %v2433 = vpop.f32.mrb[0].mxu0
      %v2434 = vpop.f32.mrb[0].mxu0
      %v2435 = vadd.f32 0.0, %v2434
      %v2436 = vpop.f32.mrb[0].mxu0
      %2437 = vmatprep.mubr.bf16.mxu0 0
      %2438 = vmatmul.mubr.bf16.gmra.mrb[0].mxu0 %v1642
      %v2439 = vpop.f32.mrb[0].mxu0
      %v2440 = vadd.f32 0.0, %v2439
      %v2441 = vpop.f32.mrb[0].mxu0
      %v2442 = vpop.f32.mrb[0].mxu0
      %v2443 = vadd.f32 0.0, %v2442
      %v2444 = vpop.f32.mrb[0].mxu0
      %2445 = vmatprep.mubr.bf16.mxu0 0
      %2446 = vmatmul.mubr.bf16.gmra.mrb[0].mxu0 %v2288
      %v2447 = vpop.f32.mrb[0].mxu0
      %v2448 = vadd.f32 0.0, %v2447
      %v2449 = vpop.f32.mrb[0].mxu0
      %v2450 = vpop.f32.mrb[0].mxu0
      %v2451 = vadd.f32 0.0, %v2450
      %v2452 = vpop.f32.mrb[0].mxu0
      %2453 = vdwg.mxu0
      %v2454 = vadd.f32 %v2248, %v2328
      %v2455 = vadd.f32 %v2249, %v2331
      %v2456 = vadd.f32 %v2250, %v2336
      %v2457 = vadd.f32 %v2251, %v2339
      %v2458 = vadd.f32 %v2252, %v2344
      %v2459 = vadd.f32 %v2253, %v2347
      %v2460 = vadd.f32 %v2254, %v2352
      %v2461 = vadd.f32 %v2255, %v2355
      %v2462 = vadd.f32 %v2256, %v2360
      %v2463 = vadd.f32 %v2257, %v2363
      %v2464 = vadd.f32 %v2258, %v2368
      %v2465 = vadd.f32 %v2259, %v2371
      %v2466 = vadd.f32 %v2260, %v2376
      %v2467 = vadd.f32 %v2261, %v2379
      %v2468 = vadd.f32 %v2262, %v2384
      %v2469 = vadd.f32 %v2263, %v2387
      %v2470 = vadd.f32 %v2264, %v2392
      %v2471 = vadd.f32 %v2265, %v2395
      %v2472 = vadd.f32 %v2266, %v2400
      %v2473 = vadd.f32 %v2267, %v2403
      %v2474 = vadd.f32 %v2268, %v2408
      %v2475 = vadd.f32 %v2269, %v2411
      %v2476 = vadd.f32 %v2270, %v2416
      %v2477 = vadd.f32 %v2271, %v2419
      %v2478 = vadd.f32 %v2272, %v2424
      %v2479 = vadd.f32 %v2273, %v2427
      %v2480 = vadd.f32 %v2274, %v2432
      %v2481 = vadd.f32 %v2275, %v2435
      %v2482 = vadd.f32 %v2276, %v2440
      %v2483 = vadd.f32 %v2277, %v2443
      %v2484 = vadd.f32 %v2278, %v2448
      %v2485 = vadd.f32 %v2279, %v2451
      %v2487 = vshrl.u32 %v262, 16
      %v2489 = vrot.slane %v2487, 4
      %v2490 = vshll.u32 %v262, 16
      %v2492 = vrot.slane %v2490, 5
      %v2493 = vor.u32 %v2489, %v2492
      %v2494 = vrot.slane %v2493, 4
      %v2496 = vshll.u32 %v263, 16
      %v2498 = vrot.slane %v2496, 5
      %v2499 = vsel %vm268, %v2494, %v2498
      %v2500 = vshrl.u32 %v263, 16
      %v2502 = vrot.slane %v2500, 4
      %v2503 = vor.u32 %v2502, %v2498
      %v2504 = vrot.slane %v2503, 4
      %v2506 = vshll.u32 %v264, 16
      %v2508 = vrot.slane %v2506, 5
      %v2509 = vsel %vm268, %v2504, %v2508
      %s2510 = scalar_lea.vmem %s1, 14
      %v2511 = vld [vmem:[%s2510] sm:$0x3]
      %v2512 = vunpack.c.l.b16 %v2499
      %v2513 = vunpack.c.l.b16 %v2509
      %v2514 = vpack.c.b16 %v2513, %v2512
      %v2516 = vsel %vm703, %v2514, 0
      %v2519 = vsel %vm752, %v2511, 0
      %2521 = vmatprep.subr.bf16.mxu0 0
      %2522 = vmatpush1.bf16.msra.mxu0 %v2519
      %2523 = vmatprep.subr.bf16.mxu0 0
      %2524 = vmatpush1.bf16.msra.mxu0 0
      %2525 = vmatprep.subr.bf16.mxu0 0
      %2526 = vmatpush1.bf16.msra.mxu0 0
      %2527 = vmatprep.subr.bf16.mxu0 0
      %2528 = vmatpush1.bf16.msra.mxu0 0
      %2529 = vmatprep.subr.bf16.mxu0 0
      %2530 = vmatpush1.bf16.msra.mxu0 0
      %2531 = vmatprep.subr.bf16.mxu0 0
      %2532 = vmatpush1.bf16.msra.mxu0 0
      %2533 = vmatprep.subr.bf16.mxu0 0
      %2534 = vmatpush1.bf16.msra.mxu0 0
      %2535 = vmatprep.subr.bf16.mxu0 0
      %2536 = vmatpush1.bf16.msra.mxu0 0
      %2537 = vmatprep.subr.bf16.mxu0 0
      %2538 = vmatpush1.bf16.msra.mxu0 0
      %2539 = vmatprep.subr.bf16.mxu0 0
      %2540 = vmatpush1.bf16.msra.mxu0 0
      %2541 = vmatprep.subr.bf16.mxu0 0
      %2542 = vmatpush1.bf16.msra.mxu0 0
      %2543 = vmatprep.subr.bf16.mxu0 0
      %2544 = vmatpush1.bf16.msra.mxu0 0
      %2545 = vmatprep.subr.bf16.mxu0 0
      %2546 = vmatpush1.bf16.msra.mxu0 0
      %2547 = vmatprep.subr.bf16.mxu0 0
      %2548 = vmatpush1.bf16.msra.mxu0 0
      %2549 = vmatprep.subr.bf16.mxu0 0
      %2550 = vmatpush1.bf16.msra.mxu0 0
      %2551 = vmatprep.subr.bf16.mxu0 0
      %2552 = vmatpush1.bf16.msra.mxu0 0
      %2553 = vmatprep.mubr.bf16.mxu0 0
      %2554 = vmatmul.mubr.bf16.gmra.mrb[0].mxu0 %v711
      %v2555 = vpop.f32.mrb[0].mxu0
      %v2556 = vadd.f32 0.0, %v2555
      %v2557 = vpop.f32.mrb[0].mxu0
      %v2558 = vpop.f32.mrb[0].mxu0
      %v2559 = vadd.f32 0.0, %v2558
      %v2560 = vpop.f32.mrb[0].mxu0
      %2561 = vmatprep.mubr.bf16.mxu0 0
      %2562 = vmatmul.mubr.bf16.gmra.mrb[0].mxu0 %v714
      %v2563 = vpop.f32.mrb[0].mxu0
      %v2564 = vadd.f32 0.0, %v2563
      %v2565 = vpop.f32.mrb[0].mxu0
      %v2566 = vpop.f32.mrb[0].mxu0
      %v2567 = vadd.f32 0.0, %v2566
      %v2568 = vpop.f32.mrb[0].mxu0
      %2569 = vmatprep.mubr.bf16.mxu0 0
      %2570 = vmatmul.mubr.bf16.gmra.mrb[0].mxu0 %v717
      %v2571 = vpop.f32.mrb[0].mxu0
      %v2572 = vadd.f32 0.0, %v2571
      %v2573 = vpop.f32.mrb[0].mxu0
      %v2574 = vpop.f32.mrb[0].mxu0
      %v2575 = vadd.f32 0.0, %v2574
      %v2576 = vpop.f32.mrb[0].mxu0
      %2577 = vmatprep.mubr.bf16.mxu0 0
      %2578 = vmatmul.mubr.bf16.gmra.mrb[0].mxu0 %v720
      %v2579 = vpop.f32.mrb[0].mxu0
      %v2580 = vadd.f32 0.0, %v2579
      %v2581 = vpop.f32.mrb[0].mxu0
      %v2582 = vpop.f32.mrb[0].mxu0
      %v2583 = vadd.f32 0.0, %v2582
      %v2584 = vpop.f32.mrb[0].mxu0
      %2585 = vmatprep.mubr.bf16.mxu0 0
      %2586 = vmatmul.mubr.bf16.gmra.mrb[0].mxu0 %v723
      %v2587 = vpop.f32.mrb[0].mxu0
      %v2588 = vadd.f32 0.0, %v2587
      %v2589 = vpop.f32.mrb[0].mxu0
      %v2590 = vpop.f32.mrb[0].mxu0
      %v2591 = vadd.f32 0.0, %v2590
      %v2592 = vpop.f32.mrb[0].mxu0
      %2593 = vmatprep.mubr.bf16.mxu0 0
      %2594 = vmatmul.mubr.bf16.gmra.mrb[0].mxu0 %v726
      %v2595 = vpop.f32.mrb[0].mxu0
      %v2596 = vadd.f32 0.0, %v2595
      %v2597 = vpop.f32.mrb[0].mxu0
      %v2598 = vpop.f32.mrb[0].mxu0
      %v2599 = vadd.f32 0.0, %v2598
      %v2600 = vpop.f32.mrb[0].mxu0
      %2601 = vmatprep.mubr.bf16.mxu0 0
      %2602 = vmatmul.mubr.bf16.gmra.mrb[0].mxu0 %v729
      %v2603 = vpop.f32.mrb[0].mxu0
      %v2604 = vadd.f32 0.0, %v2603
      %v2605 = vpop.f32.mrb[0].mxu0
      %v2606 = vpop.f32.mrb[0].mxu0
      %v2607 = vadd.f32 0.0, %v2606
      %v2608 = vpop.f32.mrb[0].mxu0
      %2609 = vmatprep.mubr.bf16.mxu0 0
      %2610 = vmatmul.mubr.bf16.gmra.mrb[0].mxu0 %v732
      %v2611 = vpop.f32.mrb[0].mxu0
      %v2612 = vadd.f32 0.0, %v2611
      %v2613 = vpop.f32.mrb[0].mxu0
      %v2614 = vpop.f32.mrb[0].mxu0
      %v2615 = vadd.f32 0.0, %v2614
      %v2616 = vpop.f32.mrb[0].mxu0
      %2617 = vmatprep.mubr.bf16.mxu0 0
      %2618 = vmatmul.mubr.bf16.gmra.mrb[0].mxu0 %v735
      %v2619 = vpop.f32.mrb[0].mxu0
      %v2620 = vadd.f32 0.0, %v2619
      %v2621 = vpop.f32.mrb[0].mxu0
      %v2622 = vpop.f32.mrb[0].mxu0
      %v2623 = vadd.f32 0.0, %v2622
      %v2624 = vpop.f32.mrb[0].mxu0
      %2625 = vmatprep.mubr.bf16.mxu0 0
      %2626 = vmatmul.mubr.bf16.gmra.mrb[0].mxu0 %v738
      %v2627 = vpop.f32.mrb[0].mxu0
      %v2628 = vadd.f32 0.0, %v2627
      %v2629 = vpop.f32.mrb[0].mxu0
      %v2630 = vpop.f32.mrb[0].mxu0
      %v2631 = vadd.f32 0.0, %v2630
      %v2632 = vpop.f32.mrb[0].mxu0
      %2633 = vmatprep.mubr.bf16.mxu0 0
      %2634 = vmatmul.mubr.bf16.gmra.mrb[0].mxu0 %v741
      %v2635 = vpop.f32.mrb[0].mxu0
      %v2636 = vadd.f32 0.0, %v2635
      %v2637 = vpop.f32.mrb[0].mxu0
      %v2638 = vpop.f32.mrb[0].mxu0
      %v2639 = vadd.f32 0.0, %v2638
      %v2640 = vpop.f32.mrb[0].mxu0
      %2641 = vmatprep.mubr.bf16.mxu0 0
      %2642 = vmatmul.mubr.bf16.gmra.mrb[0].mxu0 %v744
      %v2643 = vpop.f32.mrb[0].mxu0
      %v2644 = vadd.f32 0.0, %v2643
      %v2645 = vpop.f32.mrb[0].mxu0
      %v2646 = vpop.f32.mrb[0].mxu0
      %v2647 = vadd.f32 0.0, %v2646
      %v2648 = vpop.f32.mrb[0].mxu0
      %2649 = vmatprep.mubr.bf16.mxu0 0
      %2650 = vmatmul.mubr.bf16.gmra.mrb[0].mxu0 %v747
      %v2651 = vpop.f32.mrb[0].mxu0
      %v2652 = vadd.f32 0.0, %v2651
      %v2653 = vpop.f32.mrb[0].mxu0
      %v2654 = vpop.f32.mrb[0].mxu0
      %v2655 = vadd.f32 0.0, %v2654
      %v2656 = vpop.f32.mrb[0].mxu0
      %2657 = vmatprep.mubr.bf16.mxu0 0
      %2658 = vmatmul.mubr.bf16.gmra.mrb[0].mxu0 %v750
      %v2659 = vpop.f32.mrb[0].mxu0
      %v2660 = vadd.f32 0.0, %v2659
      %v2661 = vpop.f32.mrb[0].mxu0
      %v2662 = vpop.f32.mrb[0].mxu0
      %v2663 = vadd.f32 0.0, %v2662
      %v2664 = vpop.f32.mrb[0].mxu0
      %2665 = vmatprep.mubr.bf16.mxu0 0
      %2666 = vmatmul.mubr.bf16.gmra.mrb[0].mxu0 %v1870
      %v2667 = vpop.f32.mrb[0].mxu0
      %v2668 = vadd.f32 0.0, %v2667
      %v2669 = vpop.f32.mrb[0].mxu0
      %v2670 = vpop.f32.mrb[0].mxu0
      %v2671 = vadd.f32 0.0, %v2670
      %v2672 = vpop.f32.mrb[0].mxu0
      %2673 = vmatprep.mubr.bf16.mxu0 0
      %2674 = vmatmul.mubr.bf16.gmra.mrb[0].mxu0 %v2516
      %v2675 = vpop.f32.mrb[0].mxu0
      %v2676 = vadd.f32 0.0, %v2675
      %v2677 = vpop.f32.mrb[0].mxu0
      %v2678 = vpop.f32.mrb[0].mxu0
      %v2679 = vadd.f32 0.0, %v2678
      %v2680 = vpop.f32.mrb[0].mxu0
      %2681 = vdwg.mxu0
      %v2682 = vadd.f32 %v2454, %v2556
      %v2683 = vadd.f32 %v2455, %v2559
      %v2684 = vadd.f32 %v2456, %v2564
      %v2685 = vadd.f32 %v2457, %v2567
      %v2686 = vadd.f32 %v2458, %v2572
      %v2687 = vadd.f32 %v2459, %v2575
      %v2688 = vadd.f32 %v2460, %v2580
      %v2689 = vadd.f32 %v2461, %v2583
      %v2690 = vadd.f32 %v2462, %v2588
      %v2691 = vadd.f32 %v2463, %v2591
      %v2692 = vadd.f32 %v2464, %v2596
      %v2693 = vadd.f32 %v2465, %v2599
      %v2694 = vadd.f32 %v2466, %v2604
      %v2695 = vadd.f32 %v2467, %v2607
      %v2696 = vadd.f32 %v2468, %v2612
      %v2697 = vadd.f32 %v2469, %v2615
      %v2698 = vadd.f32 %v2470, %v2620
      %v2699 = vadd.f32 %v2471, %v2623
      %v2700 = vadd.f32 %v2472, %v2628
      %v2701 = vadd.f32 %v2473, %v2631
      %v2702 = vadd.f32 %v2474, %v2636
      %v2703 = vadd.f32 %v2475, %v2639
      %v2704 = vadd.f32 %v2476, %v2644
      %v2705 = vadd.f32 %v2477, %v2647
      %v2706 = vadd.f32 %v2478, %v2652
      %v2707 = vadd.f32 %v2479, %v2655
      %v2708 = vadd.f32 %v2480, %v2660
      %v2709 = vadd.f32 %v2481, %v2663
      %v2710 = vadd.f32 %v2482, %v2668
      %v2711 = vadd.f32 %v2483, %v2671
      %v2712 = vadd.f32 %v2484, %v2676
      %v2713 = vadd.f32 %v2485, %v2679
      %v2715 = vrot.slane %v262, 5
      %v2716 = vrot.slane %v2715, 4
      %v2717 = vrot.slane %v263, 5
      %v2718 = vsel %vm1227, %v2716, %v2717
      %v2719 = vrot.slane %v2717, 4
      %v2720 = vrot.slane %v264, 5
      %v2721 = vsel %vm1227, %v2719, %v2720
      %s2722 = scalar_lea.vmem %s1, 16
      %v2723 = vld [vmem:[%s2722] sm:$0x3]
      %v2724 = vunpack.c.l.b16 %v2718
      %v2725 = vunpack.c.l.b16 %v2721
      %v2726 = vpack.c.b16 %v2725, %v2724
      %v2728 = vsel %vm703, %v2726, 0
      %v2731 = vsel %vm752, %v2723, 0
      %2733 = vmatprep.subr.bf16.mxu0 0
      %2734 = vmatpush1.bf16.msra.mxu0 %v2731
      %2735 = vmatprep.subr.bf16.mxu0 0
      %2736 = vmatpush1.bf16.msra.mxu0 0
      %2737 = vmatprep.subr.bf16.mxu0 0
      %2738 = vmatpush1.bf16.msra.mxu0 0
      %2739 = vmatprep.subr.bf16.mxu0 0
      %2740 = vmatpush1.bf16.msra.mxu0 0
      %2741 = vmatprep.subr.bf16.mxu0 0
      %2742 = vmatpush1.bf16.msra.mxu0 0
      %2743 = vmatprep.subr.bf16.mxu0 0
      %2744 = vmatpush1.bf16.msra.mxu0 0
      %2745 = vmatprep.subr.bf16.mxu0 0
      %2746 = vmatpush1.bf16.msra.mxu0 0
      %2747 = vmatprep.subr.bf16.mxu0 0
      %2748 = vmatpush1.bf16.msra.mxu0 0
      %2749 = vmatprep.subr.bf16.mxu0 0
      %2750 = vmatpush1.bf16.msra.mxu0 0
      %2751 = vmatprep.subr.bf16.mxu0 0
      %2752 = vmatpush1.bf16.msra.mxu0 0
      %2753 = vmatprep.subr.bf16.mxu0 0
      %2754 = vmatpush1.bf16.msra.mxu0 0
      %2755 = vmatprep.subr.bf16.mxu0 0
      %2756 = vmatpush1.bf16.msra.mxu0 0
      %2757 = vmatprep.subr.bf16.mxu0 0
      %2758 = vmatpush1.bf16.msra.mxu0 0
      %2759 = vmatprep.subr.bf16.mxu0 0
      %2760 = vmatpush1.bf16.msra.mxu0 0
      %2761 = vmatprep.subr.bf16.mxu0 0
      %2762 = vmatpush1.bf16.msra.mxu0 0
      %2763 = vmatprep.subr.bf16.mxu0 0
      %2764 = vmatpush1.bf16.msra.mxu0 0
      %2765 = vmatprep.mubr.bf16.mxu0 0
      %2766 = vmatmul.mubr.bf16.gmra.mrb[0].mxu0 %v1397
      %v2767 = vpop.f32.mrb[0].mxu0
      %v2768 = vadd.f32 0.0, %v2767
      %v2769 = vpop.f32.mrb[0].mxu0
      %v2770 = vpop.f32.mrb[0].mxu0
      %v2771 = vadd.f32 0.0, %v2770
      %v2772 = vpop.f32.mrb[0].mxu0
      %2773 = vmatprep.mubr.bf16.mxu0 0
      %2774 = vmatmul.mubr.bf16.gmra.mrb[0].mxu0 %v1400
      %v2775 = vpop.f32.mrb[0].mxu0
      %v2776 = vadd.f32 0.0, %v2775
      %v2777 = vpop.f32.mrb[0].mxu0
      %v2778 = vpop.f32.mrb[0].mxu0
      %v2779 = vadd.f32 0.0, %v2778
      %v2780 = vpop.f32.mrb[0].mxu0
      %2781 = vmatprep.mubr.bf16.mxu0 0
      %2782 = vmatmul.mubr.bf16.gmra.mrb[0].mxu0 %v1403
      %v2783 = vpop.f32.mrb[0].mxu0
      %v2784 = vadd.f32 0.0, %v2783
      %v2785 = vpop.f32.mrb[0].mxu0
      %v2786 = vpop.f32.mrb[0].mxu0
      %v2787 = vadd.f32 0.0, %v2786
      %v2788 = vpop.f32.mrb[0].mxu0
      %2789 = vmatprep.mubr.bf16.mxu0 0
      %2790 = vmatmul.mubr.bf16.gmra.mrb[0].mxu0 %v1406
      %v2791 = vpop.f32.mrb[0].mxu0
      %v2792 = vadd.f32 0.0, %v2791
      %v2793 = vpop.f32.mrb[0].mxu0
      %v2794 = vpop.f32.mrb[0].mxu0
      %v2795 = vadd.f32 0.0, %v2794
      %v2796 = vpop.f32.mrb[0].mxu0
      %2797 = vmatprep.mubr.bf16.mxu0 0
      %2798 = vmatmul.mubr.bf16.gmra.mrb[0].mxu0 %v1409
      %v2799 = vpop.f32.mrb[0].mxu0
      %v2800 = vadd.f32 0.0, %v2799
      %v2801 = vpop.f32.mrb[0].mxu0
      %v2802 = vpop.f32.mrb[0].mxu0
      %v2803 = vadd.f32 0.0, %v2802
      %v2804 = vpop.f32.mrb[0].mxu0
      %2805 = vmatprep.mubr.bf16.mxu0 0
      %2806 = vmatmul.mubr.bf16.gmra.mrb[0].mxu0 %v1412
      %v2807 = vpop.f32.mrb[0].mxu0
      %v2808 = vadd.f32 0.0, %v2807
      %v2809 = vpop.f32.mrb[0].mxu0
      %v2810 = vpop.f32.mrb[0].mxu0
      %v2811 = vadd.f32 0.0, %v2810
      %v2812 = vpop.f32.mrb[0].mxu0
      %2813 = vmatprep.mubr.bf16.mxu0 0
      %2814 = vmatmul.mubr.bf16.gmra.mrb[0].mxu0 %v1415
      %v2815 = vpop.f32.mrb[0].mxu0
      %v2816 = vadd.f32 0.0, %v2815
      %v2817 = vpop.f32.mrb[0].mxu0
      %v2818 = vpop.f32.mrb[0].mxu0
      %v2819 = vadd.f32 0.0, %v2818
      %v2820 = vpop.f32.mrb[0].mxu0
      %2821 = vmatprep.mubr.bf16.mxu0 0
      %2822 = vmatmul.mubr.bf16.gmra.mrb[0].mxu0 %v1418
      %v2823 = vpop.f32.mrb[0].mxu0
      %v2824 = vadd.f32 0.0, %v2823
      %v2825 = vpop.f32.mrb[0].mxu0
      %v2826 = vpop.f32.mrb[0].mxu0
      %v2827 = vadd.f32 0.0, %v2826
      %v2828 = vpop.f32.mrb[0].mxu0
      %2829 = vmatprep.mubr.bf16.mxu0 0
      %2830 = vmatmul.mubr.bf16.gmra.mrb[0].mxu0 %v1421
      %v2831 = vpop.f32.mrb[0].mxu0
      %v2832 = vadd.f32 0.0, %v2831
      %v2833 = vpop.f32.mrb[0].mxu0
      %v2834 = vpop.f32.mrb[0].mxu0
      %v2835 = vadd.f32 0.0, %v2834
      %v2836 = vpop.f32.mrb[0].mxu0
      %2837 = vmatprep.mubr.bf16.mxu0 0
      %2838 = vmatmul.mubr.bf16.gmra.mrb[0].mxu0 %v1424
      %v2839 = vpop.f32.mrb[0].mxu0
      %v2840 = vadd.f32 0.0, %v2839
      %v2841 = vpop.f32.mrb[0].mxu0
      %v2842 = vpop.f32.mrb[0].mxu0
      %v2843 = vadd.f32 0.0, %v2842
      %v2844 = vpop.f32.mrb[0].mxu0
      %2845 = vmatprep.mubr.bf16.mxu0 0
      %2846 = vmatmul.mubr.bf16.gmra.mrb[0].mxu0 %v1427
      %v2847 = vpop.f32.mrb[0].mxu0
      %v2848 = vadd.f32 0.0, %v2847
      %v2849 = vpop.f32.mrb[0].mxu0
      %v2850 = vpop.f32.mrb[0].mxu0
      %v2851 = vadd.f32 0.0, %v2850
      %v2852 = vpop.f32.mrb[0].mxu0
      %2853 = vmatprep.mubr.bf16.mxu0 0
      %2854 = vmatmul.mubr.bf16.gmra.mrb[0].mxu0 %v1430
      %v2855 = vpop.f32.mrb[0].mxu0
      %v2856 = vadd.f32 0.0, %v2855
      %v2857 = vpop.f32.mrb[0].mxu0
      %v2858 = vpop.f32.mrb[0].mxu0
      %v2859 = vadd.f32 0.0, %v2858
      %v2860 = vpop.f32.mrb[0].mxu0
      %2861 = vmatprep.mubr.bf16.mxu0 0
      %2862 = vmatmul.mubr.bf16.gmra.mrb[0].mxu0 %v1433
      %v2863 = vpop.f32.mrb[0].mxu0
      %v2864 = vadd.f32 0.0, %v2863
      %v2865 = vpop.f32.mrb[0].mxu0
      %v2866 = vpop.f32.mrb[0].mxu0
      %v2867 = vadd.f32 0.0, %v2866
      %v2868 = vpop.f32.mrb[0].mxu0
      %2869 = vmatprep.mubr.bf16.mxu0 0
      %2870 = vmatmul.mubr.bf16.gmra.mrb[0].mxu0 %v1436
      %v2871 = vpop.f32.mrb[0].mxu0
      %v2872 = vadd.f32 0.0, %v2871
      %v2873 = vpop.f32.mrb[0].mxu0
      %v2874 = vpop.f32.mrb[0].mxu0
      %v2875 = vadd.f32 0.0, %v2874
      %v2876 = vpop.f32.mrb[0].mxu0
      %2877 = vmatprep.mubr.bf16.mxu0 0
      %2878 = vmatmul.mubr.bf16.gmra.mrb[0].mxu0 %v2082
      %v2879 = vpop.f32.mrb[0].mxu0
      %v2880 = vadd.f32 0.0, %v2879
      %v2881 = vpop.f32.mrb[0].mxu0
      %v2882 = vpop.f32.mrb[0].mxu0
      %v2883 = vadd.f32 0.0, %v2882
      %v2884 = vpop.f32.mrb[0].mxu0
      %2885 = vmatprep.mubr.bf16.mxu0 0
      %2886 = vmatmul.mubr.bf16.gmra.mrb[0].mxu0 %v2728
      %v2887 = vpop.f32.mrb[0].mxu0
      %v2888 = vadd.f32 0.0, %v2887
      %v2889 = vpop.f32.mrb[0].mxu0
      %v2890 = vpop.f32.mrb[0].mxu0
      %v2891 = vadd.f32 0.0, %v2890
      %v2892 = vpop.f32.mrb[0].mxu0
      %2893 = vdwg.mxu0
      %v2894 = vadd.f32 %v2682, %v2768
      %v2895 = vadd.f32 %v2683, %v2771
      %v2896 = vadd.f32 %v2684, %v2776
      %v2897 = vadd.f32 %v2685, %v2779
      %v2898 = vadd.f32 %v2686, %v2784
      %v2899 = vadd.f32 %v2687, %v2787
      %v2900 = vadd.f32 %v2688, %v2792
      %v2901 = vadd.f32 %v2689, %v2795
      %v2902 = vadd.f32 %v2690, %v2800
      %v2903 = vadd.f32 %v2691, %v2803
      %v2904 = vadd.f32 %v2692, %v2808
      %v2905 = vadd.f32 %v2693, %v2811
      %v2906 = vadd.f32 %v2694, %v2816
      %v2907 = vadd.f32 %v2695, %v2819
      %v2908 = vadd.f32 %v2696, %v2824
      %v2909 = vadd.f32 %v2697, %v2827
      %v2910 = vadd.f32 %v2698, %v2832
      %v2911 = vadd.f32 %v2699, %v2835
      %v2912 = vadd.f32 %v2700, %v2840
      %v2913 = vadd.f32 %v2701, %v2843
      %v2914 = vadd.f32 %v2702, %v2848
      %v2915 = vadd.f32 %v2703, %v2851
      %v2916 = vadd.f32 %v2704, %v2856
      %v2917 = vadd.f32 %v2705, %v2859
      %v2918 = vadd.f32 %v2706, %v2864
      %v2919 = vadd.f32 %v2707, %v2867
      %v2920 = vadd.f32 %v2708, %v2872
      %v2921 = vadd.f32 %v2709, %v2875
      %v2922 = vadd.f32 %v2710, %v2880
      %v2923 = vadd.f32 %v2711, %v2883
      %v2924 = vadd.f32 %v2712, %v2888
      %v2925 = vadd.f32 %v2713, %v2891
      %v2926 = vld [vmem:[%s2] sm:$0x1]
      %v2928 = vlaneseq
      %v2929 = vshrl.u32 %v2928, 7
      %v2930 = vsub.s32 0, %v2929
      %v2931 = vrot.slane %v2926, %v2930
      %v2933 = vadd.f32 %v2894, %v2931
      %v2934 = vadd.f32 %v2895, %v2931
      %v2935 = vadd.f32 %v2896, %v2931
      %v2936 = vadd.f32 %v2897, %v2931
      %v2937 = vadd.f32 %v2898, %v2931
      %v2938 = vadd.f32 %v2899, %v2931
      %v2939 = vadd.f32 %v2900, %v2931
      %v2940 = vadd.f32 %v2901, %v2931
      %v2941 = vadd.f32 %v2902, %v2931
      %v2942 = vadd.f32 %v2903, %v2931
      %v2943 = vadd.f32 %v2904, %v2931
      %v2944 = vadd.f32 %v2905, %v2931
      %v2945 = vadd.f32 %v2906, %v2931
      %v2946 = vadd.f32 %v2907, %v2931
      %v2947 = vadd.f32 %v2908, %v2931
      %v2948 = vadd.f32 %v2909, %v2931
      %v2949 = vadd.f32 %v2910, %v2931
      %v2950 = vadd.f32 %v2911, %v2931
      %v2951 = vadd.f32 %v2912, %v2931
      %v2952 = vadd.f32 %v2913, %v2931
      %v2953 = vadd.f32 %v2914, %v2931
      %v2954 = vadd.f32 %v2915, %v2931
      %v2955 = vadd.f32 %v2916, %v2931
      %v2956 = vadd.f32 %v2917, %v2931
      %v2957 = vadd.f32 %v2918, %v2931
      %v2958 = vadd.f32 %v2919, %v2931
      %v2959 = vadd.f32 %v2920, %v2931
      %v2960 = vadd.f32 %v2921, %v2931
      %v2961 = vadd.f32 %v2922, %v2931
      %v2962 = vadd.f32 %v2923, %v2931
      %v2963 = vadd.f32 %v2924, %v2931
      %v2964 = vadd.f32 %v2925, %v2931
      %2965 = vst.msk [vmem:[%s204] sm:$0xff] %vm703, %v2933
      %2966 = vst.msk [vmem:[%s204 + $0x8] sm:$0xff] %vm703, %v2934
      %2967 = vst.msk [vmem:[%s204 + $0x10] sm:$0xff] %vm703, %v2935
      %2968 = vst.msk [vmem:[%s204 + $0x18] sm:$0xff] %vm703, %v2936
      %2969 = vst.msk [vmem:[%s204 + $0x20] sm:$0xff] %vm703, %v2937
      %2970 = vst.msk [vmem:[%s204 + $0x28] sm:$0xff] %vm703, %v2938
      %2971 = vst.msk [vmem:[%s204 + $0x30] sm:$0xff] %vm703, %v2939
      %2972 = vst.msk [vmem:[%s204 + $0x38] sm:$0xff] %vm703, %v2940
      %2973 = vst.msk [vmem:[%s204 + $0x40] sm:$0xff] %vm703, %v2941
      %2974 = vst.msk [vmem:[%s204 + $0x48] sm:$0xff] %vm703, %v2942
      %2975 = vst.msk [vmem:[%s204 + $0x50] sm:$0xff] %vm703, %v2943
      %2976 = vst.msk [vmem:[%s204 + $0x58] sm:$0xff] %vm703, %v2944
      %2977 = vst.msk [vmem:[%s204 + $0x60] sm:$0xff] %vm703, %v2945
      %2978 = vst.msk [vmem:[%s204 + $0x68] sm:$0xff] %vm703, %v2946
      %2979 = vst.msk [vmem:[%s204 + $0x70] sm:$0xff] %vm703, %v2947
      %2980 = vst.msk [vmem:[%s204 + $0x78] sm:$0xff] %vm703, %v2948
      %2981 = vst.msk [vmem:[%s204 + $0x80] sm:$0xff] %vm703, %v2949
      %2982 = vst.msk [vmem:[%s204 + $0x88] sm:$0xff] %vm703, %v2950
      %2983 = vst.msk [vmem:[%s204 + $0x90] sm:$0xff] %vm703, %v2951
      %2984 = vst.msk [vmem:[%s204 + $0x98] sm:$0xff] %vm703, %v2952
      %2985 = vst.msk [vmem:[%s204 + $0xa0] sm:$0xff] %vm703, %v2953
      %2986 = vst.msk [vmem:[%s204 + $0xa8] sm:$0xff] %vm703, %v2954
      %2987 = vst.msk [vmem:[%s204 + $0xb0] sm:$0xff] %vm703, %v2955
      %2988 = vst.msk [vmem:[%s204 + $0xb8] sm:$0xff] %vm703, %v2956
      %2989 = vst.msk [vmem:[%s204 + $0xc0] sm:$0xff] %vm703, %v2957
      %2990 = vst.msk [vmem:[%s204 + $0xc8] sm:$0xff] %vm703, %v2958
      %2991 = vst.msk [vmem:[%s204 + $0xd0] sm:$0xff] %vm703, %v2959
      %2992 = vst.msk [vmem:[%s204 + $0xd8] sm:$0xff] %vm703, %v2960
      %2993 = vst.msk [vmem:[%s204 + $0xe0] sm:$0xff] %vm703, %v2961
      %2994 = vst.msk [vmem:[%s204 + $0xe8] sm:$0xff] %vm703, %v2962
      %2995 = vst.msk [vmem:[%s204 + $0xf0] sm:$0xff] %vm703, %v2963
      %2996 = vst.msk [vmem:[%s204 + $0xf8] sm:$0xff] %vm703, %v2964
      %v2997 = vsel %vm703, %v2933, 0.0
      %v2998 = vsel %vm703, %v2934, 0.0
      %v2999 = vadd.f32 %v2997, %v2998
      %v3000 = vsel %vm703, %v2935, 0.0
      %v3001 = vadd.f32 %v2999, %v3000
      %v3002 = vsel %vm703, %v2936, 0.0
      %v3003 = vadd.f32 %v3001, %v3002
      %v3004 = vsel %vm703, %v2937, 0.0
      %v3005 = vadd.f32 %v3003, %v3004
      %v3006 = vsel %vm703, %v2938, 0.0
      %v3007 = vadd.f32 %v3005, %v3006
      %v3008 = vsel %vm703, %v2939, 0.0
      %v3009 = vadd.f32 %v3007, %v3008
      %v3010 = vsel %vm703, %v2940, 0.0
      %v3011 = vadd.f32 %v3009, %v3010
      %v3012 = vsel %vm703, %v2941, 0.0
      %v3013 = vadd.f32 %v3011, %v3012
      %v3014 = vsel %vm703, %v2942, 0.0
      %v3015 = vadd.f32 %v3013, %v3014
      %v3016 = vsel %vm703, %v2943, 0.0
      %v3017 = vadd.f32 %v3015, %v3016
      %v3018 = vsel %vm703, %v2944, 0.0
      %v3019 = vadd.f32 %v3017, %v3018
      %v3020 = vsel %vm703, %v2945, 0.0
      %v3021 = vadd.f32 %v3019, %v3020
      %v3022 = vsel %vm703, %v2946, 0.0
      %v3023 = vadd.f32 %v3021, %v3022
      %v3024 = vsel %vm703, %v2947, 0.0
      %v3025 = vadd.f32 %v3023, %v3024
      %v3026 = vsel %vm703, %v2948, 0.0
      %v3027 = vadd.f32 %v3025, %v3026
      %v3028 = vsel %vm703, %v2949, 0.0
      %v3029 = vadd.f32 %v3027, %v3028
      %v3030 = vsel %vm703, %v2950, 0.0
      %v3031 = vadd.f32 %v3029, %v3030
      %v3032 = vsel %vm703, %v2951, 0.0
      %v3033 = vadd.f32 %v3031, %v3032
      %v3034 = vsel %vm703, %v2952, 0.0
      %v3035 = vadd.f32 %v3033, %v3034
      %v3036 = vsel %vm703, %v2953, 0.0
      %v3037 = vadd.f32 %v3035, %v3036
      %v3038 = vsel %vm703, %v2954, 0.0
      %v3039 = vadd.f32 %v3037, %v3038
      %v3040 = vsel %vm703, %v2955, 0.0
      %v3041 = vadd.f32 %v3039, %v3040
      %v3042 = vsel %vm703, %v2956, 0.0
      %v3043 = vadd.f32 %v3041, %v3042
      %v3044 = vsel %vm703, %v2957, 0.0
      %v3045 = vadd.f32 %v3043, %v3044
      %v3046 = vsel %vm703, %v2958, 0.0
      %v3047 = vadd.f32 %v3045, %v3046
      %v3048 = vsel %vm703, %v2959, 0.0
      %v3049 = vadd.f32 %v3047, %v3048
      %v3050 = vsel %vm703, %v2960, 0.0
      %v3051 = vadd.f32 %v3049, %v3050
      %v3052 = vsel %vm703, %v2961, 0.0
      %v3053 = vadd.f32 %v3051, %v3052
      %v3054 = vsel %vm703, %v2962, 0.0
      %v3055 = vadd.f32 %v3053, %v3054
      %v3056 = vsel %vm703, %v2963, 0.0
      %v3057 = vadd.f32 %v3055, %v3056
      %v3058 = vsel %vm703, %v2964, 0.0
      %v3059 = vadd.f32 %v3057, %v3058
      %v3060 = vrot.slane %v3059, 4
      %v3061 = vadd.f32 %v3059, %v3060
      %v3062 = vrot.slane %v3061, 2
      %v3063 = vadd.f32 %v3061, %v3062
      %v3064 = vrot.slane %v3063, 1
      %v3065 = vadd.f32 %v3063, %v3064
      %v3066 = vmul.f32 %v2933, %v2933
      %v3067 = vmul.f32 %v2934, %v2934
      %v3068 = vmul.f32 %v2935, %v2935
      %v3069 = vmul.f32 %v2936, %v2936
      %v3070 = vmul.f32 %v2937, %v2937
      %v3071 = vmul.f32 %v2938, %v2938
      %v3072 = vmul.f32 %v2939, %v2939
      %v3073 = vmul.f32 %v2940, %v2940
      %v3074 = vmul.f32 %v2941, %v2941
      %v3075 = vmul.f32 %v2942, %v2942
      %v3076 = vmul.f32 %v2943, %v2943
      %v3077 = vmul.f32 %v2944, %v2944
      %v3078 = vmul.f32 %v2945, %v2945
      %v3079 = vmul.f32 %v2946, %v2946
      %v3080 = vmul.f32 %v2947, %v2947
      %v3081 = vmul.f32 %v2948, %v2948
      %v3082 = vmul.f32 %v2949, %v2949
      %v3083 = vmul.f32 %v2950, %v2950
      %v3084 = vmul.f32 %v2951, %v2951
      %v3085 = vmul.f32 %v2952, %v2952
      %v3086 = vmul.f32 %v2953, %v2953
      %v3087 = vmul.f32 %v2954, %v2954
      %v3088 = vmul.f32 %v2955, %v2955
      %v3089 = vmul.f32 %v2956, %v2956
      %v3090 = vmul.f32 %v2957, %v2957
      %v3091 = vmul.f32 %v2958, %v2958
      %v3092 = vmul.f32 %v2959, %v2959
      %v3093 = vmul.f32 %v2960, %v2960
      %v3094 = vmul.f32 %v2961, %v2961
      %v3095 = vmul.f32 %v2962, %v2962
      %v3096 = vmul.f32 %v2963, %v2963
      %v3097 = vmul.f32 %v2964, %v2964
      %v3098 = vsel %vm703, %v3066, 0.0
      %v3099 = vsel %vm703, %v3067, 0.0
      %v3100 = vadd.f32 %v3098, %v3099
      %v3101 = vsel %vm703, %v3068, 0.0
      %v3102 = vadd.f32 %v3100, %v3101
      %v3103 = vsel %vm703, %v3069, 0.0
      %v3104 = vadd.f32 %v3102, %v3103
      %v3105 = vsel %vm703, %v3070, 0.0
      %v3106 = vadd.f32 %v3104, %v3105
      %v3107 = vsel %vm703, %v3071, 0.0
      %v3108 = vadd.f32 %v3106, %v3107
      %v3109 = vsel %vm703, %v3072, 0.0
      %v3110 = vadd.f32 %v3108, %v3109
      %v3111 = vsel %vm703, %v3073, 0.0
      %v3112 = vadd.f32 %v3110, %v3111
      %v3113 = vsel %vm703, %v3074, 0.0
      %v3114 = vadd.f32 %v3112, %v3113
      %v3115 = vsel %vm703, %v3075, 0.0
      %v3116 = vadd.f32 %v3114, %v3115
      %v3117 = vsel %vm703, %v3076, 0.0
      %v3118 = vadd.f32 %v3116, %v3117
      %v3119 = vsel %vm703, %v3077, 0.0
      %v3120 = vadd.f32 %v3118, %v3119
      %v3121 = vsel %vm703, %v3078, 0.0
      %v3122 = vadd.f32 %v3120, %v3121
      %v3123 = vsel %vm703, %v3079, 0.0
      %v3124 = vadd.f32 %v3122, %v3123
      %v3125 = vsel %vm703, %v3080, 0.0
      %v3126 = vadd.f32 %v3124, %v3125
      %v3127 = vsel %vm703, %v3081, 0.0
      %v3128 = vadd.f32 %v3126, %v3127
      %v3129 = vsel %vm703, %v3082, 0.0
      %v3130 = vadd.f32 %v3128, %v3129
      %v3131 = vsel %vm703, %v3083, 0.0
      %v3132 = vadd.f32 %v3130, %v3131
      %v3133 = vsel %vm703, %v3084, 0.0
      %v3134 = vadd.f32 %v3132, %v3133
      %v3135 = vsel %vm703, %v3085, 0.0
      %v3136 = vadd.f32 %v3134, %v3135
      %v3137 = vsel %vm703, %v3086, 0.0
      %v3138 = vadd.f32 %v3136, %v3137
      %v3139 = vsel %vm703, %v3087, 0.0
      %v3140 = vadd.f32 %v3138, %v3139
      %v3141 = vsel %vm703, %v3088, 0.0
      %v3142 = vadd.f32 %v3140, %v3141
      %v3143 = vsel %vm703, %v3089, 0.0
      %v3144 = vadd.f32 %v3142, %v3143
      %v3145 = vsel %vm703, %v3090, 0.0
      %v3146 = vadd.f32 %v3144, %v3145
      %v3147 = vsel %vm703, %v3091, 0.0
      %v3148 = vadd.f32 %v3146, %v3147
      %v3149 = vsel %vm703, %v3092, 0.0
      %v3150 = vadd.f32 %v3148, %v3149
      %v3151 = vsel %vm703, %v3093, 0.0
      %v3152 = vadd.f32 %v3150, %v3151
      %v3153 = vsel %vm703, %v3094, 0.0
      %v3154 = vadd.f32 %v3152, %v3153
      %v3155 = vsel %vm703, %v3095, 0.0
      %v3156 = vadd.f32 %v3154, %v3155
      %v3157 = vsel %vm703, %v3096, 0.0
      %v3158 = vadd.f32 %v3156, %v3157
      %v3159 = vsel %vm703, %v3097, 0.0
      %v3160 = vadd.f32 %v3158, %v3159
      %v3161 = vrot.slane %v3160, 4
      %v3162 = vadd.f32 %v3160, %v3161
      %v3163 = vrot.slane %v3162, 2
      %v3164 = vadd.f32 %v3162, %v3163
      %v3165 = vrot.slane %v3164, 1
      %v3166 = vadd.f32 %v3164, %v3165
      %vm3167 = vcmask 1040384
      %v3168 = vsel %vm3167, %v3065, %v3166
      %vm3169 = vcmask 25600
      %3170 = vst.msk [vmem:[%s209] sm:$0x3] %vm3169, %v3168
      %s3171 = smul.u32 32, %s16
      %p3172 = scmp.lt.s32.totalorder %s3171, 63
      %s3173 = scalar_select %p3172, %s3171, 63
      %s3174 = smul.addr %s3173, 8
      %s3175 = scalar_lea.vmem %s3, %s3174
      %p3176 = scmp.lt.s32.totalorder %s16, 1
      %s3177 = scalar_select %p3176, %s16, 1
      %s3178 = smul.addr %s3177, 2
      %s3179 = scalar_lea.vmem %s4, %s3178
      // Predicated region
      $region33: #{decoder_block_forward.8} parent=31 // pred_check
        %p3180 = pneg %p102
      $region34: #{decoder_block_forward.8} parent=31 // pred_check_branch
        %3182 = sbr.rel (%p3180) target = $region36
      $region35: #{decoder_block_forward.8} parent=31 // pred_region
        %s3183 = smul.u32 32, %s16
      $region36: #{decoder_block_forward.8} parent=31 // pred_fallthru
        _
      // Predicated region
      $region37: #{decoder_block_forward.8} parent=31 // pred_check
        %p3184 = pneg %p128
      $region38: #{decoder_block_forward.8} parent=31 // pred_check_branch
        %3186 = sbr.rel (%p3184) target = $region40
      $region39: #{decoder_block_forward.8} parent=31 // pred_region
        _
      $region40: #{decoder_block_forward.8} parent=31 // pred_fallthru
        _
    $region32: #{decoder_block_forward.8} parent=5 // pred_fallthru
      _
    %p3187 = scmp.le.s32.totalorder 2, %s11
    // Predicated region
    $region41: #{decoder_block_forward.8} parent=5 // pred_check
      %p3188 = pneg %p3187
    $region42: #{decoder_block_forward.8} parent=5 // pred_check_branch
      %3190 = sbr.rel (%p3188) target = $region44
    $region43: #{decoder_block_forward.8} parent=5 // pred_region
      %s3191 = ssub.s32 %s11, 2
      // Predicated region
      $region45: #{decoder_block_forward.8} parent=43 // pred_check
        %p3192 = pneg %p108
      $region46: #{decoder_block_forward.8} parent=43 // pred_check_branch
        %3194 = sbr.rel (%p3192) target = $region48
      $region47: #{decoder_block_forward.8} parent=43 // pred_region
        %s3195 = smul.u32 32, %s17
        %p3196 = scmp.lt.s32.totalorder %s3195, 63
        %s3197 = scalar_select %p3196, %s3195, 63
        %s3198 = smul.addr %s3197, 8
        %s3199 = scalar_lea.vmem %s3, %s3198
      $region48: #{decoder_block_forward.8} parent=43 // pred_fallthru
        _
      // Predicated region
      $region49: #{decoder_block_forward.8} parent=43 // pred_check
        %p3200 = pneg %p134
      $region50: #{decoder_block_forward.8} parent=43 // pred_check_branch
        %3202 = sbr.rel (%p3200) target = $region52
      $region51: #{decoder_block_forward.8} parent=43 // pred_region
        %p3203 = scmp.lt.s32.totalorder %s17, 1
        %s3204 = scalar_select %p3203, %s17, 1
        %s3205 = smul.addr %s3204, 2
        %s3206 = scalar_lea.vmem %s4, %s3205
      $region52: #{decoder_block_forward.8} parent=43 // pred_fallthru
        _
    $region44: #{decoder_block_forward.8} parent=5 // pred_fallthru
      _
  $region6: #{decoder_block_forward.8} parent=0 // loop_footer
    %s15 = sadd.s32 1, %s11
  $region7: #{decoder_block_forward.8} parent=0 // loop_footer_branch
    %10 = sbr.rel target = $region3
  $region8: #{decoder_block_forward.8} parent=0 // loop_exit
    _

</llo_original>
